<compile_context>
chip_gen: v7x
topology: tpu7x:2x2x1
jax: 0.10.0
libtpu: 0.0.40
codegen_flags: <defaults>
</compile_context>

<pallas_src>
import jax
import jax.numpy as jnp
from jax.experimental import pallas as pl
from jax.experimental.pallas import tpu as pltpu

EPS = 1e-5  # PyTorch BatchNorm2d default eps


def _d_res_block_kernel(x_ref, w3_ref, g_ref, b_ref, a_ref, out_ref,
                        xcol_ref, resin_ref):
    # x_ref:    (N, H, W, C)        input, VMEM, f32
    # w3_ref:   (3, 3*C, C)         conv weight, kx taps merged along Cin, VMEM, bf16
    # g_ref:    (1, C)              BN gamma, VMEM, f32
    # b_ref:    (1, C)              BN beta, VMEM, f32
    # a_ref:    (1,)                PReLU alpha (num_parameters=1), SMEM, f32
    # out_ref:  (N, H, W, C)        output, VMEM, f32
    # xcol_ref: (N, H+2, W, 3*C)    kx-expanded padded im2col scratch, VMEM, f32
    # resin_ref:(N, H, W, C)        current ResBlock input (inner residual), VMEM, f32
    N, H, W, C = x_ref.shape
    M = N * H * W
    C3 = 3 * C

    gamma = g_ref[...]            # (1, C)
    beta = b_ref[...]             # (1, C)
    alpha = a_ref[0]              # scalar
    inv_m = jnp.float32(1.0 / M)

    # Ones block for MXU-based column sums (built once, reused for all 12 reductions).
    ones_rows = jnp.ones((8, M), jnp.float32)

    # ---- Halo-only zeroing: regions set_interior never writes, stay zero for all 6 passes.
    zrow = jnp.zeros((N, 1, W, C3), jnp.float32)
    xcol_ref[:, 0:1, :, :] = zrow                     # ky top halo row
    xcol_ref[:, H + 1:H + 2, :, :] = zrow             # ky bottom halo row
    zcol = jnp.zeros((N, H, 1, C), jnp.float32)
    xcol_ref[:, 1:H + 1, 0:1, 0:C] = zcol             # kx=0 tap at w == 0
    xcol_ref[:, 1:H + 1, W - 1:W, 2 * C:C3] = zcol    # kx=2 tap at w == W-1

    def set_interior(act):
        # Write the activation once per pass with the kx shift applied at store time,
        # at lane offsets 0 / C / 2C (all multiples of 128 -> lane-aligned stores).
        # Every ky tap then becomes a contiguous zero-copy (M, 3C) view of this scratch.
        xcol_ref[:, 1:H + 1, :, C:2 * C] = act                          # kx = 1 (center)
        xcol_ref[:, 1:H + 1, 1:W, 0:C] = act[:, :, 0:W - 1, :]          # kx = 0 (left)
        xcol_ref[:, 1:H + 1, 0:W - 1, 2 * C:C3] = act[:, :, 1:W, :]     # kx = 2 (right)

    def conv_bn(apply_prelu):
        # 3x3 "SAME" conv as 3 MXU matmuls with K = 3*C; bf16 operands, f32 accumulation.
        acc = None
        for ky in range(3):
            lhs = xcol_ref[:, ky:ky + H, :, :].reshape(M, C3).astype(jnp.bfloat16)
            part = jnp.dot(lhs, w3_ref[ky],
                           preferred_element_type=jnp.float32)          # (M, C) f32
            acc = part if acc is None else acc + part
        # BatchNorm2d, training-mode forward: biased batch stats over N,H,W, two-pass
        # variance, all f32. Column sums use the (otherwise idle) MXU instead of the XLU.
        mean = jnp.dot(ones_rows, acc,
                       preferred_element_type=jnp.float32)[0:1] * inv_m      # (1, C)
        diff = acc - mean
        var = jnp.dot(ones_rows, diff * diff,
                      preferred_element_type=jnp.float32)[0:1] * inv_m       # (1, C)
        y = diff * jax.lax.rsqrt(var + EPS) * gamma + beta                   # (M, C)
        if apply_prelu:
            y = jnp.where(y >= 0.0, y, alpha * y)
        return y.reshape(N, H, W, C)

    resin_ref[...] = x_ref[...]
    set_interior(x_ref[...])

    for rb in range(3):
        # conv -> BN -> PReLU
        h = conv_bn(apply_prelu=True)
        set_interior(h)
        # conv -> BN -> + ResBlock input
        y = conv_bn(apply_prelu=False) + resin_ref[...]
        if rb < 2:
            resin_ref[...] = y
            set_interior(y)
        else:
            # outer residual of D_ResBlock
            out_ref[...] = (y + x_ref[...]).astype(out_ref.dtype)


def d_res_block(x_nhwc, w3_bf16, gamma, beta, alpha):
    """x_nhwc: (N,H,W,C) f32; w3_bf16: (3, 3*Cin, Cout) bf16 (kx taps merged along Cin)."""
    N, H, W, C = x_nhwc.shape
    vmem = pl.BlockSpec(memory_space=pltpu.MemorySpace.VMEM)
    smem = pl.BlockSpec(memory_space=pltpu.MemorySpace.SMEM)
    return pl.pallas_call(
        _d_res_block_kernel,
        out_shape=jax.ShapeDtypeStruct((N, H, W, C), jnp.float32),
        in_specs=[vmem, vmem, vmem, vmem, smem],
        out_specs=vmem,
        scratch_shapes=[
            pltpu.VMEM((N, H + 2, W, 3 * C), jnp.float32),  # kx-expanded padded im2col
            pltpu.VMEM((N, H, W, C), jnp.float32),          # ResBlock input (residual)
        ],
        # Residency ~0.75 MiB (bf16 weights 288 KiB + im2col 245 KiB + acts). 16 MiB budget
        # stated explicitly so scaling the shape fails loudly; v7x (64 MiB phys / 32 MiB
        # scoped) needs the gridded two-phase-BN variant well before this is reached.
        compiler_params=pltpu.CompilerParams(vmem_limit_bytes=16 * 1024 * 1024),
    )(x_nhwc, w3_bf16,
      gamma.reshape(1, C).astype(jnp.float32),
      beta.reshape(1, C).astype(jnp.float32),
      jnp.asarray([alpha], jnp.float32))


# ---------------- pure-JAX reference (for correctness check, f32 HIGHEST) ----------------
def _ref_conv_bn_act(x, w_hwio, gamma, beta, alpha, prelu):
    y = jax.lax.conv_general_dilated(
        x, w_hwio, (1, 1), "SAME",
        dimension_numbers=("NHWC", "HWIO", "NHWC"),
        precision=jax.lax.Precision.HIGHEST)
    mean = jnp.mean(y, axis=(0, 1, 2), keepdims=True)
    var = jnp.mean((y - mean) ** 2, axis=(0, 1, 2), keepdims=True)
    y = (y - mean) / jnp.sqrt(var + EPS) * gamma.reshape(1, 1, 1, -1) \
        + beta.reshape(1, 1, 1, -1)
    if prelu:
        y = jnp.where(y >= 0.0, y, alpha * y)
    return y


def _ref_res_block(x, w_hwio, gamma, beta, alpha):
    h = _ref_conv_bn_act(x, w_hwio, gamma, beta, alpha, prelu=True)
    h = _ref_conv_bn_act(h, w_hwio, gamma, beta, alpha, prelu=False)
    return h + x


def _ref_d_res_block(x, w_hwio, gamma, beta, alpha):
    out = _ref_res_block(x, w_hwio, gamma, beta, alpha)
    out = _ref_res_block(out, w_hwio, gamma, beta, alpha)
    out = _ref_res_block(out, w_hwio, gamma, beta, alpha)
    return out + x


if __name__ == "__main__":
    key = jax.random.PRNGKey(0)
    k1, k2, k3, k4 = jax.random.split(key, 4)

    # Conv2d(128, 128, 3) forces C=128; keep batch/spatial small.
    N, C, H, W = 2, 128, 8, 8

    x_nchw = jax.random.normal(k1, (N, C, H, W), jnp.float32)          # PyTorch layout
    w_oihw = jax.random.normal(k2, (C, C, 3, 3), jnp.float32) * 0.05   # conv weight (O,I,kH,kW)
    gamma = 1.0 + 0.1 * jax.random.normal(k3, (C,), jnp.float32)       # BN weight
    beta = 0.1 * jax.random.normal(k4, (C,), jnp.float32)              # BN bias
    alpha = jnp.float32(0.25)                                          # PReLU default init

    # NCHW -> NHWC; OIHW -> HWIO -> (3, 3*Cin, Cout) with kx taps merged along Cin; bf16.
    x = jnp.transpose(x_nchw, (0, 2, 3, 1))
    w_hwio = jnp.transpose(w_oihw, (2, 3, 1, 0))        # (ky, kx, Cin, Cout)
    w3 = w_hwio.reshape(3, 3 * C, C).astype(jnp.bfloat16)

    out = jax.block_until_ready(d_res_block(x, w3, gamma, beta, alpha))
    assert out.shape == (N, H, W, C)

    ref = _ref_d_res_block(x, w_hwio, gamma, beta, alpha)
    err = out - ref
    max_err = float(jnp.max(jnp.abs(err)))
    rel_l2 = float(jnp.sqrt(jnp.sum(err * err) / jnp.sum(ref * ref)))
    # Kernel uses bf16 matmul operands (f32 accumulation, f32 BN stats) vs. an all-f32
    # HIGHEST-precision reference, so the tolerance reflects bf16 operand rounding.
    ok = bool(jnp.allclose(out, ref, atol=7e-2, rtol=2e-2)) and rel_l2 < 2e-2
    assert ok, f"max_err={max_err} rel_l2={rel_l2}"

    print("KERNEL_OK")
</pallas_src>

<mosaic_0001>
module attributes {stable_mosaic.version = 11 : i64} {
  func.func @_d_res_block_kernel(%arg0: memref<2x8x8x128xf32, #tpu.memory_space<vmem>>, %arg1: memref<3x384x128xbf16, #tpu.memory_space<vmem>>, %arg2: memref<1x128xf32, #tpu.memory_space<vmem>>, %arg3: memref<1x128xf32, #tpu.memory_space<vmem>>, %arg4: memref<1xf32, #tpu.memory_space<smem>>, %arg5: memref<2x8x8x128xf32, #tpu.memory_space<vmem>>, %arg6: memref<2x10x8x384xf32, #tpu.memory_space<vmem>>, %arg7: memref<2x8x8x128xf32, #tpu.memory_space<vmem>>) attributes {dimension_semantics = [], scalar_prefetch = 0 : i64, scratch_operands = 2 : i64, tpu.core_type = #tpu.core_type<tc>} {
    %c0 = arith.constant 0 : index
    %c0_0 = arith.constant 0 : index
    %0 = vector.load %arg2[%c0, %c0_0] : memref<1x128xf32, #tpu.memory_space<vmem>>, vector<1x128xf32>
    %c0_1 = arith.constant 0 : index
    %c0_2 = arith.constant 0 : index
    %1 = vector.load %arg3[%c0_1, %c0_2] : memref<1x128xf32, #tpu.memory_space<vmem>>, vector<1x128xf32>
    %c0_3 = arith.constant 0 : index
    %2 = memref.load %arg4[%c0_3] : memref<1xf32, #tpu.memory_space<smem>>
    %cst = arith.constant 1.000000e+00 : f32
    %3 = vector.broadcast %cst : f32 to vector<8x128xf32>
    %cst_4 = arith.constant 0.000000e+00 : f32
    %4 = vector.broadcast %cst_4 : f32 to vector<2x1x8x384xf32>
    %c0_5 = arith.constant 0 : index
    %c0_6 = arith.constant 0 : index
    %c0_7 = arith.constant 0 : index
    %c0_8 = arith.constant 0 : index
    %5 = vector.load %arg6[%c0_5, %c0_6, %c0_7, %c0_8] : memref<2x10x8x384xf32, #tpu.memory_space<vmem>>, vector<2x1x8x384xf32>
    tpu.vector_store %arg6[%c0_5, %c0_6, %c0_7, %c0_8], %4 {strides = array<i32>} : memref<2x10x8x384xf32, #tpu.memory_space<vmem>>, vector<2x1x8x384xf32>,
    %c0_9 = arith.constant 0 : index
    %c9 = arith.constant 9 : index
    %c0_10 = arith.constant 0 : index
    %c0_11 = arith.constant 0 : index
    %6 = vector.load %arg6[%c0_9, %c9, %c0_10, %c0_11] : memref<2x10x8x384xf32, #tpu.memory_space<vmem>>, vector<2x1x8x384xf32>
    tpu.vector_store %arg6[%c0_9, %c9, %c0_10, %c0_11], %4 {strides = array<i32>} : memref<2x10x8x384xf32, #tpu.memory_space<vmem>>, vector<2x1x8x384xf32>,
    %cst_12 = arith.constant 0.000000e+00 : f32
    %7 = vector.broadcast %cst_12 : f32 to vector<2x8x1x128xf32>
    %c0_13 = arith.constant 0 : index
    %c1 = arith.constant 1 : index
    %c0_14 = arith.constant 0 : index
    %c0_15 = arith.constant 0 : index
    %8 = vector.load %arg6[%c0_13, %c1, %c0_14, %c0_15] : memref<2x10x8x384xf32, #tpu.memory_space<vmem>>, vector<2x8x1x128xf32>
    tpu.vector_store %arg6[%c0_13, %c1, %c0_14, %c0_15], %7 {strides = array<i32>} : memref<2x10x8x384xf32, #tpu.memory_space<vmem>>, vector<2x8x1x128xf32>,
    %c0_16 = arith.constant 0 : index
    %c1_17 = arith.constant 1 : index
    %c7 = arith.constant 7 : index
    %c256 = arith.constant 256 : index
    %9 = vector.load %arg6[%c0_16, %c1_17, %c7, %c256] : memref<2x10x8x384xf32, #tpu.memory_space<vmem>>, vector<2x8x1x128xf32>
    tpu.vector_store %arg6[%c0_16, %c1_17, %c7, %c256], %7 {strides = array<i32>} : memref<2x10x8x384xf32, #tpu.memory_space<vmem>>, vector<2x8x1x128xf32>,
    %c0_18 = arith.constant 0 : index
    %c0_19 = arith.constant 0 : index
    %c0_20 = arith.constant 0 : index
    %c0_21 = arith.constant 0 : index
    %10 = vector.load %arg0[%c0_18, %c0_19, %c0_20, %c0_21] : memref<2x8x8x128xf32, #tpu.memory_space<vmem>>, vector<2x8x8x128xf32>
    %c0_22 = arith.constant 0 : index
    %c0_23 = arith.constant 0 : index
    %c0_24 = arith.constant 0 : index
    %c0_25 = arith.constant 0 : index
    %11 = vector.load %arg7[%c0_22, %c0_23, %c0_24, %c0_25] : memref<2x8x8x128xf32, #tpu.memory_space<vmem>>, vector<2x8x8x128xf32>
    tpu.vector_store %arg7[%c0_22, %c0_23, %c0_24, %c0_25], %10 {strides = array<i32>} : memref<2x8x8x128xf32, #tpu.memory_space<vmem>>, vector<2x8x8x128xf32>,
    %c0_26 = arith.constant 0 : index
    %c0_27 = arith.constant 0 : index
    %c0_28 = arith.constant 0 : index
    %c0_29 = arith.constant 0 : index
    %12 = vector.load %arg0[%c0_26, %c0_27, %c0_28, %c0_29] : memref<2x8x8x128xf32, #tpu.memory_space<vmem>>, vector<2x8x8x128xf32>
    %c0_30 = arith.constant 0 : index
    %c1_31 = arith.constant 1 : index
    %c0_32 = arith.constant 0 : index
    %c128 = arith.constant 128 : index
    %13 = vector.load %arg6[%c0_30, %c1_31, %c0_32, %c128] : memref<2x10x8x384xf32, #tpu.memory_space<vmem>>, vector<2x8x8x128xf32>
    tpu.vector_store %arg6[%c0_30, %c1_31, %c0_32, %c128], %12 {strides = array<i32>} : memref<2x10x8x384xf32, #tpu.memory_space<vmem>>, vector<2x8x8x128xf32>,
    %14 = vector.extract_strided_slice %12 {offsets = [0, 0, 0, 0], sizes = [2, 8, 7, 128], strides = [1, 1, 1, 1]} : vector<2x8x8x128xf32> to vector<2x8x7x128xf32>
    %c0_33 = arith.constant 0 : index
    %c1_34 = arith.constant 1 : index
    %c1_35 = arith.constant 1 : index
    %c0_36 = arith.constant 0 : index
    %15 = vector.load %arg6[%c0_33, %c1_34, %c1_35, %c0_36] : memref<2x10x8x384xf32, #tpu.memory_space<vmem>>, vector<2x8x7x128xf32>
    tpu.vector_store %arg6[%c0_33, %c1_34, %c1_35, %c0_36], %14 {strides = array<i32>} : memref<2x10x8x384xf32, #tpu.memory_space<vmem>>, vector<2x8x7x128xf32>,
    %16 = vector.extract_strided_slice %12 {offsets = [0, 0, 1, 0], sizes = [2, 8, 7, 128], strides = [1, 1, 1, 1]} : vector<2x8x8x128xf32> to vector<2x8x7x128xf32>
    %c0_37 = arith.constant 0 : index
    %c1_38 = arith.constant 1 : index
    %c0_39 = arith.constant 0 : index
    %c256_40 = arith.constant 256 : index
    %17 = vector.load %arg6[%c0_37, %c1_38, %c0_39, %c256_40] : memref<2x10x8x384xf32, #tpu.memory_space<vmem>>, vector<2x8x7x128xf32>
    tpu.vector_store %arg6[%c0_37, %c1_38, %c0_39, %c256_40], %16 {strides = array<i32>} : memref<2x10x8x384xf32, #tpu.memory_space<vmem>>, vector<2x8x7x128xf32>,
    %c0_41 = arith.constant 0 : index
    %c0_42 = arith.constant 0 : index
    %c0_43 = arith.constant 0 : index
    %c0_44 = arith.constant 0 : index
    %18 = vector.load %arg6[%c0_41, %c0_42, %c0_43, %c0_44] : memref<2x10x8x384xf32, #tpu.memory_space<vmem>>, vector<2x8x8x384xf32>
    %19 = vector.shape_cast %18 : vector<2x8x8x384xf32> to vector<128x384xf32>
    %20 = arith.truncf %19 : vector<128x384xf32> to vector<128x384xbf16>
    %c0_45 = arith.constant 0 : index
    %c0_46 = arith.constant 0 : index
    %c0_47 = arith.constant 0 : index
    %21 = vector.load %arg1[%c0_45, %c0_46, %c0_47] : memref<3x384x128xbf16, #tpu.memory_space<vmem>>, vector<1x384x128xbf16>
    %22 = vector.shape_cast %21 : vector<1x384x128xbf16> to vector<384x128xbf16>
    %cst_48 = arith.constant dense<0.000000e+00> : vector<128x128xf32>
    %23 = tpu.matmul %20, %22, %cst_48 {dimension_numbers = #tpu.dot_dimension_numbers<[1], [0], [0], [1], [0, 0, 1, 1], [], []>} : vector<128x384xbf16>, vector<384x128xbf16>, vector<128x128xf32> -> vector<128x128xf32>
    %c0_49 = arith.constant 0 : index
    %c1_50 = arith.constant 1 : index
    %c0_51 = arith.constant 0 : index
    %c0_52 = arith.constant 0 : index
    %24 = vector.load %arg6[%c0_49, %c1_50, %c0_51, %c0_52] : memref<2x10x8x384xf32, #tpu.memory_space<vmem>>, vector<2x8x8x384xf32>
    %25 = vector.shape_cast %24 : vector<2x8x8x384xf32> to vector<128x384xf32>
    %26 = arith.truncf %25 : vector<128x384xf32> to vector<128x384xbf16>
    %c1_53 = arith.constant 1 : index
    %c0_54 = arith.constant 0 : index
    %c0_55 = arith.constant 0 : index
    %27 = vector.load %arg1[%c1_53, %c0_54, %c0_55] : memref<3x384x128xbf16, #tpu.memory_space<vmem>>, vector<1x384x128xbf16>
    %28 = vector.shape_cast %27 : vector<1x384x128xbf16> to vector<384x128xbf16>
    %cst_56 = arith.constant dense<0.000000e+00> : vector<128x128xf32>
    %29 = tpu.matmul %26, %28, %cst_56 {dimension_numbers = #tpu.dot_dimension_numbers<[1], [0], [0], [1], [0, 0, 1, 1], [], []>} : vector<128x384xbf16>, vector<384x128xbf16>, vector<128x128xf32> -> vector<128x128xf32>
    %30 = arith.addf %23, %29 : vector<128x128xf32>
    %c0_57 = arith.constant 0 : index
    %c2 = arith.constant 2 : index
    %c0_58 = arith.constant 0 : index
    %c0_59 = arith.constant 0 : index
    %31 = vector.load %arg6[%c0_57, %c2, %c0_58, %c0_59] : memref<2x10x8x384xf32, #tpu.memory_space<vmem>>, vector<2x8x8x384xf32>
    %32 = vector.shape_cast %31 : vector<2x8x8x384xf32> to vector<128x384xf32>
    %33 = arith.truncf %32 : vector<128x384xf32> to vector<128x384xbf16>
    %c2_60 = arith.constant 2 : index
    %c0_61 = arith.constant 0 : index
    %c0_62 = arith.constant 0 : index
    %34 = vector.load %arg1[%c2_60, %c0_61, %c0_62] : memref<3x384x128xbf16, #tpu.memory_space<vmem>>, vector<1x384x128xbf16>
    %35 = vector.shape_cast %34 : vector<1x384x128xbf16> to vector<384x128xbf16>
    %cst_63 = arith.constant dense<0.000000e+00> : vector<128x128xf32>
    %36 = tpu.matmul %33, %35, %cst_63 {dimension_numbers = #tpu.dot_dimension_numbers<[1], [0], [0], [1], [0, 0, 1, 1], [], []>} : vector<128x384xbf16>, vector<384x128xbf16>, vector<128x128xf32> -> vector<128x128xf32>
    %37 = arith.addf %30, %36 : vector<128x128xf32>
    %cst_64 = arith.constant dense<0.000000e+00> : vector<8x128xf32>
    %38 = tpu.matmul %3, %37, %cst_64 {dimension_numbers = #tpu.dot_dimension_numbers<[1], [0], [0], [1], [0, 0, 1, 1], [], []>} : vector<8x128xf32>, vector<128x128xf32>, vector<8x128xf32> -> vector<8x128xf32>
    %39 = vector.extract_strided_slice %38 {offsets = [0, 0], sizes = [1, 128], strides = [1, 1]} : vector<8x128xf32> to vector<1x128xf32>
    %cst_65 = arith.constant 7.812500e-03 : f32
    %40 = vector.broadcast %cst_65 : f32 to vector<1x128xf32>
    %41 = arith.mulf %39, %40 : vector<1x128xf32>
    %42 = vector.broadcast %41 : vector<1x128xf32> to vector<128x128xf32>
    %43 = arith.subf %37, %42 : vector<128x128xf32>
    %44 = arith.mulf %43, %43 : vector<128x128xf32>
    %cst_66 = arith.constant dense<0.000000e+00> : vector<8x128xf32>
    %45 = tpu.matmul %3, %44, %cst_66 {dimension_numbers = #tpu.dot_dimension_numbers<[1], [0], [0], [1], [0, 0, 1, 1], [], []>} : vector<8x128xf32>, vector<128x128xf32>, vector<8x128xf32> -> vector<8x128xf32>
    %46 = vector.extract_strided_slice %45 {offsets = [0, 0], sizes = [1, 128], strides = [1, 1]} : vector<8x128xf32> to vector<1x128xf32>
    %cst_67 = arith.constant 7.812500e-03 : f32
    %47 = vector.broadcast %cst_67 : f32 to vector<1x128xf32>
    %48 = arith.mulf %46, %47 : vector<1x128xf32>
    %cst_68 = arith.constant 9.99999974E-6 : f32
    %49 = vector.broadcast %cst_68 : f32 to vector<1x128xf32>
    %50 = arith.addf %48, %49 : vector<1x128xf32>
    %51 = math.rsqrt %50 : vector<1x128xf32>
    %52 = vector.broadcast %51 : vector<1x128xf32> to vector<128x128xf32>
    %53 = arith.mulf %43, %52 : vector<128x128xf32>
    %54 = vector.broadcast %0 : vector<1x128xf32> to vector<128x128xf32>
    %55 = arith.mulf %53, %54 : vector<128x128xf32>
    %56 = vector.broadcast %1 : vector<1x128xf32> to vector<128x128xf32>
    %57 = arith.addf %55, %56 : vector<128x128xf32>
    %cst_69 = arith.constant 0.000000e+00 : f32
    %58 = vector.broadcast %cst_69 : f32 to vector<128x128xf32>
    %59 = arith.cmpf oge, %57, %58 : vector<128x128xf32>
    %60 = vector.broadcast %2 : f32 to vector<128x128xf32>
    %61 = arith.mulf %60, %57 : vector<128x128xf32>
    %62 = arith.select %59, %57, %61 : vector<128x128xi1>, vector<128x128xf32>
    %63 = vector.shape_cast %62 : vector<128x128xf32> to vector<2x8x8x128xf32>
    %c0_70 = arith.constant 0 : index
    %c1_71 = arith.constant 1 : index
    %c0_72 = arith.constant 0 : index
    %c128_73 = arith.constant 128 : index
    %64 = vector.load %arg6[%c0_70, %c1_71, %c0_72, %c128_73] : memref<2x10x8x384xf32, #tpu.memory_space<vmem>>, vector<2x8x8x128xf32>
    tpu.vector_store %arg6[%c0_70, %c1_71, %c0_72, %c128_73], %63 {strides = array<i32>} : memref<2x10x8x384xf32, #tpu.memory_space<vmem>>, vector<2x8x8x128xf32>,
    %65 = vector.extract_strided_slice %63 {offsets = [0, 0, 0, 0], sizes = [2, 8, 7, 128], strides = [1, 1, 1, 1]} : vector<2x8x8x128xf32> to vector<2x8x7x128xf32>
    %c0_74 = arith.constant 0 : index
    %c1_75 = arith.constant 1 : index
    %c1_76 = arith.constant 1 : index
    %c0_77 = arith.constant 0 : index
    %66 = vector.load %arg6[%c0_74, %c1_75, %c1_76, %c0_77] : memref<2x10x8x384xf32, #tpu.memory_space<vmem>>, vector<2x8x7x128xf32>
    tpu.vector_store %arg6[%c0_74, %c1_75, %c1_76, %c0_77], %65 {strides = array<i32>} : memref<2x10x8x384xf32, #tpu.memory_space<vmem>>, vector<2x8x7x128xf32>,
    %67 = vector.extract_strided_slice %63 {offsets = [0, 0, 1, 0], sizes = [2, 8, 7, 128], strides = [1, 1, 1, 1]} : vector<2x8x8x128xf32> to vector<2x8x7x128xf32>
    %c0_78 = arith.constant 0 : index
    %c1_79 = arith.constant 1 : index
    %c0_80 = arith.constant 0 : index
    %c256_81 = arith.constant 256 : index
    %68 = vector.load %arg6[%c0_78, %c1_79, %c0_80, %c256_81] : memref<2x10x8x384xf32, #tpu.memory_space<vmem>>, vector<2x8x7x128xf32>
    tpu.vector_store %arg6[%c0_78, %c1_79, %c0_80, %c256_81], %67 {strides = array<i32>} : memref<2x10x8x384xf32, #tpu.memory_space<vmem>>, vector<2x8x7x128xf32>,
    %c0_82 = arith.constant 0 : index
    %c0_83 = arith.constant 0 : index
    %c0_84 = arith.constant 0 : index
    %c0_85 = arith.constant 0 : index
    %69 = vector.load %arg6[%c0_82, %c0_83, %c0_84, %c0_85] : memref<2x10x8x384xf32, #tpu.memory_space<vmem>>, vector<2x8x8x384xf32>
    %70 = vector.shape_cast %69 : vector<2x8x8x384xf32> to vector<128x384xf32>
    %71 = arith.truncf %70 : vector<128x384xf32> to vector<128x384xbf16>
    %c0_86 = arith.constant 0 : index
    %c0_87 = arith.constant 0 : index
    %c0_88 = arith.constant 0 : index
    %72 = vector.load %arg1[%c0_86, %c0_87, %c0_88] : memref<3x384x128xbf16, #tpu.memory_space<vmem>>, vector<1x384x128xbf16>
    %73 = vector.shape_cast %72 : vector<1x384x128xbf16> to vector<384x128xbf16>
    %cst_89 = arith.constant dense<0.000000e+00> : vector<128x128xf32>
    %74 = tpu.matmul %71, %73, %cst_89 {dimension_numbers = #tpu.dot_dimension_numbers<[1], [0], [0], [1], [0, 0, 1, 1], [], []>} : vector<128x384xbf16>, vector<384x128xbf16>, vector<128x128xf32> -> vector<128x128xf32>
    %c0_90 = arith.constant 0 : index
    %c1_91 = arith.constant 1 : index
    %c0_92 = arith.constant 0 : index
    %c0_93 = arith.constant 0 : index
    %75 = vector.load %arg6[%c0_90, %c1_91, %c0_92, %c0_93] : memref<2x10x8x384xf32, #tpu.memory_space<vmem>>, vector<2x8x8x384xf32>
    %76 = vector.shape_cast %75 : vector<2x8x8x384xf32> to vector<128x384xf32>
    %77 = arith.truncf %76 : vector<128x384xf32> to vector<128x384xbf16>
    %c1_94 = arith.constant 1 : index
    %c0_95 = arith.constant 0 : index
    %c0_96 = arith.constant 0 : index
    %78 = vector.load %arg1[%c1_94, %c0_95, %c0_96] : memref<3x384x128xbf16, #tpu.memory_space<vmem>>, vector<1x384x128xbf16>
    %79 = vector.shape_cast %78 : vector<1x384x128xbf16> to vector<384x128xbf16>
    %cst_97 = arith.constant dense<0.000000e+00> : vector<128x128xf32>
    %80 = tpu.matmul %77, %79, %cst_97 {dimension_numbers = #tpu.dot_dimension_numbers<[1], [0], [0], [1], [0, 0, 1, 1], [], []>} : vector<128x384xbf16>, vector<384x128xbf16>, vector<128x128xf32> -> vector<128x128xf32>
    %81 = arith.addf %74, %80 : vector<128x128xf32>
    %c0_98 = arith.constant 0 : index
    %c2_99 = arith.constant 2 : index
    %c0_100 = arith.constant 0 : index
    %c0_101 = arith.constant 0 : index
    %82 = vector.load %arg6[%c0_98, %c2_99, %c0_100, %c0_101] : memref<2x10x8x384xf32, #tpu.memory_space<vmem>>, vector<2x8x8x384xf32>
    %83 = vector.shape_cast %82 : vector<2x8x8x384xf32> to vector<128x384xf32>
    %84 = arith.truncf %83 : vector<128x384xf32> to vector<128x384xbf16>
    %c2_102 = arith.constant 2 : index
    %c0_103 = arith.constant 0 : index
    %c0_104 = arith.constant 0 : index
    %85 = vector.load %arg1[%c2_102, %c0_103, %c0_104] : memref<3x384x128xbf16, #tpu.memory_space<vmem>>, vector<1x384x128xbf16>
    %86 = vector.shape_cast %85 : vector<1x384x128xbf16> to vector<384x128xbf16>
    %cst_105 = arith.constant dense<0.000000e+00> : vector<128x128xf32>
    %87 = tpu.matmul %84, %86, %cst_105 {dimension_numbers = #tpu.dot_dimension_numbers<[1], [0], [0], [1], [0, 0, 1, 1], [], []>} : vector<128x384xbf16>, vector<384x128xbf16>, vector<128x128xf32> -> vector<128x128xf32>
    %88 = arith.addf %81, %87 : vector<128x128xf32>
    %cst_106 = arith.constant dense<0.000000e+00> : vector<8x128xf32>
    %89 = tpu.matmul %3, %88, %cst_106 {dimension_numbers = #tpu.dot_dimension_numbers<[1], [0], [0], [1], [0, 0, 1, 1], [], []>} : vector<8x128xf32>, vector<128x128xf32>, vector<8x128xf32> -> vector<8x128xf32>
    %90 = vector.extract_strided_slice %89 {offsets = [0, 0], sizes = [1, 128], strides = [1, 1]} : vector<8x128xf32> to vector<1x128xf32>
    %cst_107 = arith.constant 7.812500e-03 : f32
    %91 = vector.broadcast %cst_107 : f32 to vector<1x128xf32>
    %92 = arith.mulf %90, %91 : vector<1x128xf32>
    %93 = vector.broadcast %92 : vector<1x128xf32> to vector<128x128xf32>
    %94 = arith.subf %88, %93 : vector<128x128xf32>
    %95 = arith.mulf %94, %94 : vector<128x128xf32>
    %cst_108 = arith.constant dense<0.000000e+00> : vector<8x128xf32>
    %96 = tpu.matmul %3, %95, %cst_108 {dimension_numbers = #tpu.dot_dimension_numbers<[1], [0], [0], [1], [0, 0, 1, 1], [], []>} : vector<8x128xf32>, vector<128x128xf32>, vector<8x128xf32> -> vector<8x128xf32>
    %97 = vector.extract_strided_slice %96 {offsets = [0, 0], sizes = [1, 128], strides = [1, 1]} : vector<8x128xf32> to vector<1x128xf32>
    %cst_109 = arith.constant 7.812500e-03 : f32
    %98 = vector.broadcast %cst_109 : f32 to vector<1x128xf32>
    %99 = arith.mulf %97, %98 : vector<1x128xf32>
    %cst_110 = arith.constant 9.99999974E-6 : f32
    %100 = vector.broadcast %cst_110 : f32 to vector<1x128xf32>
    %101 = arith.addf %99, %100 : vector<1x128xf32>
    %102 = math.rsqrt %101 : vector<1x128xf32>
    %103 = vector.broadcast %102 : vector<1x128xf32> to vector<128x128xf32>
    %104 = arith.mulf %94, %103 : vector<128x128xf32>
    %105 = vector.broadcast %0 : vector<1x128xf32> to vector<128x128xf32>
    %106 = arith.mulf %104, %105 : vector<128x128xf32>
    %107 = vector.broadcast %1 : vector<1x128xf32> to vector<128x128xf32>
    %108 = arith.addf %106, %107 : vector<128x128xf32>
    %109 = vector.shape_cast %108 : vector<128x128xf32> to vector<2x8x8x128xf32>
    %c0_111 = arith.constant 0 : index
    %c0_112 = arith.constant 0 : index
    %c0_113 = arith.constant 0 : index
    %c0_114 = arith.constant 0 : index
    %110 = vector.load %arg7[%c0_111, %c0_112, %c0_113, %c0_114] : memref<2x8x8x128xf32, #tpu.memory_space<vmem>>, vector<2x8x8x128xf32>
    %111 = arith.addf %109, %110 : vector<2x8x8x128xf32>
    %c0_115 = arith.constant 0 : index
    %c0_116 = arith.constant 0 : index
    %c0_117 = arith.constant 0 : index
    %c0_118 = arith.constant 0 : index
    %112 = vector.load %arg7[%c0_115, %c0_116, %c0_117, %c0_118] : memref<2x8x8x128xf32, #tpu.memory_space<vmem>>, vector<2x8x8x128xf32>
    tpu.vector_store %arg7[%c0_115, %c0_116, %c0_117, %c0_118], %111 {strides = array<i32>} : memref<2x8x8x128xf32, #tpu.memory_space<vmem>>, vector<2x8x8x128xf32>,
    %c0_119 = arith.constant 0 : index
    %c1_120 = arith.constant 1 : index
    %c0_121 = arith.constant 0 : index
    %c128_122 = arith.constant 128 : index
    %113 = vector.load %arg6[%c0_119, %c1_120, %c0_121, %c128_122] : memref<2x10x8x384xf32, #tpu.memory_space<vmem>>, vector<2x8x8x128xf32>
    tpu.vector_store %arg6[%c0_119, %c1_120, %c0_121, %c128_122], %111 {strides = array<i32>} : memref<2x10x8x384xf32, #tpu.memory_space<vmem>>, vector<2x8x8x128xf32>,
    %114 = vector.extract_strided_slice %111 {offsets = [0, 0, 0, 0], sizes = [2, 8, 7, 128], strides = [1, 1, 1, 1]} : vector<2x8x8x128xf32> to vector<2x8x7x128xf32>
    %c0_123 = arith.constant 0 : index
    %c1_124 = arith.constant 1 : index
    %c1_125 = arith.constant 1 : index
    %c0_126 = arith.constant 0 : index
    %115 = vector.load %arg6[%c0_123, %c1_124, %c1_125, %c0_126] : memref<2x10x8x384xf32, #tpu.memory_space<vmem>>, vector<2x8x7x128xf32>
    tpu.vector_store %arg6[%c0_123, %c1_124, %c1_125, %c0_126], %114 {strides = array<i32>} : memref<2x10x8x384xf32, #tpu.memory_space<vmem>>, vector<2x8x7x128xf32>,
    %116 = vector.extract_strided_slice %111 {offsets = [0, 0, 1, 0], sizes = [2, 8, 7, 128], strides = [1, 1, 1, 1]} : vector<2x8x8x128xf32> to vector<2x8x7x128xf32>
    %c0_127 = arith.constant 0 : index
    %c1_128 = arith.constant 1 : index
    %c0_129 = arith.constant 0 : index
    %c256_130 = arith.constant 256 : index
    %117 = vector.load %arg6[%c0_127, %c1_128, %c0_129, %c256_130] : memref<2x10x8x384xf32, #tpu.memory_space<vmem>>, vector<2x8x7x128xf32>
    tpu.vector_store %arg6[%c0_127, %c1_128, %c0_129, %c256_130], %116 {strides = array<i32>} : memref<2x10x8x384xf32, #tpu.memory_space<vmem>>, vector<2x8x7x128xf32>,
    %c0_131 = arith.constant 0 : index
    %c0_132 = arith.constant 0 : index
    %c0_133 = arith.constant 0 : index
    %c0_134 = arith.constant 0 : index
    %118 = vector.load %arg6[%c0_131, %c0_132, %c0_133, %c0_134] : memref<2x10x8x384xf32, #tpu.memory_space<vmem>>, vector<2x8x8x384xf32>
    %119 = vector.shape_cast %118 : vector<2x8x8x384xf32> to vector<128x384xf32>
    %120 = arith.truncf %119 : vector<128x384xf32> to vector<128x384xbf16>
    %c0_135 = arith.constant 0 : index
    %c0_136 = arith.constant 0 : index
    %c0_137 = arith.constant 0 : index
    %121 = vector.load %arg1[%c0_135, %c0_136, %c0_137] : memref<3x384x128xbf16, #tpu.memory_space<vmem>>, vector<1x384x128xbf16>
    %122 = vector.shape_cast %121 : vector<1x384x128xbf16> to vector<384x128xbf16>
    %cst_138 = arith.constant dense<0.000000e+00> : vector<128x128xf32>
    %123 = tpu.matmul %120, %122, %cst_138 {dimension_numbers = #tpu.dot_dimension_numbers<[1], [0], [0], [1], [0, 0, 1, 1], [], []>} : vector<128x384xbf16>, vector<384x128xbf16>, vector<128x128xf32> -> vector<128x128xf32>
    %c0_139 = arith.constant 0 : index
    %c1_140 = arith.constant 1 : index
    %c0_141 = arith.constant 0 : index
    %c0_142 = arith.constant 0 : index
    %124 = vector.load %arg6[%c0_139, %c1_140, %c0_141, %c0_142] : memref<2x10x8x384xf32, #tpu.memory_space<vmem>>, vector<2x8x8x384xf32>
    %125 = vector.shape_cast %124 : vector<2x8x8x384xf32> to vector<128x384xf32>
    %126 = arith.truncf %125 : vector<128x384xf32> to vector<128x384xbf16>
    %c1_143 = arith.constant 1 : index
    %c0_144 = arith.constant 0 : index
    %c0_145 = arith.constant 0 : index
    %127 = vector.load %arg1[%c1_143, %c0_144, %c0_145] : memref<3x384x128xbf16, #tpu.memory_space<vmem>>, vector<1x384x128xbf16>
    %128 = vector.shape_cast %127 : vector<1x384x128xbf16> to vector<384x128xbf16>
    %cst_146 = arith.constant dense<0.000000e+00> : vector<128x128xf32>
    %129 = tpu.matmul %126, %128, %cst_146 {dimension_numbers = #tpu.dot_dimension_numbers<[1], [0], [0], [1], [0, 0, 1, 1], [], []>} : vector<128x384xbf16>, vector<384x128xbf16>, vector<128x128xf32> -> vector<128x128xf32>
    %130 = arith.addf %123, %129 : vector<128x128xf32>
    %c0_147 = arith.constant 0 : index
    %c2_148 = arith.constant 2 : index
    %c0_149 = arith.constant 0 : index
    %c0_150 = arith.constant 0 : index
    %131 = vector.load %arg6[%c0_147, %c2_148, %c0_149, %c0_150] : memref<2x10x8x384xf32, #tpu.memory_space<vmem>>, vector<2x8x8x384xf32>
    %132 = vector.shape_cast %131 : vector<2x8x8x384xf32> to vector<128x384xf32>
    %133 = arith.truncf %132 : vector<128x384xf32> to vector<128x384xbf16>
    %c2_151 = arith.constant 2 : index
    %c0_152 = arith.constant 0 : index
    %c0_153 = arith.constant 0 : index
    %134 = vector.load %arg1[%c2_151, %c0_152, %c0_153] : memref<3x384x128xbf16, #tpu.memory_space<vmem>>, vector<1x384x128xbf16>
    %135 = vector.shape_cast %134 : vector<1x384x128xbf16> to vector<384x128xbf16>
    %cst_154 = arith.constant dense<0.000000e+00> : vector<128x128xf32>
    %136 = tpu.matmul %133, %135, %cst_154 {dimension_numbers = #tpu.dot_dimension_numbers<[1], [0], [0], [1], [0, 0, 1, 1], [], []>} : vector<128x384xbf16>, vector<384x128xbf16>, vector<128x128xf32> -> vector<128x128xf32>
    %137 = arith.addf %130, %136 : vector<128x128xf32>
    %cst_155 = arith.constant dense<0.000000e+00> : vector<8x128xf32>
    %138 = tpu.matmul %3, %137, %cst_155 {dimension_numbers = #tpu.dot_dimension_numbers<[1], [0], [0], [1], [0, 0, 1, 1], [], []>} : vector<8x128xf32>, vector<128x128xf32>, vector<8x128xf32> -> vector<8x128xf32>
    %139 = vector.extract_strided_slice %138 {offsets = [0, 0], sizes = [1, 128], strides = [1, 1]} : vector<8x128xf32> to vector<1x128xf32>
    %cst_156 = arith.constant 7.812500e-03 : f32
    %140 = vector.broadcast %cst_156 : f32 to vector<1x128xf32>
    %141 = arith.mulf %139, %140 : vector<1x128xf32>
    %142 = vector.broadcast %141 : vector<1x128xf32> to vector<128x128xf32>
    %143 = arith.subf %137, %142 : vector<128x128xf32>
    %144 = arith.mulf %143, %143 : vector<128x128xf32>
    %cst_157 = arith.constant dense<0.000000e+00> : vector<8x128xf32>
    %145 = tpu.matmul %3, %144, %cst_157 {dimension_numbers = #tpu.dot_dimension_numbers<[1], [0], [0], [1], [0, 0, 1, 1], [], []>} : vector<8x128xf32>, vector<128x128xf32>, vector<8x128xf32> -> vector<8x128xf32>
    %146 = vector.extract_strided_slice %145 {offsets = [0, 0], sizes = [1, 128], strides = [1, 1]} : vector<8x128xf32> to vector<1x128xf32>
    %cst_158 = arith.constant 7.812500e-03 : f32
    %147 = vector.broadcast %cst_158 : f32 to vector<1x128xf32>
    %148 = arith.mulf %146, %147 : vector<1x128xf32>
    %cst_159 = arith.constant 9.99999974E-6 : f32
    %149 = vector.broadcast %cst_159 : f32 to vector<1x128xf32>
    %150 = arith.addf %148, %149 : vector<1x128xf32>
    %151 = math.rsqrt %150 : vector<1x128xf32>
    %152 = vector.broadcast %151 : vector<1x128xf32> to vector<128x128xf32>
    %153 = arith.mulf %143, %152 : vector<128x128xf32>
    %154 = vector.broadcast %0 : vector<1x128xf32> to vector<128x128xf32>
    %155 = arith.mulf %153, %154 : vector<128x128xf32>
    %156 = vector.broadcast %1 : vector<1x128xf32> to vector<128x128xf32>
    %157 = arith.addf %155, %156 : vector<128x128xf32>
    %cst_160 = arith.constant 0.000000e+00 : f32
    %158 = vector.broadcast %cst_160 : f32 to vector<128x128xf32>
    %159 = arith.cmpf oge, %157, %158 : vector<128x128xf32>
    %160 = vector.broadcast %2 : f32 to vector<128x128xf32>
    %161 = arith.mulf %160, %157 : vector<128x128xf32>
    %162 = arith.select %159, %157, %161 : vector<128x128xi1>, vector<128x128xf32>
    %163 = vector.shape_cast %162 : vector<128x128xf32> to vector<2x8x8x128xf32>
    %c0_161 = arith.constant 0 : index
    %c1_162 = arith.constant 1 : index
    %c0_163 = arith.constant 0 : index
    %c128_164 = arith.constant 128 : index
    %164 = vector.load %arg6[%c0_161, %c1_162, %c0_163, %c128_164] : memref<2x10x8x384xf32, #tpu.memory_space<vmem>>, vector<2x8x8x128xf32>
    tpu.vector_store %arg6[%c0_161, %c1_162, %c0_163, %c128_164], %163 {strides = array<i32>} : memref<2x10x8x384xf32, #tpu.memory_space<vmem>>, vector<2x8x8x128xf32>,
    %165 = vector.extract_strided_slice %163 {offsets = [0, 0, 0, 0], sizes = [2, 8, 7, 128], strides = [1, 1, 1, 1]} : vector<2x8x8x128xf32> to vector<2x8x7x128xf32>
    %c0_165 = arith.constant 0 : index
    %c1_166 = arith.constant 1 : index
    %c1_167 = arith.constant 1 : index
    %c0_168 = arith.constant 0 : index
    %166 = vector.load %arg6[%c0_165, %c1_166, %c1_167, %c0_168] : memref<2x10x8x384xf32, #tpu.memory_space<vmem>>, vector<2x8x7x128xf32>
    tpu.vector_store %arg6[%c0_165, %c1_166, %c1_167, %c0_168], %165 {strides = array<i32>} : memref<2x10x8x384xf32, #tpu.memory_space<vmem>>, vector<2x8x7x128xf32>,
    %167 = vector.extract_strided_slice %163 {offsets = [0, 0, 1, 0], sizes = [2, 8, 7, 128], strides = [1, 1, 1, 1]} : vector<2x8x8x128xf32> to vector<2x8x7x128xf32>
    %c0_169 = arith.constant 0 : index
    %c1_170 = arith.constant 1 : index
    %c0_171 = arith.constant 0 : index
    %c256_172 = arith.constant 256 : index
    %168 = vector.load %arg6[%c0_169, %c1_170, %c0_171, %c256_172] : memref<2x10x8x384xf32, #tpu.memory_space<vmem>>, vector<2x8x7x128xf32>
    tpu.vector_store %arg6[%c0_169, %c1_170, %c0_171, %c256_172], %167 {strides = array<i32>} : memref<2x10x8x384xf32, #tpu.memory_space<vmem>>, vector<2x8x7x128xf32>,
    %c0_173 = arith.constant 0 : index
    %c0_174 = arith.constant 0 : index
    %c0_175 = arith.constant 0 : index
    %c0_176 = arith.constant 0 : index
    %169 = vector.load %arg6[%c0_173, %c0_174, %c0_175, %c0_176] : memref<2x10x8x384xf32, #tpu.memory_space<vmem>>, vector<2x8x8x384xf32>
    %170 = vector.shape_cast %169 : vector<2x8x8x384xf32> to vector<128x384xf32>
    %171 = arith.truncf %170 : vector<128x384xf32> to vector<128x384xbf16>
    %c0_177 = arith.constant 0 : index
    %c0_178 = arith.constant 0 : index
    %c0_179 = arith.constant 0 : index
    %172 = vector.load %arg1[%c0_177, %c0_178, %c0_179] : memref<3x384x128xbf16, #tpu.memory_space<vmem>>, vector<1x384x128xbf16>
    %173 = vector.shape_cast %172 : vector<1x384x128xbf16> to vector<384x128xbf16>
    %cst_180 = arith.constant dense<0.000000e+00> : vector<128x128xf32>
    %174 = tpu.matmul %171, %173, %cst_180 {dimension_numbers = #tpu.dot_dimension_numbers<[1], [0], [0], [1], [0, 0, 1, 1], [], []>} : vector<128x384xbf16>, vector<384x128xbf16>, vector<128x128xf32> -> vector<128x128xf32>
    %c0_181 = arith.constant 0 : index
    %c1_182 = arith.constant 1 : index
    %c0_183 = arith.constant 0 : index
    %c0_184 = arith.constant 0 : index
    %175 = vector.load %arg6[%c0_181, %c1_182, %c0_183, %c0_184] : memref<2x10x8x384xf32, #tpu.memory_space<vmem>>, vector<2x8x8x384xf32>
    %176 = vector.shape_cast %175 : vector<2x8x8x384xf32> to vector<128x384xf32>
    %177 = arith.truncf %176 : vector<128x384xf32> to vector<128x384xbf16>
    %c1_185 = arith.constant 1 : index
    %c0_186 = arith.constant 0 : index
    %c0_187 = arith.constant 0 : index
    %178 = vector.load %arg1[%c1_185, %c0_186, %c0_187] : memref<3x384x128xbf16, #tpu.memory_space<vmem>>, vector<1x384x128xbf16>
    %179 = vector.shape_cast %178 : vector<1x384x128xbf16> to vector<384x128xbf16>
    %cst_188 = arith.constant dense<0.000000e+00> : vector<128x128xf32>
    %180 = tpu.matmul %177, %179, %cst_188 {dimension_numbers = #tpu.dot_dimension_numbers<[1], [0], [0], [1], [0, 0, 1, 1], [], []>} : vector<128x384xbf16>, vector<384x128xbf16>, vector<128x128xf32> -> vector<128x128xf32>
    %181 = arith.addf %174, %180 : vector<128x128xf32>
    %c0_189 = arith.constant 0 : index
    %c2_190 = arith.constant 2 : index
    %c0_191 = arith.constant 0 : index
    %c0_192 = arith.constant 0 : index
    %182 = vector.load %arg6[%c0_189, %c2_190, %c0_191, %c0_192] : memref<2x10x8x384xf32, #tpu.memory_space<vmem>>, vector<2x8x8x384xf32>
    %183 = vector.shape_cast %182 : vector<2x8x8x384xf32> to vector<128x384xf32>
    %184 = arith.truncf %183 : vector<128x384xf32> to vector<128x384xbf16>
    %c2_193 = arith.constant 2 : index
    %c0_194 = arith.constant 0 : index
    %c0_195 = arith.constant 0 : index
    %185 = vector.load %arg1[%c2_193, %c0_194, %c0_195] : memref<3x384x128xbf16, #tpu.memory_space<vmem>>, vector<1x384x128xbf16>
    %186 = vector.shape_cast %185 : vector<1x384x128xbf16> to vector<384x128xbf16>
    %cst_196 = arith.constant dense<0.000000e+00> : vector<128x128xf32>
    %187 = tpu.matmul %184, %186, %cst_196 {dimension_numbers = #tpu.dot_dimension_numbers<[1], [0], [0], [1], [0, 0, 1, 1], [], []>} : vector<128x384xbf16>, vector<384x128xbf16>, vector<128x128xf32> -> vector<128x128xf32>
    %188 = arith.addf %181, %187 : vector<128x128xf32>
    %cst_197 = arith.constant dense<0.000000e+00> : vector<8x128xf32>
    %189 = tpu.matmul %3, %188, %cst_197 {dimension_numbers = #tpu.dot_dimension_numbers<[1], [0], [0], [1], [0, 0, 1, 1], [], []>} : vector<8x128xf32>, vector<128x128xf32>, vector<8x128xf32> -> vector<8x128xf32>
    %190 = vector.extract_strided_slice %189 {offsets = [0, 0], sizes = [1, 128], strides = [1, 1]} : vector<8x128xf32> to vector<1x128xf32>
    %cst_198 = arith.constant 7.812500e-03 : f32
    %191 = vector.broadcast %cst_198 : f32 to vector<1x128xf32>
    %192 = arith.mulf %190, %191 : vector<1x128xf32>
    %193 = vector.broadcast %192 : vector<1x128xf32> to vector<128x128xf32>
    %194 = arith.subf %188, %193 : vector<128x128xf32>
    %195 = arith.mulf %194, %194 : vector<128x128xf32>
    %cst_199 = arith.constant dense<0.000000e+00> : vector<8x128xf32>
    %196 = tpu.matmul %3, %195, %cst_199 {dimension_numbers = #tpu.dot_dimension_numbers<[1], [0], [0], [1], [0, 0, 1, 1], [], []>} : vector<8x128xf32>, vector<128x128xf32>, vector<8x128xf32> -> vector<8x128xf32>
    %197 = vector.extract_strided_slice %196 {offsets = [0, 0], sizes = [1, 128], strides = [1, 1]} : vector<8x128xf32> to vector<1x128xf32>
    %cst_200 = arith.constant 7.812500e-03 : f32
    %198 = vector.broadcast %cst_200 : f32 to vector<1x128xf32>
    %199 = arith.mulf %197, %198 : vector<1x128xf32>
    %cst_201 = arith.constant 9.99999974E-6 : f32
    %200 = vector.broadcast %cst_201 : f32 to vector<1x128xf32>
    %201 = arith.addf %199, %200 : vector<1x128xf32>
    %202 = math.rsqrt %201 : vector<1x128xf32>
    %203 = vector.broadcast %202 : vector<1x128xf32> to vector<128x128xf32>
    %204 = arith.mulf %194, %203 : vector<128x128xf32>
    %205 = vector.broadcast %0 : vector<1x128xf32> to vector<128x128xf32>
    %206 = arith.mulf %204, %205 : vector<128x128xf32>
    %207 = vector.broadcast %1 : vector<1x128xf32> to vector<128x128xf32>
    %208 = arith.addf %206, %207 : vector<128x128xf32>
    %209 = vector.shape_cast %208 : vector<128x128xf32> to vector<2x8x8x128xf32>
    %c0_202 = arith.constant 0 : index
    %c0_203 = arith.constant 0 : index
    %c0_204 = arith.constant 0 : index
    %c0_205 = arith.constant 0 : index
    %210 = vector.load %arg7[%c0_202, %c0_203, %c0_204, %c0_205] : memref<2x8x8x128xf32, #tpu.memory_space<vmem>>, vector<2x8x8x128xf32>
    %211 = arith.addf %209, %210 : vector<2x8x8x128xf32>
    %c0_206 = arith.constant 0 : index
    %c0_207 = arith.constant 0 : index
    %c0_208 = arith.constant 0 : index
    %c0_209 = arith.constant 0 : index
    %212 = vector.load %arg7[%c0_206, %c0_207, %c0_208, %c0_209] : memref<2x8x8x128xf32, #tpu.memory_space<vmem>>, vector<2x8x8x128xf32>
    tpu.vector_store %arg7[%c0_206, %c0_207, %c0_208, %c0_209], %211 {strides = array<i32>} : memref<2x8x8x128xf32, #tpu.memory_space<vmem>>, vector<2x8x8x128xf32>,
    %c0_210 = arith.constant 0 : index
    %c1_211 = arith.constant 1 : index
    %c0_212 = arith.constant 0 : index
    %c128_213 = arith.constant 128 : index
    %213 = vector.load %arg6[%c0_210, %c1_211, %c0_212, %c128_213] : memref<2x10x8x384xf32, #tpu.memory_space<vmem>>, vector<2x8x8x128xf32>
    tpu.vector_store %arg6[%c0_210, %c1_211, %c0_212, %c128_213], %211 {strides = array<i32>} : memref<2x10x8x384xf32, #tpu.memory_space<vmem>>, vector<2x8x8x128xf32>,
    %214 = vector.extract_strided_slice %211 {offsets = [0, 0, 0, 0], sizes = [2, 8, 7, 128], strides = [1, 1, 1, 1]} : vector<2x8x8x128xf32> to vector<2x8x7x128xf32>
    %c0_214 = arith.constant 0 : index
    %c1_215 = arith.constant 1 : index
    %c1_216 = arith.constant 1 : index
    %c0_217 = arith.constant 0 : index
    %215 = vector.load %arg6[%c0_214, %c1_215, %c1_216, %c0_217] : memref<2x10x8x384xf32, #tpu.memory_space<vmem>>, vector<2x8x7x128xf32>
    tpu.vector_store %arg6[%c0_214, %c1_215, %c1_216, %c0_217], %214 {strides = array<i32>} : memref<2x10x8x384xf32, #tpu.memory_space<vmem>>, vector<2x8x7x128xf32>,
    %216 = vector.extract_strided_slice %211 {offsets = [0, 0, 1, 0], sizes = [2, 8, 7, 128], strides = [1, 1, 1, 1]} : vector<2x8x8x128xf32> to vector<2x8x7x128xf32>
    %c0_218 = arith.constant 0 : index
    %c1_219 = arith.constant 1 : index
    %c0_220 = arith.constant 0 : index
    %c256_221 = arith.constant 256 : index
    %217 = vector.load %arg6[%c0_218, %c1_219, %c0_220, %c256_221] : memref<2x10x8x384xf32, #tpu.memory_space<vmem>>, vector<2x8x7x128xf32>
    tpu.vector_store %arg6[%c0_218, %c1_219, %c0_220, %c256_221], %216 {strides = array<i32>} : memref<2x10x8x384xf32, #tpu.memory_space<vmem>>, vector<2x8x7x128xf32>,
    %c0_222 = arith.constant 0 : index
    %c0_223 = arith.constant 0 : index
    %c0_224 = arith.constant 0 : index
    %c0_225 = arith.constant 0 : index
    %218 = vector.load %arg6[%c0_222, %c0_223, %c0_224, %c0_225] : memref<2x10x8x384xf32, #tpu.memory_space<vmem>>, vector<2x8x8x384xf32>
    %219 = vector.shape_cast %218 : vector<2x8x8x384xf32> to vector<128x384xf32>
    %220 = arith.truncf %219 : vector<128x384xf32> to vector<128x384xbf16>
    %c0_226 = arith.constant 0 : index
    %c0_227 = arith.constant 0 : index
    %c0_228 = arith.constant 0 : index
    %221 = vector.load %arg1[%c0_226, %c0_227, %c0_228] : memref<3x384x128xbf16, #tpu.memory_space<vmem>>, vector<1x384x128xbf16>
    %222 = vector.shape_cast %221 : vector<1x384x128xbf16> to vector<384x128xbf16>
    %cst_229 = arith.constant dense<0.000000e+00> : vector<128x128xf32>
    %223 = tpu.matmul %220, %222, %cst_229 {dimension_numbers = #tpu.dot_dimension_numbers<[1], [0], [0], [1], [0, 0, 1, 1], [], []>} : vector<128x384xbf16>, vector<384x128xbf16>, vector<128x128xf32> -> vector<128x128xf32>
    %c0_230 = arith.constant 0 : index
    %c1_231 = arith.constant 1 : index
    %c0_232 = arith.constant 0 : index
    %c0_233 = arith.constant 0 : index
    %224 = vector.load %arg6[%c0_230, %c1_231, %c0_232, %c0_233] : memref<2x10x8x384xf32, #tpu.memory_space<vmem>>, vector<2x8x8x384xf32>
    %225 = vector.shape_cast %224 : vector<2x8x8x384xf32> to vector<128x384xf32>
    %226 = arith.truncf %225 : vector<128x384xf32> to vector<128x384xbf16>
    %c1_234 = arith.constant 1 : index
    %c0_235 = arith.constant 0 : index
    %c0_236 = arith.constant 0 : index
    %227 = vector.load %arg1[%c1_234, %c0_235, %c0_236] : memref<3x384x128xbf16, #tpu.memory_space<vmem>>, vector<1x384x128xbf16>
    %228 = vector.shape_cast %227 : vector<1x384x128xbf16> to vector<384x128xbf16>
    %cst_237 = arith.constant dense<0.000000e+00> : vector<128x128xf32>
    %229 = tpu.matmul %226, %228, %cst_237 {dimension_numbers = #tpu.dot_dimension_numbers<[1], [0], [0], [1], [0, 0, 1, 1], [], []>} : vector<128x384xbf16>, vector<384x128xbf16>, vector<128x128xf32> -> vector<128x128xf32>
    %230 = arith.addf %223, %229 : vector<128x128xf32>
    %c0_238 = arith.constant 0 : index
    %c2_239 = arith.constant 2 : index
    %c0_240 = arith.constant 0 : index
    %c0_241 = arith.constant 0 : index
    %231 = vector.load %arg6[%c0_238, %c2_239, %c0_240, %c0_241] : memref<2x10x8x384xf32, #tpu.memory_space<vmem>>, vector<2x8x8x384xf32>
    %232 = vector.shape_cast %231 : vector<2x8x8x384xf32> to vector<128x384xf32>
    %233 = arith.truncf %232 : vector<128x384xf32> to vector<128x384xbf16>
    %c2_242 = arith.constant 2 : index
    %c0_243 = arith.constant 0 : index
    %c0_244 = arith.constant 0 : index
    %234 = vector.load %arg1[%c2_242, %c0_243, %c0_244] : memref<3x384x128xbf16, #tpu.memory_space<vmem>>, vector<1x384x128xbf16>
    %235 = vector.shape_cast %234 : vector<1x384x128xbf16> to vector<384x128xbf16>
    %cst_245 = arith.constant dense<0.000000e+00> : vector<128x128xf32>
    %236 = tpu.matmul %233, %235, %cst_245 {dimension_numbers = #tpu.dot_dimension_numbers<[1], [0], [0], [1], [0, 0, 1, 1], [], []>} : vector<128x384xbf16>, vector<384x128xbf16>, vector<128x128xf32> -> vector<128x128xf32>
    %237 = arith.addf %230, %236 : vector<128x128xf32>
    %cst_246 = arith.constant dense<0.000000e+00> : vector<8x128xf32>
    %238 = tpu.matmul %3, %237, %cst_246 {dimension_numbers = #tpu.dot_dimension_numbers<[1], [0], [0], [1], [0, 0, 1, 1], [], []>} : vector<8x128xf32>, vector<128x128xf32>, vector<8x128xf32> -> vector<8x128xf32>
    %239 = vector.extract_strided_slice %238 {offsets = [0, 0], sizes = [1, 128], strides = [1, 1]} : vector<8x128xf32> to vector<1x128xf32>
    %cst_247 = arith.constant 7.812500e-03 : f32
    %240 = vector.broadcast %cst_247 : f32 to vector<1x128xf32>
    %241 = arith.mulf %239, %240 : vector<1x128xf32>
    %242 = vector.broadcast %241 : vector<1x128xf32> to vector<128x128xf32>
    %243 = arith.subf %237, %242 : vector<128x128xf32>
    %244 = arith.mulf %243, %243 : vector<128x128xf32>
    %cst_248 = arith.constant dense<0.000000e+00> : vector<8x128xf32>
    %245 = tpu.matmul %3, %244, %cst_248 {dimension_numbers = #tpu.dot_dimension_numbers<[1], [0], [0], [1], [0, 0, 1, 1], [], []>} : vector<8x128xf32>, vector<128x128xf32>, vector<8x128xf32> -> vector<8x128xf32>
    %246 = vector.extract_strided_slice %245 {offsets = [0, 0], sizes = [1, 128], strides = [1, 1]} : vector<8x128xf32> to vector<1x128xf32>
    %cst_249 = arith.constant 7.812500e-03 : f32
    %247 = vector.broadcast %cst_249 : f32 to vector<1x128xf32>
    %248 = arith.mulf %246, %247 : vector<1x128xf32>
    %cst_250 = arith.constant 9.99999974E-6 : f32
    %249 = vector.broadcast %cst_250 : f32 to vector<1x128xf32>
    %250 = arith.addf %248, %249 : vector<1x128xf32>
    %251 = math.rsqrt %250 : vector<1x128xf32>
    %252 = vector.broadcast %251 : vector<1x128xf32> to vector<128x128xf32>
    %253 = arith.mulf %243, %252 : vector<128x128xf32>
    %254 = vector.broadcast %0 : vector<1x128xf32> to vector<128x128xf32>
    %255 = arith.mulf %253, %254 : vector<128x128xf32>
    %256 = vector.broadcast %1 : vector<1x128xf32> to vector<128x128xf32>
    %257 = arith.addf %255, %256 : vector<128x128xf32>
    %cst_251 = arith.constant 0.000000e+00 : f32
    %258 = vector.broadcast %cst_251 : f32 to vector<128x128xf32>
    %259 = arith.cmpf oge, %257, %258 : vector<128x128xf32>
    %260 = vector.broadcast %2 : f32 to vector<128x128xf32>
    %261 = arith.mulf %260, %257 : vector<128x128xf32>
    %262 = arith.select %259, %257, %261 : vector<128x128xi1>, vector<128x128xf32>
    %263 = vector.shape_cast %262 : vector<128x128xf32> to vector<2x8x8x128xf32>
    %c0_252 = arith.constant 0 : index
    %c1_253 = arith.constant 1 : index
    %c0_254 = arith.constant 0 : index
    %c128_255 = arith.constant 128 : index
    %264 = vector.load %arg6[%c0_252, %c1_253, %c0_254, %c128_255] : memref<2x10x8x384xf32, #tpu.memory_space<vmem>>, vector<2x8x8x128xf32>
    tpu.vector_store %arg6[%c0_252, %c1_253, %c0_254, %c128_255], %263 {strides = array<i32>} : memref<2x10x8x384xf32, #tpu.memory_space<vmem>>, vector<2x8x8x128xf32>,
    %265 = vector.extract_strided_slice %263 {offsets = [0, 0, 0, 0], sizes = [2, 8, 7, 128], strides = [1, 1, 1, 1]} : vector<2x8x8x128xf32> to vector<2x8x7x128xf32>
    %c0_256 = arith.constant 0 : index
    %c1_257 = arith.constant 1 : index
    %c1_258 = arith.constant 1 : index
    %c0_259 = arith.constant 0 : index
    %266 = vector.load %arg6[%c0_256, %c1_257, %c1_258, %c0_259] : memref<2x10x8x384xf32, #tpu.memory_space<vmem>>, vector<2x8x7x128xf32>
    tpu.vector_store %arg6[%c0_256, %c1_257, %c1_258, %c0_259], %265 {strides = array<i32>} : memref<2x10x8x384xf32, #tpu.memory_space<vmem>>, vector<2x8x7x128xf32>,
    %267 = vector.extract_strided_slice %263 {offsets = [0, 0, 1, 0], sizes = [2, 8, 7, 128], strides = [1, 1, 1, 1]} : vector<2x8x8x128xf32> to vector<2x8x7x128xf32>
    %c0_260 = arith.constant 0 : index
    %c1_261 = arith.constant 1 : index
    %c0_262 = arith.constant 0 : index
    %c256_263 = arith.constant 256 : index
    %268 = vector.load %arg6[%c0_260, %c1_261, %c0_262, %c256_263] : memref<2x10x8x384xf32, #tpu.memory_space<vmem>>, vector<2x8x7x128xf32>
    tpu.vector_store %arg6[%c0_260, %c1_261, %c0_262, %c256_263], %267 {strides = array<i32>} : memref<2x10x8x384xf32, #tpu.memory_space<vmem>>, vector<2x8x7x128xf32>,
    %c0_264 = arith.constant 0 : index
    %c0_265 = arith.constant 0 : index
    %c0_266 = arith.constant 0 : index
    %c0_267 = arith.constant 0 : index
    %269 = vector.load %arg6[%c0_264, %c0_265, %c0_266, %c0_267] : memref<2x10x8x384xf32, #tpu.memory_space<vmem>>, vector<2x8x8x384xf32>
    %270 = vector.shape_cast %269 : vector<2x8x8x384xf32> to vector<128x384xf32>
    %271 = arith.truncf %270 : vector<128x384xf32> to vector<128x384xbf16>
    %c0_268 = arith.constant 0 : index
    %c0_269 = arith.constant 0 : index
    %c0_270 = arith.constant 0 : index
    %272 = vector.load %arg1[%c0_268, %c0_269, %c0_270] : memref<3x384x128xbf16, #tpu.memory_space<vmem>>, vector<1x384x128xbf16>
    %273 = vector.shape_cast %272 : vector<1x384x128xbf16> to vector<384x128xbf16>
    %cst_271 = arith.constant dense<0.000000e+00> : vector<128x128xf32>
    %274 = tpu.matmul %271, %273, %cst_271 {dimension_numbers = #tpu.dot_dimension_numbers<[1], [0], [0], [1], [0, 0, 1, 1], [], []>} : vector<128x384xbf16>, vector<384x128xbf16>, vector<128x128xf32> -> vector<128x128xf32>
    %c0_272 = arith.constant 0 : index
    %c1_273 = arith.constant 1 : index
    %c0_274 = arith.constant 0 : index
    %c0_275 = arith.constant 0 : index
    %275 = vector.load %arg6[%c0_272, %c1_273, %c0_274, %c0_275] : memref<2x10x8x384xf32, #tpu.memory_space<vmem>>, vector<2x8x8x384xf32>
    %276 = vector.shape_cast %275 : vector<2x8x8x384xf32> to vector<128x384xf32>
    %277 = arith.truncf %276 : vector<128x384xf32> to vector<128x384xbf16>
    %c1_276 = arith.constant 1 : index
    %c0_277 = arith.constant 0 : index
    %c0_278 = arith.constant 0 : index
    %278 = vector.load %arg1[%c1_276, %c0_277, %c0_278] : memref<3x384x128xbf16, #tpu.memory_space<vmem>>, vector<1x384x128xbf16>
    %279 = vector.shape_cast %278 : vector<1x384x128xbf16> to vector<384x128xbf16>
    %cst_279 = arith.constant dense<0.000000e+00> : vector<128x128xf32>
    %280 = tpu.matmul %277, %279, %cst_279 {dimension_numbers = #tpu.dot_dimension_numbers<[1], [0], [0], [1], [0, 0, 1, 1], [], []>} : vector<128x384xbf16>, vector<384x128xbf16>, vector<128x128xf32> -> vector<128x128xf32>
    %281 = arith.addf %274, %280 : vector<128x128xf32>
    %c0_280 = arith.constant 0 : index
    %c2_281 = arith.constant 2 : index
    %c0_282 = arith.constant 0 : index
    %c0_283 = arith.constant 0 : index
    %282 = vector.load %arg6[%c0_280, %c2_281, %c0_282, %c0_283] : memref<2x10x8x384xf32, #tpu.memory_space<vmem>>, vector<2x8x8x384xf32>
    %283 = vector.shape_cast %282 : vector<2x8x8x384xf32> to vector<128x384xf32>
    %284 = arith.truncf %283 : vector<128x384xf32> to vector<128x384xbf16>
    %c2_284 = arith.constant 2 : index
    %c0_285 = arith.constant 0 : index
    %c0_286 = arith.constant 0 : index
    %285 = vector.load %arg1[%c2_284, %c0_285, %c0_286] : memref<3x384x128xbf16, #tpu.memory_space<vmem>>, vector<1x384x128xbf16>
    %286 = vector.shape_cast %285 : vector<1x384x128xbf16> to vector<384x128xbf16>
    %cst_287 = arith.constant dense<0.000000e+00> : vector<128x128xf32>
    %287 = tpu.matmul %284, %286, %cst_287 {dimension_numbers = #tpu.dot_dimension_numbers<[1], [0], [0], [1], [0, 0, 1, 1], [], []>} : vector<128x384xbf16>, vector<384x128xbf16>, vector<128x128xf32> -> vector<128x128xf32>
    %288 = arith.addf %281, %287 : vector<128x128xf32>
    %cst_288 = arith.constant dense<0.000000e+00> : vector<8x128xf32>
    %289 = tpu.matmul %3, %288, %cst_288 {dimension_numbers = #tpu.dot_dimension_numbers<[1], [0], [0], [1], [0, 0, 1, 1], [], []>} : vector<8x128xf32>, vector<128x128xf32>, vector<8x128xf32> -> vector<8x128xf32>
    %290 = vector.extract_strided_slice %289 {offsets = [0, 0], sizes = [1, 128], strides = [1, 1]} : vector<8x128xf32> to vector<1x128xf32>
    %cst_289 = arith.constant 7.812500e-03 : f32
    %291 = vector.broadcast %cst_289 : f32 to vector<1x128xf32>
    %292 = arith.mulf %290, %291 : vector<1x128xf32>
    %293 = vector.broadcast %292 : vector<1x128xf32> to vector<128x128xf32>
    %294 = arith.subf %288, %293 : vector<128x128xf32>
    %295 = arith.mulf %294, %294 : vector<128x128xf32>
    %cst_290 = arith.constant dense<0.000000e+00> : vector<8x128xf32>
    %296 = tpu.matmul %3, %295, %cst_290 {dimension_numbers = #tpu.dot_dimension_numbers<[1], [0], [0], [1], [0, 0, 1, 1], [], []>} : vector<8x128xf32>, vector<128x128xf32>, vector<8x128xf32> -> vector<8x128xf32>
    %297 = vector.extract_strided_slice %296 {offsets = [0, 0], sizes = [1, 128], strides = [1, 1]} : vector<8x128xf32> to vector<1x128xf32>
    %cst_291 = arith.constant 7.812500e-03 : f32
    %298 = vector.broadcast %cst_291 : f32 to vector<1x128xf32>
    %299 = arith.mulf %297, %298 : vector<1x128xf32>
    %cst_292 = arith.constant 9.99999974E-6 : f32
    %300 = vector.broadcast %cst_292 : f32 to vector<1x128xf32>
    %301 = arith.addf %299, %300 : vector<1x128xf32>
    %302 = math.rsqrt %301 : vector<1x128xf32>
    %303 = vector.broadcast %302 : vector<1x128xf32> to vector<128x128xf32>
    %304 = arith.mulf %294, %303 : vector<128x128xf32>
    %305 = vector.broadcast %0 : vector<1x128xf32> to vector<128x128xf32>
    %306 = arith.mulf %304, %305 : vector<128x128xf32>
    %307 = vector.broadcast %1 : vector<1x128xf32> to vector<128x128xf32>
    %308 = arith.addf %306, %307 : vector<128x128xf32>
    %309 = vector.shape_cast %308 : vector<128x128xf32> to vector<2x8x8x128xf32>
    %c0_293 = arith.constant 0 : index
    %c0_294 = arith.constant 0 : index
    %c0_295 = arith.constant 0 : index
    %c0_296 = arith.constant 0 : index
    %310 = vector.load %arg7[%c0_293, %c0_294, %c0_295, %c0_296] : memref<2x8x8x128xf32, #tpu.memory_space<vmem>>, vector<2x8x8x128xf32>
    %311 = arith.addf %309, %310 : vector<2x8x8x128xf32>
    %c0_297 = arith.constant 0 : index
    %c0_298 = arith.constant 0 : index
    %c0_299 = arith.constant 0 : index
    %c0_300 = arith.constant 0 : index
    %312 = vector.load %arg0[%c0_297, %c0_298, %c0_299, %c0_300] : memref<2x8x8x128xf32, #tpu.memory_space<vmem>>, vector<2x8x8x128xf32>
    %313 = arith.addf %311, %312 : vector<2x8x8x128xf32>
    %c0_301 = arith.constant 0 : index
    %c0_302 = arith.constant 0 : index
    %c0_303 = arith.constant 0 : index
    %c0_304 = arith.constant 0 : index
    %314 = vector.load %arg5[%c0_301, %c0_302, %c0_303, %c0_304] : memref<2x8x8x128xf32, #tpu.memory_space<vmem>>, vector<2x8x8x128xf32>
    tpu.vector_store %arg5[%c0_301, %c0_302, %c0_303, %c0_304], %313 {strides = array<i32>} : memref<2x8x8x128xf32, #tpu.memory_space<vmem>>, vector<2x8x8x128xf32>,
    return
  }
}

</mosaic_0001>

<llo_original>
// kernel: tpu_custom_call.1
$region0: #{tpu_custom_call.1}
  #allocation0 [shape = 'u32[]', space=smem, size = 0x4, offset = 0x4, fixed_abs, tag = 'smem constant byte address 0x4 - core index']
  #allocation1 [shape = 'u32[144,128]{1,0:T(1,128)}', space=vmem, size = 0x12000, scoped, tag = 'internal scratch']
  #allocation2 [shape = 'f32[2,10,8,384]{3,2,1,0:T(8,128)}', space=vmem, size = 0x3c000, scoped, tag = 'scratch operand']
  #allocation3 [shape = 'f32[2,8,8,128]{3,2,1,0:T(8,128)}', space=vmem, size = 0x10000, scoped, tag = 'scratch operand']
  #allocation4 [shape = 'f32[1]{0:T(128)S(6)}', space=smem, size = 0x200, scoped, tag = 'scoped memory for tpu_custom_call.1']
  %s0 = inlined_call_operand.hbm [shape: f32[2,8,8,128], index: 0, kind: input, shape index: {}]
  %s1 = inlined_call_operand.hbm [shape: bf16[3,384,128], index: 1, kind: input, shape index: {}]
  %s2 = inlined_call_operand.vmem [shape: f32[1,128], index: 2, kind: input, shape index: {}]
  %s3 = inlined_call_operand.vmem [shape: f32[1,128], index: 3, kind: input, shape index: {}]
  %s4 = inlined_call_operand.<no memory space> [shape: f32[1], index: 4, kind: input, shape index: {}]
  %s5 = inlined_call_operand.hbm [shape: f32[2,8,8,128], index: 5, kind: output, shape index: {}]
  %s6 = sld [smem:[#allocation0]]
  $region38: #{tpu_custom_call.1} parent=0
    _
  %s8 = ssub.s32 1, %s6
  %s9 = scalar_select 0, %s8, %s6
  %10 = sst [smem:[#allocation4]] %s4
  $region1: #{tpu_custom_call.1} parent=0
    #allocation5 [shape = 'u8[65536]{0}', space=vmem, size = 0x10000, scoped, tag = 'input window, operand 0, single buffered']
    #allocation6 [shape = 's32[1]{0}', space=sflag, size = 0x4, scoped, tag = 'scoped memory for tpu_custom_call.1']
    #allocation7 [shape = 's32[1]{0}', space=sflag, size = 0x4, scoped, tag = 'scoped memory for tpu_custom_call.1']
    #allocation8 [shape = 'u8[294912]{0}', space=vmem, size = 0x48000, scoped, tag = 'input window, operand 1, single buffered']
    #allocation9 [shape = 's32[1]{0}', space=sflag, size = 0x4, scoped, tag = 'scoped memory for tpu_custom_call.1']
    #allocation10 [shape = 'u8[65536]{0}', space=vmem, size = 0x10000, scoped, tag = 'output window, operand 0, single buffered']
    %11 = vsyncpa [#allocation6], 0
    %12 = vsyncpa [#allocation9], 0
    %13 = vsyncpa [#allocation7], 0
    // Predicated region
    $region2: #{tpu_custom_call.1} parent=1 // pred_check
      _
    $region3: #{tpu_custom_call.1} parent=1 // pred_check_branch
      %15 = sbr.rel (0) target = $region5
    $region4: #{tpu_custom_call.1} parent=1 // pred_region
      %s17 = ssub.s32 2048, 2048
      %18 = vsyncadd [#allocation6], %s17
      %s19 = sshll.u32 [#allocation5], 4
      %s20 = int_to_ptr.vmem [resolvable:$true] %s19
      %25 = dma.hbm_to_vmem [thread:$0]  %s0, 2048, %s20, [#allocation6], 128, 128, 8
    $region5: #{tpu_custom_call.1} parent=1 // pred_fallthru
      _
    // Predicated region
    $region6: #{tpu_custom_call.1} parent=1 // pred_check
      _
    $region7: #{tpu_custom_call.1} parent=1 // pred_check_branch
      %27 = sbr.rel (0) target = $region9
    $region8: #{tpu_custom_call.1} parent=1 // pred_region
      %s29 = ssub.s32 9216, 9216
      %30 = vsyncadd [#allocation9], %s29
      %s31 = sshll.u32 [#allocation8], 4
      %s32 = int_to_ptr.vmem [resolvable:$true] %s31
      %37 = dma.hbm_to_vmem [thread:$0]  %s1, 9216, %s32, [#allocation9], 64, 64, 4
    $region9: #{tpu_custom_call.1} parent=1 // pred_fallthru
      _
    // Predicated region
    $region10: #{tpu_custom_call.1} parent=1 // pred_check
      _
    $region11: #{tpu_custom_call.1} parent=1 // pred_check_branch
      %39 = sbr.rel (0) target = $region13
    $region12: #{tpu_custom_call.1} parent=1 // pred_region
      _
    $region13: #{tpu_custom_call.1} parent=1 // pred_fallthru
      _
    // Predicated region
    $region14: #{tpu_custom_call.1} parent=1 // pred_check
      _
    $region15: #{tpu_custom_call.1} parent=1 // pred_check_branch
      %41 = sbr.rel (0) target = $region17
    $region16: #{tpu_custom_call.1} parent=1 // pred_region
      _
    $region17: #{tpu_custom_call.1} parent=1 // pred_fallthru
      _
    // Predicated region
    $region18: #{tpu_custom_call.1} parent=1 // pred_check
      _
    $region19: #{tpu_custom_call.1} parent=1 // pred_check_branch
      %43 = sbr.rel (0) target = $region21
    $region20: #{tpu_custom_call.1} parent=1 // pred_region
      _
    $region21: #{tpu_custom_call.1} parent=1 // pred_fallthru
      _
    // Predicated region
    $region22: #{tpu_custom_call.1} parent=1 // pred_check
      _
    $region23: #{tpu_custom_call.1} parent=1 // pred_check_branch
      %45 = sbr.rel (0) target = $region25
    $region24: #{tpu_custom_call.1} parent=1 // pred_region
      %46 = dma.done [#allocation6], 2048
    $region25: #{tpu_custom_call.1} parent=1 // pred_fallthru
      _
    // Predicated region
    $region26: #{tpu_custom_call.1} parent=1 // pred_check
      _
    $region27: #{tpu_custom_call.1} parent=1 // pred_check_branch
      %48 = sbr.rel (0) target = $region29
    $region28: #{tpu_custom_call.1} parent=1 // pred_region
      %49 = dma.done [#allocation9], 9216
    $region29: #{tpu_custom_call.1} parent=1 // pred_fallthru
      _
    %v51 = vld [vmem:[%s2] sm:$0x1]
    %v52 = vld [vmem:[%s3] sm:$0x1]
    %s53 = sld [smem:[#allocation4]]
    %54 = vst [vmem:[#allocation2] sm:$0xff] 0.0
    %55 = vst [vmem:[#allocation2 + $0x8] sm:$0xff] 0.0
    %56 = vst [vmem:[#allocation2 + $0x10] sm:$0xff] 0.0
    %57 = vst [vmem:[#allocation2 + $0xf0] sm:$0xff] 0.0
    %58 = vst [vmem:[#allocation2 + $0xf8] sm:$0xff] 0.0
    %59 = vst [vmem:[#allocation2 + $0x100] sm:$0xff] 0.0
    %s60 = scalar_lea.vmem [#allocation2], 216
    %61 = vst [vmem:[%s60] sm:$0xff] 0.0
    %62 = vst [vmem:[%s60 + $0x8] sm:$0xff] 0.0
    %63 = vst [vmem:[%s60 + $0x10] sm:$0xff] 0.0
    %64 = vst [vmem:[%s60 + $0xf0] sm:$0xff] 0.0
    %65 = vst [vmem:[%s60 + $0xf8] sm:$0xff] 0.0
    %66 = vst [vmem:[%s60 + $0x100] sm:$0xff] 0.0
    %s67 = scalar_lea.vmem [#allocation2], 24
    %68 = vst [vmem:[%s67] sm:$0x1] 0.0
    %69 = vst [vmem:[%s67 + $0x18] sm:$0x1] 0.0
    %70 = vst [vmem:[%s67 + $0x30] sm:$0x1] 0.0
    %71 = vst [vmem:[%s67 + $0x48] sm:$0x1] 0.0
    %72 = vst [vmem:[%s67 + $0x60] sm:$0x1] 0.0
    %73 = vst [vmem:[%s67 + $0x78] sm:$0x1] 0.0
    %74 = vst [vmem:[%s67 + $0x90] sm:$0x1] 0.0
    %75 = vst [vmem:[%s67 + $0xa8] sm:$0x1] 0.0
    %76 = vst [vmem:[%s67 + $0xf0] sm:$0x1] 0.0
    %77 = vst [vmem:[%s67 + $0x108] sm:$0x1] 0.0
    %78 = vst [vmem:[%s67 + $0x120] sm:$0x1] 0.0
    %79 = vst [vmem:[%s67 + $0x138] sm:$0x1] 0.0
    %80 = vst [vmem:[%s67 + $0x150] sm:$0x1] 0.0
    %81 = vst [vmem:[%s67 + $0x168] sm:$0x1] 0.0
    %82 = vst [vmem:[%s67 + $0x180] sm:$0x1] 0.0
    %83 = vst [vmem:[%s67 + $0x198] sm:$0x1] 0.0
    %84 = vst [vmem:[%s67 + $0x17] sm:$0x1] 0.0
    %85 = vst [vmem:[%s67 + $0x2f] sm:$0x1] 0.0
    %86 = vst [vmem:[%s67 + $0x47] sm:$0x1] 0.0
    %87 = vst [vmem:[%s67 + $0x5f] sm:$0x1] 0.0
    %88 = vst [vmem:[%s67 + $0x77] sm:$0x1] 0.0
    %89 = vst [vmem:[%s67 + $0x8f] sm:$0x1] 0.0
    %90 = vst [vmem:[%s67 + $0xa7] sm:$0x1] 0.0
    %91 = vst [vmem:[%s67 + $0xbf] sm:$0x1] 0.0
    %92 = vst [vmem:[%s67 + $0x107] sm:$0x1] 0.0
    %93 = vst [vmem:[%s67 + $0x11f] sm:$0x1] 0.0
    %94 = vst [vmem:[%s67 + $0x137] sm:$0x1] 0.0
    %95 = vst [vmem:[%s67 + $0x14f] sm:$0x1] 0.0
    %96 = vst [vmem:[%s67 + $0x167] sm:$0x1] 0.0
    %97 = vst [vmem:[%s67 + $0x17f] sm:$0x1] 0.0
    %98 = vst [vmem:[%s67 + $0x197] sm:$0x1] 0.0
    %99 = vst [vmem:[%s67 + $0x1af] sm:$0x1] 0.0
    %v100 = vld [vmem:[#allocation5] sm:$0xff]
    %v101 = vld [vmem:[#allocation5 + $0x8] sm:$0xff]
    %v102 = vld [vmem:[#allocation5 + $0x10] sm:$0xff]
    %v103 = vld [vmem:[#allocation5 + $0x18] sm:$0xff]
    %v104 = vld [vmem:[#allocation5 + $0x20] sm:$0xff]
    %v105 = vld [vmem:[#allocation5 + $0x28] sm:$0xff]
    %v106 = vld [vmem:[#allocation5 + $0x30] sm:$0xff]
    %v107 = vld [vmem:[#allocation5 + $0x38] sm:$0xff]
    %v108 = vld [vmem:[#allocation5 + $0x40] sm:$0xff]
    %v109 = vld [vmem:[#allocation5 + $0x48] sm:$0xff]
    %v110 = vld [vmem:[#allocation5 + $0x50] sm:$0xff]
    %v111 = vld [vmem:[#allocation5 + $0x58] sm:$0xff]
    %v112 = vld [vmem:[#allocation5 + $0x60] sm:$0xff]
    %v113 = vld [vmem:[#allocation5 + $0x68] sm:$0xff]
    %v114 = vld [vmem:[#allocation5 + $0x70] sm:$0xff]
    %v115 = vld [vmem:[#allocation5 + $0x78] sm:$0xff]
    %116 = vst [vmem:[#allocation3] sm:$0xff] %v100
    %117 = vst [vmem:[#allocation3 + $0x8] sm:$0xff] %v101
    %118 = vst [vmem:[#allocation3 + $0x10] sm:$0xff] %v102
    %119 = vst [vmem:[#allocation3 + $0x18] sm:$0xff] %v103
    %120 = vst [vmem:[#allocation3 + $0x20] sm:$0xff] %v104
    %121 = vst [vmem:[#allocation3 + $0x28] sm:$0xff] %v105
    %122 = vst [vmem:[#allocation3 + $0x30] sm:$0xff] %v106
    %123 = vst [vmem:[#allocation3 + $0x38] sm:$0xff] %v107
    %124 = vst [vmem:[#allocation3 + $0x40] sm:$0xff] %v108
    %125 = vst [vmem:[#allocation3 + $0x48] sm:$0xff] %v109
    %126 = vst [vmem:[#allocation3 + $0x50] sm:$0xff] %v110
    %127 = vst [vmem:[#allocation3 + $0x58] sm:$0xff] %v111
    %128 = vst [vmem:[#allocation3 + $0x60] sm:$0xff] %v112
    %129 = vst [vmem:[#allocation3 + $0x68] sm:$0xff] %v113
    %130 = vst [vmem:[#allocation3 + $0x70] sm:$0xff] %v114
    %131 = vst [vmem:[#allocation3 + $0x78] sm:$0xff] %v115
    %v132 = vld [vmem:[#allocation5] sm:$0xff]
    %v133 = vld [vmem:[#allocation5 + $0x8] sm:$0xff]
    %v134 = vld [vmem:[#allocation5 + $0x10] sm:$0xff]
    %v135 = vld [vmem:[#allocation5 + $0x18] sm:$0xff]
    %v136 = vld [vmem:[#allocation5 + $0x20] sm:$0xff]
    %v137 = vld [vmem:[#allocation5 + $0x28] sm:$0xff]
    %v138 = vld [vmem:[#allocation5 + $0x30] sm:$0xff]
    %v139 = vld [vmem:[#allocation5 + $0x38] sm:$0xff]
    %v140 = vld [vmem:[#allocation5 + $0x40] sm:$0xff]
    %v141 = vld [vmem:[#allocation5 + $0x48] sm:$0xff]
    %v142 = vld [vmem:[#allocation5 + $0x50] sm:$0xff]
    %v143 = vld [vmem:[#allocation5 + $0x58] sm:$0xff]
    %v144 = vld [vmem:[#allocation5 + $0x60] sm:$0xff]
    %v145 = vld [vmem:[#allocation5 + $0x68] sm:$0xff]
    %v146 = vld [vmem:[#allocation5 + $0x70] sm:$0xff]
    %v147 = vld [vmem:[#allocation5 + $0x78] sm:$0xff]
    %148 = vst [vmem:[%s67 + $0x8] sm:$0xff] %v132
    %149 = vst [vmem:[%s67 + $0x20] sm:$0xff] %v133
    %150 = vst [vmem:[%s67 + $0x38] sm:$0xff] %v134
    %151 = vst [vmem:[%s67 + $0x50] sm:$0xff] %v135
    %152 = vst [vmem:[%s67 + $0x68] sm:$0xff] %v136
    %153 = vst [vmem:[%s67 + $0x80] sm:$0xff] %v137
    %154 = vst [vmem:[%s67 + $0x98] sm:$0xff] %v138
    %155 = vst [vmem:[%s67 + $0xb0] sm:$0xff] %v139
    %156 = vst [vmem:[%s67 + $0xf8] sm:$0xff] %v140
    %157 = vst [vmem:[%s67 + $0x110] sm:$0xff] %v141
    %158 = vst [vmem:[%s67 + $0x128] sm:$0xff] %v142
    %159 = vst [vmem:[%s67 + $0x140] sm:$0xff] %v143
    %160 = vst [vmem:[%s67 + $0x158] sm:$0xff] %v144
    %161 = vst [vmem:[%s67 + $0x170] sm:$0xff] %v145
    %162 = vst [vmem:[%s67 + $0x188] sm:$0xff] %v146
    %163 = vst [vmem:[%s67 + $0x1a0] sm:$0xff] %v147
    %v180 = vrot.slane %v132, 7
    %v181 = vrot.slane %v133, 7
    %v182 = vrot.slane %v134, 7
    %v183 = vrot.slane %v135, 7
    %v184 = vrot.slane %v136, 7
    %v185 = vrot.slane %v137, 7
    %v186 = vrot.slane %v138, 7
    %v187 = vrot.slane %v139, 7
    %v188 = vrot.slane %v140, 7
    %v189 = vrot.slane %v141, 7
    %v190 = vrot.slane %v142, 7
    %v191 = vrot.slane %v143, 7
    %v192 = vrot.slane %v144, 7
    %v193 = vrot.slane %v145, 7
    %v194 = vrot.slane %v146, 7
    %v195 = vrot.slane %v147, 7
    %212 = vst [vmem:[%s67] sm:$0xfe] %v180
    %213 = vst [vmem:[%s67 + $0x18] sm:$0xfe] %v181
    %214 = vst [vmem:[%s67 + $0x30] sm:$0xfe] %v182
    %215 = vst [vmem:[%s67 + $0x48] sm:$0xfe] %v183
    %216 = vst [vmem:[%s67 + $0x60] sm:$0xfe] %v184
    %217 = vst [vmem:[%s67 + $0x78] sm:$0xfe] %v185
    %218 = vst [vmem:[%s67 + $0x90] sm:$0xfe] %v186
    %219 = vst [vmem:[%s67 + $0xa8] sm:$0xfe] %v187
    %220 = vst [vmem:[%s67 + $0xf0] sm:$0xfe] %v188
    %221 = vst [vmem:[%s67 + $0x108] sm:$0xfe] %v189
    %222 = vst [vmem:[%s67 + $0x120] sm:$0xfe] %v190
    %223 = vst [vmem:[%s67 + $0x138] sm:$0xfe] %v191
    %224 = vst [vmem:[%s67 + $0x150] sm:$0xfe] %v192
    %225 = vst [vmem:[%s67 + $0x168] sm:$0xfe] %v193
    %226 = vst [vmem:[%s67 + $0x180] sm:$0xfe] %v194
    %227 = vst [vmem:[%s67 + $0x198] sm:$0xfe] %v195
    %v228 = vrot.slane %v132, 1
    %v229 = vrot.slane %v133, 1
    %v230 = vrot.slane %v134, 1
    %v231 = vrot.slane %v135, 1
    %v232 = vrot.slane %v136, 1
    %v233 = vrot.slane %v137, 1
    %v234 = vrot.slane %v138, 1
    %v235 = vrot.slane %v139, 1
    %v236 = vrot.slane %v140, 1
    %v237 = vrot.slane %v141, 1
    %v238 = vrot.slane %v142, 1
    %v239 = vrot.slane %v143, 1
    %v240 = vrot.slane %v144, 1
    %v241 = vrot.slane %v145, 1
    %v242 = vrot.slane %v146, 1
    %v243 = vrot.slane %v147, 1
    %260 = vst [vmem:[%s67 + $0x10] sm:$0x7f] %v228
    %261 = vst [vmem:[%s67 + $0x28] sm:$0x7f] %v229
    %262 = vst [vmem:[%s67 + $0x40] sm:$0x7f] %v230
    %263 = vst [vmem:[%s67 + $0x58] sm:$0x7f] %v231
    %264 = vst [vmem:[%s67 + $0x70] sm:$0x7f] %v232
    %265 = vst [vmem:[%s67 + $0x88] sm:$0x7f] %v233
    %266 = vst [vmem:[%s67 + $0xa0] sm:$0x7f] %v234
    %267 = vst [vmem:[%s67 + $0xb8] sm:$0x7f] %v235
    %268 = vst [vmem:[%s67 + $0x100] sm:$0x7f] %v236
    %269 = vst [vmem:[%s67 + $0x118] sm:$0x7f] %v237
    %270 = vst [vmem:[%s67 + $0x130] sm:$0x7f] %v238
    %271 = vst [vmem:[%s67 + $0x148] sm:$0x7f] %v239
    %272 = vst [vmem:[%s67 + $0x160] sm:$0x7f] %v240
    %273 = vst [vmem:[%s67 + $0x178] sm:$0x7f] %v241
    %274 = vst [vmem:[%s67 + $0x190] sm:$0x7f] %v242
    %275 = vst [vmem:[%s67 + $0x1a8] sm:$0x7f] %v243
    %v276 = vld [vmem:[#allocation2] sm:$0xff]
    %v277 = vld [vmem:[#allocation2 + $0x8] sm:$0xff]
    %v278 = vld [vmem:[#allocation2 + $0x10] sm:$0xff]
    %v279 = vld [vmem:[#allocation2 + $0x18] sm:$0xff]
    %v280 = vld [vmem:[#allocation2 + $0x20] sm:$0xff]
    %v281 = vld [vmem:[#allocation2 + $0x28] sm:$0xff]
    %v282 = vld [vmem:[#allocation2 + $0x30] sm:$0xff]
    %v283 = vld [vmem:[#allocation2 + $0x38] sm:$0xff]
    %v284 = vld [vmem:[#allocation2 + $0x40] sm:$0xff]
    %v285 = vld [vmem:[#allocation2 + $0x48] sm:$0xff]
    %v286 = vld [vmem:[#allocation2 + $0x50] sm:$0xff]
    %v287 = vld [vmem:[#allocation2 + $0x58] sm:$0xff]
    %v288 = vld [vmem:[#allocation2 + $0x60] sm:$0xff]
    %v289 = vld [vmem:[#allocation2 + $0x68] sm:$0xff]
    %v290 = vld [vmem:[#allocation2 + $0x70] sm:$0xff]
    %v291 = vld [vmem:[#allocation2 + $0x78] sm:$0xff]
    %v292 = vld [vmem:[#allocation2 + $0x80] sm:$0xff]
    %v293 = vld [vmem:[#allocation2 + $0x88] sm:$0xff]
    %v294 = vld [vmem:[#allocation2 + $0x90] sm:$0xff]
    %v295 = vld [vmem:[#allocation2 + $0x98] sm:$0xff]
    %v296 = vld [vmem:[#allocation2 + $0xa0] sm:$0xff]
    %v297 = vld [vmem:[#allocation2 + $0xa8] sm:$0xff]
    %v298 = vld [vmem:[#allocation2 + $0xb0] sm:$0xff]
    %v299 = vld [vmem:[#allocation2 + $0xb8] sm:$0xff]
    %v300 = vld [vmem:[#allocation2 + $0xf0] sm:$0xff]
    %v301 = vld [vmem:[#allocation2 + $0xf8] sm:$0xff]
    %v302 = vld [vmem:[#allocation2 + $0x100] sm:$0xff]
    %v303 = vld [vmem:[#allocation2 + $0x108] sm:$0xff]
    %v304 = vld [vmem:[#allocation2 + $0x110] sm:$0xff]
    %v305 = vld [vmem:[#allocation2 + $0x118] sm:$0xff]
    %v306 = vld [vmem:[#allocation2 + $0x120] sm:$0xff]
    %v307 = vld [vmem:[#allocation2 + $0x128] sm:$0xff]
    %v308 = vld [vmem:[#allocation2 + $0x130] sm:$0xff]
    %v309 = vld [vmem:[#allocation2 + $0x138] sm:$0xff]
    %v310 = vld [vmem:[#allocation2 + $0x140] sm:$0xff]
    %v311 = vld [vmem:[#allocation2 + $0x148] sm:$0xff]
    %v312 = vld [vmem:[#allocation2 + $0x150] sm:$0xff]
    %v313 = vld [vmem:[#allocation2 + $0x158] sm:$0xff]
    %v314 = vld [vmem:[#allocation2 + $0x160] sm:$0xff]
    %v315 = vld [vmem:[#allocation2 + $0x168] sm:$0xff]
    %v316 = vld [vmem:[#allocation2 + $0x170] sm:$0xff]
    %v317 = vld [vmem:[#allocation2 + $0x178] sm:$0xff]
    %v318 = vld [vmem:[#allocation2 + $0x180] sm:$0xff]
    %v319 = vld [vmem:[#allocation2 + $0x188] sm:$0xff]
    %v320 = vld [vmem:[#allocation2 + $0x190] sm:$0xff]
    %v321 = vld [vmem:[#allocation2 + $0x198] sm:$0xff]
    %v322 = vld [vmem:[#allocation2 + $0x1a0] sm:$0xff]
    %v323 = vld [vmem:[#allocation2 + $0x1a8] sm:$0xff]
    %v324 = vpack.c.bf16 %v279, %v276
    %v325 = vpack.c.bf16 %v280, %v277
    %v326 = vpack.c.bf16 %v281, %v278
    %v327 = vpack.c.bf16 %v285, %v282
    %v328 = vpack.c.bf16 %v286, %v283
    %v329 = vpack.c.bf16 %v287, %v284
    %v330 = vpack.c.bf16 %v291, %v288
    %v331 = vpack.c.bf16 %v292, %v289
    %v332 = vpack.c.bf16 %v293, %v290
    %v333 = vpack.c.bf16 %v297, %v294
    %v334 = vpack.c.bf16 %v298, %v295
    %v335 = vpack.c.bf16 %v299, %v296
    %v336 = vpack.c.bf16 %v303, %v300
    %v337 = vpack.c.bf16 %v304, %v301
    %v338 = vpack.c.bf16 %v305, %v302
    %v339 = vpack.c.bf16 %v309, %v306
    %v340 = vpack.c.bf16 %v310, %v307
    %v341 = vpack.c.bf16 %v311, %v308
    %v342 = vpack.c.bf16 %v315, %v312
    %v343 = vpack.c.bf16 %v316, %v313
    %v344 = vpack.c.bf16 %v317, %v314
    %v345 = vpack.c.bf16 %v321, %v318
    %v346 = vpack.c.bf16 %v322, %v319
    %v347 = vpack.c.bf16 %v323, %v320
    %v348 = vld [vmem:[#allocation8] sm:$0xf]
    %v349 = vld [vmem:[#allocation8 + $0x4] sm:$0xf]
    %v350 = vld [vmem:[#allocation8 + $0x8] sm:$0xf]
    %v351 = vld [vmem:[#allocation8 + $0xc] sm:$0xf]
    %v352 = vld [vmem:[#allocation8 + $0x10] sm:$0xf]
    %v353 = vld [vmem:[#allocation8 + $0x14] sm:$0xf]
    %v354 = vld [vmem:[#allocation8 + $0x18] sm:$0xf]
    %v355 = vld [vmem:[#allocation8 + $0x1c] sm:$0xf]
    %v356 = vld [vmem:[#allocation8 + $0x20] sm:$0xf]
    %v357 = vld [vmem:[#allocation8 + $0x24] sm:$0xf]
    %v358 = vld [vmem:[#allocation8 + $0x28] sm:$0xf]
    %v359 = vld [vmem:[#allocation8 + $0x2c] sm:$0xf]
    %v360 = vld [vmem:[#allocation8 + $0x30] sm:$0xf]
    %v361 = vld [vmem:[#allocation8 + $0x34] sm:$0xf]
    %v362 = vld [vmem:[#allocation8 + $0x38] sm:$0xf]
    %v363 = vld [vmem:[#allocation8 + $0x3c] sm:$0xf]
    %v364 = vld [vmem:[#allocation8 + $0x40] sm:$0xf]
    %v365 = vld [vmem:[#allocation8 + $0x44] sm:$0xf]
    %v366 = vld [vmem:[#allocation8 + $0x48] sm:$0xf]
    %v367 = vld [vmem:[#allocation8 + $0x4c] sm:$0xf]
    %v368 = vld [vmem:[#allocation8 + $0x50] sm:$0xf]
    %v369 = vld [vmem:[#allocation8 + $0x54] sm:$0xf]
    %v370 = vld [vmem:[#allocation8 + $0x58] sm:$0xf]
    %v371 = vld [vmem:[#allocation8 + $0x5c] sm:$0xf]
    %v372 = vld [vmem:[#allocation8 + $0x60] sm:$0xf]
    %v373 = vld [vmem:[#allocation8 + $0x64] sm:$0xf]
    %v374 = vld [vmem:[#allocation8 + $0x68] sm:$0xf]
    %v375 = vld [vmem:[#allocation8 + $0x6c] sm:$0xf]
    %v376 = vld [vmem:[#allocation8 + $0x70] sm:$0xf]
    %v377 = vld [vmem:[#allocation8 + $0x74] sm:$0xf]
    %v378 = vld [vmem:[#allocation8 + $0x78] sm:$0xf]
    %v379 = vld [vmem:[#allocation8 + $0x7c] sm:$0xf]
    %v380 = vld [vmem:[#allocation8 + $0x80] sm:$0xf]
    %v381 = vld [vmem:[#allocation8 + $0x84] sm:$0xf]
    %v382 = vld [vmem:[#allocation8 + $0x88] sm:$0xf]
    %v383 = vld [vmem:[#allocation8 + $0x8c] sm:$0xf]
    %v384 = vld [vmem:[#allocation8 + $0x90] sm:$0xf]
    %v385 = vld [vmem:[#allocation8 + $0x94] sm:$0xf]
    %v386 = vld [vmem:[#allocation8 + $0x98] sm:$0xf]
    %v387 = vld [vmem:[#allocation8 + $0x9c] sm:$0xf]
    %v388 = vld [vmem:[#allocation8 + $0xa0] sm:$0xf]
    %v389 = vld [vmem:[#allocation8 + $0xa4] sm:$0xf]
    %v390 = vld [vmem:[#allocation8 + $0xa8] sm:$0xf]
    %v391 = vld [vmem:[#allocation8 + $0xac] sm:$0xf]
    %v392 = vld [vmem:[#allocation8 + $0xb0] sm:$0xf]
    %v393 = vld [vmem:[#allocation8 + $0xb4] sm:$0xf]
    %v394 = vld [vmem:[#allocation8 + $0xb8] sm:$0xf]
    %v395 = vld [vmem:[#allocation8 + $0xbc] sm:$0xf]
    %v396 = vld [vmem:[%s67] sm:$0xff]
    %v397 = vld [vmem:[%s67 + $0x8] sm:$0xff]
    %v398 = vld [vmem:[%s67 + $0x10] sm:$0xff]
    %v399 = vld [vmem:[%s67 + $0x18] sm:$0xff]
    %v400 = vld [vmem:[%s67 + $0x20] sm:$0xff]
    %v401 = vld [vmem:[%s67 + $0x28] sm:$0xff]
    %v402 = vld [vmem:[%s67 + $0x30] sm:$0xff]
    %v403 = vld [vmem:[%s67 + $0x38] sm:$0xff]
    %v404 = vld [vmem:[%s67 + $0x40] sm:$0xff]
    %v405 = vld [vmem:[%s67 + $0x48] sm:$0xff]
    %v406 = vld [vmem:[%s67 + $0x50] sm:$0xff]
    %v407 = vld [vmem:[%s67 + $0x58] sm:$0xff]
    %v408 = vld [vmem:[%s67 + $0x60] sm:$0xff]
    %v409 = vld [vmem:[%s67 + $0x68] sm:$0xff]
    %v410 = vld [vmem:[%s67 + $0x70] sm:$0xff]
    %v411 = vld [vmem:[%s67 + $0x78] sm:$0xff]
    %v412 = vld [vmem:[%s67 + $0x80] sm:$0xff]
    %v413 = vld [vmem:[%s67 + $0x88] sm:$0xff]
    %v414 = vld [vmem:[%s67 + $0x90] sm:$0xff]
    %v415 = vld [vmem:[%s67 + $0x98] sm:$0xff]
    %v416 = vld [vmem:[%s67 + $0xa0] sm:$0xff]
    %v417 = vld [vmem:[%s67 + $0xa8] sm:$0xff]
    %v418 = vld [vmem:[%s67 + $0xb0] sm:$0xff]
    %v419 = vld [vmem:[%s67 + $0xb8] sm:$0xff]
    %v420 = vld [vmem:[%s67 + $0xf0] sm:$0xff]
    %v421 = vld [vmem:[%s67 + $0xf8] sm:$0xff]
    %v422 = vld [vmem:[%s67 + $0x100] sm:$0xff]
    %v423 = vld [vmem:[%s67 + $0x108] sm:$0xff]
    %v424 = vld [vmem:[%s67 + $0x110] sm:$0xff]
    %v425 = vld [vmem:[%s67 + $0x118] sm:$0xff]
    %v426 = vld [vmem:[%s67 + $0x120] sm:$0xff]
    %v427 = vld [vmem:[%s67 + $0x128] sm:$0xff]
    %v428 = vld [vmem:[%s67 + $0x130] sm:$0xff]
    %v429 = vld [vmem:[%s67 + $0x138] sm:$0xff]
    %v430 = vld [vmem:[%s67 + $0x140] sm:$0xff]
    %v431 = vld [vmem:[%s67 + $0x148] sm:$0xff]
    %v432 = vld [vmem:[%s67 + $0x150] sm:$0xff]
    %v433 = vld [vmem:[%s67 + $0x158] sm:$0xff]
    %v434 = vld [vmem:[%s67 + $0x160] sm:$0xff]
    %v435 = vld [vmem:[%s67 + $0x168] sm:$0xff]
    %v436 = vld [vmem:[%s67 + $0x170] sm:$0xff]
    %v437 = vld [vmem:[%s67 + $0x178] sm:$0xff]
    %v438 = vld [vmem:[%s67 + $0x180] sm:$0xff]
    %v439 = vld [vmem:[%s67 + $0x188] sm:$0xff]
    %v440 = vld [vmem:[%s67 + $0x190] sm:$0xff]
    %v441 = vld [vmem:[%s67 + $0x198] sm:$0xff]
    %v442 = vld [vmem:[%s67 + $0x1a0] sm:$0xff]
    %v443 = vld [vmem:[%s67 + $0x1a8] sm:$0xff]
    %v444 = vpack.c.bf16 %v399, %v396
    %v445 = vpack.c.bf16 %v400, %v397
    %v446 = vpack.c.bf16 %v401, %v398
    %v447 = vpack.c.bf16 %v405, %v402
    %v448 = vpack.c.bf16 %v406, %v403
    %v449 = vpack.c.bf16 %v407, %v404
    %v450 = vpack.c.bf16 %v411, %v408
    %v451 = vpack.c.bf16 %v412, %v409
    %v452 = vpack.c.bf16 %v413, %v410
    %v453 = vpack.c.bf16 %v417, %v414
    %v454 = vpack.c.bf16 %v418, %v415
    %v455 = vpack.c.bf16 %v419, %v416
    %v456 = vpack.c.bf16 %v423, %v420
    %v457 = vpack.c.bf16 %v424, %v421
    %v458 = vpack.c.bf16 %v425, %v422
    %v459 = vpack.c.bf16 %v429, %v426
    %v460 = vpack.c.bf16 %v430, %v427
    %v461 = vpack.c.bf16 %v431, %v428
    %v462 = vpack.c.bf16 %v435, %v432
    %v463 = vpack.c.bf16 %v436, %v433
    %v464 = vpack.c.bf16 %v437, %v434
    %v465 = vpack.c.bf16 %v441, %v438
    %v466 = vpack.c.bf16 %v442, %v439
    %v467 = vpack.c.bf16 %v443, %v440
    %s468 = scalar_lea.vmem [#allocation8], 192
    %v469 = vld [vmem:[%s468] sm:$0xf]
    %v470 = vld [vmem:[%s468 + $0x4] sm:$0xf]
    %v471 = vld [vmem:[%s468 + $0x8] sm:$0xf]
    %v472 = vld [vmem:[%s468 + $0xc] sm:$0xf]
    %v473 = vld [vmem:[%s468 + $0x10] sm:$0xf]
    %v474 = vld [vmem:[%s468 + $0x14] sm:$0xf]
    %v475 = vld [vmem:[%s468 + $0x18] sm:$0xf]
    %v476 = vld [vmem:[%s468 + $0x1c] sm:$0xf]
    %v477 = vld [vmem:[%s468 + $0x20] sm:$0xf]
    %v478 = vld [vmem:[%s468 + $0x24] sm:$0xf]
    %v479 = vld [vmem:[%s468 + $0x28] sm:$0xf]
    %v480 = vld [vmem:[%s468 + $0x2c] sm:$0xf]
    %v481 = vld [vmem:[%s468 + $0x30] sm:$0xf]
    %v482 = vld [vmem:[%s468 + $0x34] sm:$0xf]
    %v483 = vld [vmem:[%s468 + $0x38] sm:$0xf]
    %v484 = vld [vmem:[%s468 + $0x3c] sm:$0xf]
    %v485 = vld [vmem:[%s468 + $0x40] sm:$0xf]
    %v486 = vld [vmem:[%s468 + $0x44] sm:$0xf]
    %v487 = vld [vmem:[%s468 + $0x48] sm:$0xf]
    %v488 = vld [vmem:[%s468 + $0x4c] sm:$0xf]
    %v489 = vld [vmem:[%s468 + $0x50] sm:$0xf]
    %v490 = vld [vmem:[%s468 + $0x54] sm:$0xf]
    %v491 = vld [vmem:[%s468 + $0x58] sm:$0xf]
    %v492 = vld [vmem:[%s468 + $0x5c] sm:$0xf]
    %v493 = vld [vmem:[%s468 + $0x60] sm:$0xf]
    %v494 = vld [vmem:[%s468 + $0x64] sm:$0xf]
    %v495 = vld [vmem:[%s468 + $0x68] sm:$0xf]
    %v496 = vld [vmem:[%s468 + $0x6c] sm:$0xf]
    %v497 = vld [vmem:[%s468 + $0x70] sm:$0xf]
    %v498 = vld [vmem:[%s468 + $0x74] sm:$0xf]
    %v499 = vld [vmem:[%s468 + $0x78] sm:$0xf]
    %v500 = vld [vmem:[%s468 + $0x7c] sm:$0xf]
    %v501 = vld [vmem:[%s468 + $0x80] sm:$0xf]
    %v502 = vld [vmem:[%s468 + $0x84] sm:$0xf]
    %v503 = vld [vmem:[%s468 + $0x88] sm:$0xf]
    %v504 = vld [vmem:[%s468 + $0x8c] sm:$0xf]
    %v505 = vld [vmem:[%s468 + $0x90] sm:$0xf]
    %v506 = vld [vmem:[%s468 + $0x94] sm:$0xf]
    %v507 = vld [vmem:[%s468 + $0x98] sm:$0xf]
    %v508 = vld [vmem:[%s468 + $0x9c] sm:$0xf]
    %v509 = vld [vmem:[%s468 + $0xa0] sm:$0xf]
    %v510 = vld [vmem:[%s468 + $0xa4] sm:$0xf]
    %v511 = vld [vmem:[%s468 + $0xa8] sm:$0xf]
    %v512 = vld [vmem:[%s468 + $0xac] sm:$0xf]
    %v513 = vld [vmem:[%s468 + $0xb0] sm:$0xf]
    %v514 = vld [vmem:[%s468 + $0xb4] sm:$0xf]
    %v515 = vld [vmem:[%s468 + $0xb8] sm:$0xf]
    %v516 = vld [vmem:[%s468 + $0xbc] sm:$0xf]
    %v565 = vunpack.c.l.b16 %v469
    %v566 = vunpack.c.l.b16 %v470
    %v567 = vunpack.c.l.b16 %v471
    %v568 = vunpack.c.l.b16 %v472
    %v569 = vunpack.c.l.b16 %v473
    %v570 = vunpack.c.l.b16 %v474
    %v571 = vunpack.c.l.b16 %v475
    %v572 = vunpack.c.l.b16 %v476
    %v573 = vunpack.c.l.b16 %v477
    %v574 = vunpack.c.l.b16 %v478
    %v575 = vunpack.c.l.b16 %v479
    %v576 = vunpack.c.l.b16 %v480
    %v577 = vunpack.c.l.b16 %v481
    %v578 = vunpack.c.l.b16 %v482
    %v579 = vunpack.c.l.b16 %v483
    %v580 = vunpack.c.l.b16 %v484
    %v581 = vunpack.c.l.b16 %v485
    %v582 = vunpack.c.l.b16 %v486
    %v583 = vunpack.c.l.b16 %v487
    %v584 = vunpack.c.l.b16 %v488
    %v585 = vunpack.c.l.b16 %v489
    %v586 = vunpack.c.l.b16 %v490
    %v587 = vunpack.c.l.b16 %v491
    %v588 = vunpack.c.l.b16 %v492
    %v589 = vunpack.c.l.b16 %v493
    %v590 = vunpack.c.l.b16 %v494
    %v591 = vunpack.c.l.b16 %v495
    %v592 = vunpack.c.l.b16 %v496
    %v593 = vunpack.c.l.b16 %v497
    %v594 = vunpack.c.l.b16 %v498
    %v595 = vunpack.c.l.b16 %v499
    %v596 = vunpack.c.l.b16 %v500
    %v597 = vunpack.c.l.b16 %v501
    %v598 = vunpack.c.l.b16 %v502
    %v599 = vunpack.c.l.b16 %v503
    %v600 = vunpack.c.l.b16 %v504
    %v601 = vunpack.c.l.b16 %v505
    %v602 = vunpack.c.l.b16 %v506
    %v603 = vunpack.c.l.b16 %v507
    %v604 = vunpack.c.l.b16 %v508
    %v605 = vunpack.c.l.b16 %v509
    %v606 = vunpack.c.l.b16 %v510
    %v607 = vunpack.c.l.b16 %v511
    %v608 = vunpack.c.l.b16 %v512
    %v609 = vunpack.c.l.b16 %v513
    %v610 = vunpack.c.l.b16 %v514
    %v611 = vunpack.c.l.b16 %v515
    %v612 = vunpack.c.l.b16 %v516
    %v613 = vpack.c.b16 %v566, %v565
    %v614 = vpack.c.b16 %v568, %v567
    %v615 = vpack.c.b16 %v570, %v569
    %v616 = vpack.c.b16 %v572, %v571
    %v617 = vpack.c.b16 %v574, %v573
    %v618 = vpack.c.b16 %v576, %v575
    %v619 = vpack.c.b16 %v578, %v577
    %v620 = vpack.c.b16 %v580, %v579
    %v621 = vpack.c.b16 %v582, %v581
    %v622 = vpack.c.b16 %v584, %v583
    %v623 = vpack.c.b16 %v586, %v585
    %v624 = vpack.c.b16 %v588, %v587
    %v625 = vpack.c.b16 %v590, %v589
    %v626 = vpack.c.b16 %v592, %v591
    %v627 = vpack.c.b16 %v594, %v593
    %v628 = vpack.c.b16 %v596, %v595
    %v629 = vpack.c.b16 %v598, %v597
    %v630 = vpack.c.b16 %v600, %v599
    %v631 = vpack.c.b16 %v602, %v601
    %v632 = vpack.c.b16 %v604, %v603
    %v633 = vpack.c.b16 %v606, %v605
    %v634 = vpack.c.b16 %v608, %v607
    %v635 = vpack.c.b16 %v610, %v609
    %v636 = vpack.c.b16 %v612, %v611
    %661 = vmatprep.subr.bf16.mxu0 0
    %662 = vmatpush1.bf16.msra.mxu0 %v613
    %663 = vmatprep.subr.bf16.mxu0 0
    %664 = vmatpush1.bf16.msra.mxu0 %v614
    %665 = vmatprep.subr.bf16.mxu0 0
    %666 = vmatpush1.bf16.msra.mxu0 %v615
    %667 = vmatprep.subr.bf16.mxu0 0
    %668 = vmatpush1.bf16.msra.mxu0 %v616
    %669 = vmatprep.subr.bf16.mxu0 0
    %670 = vmatpush1.bf16.msra.mxu0 %v617
    %671 = vmatprep.subr.bf16.mxu0 0
    %672 = vmatpush1.bf16.msra.mxu0 %v618
    %673 = vmatprep.subr.bf16.mxu0 0
    %674 = vmatpush1.bf16.msra.mxu0 %v619
    %675 = vmatprep.subr.bf16.mxu0 0
    %676 = vmatpush1.bf16.msra.mxu0 %v620
    %677 = vmatprep.subr.bf16.mxu0 0
    %678 = vmatpush1.bf16.msra.mxu0 %v621
    %679 = vmatprep.subr.bf16.mxu0 0
    %680 = vmatpush1.bf16.msra.mxu0 %v622
    %681 = vmatprep.subr.bf16.mxu0 0
    %682 = vmatpush1.bf16.msra.mxu0 %v623
    %683 = vmatprep.subr.bf16.mxu0 0
    %684 = vmatpush1.bf16.msra.mxu0 %v624
    %685 = vmatprep.subr.bf16.mxu0 0
    %686 = vmatpush1.bf16.msra.mxu0 %v625
    %687 = vmatprep.subr.bf16.mxu0 0
    %688 = vmatpush1.bf16.msra.mxu0 %v626
    %689 = vmatprep.subr.bf16.mxu0 0
    %690 = vmatpush1.bf16.msra.mxu0 %v627
    %691 = vmatprep.subr.bf16.mxu0 0
    %692 = vmatpush1.bf16.msra.mxu0 %v628
    %693 = vmatprep.mubr.bf16.mxu0 %v445
    %694 = vmatmul.mubr.bf16.gmra.mrb[0].mxu0 %v444
    %v695 = vpop.f32.mrb[0].mxu0
    %v696 = vadd.f32 0.0, %v695
    %v697 = vpop.f32.mrb[0].mxu0
    %v698 = vpop.f32.mrb[0].mxu0
    %v699 = vadd.f32 0.0, %v698
    %v700 = vpop.f32.mrb[0].mxu0
    %701 = vmatprep.mubr.bf16.mxu0 %v448
    %702 = vmatmul.mubr.bf16.gmra.mrb[0].mxu0 %v447
    %v703 = vpop.f32.mrb[0].mxu0
    %v704 = vadd.f32 0.0, %v703
    %v705 = vpop.f32.mrb[0].mxu0
    %v706 = vpop.f32.mrb[0].mxu0
    %v707 = vadd.f32 0.0, %v706
    %v708 = vpop.f32.mrb[0].mxu0
    %709 = vmatprep.mubr.bf16.mxu0 %v451
    %710 = vmatmul.mubr.bf16.gmra.mrb[0].mxu0 %v450
    %v711 = vpop.f32.mrb[0].mxu0
    %v712 = vadd.f32 0.0, %v711
    %v713 = vpop.f32.mrb[0].mxu0
    %v714 = vpop.f32.mrb[0].mxu0
    %v715 = vadd.f32 0.0, %v714
    %v716 = vpop.f32.mrb[0].mxu0
    %717 = vmatprep.mubr.bf16.mxu0 %v454
    %718 = vmatmul.mubr.bf16.gmra.mrb[0].mxu0 %v453
    %v719 = vpop.f32.mrb[0].mxu0
    %v720 = vadd.f32 0.0, %v719
    %v721 = vpop.f32.mrb[0].mxu0
    %v722 = vpop.f32.mrb[0].mxu0
    %v723 = vadd.f32 0.0, %v722
    %v724 = vpop.f32.mrb[0].mxu0
    %725 = vmatprep.mubr.bf16.mxu0 %v457
    %726 = vmatmul.mubr.bf16.gmra.mrb[0].mxu0 %v456
    %v727 = vpop.f32.mrb[0].mxu0
    %v728 = vadd.f32 0.0, %v727
    %v729 = vpop.f32.mrb[0].mxu0
    %v730 = vpop.f32.mrb[0].mxu0
    %v731 = vadd.f32 0.0, %v730
    %v732 = vpop.f32.mrb[0].mxu0
    %733 = vmatprep.mubr.bf16.mxu0 %v460
    %734 = vmatmul.mubr.bf16.gmra.mrb[0].mxu0 %v459
    %v735 = vpop.f32.mrb[0].mxu0
    %v736 = vadd.f32 0.0, %v735
    %v737 = vpop.f32.mrb[0].mxu0
    %v738 = vpop.f32.mrb[0].mxu0
    %v739 = vadd.f32 0.0, %v738
    %v740 = vpop.f32.mrb[0].mxu0
    %741 = vmatprep.mubr.bf16.mxu0 %v463
    %742 = vmatmul.mubr.bf16.gmra.mrb[0].mxu0 %v462
    %v743 = vpop.f32.mrb[0].mxu0
    %v744 = vadd.f32 0.0, %v743
    %v745 = vpop.f32.mrb[0].mxu0
    %v746 = vpop.f32.mrb[0].mxu0
    %v747 = vadd.f32 0.0, %v746
    %v748 = vpop.f32.mrb[0].mxu0
    %749 = vmatprep.mubr.bf16.mxu0 %v466
    %750 = vmatmul.mubr.bf16.gmra.mrb[0].mxu0 %v465
    %v751 = vpop.f32.mrb[0].mxu0
    %v752 = vadd.f32 0.0, %v751
    %v753 = vpop.f32.mrb[0].mxu0
    %v754 = vpop.f32.mrb[0].mxu0
    %v755 = vadd.f32 0.0, %v754
    %v756 = vpop.f32.mrb[0].mxu0
    %757 = vdwg.mxu0
    %758 = vmatprep.subr.bf16.mxu0 0
    %759 = vmatpush1.bf16.msra.mxu0 %v629
    %760 = vmatprep.subr.bf16.mxu0 0
    %761 = vmatpush1.bf16.msra.mxu0 %v630
    %762 = vmatprep.subr.bf16.mxu0 0
    %763 = vmatpush1.bf16.msra.mxu0 %v631
    %764 = vmatprep.subr.bf16.mxu0 0
    %765 = vmatpush1.bf16.msra.mxu0 %v632
    %766 = vmatprep.subr.bf16.mxu0 0
    %767 = vmatpush1.bf16.msra.mxu0 %v633
    %768 = vmatprep.subr.bf16.mxu0 0
    %769 = vmatpush1.bf16.msra.mxu0 %v634
    %770 = vmatprep.subr.bf16.mxu0 0
    %771 = vmatpush1.bf16.msra.mxu0 %v635
    %772 = vmatprep.subr.bf16.mxu0 0
    %773 = vmatpush1.bf16.msra.mxu0 %v636
    %774 = vmatprep.subr.bf16.mxu0 0
    %775 = vmatpush1.bf16.msra.mxu0 0
    %776 = vmatprep.subr.bf16.mxu0 0
    %777 = vmatpush1.bf16.msra.mxu0 0
    %778 = vmatprep.subr.bf16.mxu0 0
    %779 = vmatpush1.bf16.msra.mxu0 0
    %780 = vmatprep.subr.bf16.mxu0 0
    %781 = vmatpush1.bf16.msra.mxu0 0
    %782 = vmatprep.subr.bf16.mxu0 0
    %783 = vmatpush1.bf16.msra.mxu0 0
    %784 = vmatprep.subr.bf16.mxu0 0
    %785 = vmatpush1.bf16.msra.mxu0 0
    %786 = vmatprep.subr.bf16.mxu0 0
    %787 = vmatpush1.bf16.msra.mxu0 0
    %788 = vmatprep.subr.bf16.mxu0 0
    %789 = vmatpush1.bf16.msra.mxu0 0
    %790 = vmatprep.mubr.bf16.mxu0 0
    %791 = vmatmul.mubr.bf16.gmra.mrb[0].mxu0 %v446
    %v792 = vpop.f32.mrb[0].mxu0
    %v793 = vadd.f32 %v696, %v792
    %v794 = vpop.f32.mrb[0].mxu0
    %v795 = vpop.f32.mrb[0].mxu0
    %v796 = vadd.f32 %v699, %v795
    %v797 = vpop.f32.mrb[0].mxu0
    %798 = vmatprep.mubr.bf16.mxu0 0
    %799 = vmatmul.mubr.bf16.gmra.mrb[0].mxu0 %v449
    %v800 = vpop.f32.mrb[0].mxu0
    %v801 = vadd.f32 %v704, %v800
    %v802 = vpop.f32.mrb[0].mxu0
    %v803 = vpop.f32.mrb[0].mxu0
    %v804 = vadd.f32 %v707, %v803
    %v805 = vpop.f32.mrb[0].mxu0
    %806 = vmatprep.mubr.bf16.mxu0 0
    %807 = vmatmul.mubr.bf16.gmra.mrb[0].mxu0 %v452
    %v808 = vpop.f32.mrb[0].mxu0
    %v809 = vadd.f32 %v712, %v808
    %v810 = vpop.f32.mrb[0].mxu0
    %v811 = vpop.f32.mrb[0].mxu0
    %v812 = vadd.f32 %v715, %v811
    %v813 = vpop.f32.mrb[0].mxu0
    %814 = vmatprep.mubr.bf16.mxu0 0
    %815 = vmatmul.mubr.bf16.gmra.mrb[0].mxu0 %v455
    %v816 = vpop.f32.mrb[0].mxu0
    %v817 = vadd.f32 %v720, %v816
    %v818 = vpop.f32.mrb[0].mxu0
    %v819 = vpop.f32.mrb[0].mxu0
    %v820 = vadd.f32 %v723, %v819
    %v821 = vpop.f32.mrb[0].mxu0
    %822 = vmatprep.mubr.bf16.mxu0 0
    %823 = vmatmul.mubr.bf16.gmra.mrb[0].mxu0 %v458
    %v824 = vpop.f32.mrb[0].mxu0
    %v825 = vadd.f32 %v728, %v824
    %v826 = vpop.f32.mrb[0].mxu0
    %v827 = vpop.f32.mrb[0].mxu0
    %v828 = vadd.f32 %v731, %v827
    %v829 = vpop.f32.mrb[0].mxu0
    %830 = vmatprep.mubr.bf16.mxu0 0
    %831 = vmatmul.mubr.bf16.gmra.mrb[0].mxu0 %v461
    %v832 = vpop.f32.mrb[0].mxu0
    %v833 = vadd.f32 %v736, %v832
    %v834 = vpop.f32.mrb[0].mxu0
    %v835 = vpop.f32.mrb[0].mxu0
    %v836 = vadd.f32 %v739, %v835
    %v837 = vpop.f32.mrb[0].mxu0
    %838 = vmatprep.mubr.bf16.mxu0 0
    %839 = vmatmul.mubr.bf16.gmra.mrb[0].mxu0 %v464
    %v840 = vpop.f32.mrb[0].mxu0
    %v841 = vadd.f32 %v744, %v840
    %v842 = vpop.f32.mrb[0].mxu0
    %v843 = vpop.f32.mrb[0].mxu0
    %v844 = vadd.f32 %v747, %v843
    %v845 = vpop.f32.mrb[0].mxu0
    %846 = vmatprep.mubr.bf16.mxu0 0
    %847 = vmatmul.mubr.bf16.gmra.mrb[0].mxu0 %v467
    %v848 = vpop.f32.mrb[0].mxu0
    %v849 = vadd.f32 %v752, %v848
    %v850 = vpop.f32.mrb[0].mxu0
    %v851 = vpop.f32.mrb[0].mxu0
    %v852 = vadd.f32 %v755, %v851
    %v853 = vpop.f32.mrb[0].mxu0
    %854 = vdwg.mxu0
    %v903 = vunpack.c.l.b16 %v348
    %v904 = vunpack.c.l.b16 %v349
    %v905 = vunpack.c.l.b16 %v350
    %v906 = vunpack.c.l.b16 %v351
    %v907 = vunpack.c.l.b16 %v352
    %v908 = vunpack.c.l.b16 %v353
    %v909 = vunpack.c.l.b16 %v354
    %v910 = vunpack.c.l.b16 %v355
    %v911 = vunpack.c.l.b16 %v356
    %v912 = vunpack.c.l.b16 %v357
    %v913 = vunpack.c.l.b16 %v358
    %v914 = vunpack.c.l.b16 %v359
    %v915 = vunpack.c.l.b16 %v360
    %v916 = vunpack.c.l.b16 %v361
    %v917 = vunpack.c.l.b16 %v362
    %v918 = vunpack.c.l.b16 %v363
    %v919 = vunpack.c.l.b16 %v364
    %v920 = vunpack.c.l.b16 %v365
    %v921 = vunpack.c.l.b16 %v366
    %v922 = vunpack.c.l.b16 %v367
    %v923 = vunpack.c.l.b16 %v368
    %v924 = vunpack.c.l.b16 %v369
    %v925 = vunpack.c.l.b16 %v370
    %v926 = vunpack.c.l.b16 %v371
    %v927 = vunpack.c.l.b16 %v372
    %v928 = vunpack.c.l.b16 %v373
    %v929 = vunpack.c.l.b16 %v374
    %v930 = vunpack.c.l.b16 %v375
    %v931 = vunpack.c.l.b16 %v376
    %v932 = vunpack.c.l.b16 %v377
    %v933 = vunpack.c.l.b16 %v378
    %v934 = vunpack.c.l.b16 %v379
    %v935 = vunpack.c.l.b16 %v380
    %v936 = vunpack.c.l.b16 %v381
    %v937 = vunpack.c.l.b16 %v382
    %v938 = vunpack.c.l.b16 %v383
    %v939 = vunpack.c.l.b16 %v384
    %v940 = vunpack.c.l.b16 %v385
    %v941 = vunpack.c.l.b16 %v386
    %v942 = vunpack.c.l.b16 %v387
    %v943 = vunpack.c.l.b16 %v388
    %v944 = vunpack.c.l.b16 %v389
    %v945 = vunpack.c.l.b16 %v390
    %v946 = vunpack.c.l.b16 %v391
    %v947 = vunpack.c.l.b16 %v392
    %v948 = vunpack.c.l.b16 %v393
    %v949 = vunpack.c.l.b16 %v394
    %v950 = vunpack.c.l.b16 %v395
    %v951 = vpack.c.b16 %v904, %v903
    %v952 = vpack.c.b16 %v906, %v905
    %v953 = vpack.c.b16 %v908, %v907
    %v954 = vpack.c.b16 %v910, %v909
    %v955 = vpack.c.b16 %v912, %v911
    %v956 = vpack.c.b16 %v914, %v913
    %v957 = vpack.c.b16 %v916, %v915
    %v958 = vpack.c.b16 %v918, %v917
    %v959 = vpack.c.b16 %v920, %v919
    %v960 = vpack.c.b16 %v922, %v921
    %v961 = vpack.c.b16 %v924, %v923
    %v962 = vpack.c.b16 %v926, %v925
    %v963 = vpack.c.b16 %v928, %v927
    %v964 = vpack.c.b16 %v930, %v929
    %v965 = vpack.c.b16 %v932, %v931
    %v966 = vpack.c.b16 %v934, %v933
    %v967 = vpack.c.b16 %v936, %v935
    %v968 = vpack.c.b16 %v938, %v937
    %v969 = vpack.c.b16 %v940, %v939
    %v970 = vpack.c.b16 %v942, %v941
    %v971 = vpack.c.b16 %v944, %v943
    %v972 = vpack.c.b16 %v946, %v945
    %v973 = vpack.c.b16 %v948, %v947
    %v974 = vpack.c.b16 %v950, %v949
    %999 = vmatprep.subr.bf16.mxu0 0
    %1000 = vmatpush1.bf16.msra.mxu0 %v951
    %1001 = vmatprep.subr.bf16.mxu0 0
    %1002 = vmatpush1.bf16.msra.mxu0 %v952
    %1003 = vmatprep.subr.bf16.mxu0 0
    %1004 = vmatpush1.bf16.msra.mxu0 %v953
    %1005 = vmatprep.subr.bf16.mxu0 0
    %1006 = vmatpush1.bf16.msra.mxu0 %v954
    %1007 = vmatprep.subr.bf16.mxu0 0
    %1008 = vmatpush1.bf16.msra.mxu0 %v955
    %1009 = vmatprep.subr.bf16.mxu0 0
    %1010 = vmatpush1.bf16.msra.mxu0 %v956
    %1011 = vmatprep.subr.bf16.mxu0 0
    %1012 = vmatpush1.bf16.msra.mxu0 %v957
    %1013 = vmatprep.subr.bf16.mxu0 0
    %1014 = vmatpush1.bf16.msra.mxu0 %v958
    %1015 = vmatprep.subr.bf16.mxu0 0
    %1016 = vmatpush1.bf16.msra.mxu0 %v959
    %1017 = vmatprep.subr.bf16.mxu0 0
    %1018 = vmatpush1.bf16.msra.mxu0 %v960
    %1019 = vmatprep.subr.bf16.mxu0 0
    %1020 = vmatpush1.bf16.msra.mxu0 %v961
    %1021 = vmatprep.subr.bf16.mxu0 0
    %1022 = vmatpush1.bf16.msra.mxu0 %v962
    %1023 = vmatprep.subr.bf16.mxu0 0
    %1024 = vmatpush1.bf16.msra.mxu0 %v963
    %1025 = vmatprep.subr.bf16.mxu0 0
    %1026 = vmatpush1.bf16.msra.mxu0 %v964
    %1027 = vmatprep.subr.bf16.mxu0 0
    %1028 = vmatpush1.bf16.msra.mxu0 %v965
    %1029 = vmatprep.subr.bf16.mxu0 0
    %1030 = vmatpush1.bf16.msra.mxu0 %v966
    %1031 = vmatprep.mubr.bf16.mxu0 %v325
    %1032 = vmatmul.mubr.bf16.gmra.mrb[0].mxu0 %v324
    %v1033 = vpop.f32.mrb[0].mxu0
    %v1034 = vadd.f32 %v793, %v1033
    %v1035 = vpop.f32.mrb[0].mxu0
    %v1036 = vpop.f32.mrb[0].mxu0
    %v1037 = vadd.f32 %v796, %v1036
    %v1038 = vpop.f32.mrb[0].mxu0
    %1039 = vmatprep.mubr.bf16.mxu0 %v328
    %1040 = vmatmul.mubr.bf16.gmra.mrb[0].mxu0 %v327
    %v1041 = vpop.f32.mrb[0].mxu0
    %v1042 = vadd.f32 %v801, %v1041
    %v1043 = vpop.f32.mrb[0].mxu0
    %v1044 = vpop.f32.mrb[0].mxu0
    %v1045 = vadd.f32 %v804, %v1044
    %v1046 = vpop.f32.mrb[0].mxu0
    %1047 = vmatprep.mubr.bf16.mxu0 %v331
    %1048 = vmatmul.mubr.bf16.gmra.mrb[0].mxu0 %v330
    %v1049 = vpop.f32.mrb[0].mxu0
    %v1050 = vadd.f32 %v809, %v1049
    %v1051 = vpop.f32.mrb[0].mxu0
    %v1052 = vpop.f32.mrb[0].mxu0
    %v1053 = vadd.f32 %v812, %v1052
    %v1054 = vpop.f32.mrb[0].mxu0
    %1055 = vmatprep.mubr.bf16.mxu0 %v334
    %1056 = vmatmul.mubr.bf16.gmra.mrb[0].mxu0 %v333
    %v1057 = vpop.f32.mrb[0].mxu0
    %v1058 = vadd.f32 %v817, %v1057
    %v1059 = vpop.f32.mrb[0].mxu0
    %v1060 = vpop.f32.mrb[0].mxu0
    %v1061 = vadd.f32 %v820, %v1060
    %v1062 = vpop.f32.mrb[0].mxu0
    %1063 = vmatprep.mubr.bf16.mxu0 %v337
    %1064 = vmatmul.mubr.bf16.gmra.mrb[0].mxu0 %v336
    %v1065 = vpop.f32.mrb[0].mxu0
    %v1066 = vadd.f32 %v825, %v1065
    %v1067 = vpop.f32.mrb[0].mxu0
    %v1068 = vpop.f32.mrb[0].mxu0
    %v1069 = vadd.f32 %v828, %v1068
    %v1070 = vpop.f32.mrb[0].mxu0
    %1071 = vmatprep.mubr.bf16.mxu0 %v340
    %1072 = vmatmul.mubr.bf16.gmra.mrb[0].mxu0 %v339
    %v1073 = vpop.f32.mrb[0].mxu0
    %v1074 = vadd.f32 %v833, %v1073
    %v1075 = vpop.f32.mrb[0].mxu0
    %v1076 = vpop.f32.mrb[0].mxu0
    %v1077 = vadd.f32 %v836, %v1076
    %v1078 = vpop.f32.mrb[0].mxu0
    %1079 = vmatprep.mubr.bf16.mxu0 %v343
    %1080 = vmatmul.mubr.bf16.gmra.mrb[0].mxu0 %v342
    %v1081 = vpop.f32.mrb[0].mxu0
    %v1082 = vadd.f32 %v841, %v1081
    %v1083 = vpop.f32.mrb[0].mxu0
    %v1084 = vpop.f32.mrb[0].mxu0
    %v1085 = vadd.f32 %v844, %v1084
    %v1086 = vpop.f32.mrb[0].mxu0
    %1087 = vmatprep.mubr.bf16.mxu0 %v346
    %1088 = vmatmul.mubr.bf16.gmra.mrb[0].mxu0 %v345
    %v1089 = vpop.f32.mrb[0].mxu0
    %v1090 = vadd.f32 %v849, %v1089
    %v1091 = vpop.f32.mrb[0].mxu0
    %v1092 = vpop.f32.mrb[0].mxu0
    %v1093 = vadd.f32 %v852, %v1092
    %v1094 = vpop.f32.mrb[0].mxu0
    %1095 = vdwg.mxu0
    %1096 = vmatprep.subr.bf16.mxu0 0
    %1097 = vmatpush1.bf16.msra.mxu0 %v967
    %1098 = vmatprep.subr.bf16.mxu0 0
    %1099 = vmatpush1.bf16.msra.mxu0 %v968
    %1100 = vmatprep.subr.bf16.mxu0 0
    %1101 = vmatpush1.bf16.msra.mxu0 %v969
    %1102 = vmatprep.subr.bf16.mxu0 0
    %1103 = vmatpush1.bf16.msra.mxu0 %v970
    %1104 = vmatprep.subr.bf16.mxu0 0
    %1105 = vmatpush1.bf16.msra.mxu0 %v971
    %1106 = vmatprep.subr.bf16.mxu0 0
    %1107 = vmatpush1.bf16.msra.mxu0 %v972
    %1108 = vmatprep.subr.bf16.mxu0 0
    %1109 = vmatpush1.bf16.msra.mxu0 %v973
    %1110 = vmatprep.subr.bf16.mxu0 0
    %1111 = vmatpush1.bf16.msra.mxu0 %v974
    %1112 = vmatprep.subr.bf16.mxu0 0
    %1113 = vmatpush1.bf16.msra.mxu0 0
    %1114 = vmatprep.subr.bf16.mxu0 0
    %1115 = vmatpush1.bf16.msra.mxu0 0
    %1116 = vmatprep.subr.bf16.mxu0 0
    %1117 = vmatpush1.bf16.msra.mxu0 0
    %1118 = vmatprep.subr.bf16.mxu0 0
    %1119 = vmatpush1.bf16.msra.mxu0 0
    %1120 = vmatprep.subr.bf16.mxu0 0
    %1121 = vmatpush1.bf16.msra.mxu0 0
    %1122 = vmatprep.subr.bf16.mxu0 0
    %1123 = vmatpush1.bf16.msra.mxu0 0
    %1124 = vmatprep.subr.bf16.mxu0 0
    %1125 = vmatpush1.bf16.msra.mxu0 0
    %1126 = vmatprep.subr.bf16.mxu0 0
    %1127 = vmatpush1.bf16.msra.mxu0 0
    %1128 = vmatprep.mubr.bf16.mxu0 0
    %1129 = vmatmul.mubr.bf16.gmra.mrb[0].mxu0 %v326
    %v1130 = vpop.f32.mrb[0].mxu0
    %v1131 = vadd.f32 %v1034, %v1130
    %v1132 = vpop.f32.mrb[0].mxu0
    %v1133 = vpop.f32.mrb[0].mxu0
    %v1134 = vadd.f32 %v1037, %v1133
    %v1135 = vpop.f32.mrb[0].mxu0
    %1136 = vmatprep.mubr.bf16.mxu0 0
    %1137 = vmatmul.mubr.bf16.gmra.mrb[0].mxu0 %v329
    %v1138 = vpop.f32.mrb[0].mxu0
    %v1139 = vadd.f32 %v1042, %v1138
    %v1140 = vpop.f32.mrb[0].mxu0
    %v1141 = vpop.f32.mrb[0].mxu0
    %v1142 = vadd.f32 %v1045, %v1141
    %v1143 = vpop.f32.mrb[0].mxu0
    %1144 = vmatprep.mubr.bf16.mxu0 0
    %1145 = vmatmul.mubr.bf16.gmra.mrb[0].mxu0 %v332
    %v1146 = vpop.f32.mrb[0].mxu0
    %v1147 = vadd.f32 %v1050, %v1146
    %v1148 = vpop.f32.mrb[0].mxu0
    %v1149 = vpop.f32.mrb[0].mxu0
    %v1150 = vadd.f32 %v1053, %v1149
    %v1151 = vpop.f32.mrb[0].mxu0
    %1152 = vmatprep.mubr.bf16.mxu0 0
    %1153 = vmatmul.mubr.bf16.gmra.mrb[0].mxu0 %v335
    %v1154 = vpop.f32.mrb[0].mxu0
    %v1155 = vadd.f32 %v1058, %v1154
    %v1156 = vpop.f32.mrb[0].mxu0
    %v1157 = vpop.f32.mrb[0].mxu0
    %v1158 = vadd.f32 %v1061, %v1157
    %v1159 = vpop.f32.mrb[0].mxu0
    %1160 = vmatprep.mubr.bf16.mxu0 0
    %1161 = vmatmul.mubr.bf16.gmra.mrb[0].mxu0 %v338
    %v1162 = vpop.f32.mrb[0].mxu0
    %v1163 = vadd.f32 %v1066, %v1162
    %v1164 = vpop.f32.mrb[0].mxu0
    %v1165 = vpop.f32.mrb[0].mxu0
    %v1166 = vadd.f32 %v1069, %v1165
    %v1167 = vpop.f32.mrb[0].mxu0
    %1168 = vmatprep.mubr.bf16.mxu0 0
    %1169 = vmatmul.mubr.bf16.gmra.mrb[0].mxu0 %v341
    %v1170 = vpop.f32.mrb[0].mxu0
    %v1171 = vadd.f32 %v1074, %v1170
    %v1172 = vpop.f32.mrb[0].mxu0
    %v1173 = vpop.f32.mrb[0].mxu0
    %v1174 = vadd.f32 %v1077, %v1173
    %v1175 = vpop.f32.mrb[0].mxu0
    %1176 = vmatprep.mubr.bf16.mxu0 0
    %1177 = vmatmul.mubr.bf16.gmra.mrb[0].mxu0 %v344
    %v1178 = vpop.f32.mrb[0].mxu0
    %v1179 = vadd.f32 %v1082, %v1178
    %v1180 = vpop.f32.mrb[0].mxu0
    %v1181 = vpop.f32.mrb[0].mxu0
    %v1182 = vadd.f32 %v1085, %v1181
    %v1183 = vpop.f32.mrb[0].mxu0
    %1184 = vmatprep.mubr.bf16.mxu0 0
    %1185 = vmatmul.mubr.bf16.gmra.mrb[0].mxu0 %v347
    %v1186 = vpop.f32.mrb[0].mxu0
    %v1187 = vadd.f32 %v1090, %v1186
    %v1188 = vpop.f32.mrb[0].mxu0
    %v1189 = vpop.f32.mrb[0].mxu0
    %v1190 = vadd.f32 %v1093, %v1189
    %v1191 = vpop.f32.mrb[0].mxu0
    %1192 = vdwg.mxu0
    %s1193 = scalar_lea.vmem [#allocation2], 48
    %v1194 = vld [vmem:[%s1193] sm:$0xff]
    %v1195 = vld [vmem:[%s1193 + $0x8] sm:$0xff]
    %v1196 = vld [vmem:[%s1193 + $0x10] sm:$0xff]
    %v1197 = vld [vmem:[%s1193 + $0x18] sm:$0xff]
    %v1198 = vld [vmem:[%s1193 + $0x20] sm:$0xff]
    %v1199 = vld [vmem:[%s1193 + $0x28] sm:$0xff]
    %v1200 = vld [vmem:[%s1193 + $0x30] sm:$0xff]
    %v1201 = vld [vmem:[%s1193 + $0x38] sm:$0xff]
    %v1202 = vld [vmem:[%s1193 + $0x40] sm:$0xff]
    %v1203 = vld [vmem:[%s1193 + $0x48] sm:$0xff]
    %v1204 = vld [vmem:[%s1193 + $0x50] sm:$0xff]
    %v1205 = vld [vmem:[%s1193 + $0x58] sm:$0xff]
    %v1206 = vld [vmem:[%s1193 + $0x60] sm:$0xff]
    %v1207 = vld [vmem:[%s1193 + $0x68] sm:$0xff]
    %v1208 = vld [vmem:[%s1193 + $0x70] sm:$0xff]
    %v1209 = vld [vmem:[%s1193 + $0x78] sm:$0xff]
    %v1210 = vld [vmem:[%s1193 + $0x80] sm:$0xff]
    %v1211 = vld [vmem:[%s1193 + $0x88] sm:$0xff]
    %v1212 = vld [vmem:[%s1193 + $0x90] sm:$0xff]
    %v1213 = vld [vmem:[%s1193 + $0x98] sm:$0xff]
    %v1214 = vld [vmem:[%s1193 + $0xa0] sm:$0xff]
    %v1215 = vld [vmem:[%s1193 + $0xa8] sm:$0xff]
    %v1216 = vld [vmem:[%s1193 + $0xb0] sm:$0xff]
    %v1217 = vld [vmem:[%s1193 + $0xb8] sm:$0xff]
    %v1218 = vld [vmem:[%s1193 + $0xf0] sm:$0xff]
    %v1219 = vld [vmem:[%s1193 + $0xf8] sm:$0xff]
    %v1220 = vld [vmem:[%s1193 + $0x100] sm:$0xff]
    %v1221 = vld [vmem:[%s1193 + $0x108] sm:$0xff]
    %v1222 = vld [vmem:[%s1193 + $0x110] sm:$0xff]
    %v1223 = vld [vmem:[%s1193 + $0x118] sm:$0xff]
    %v1224 = vld [vmem:[%s1193 + $0x120] sm:$0xff]
    %v1225 = vld [vmem:[%s1193 + $0x128] sm:$0xff]
    %v1226 = vld [vmem:[%s1193 + $0x130] sm:$0xff]
    %v1227 = vld [vmem:[%s1193 + $0x138] sm:$0xff]
    %v1228 = vld [vmem:[%s1193 + $0x140] sm:$0xff]
    %v1229 = vld [vmem:[%s1193 + $0x148] sm:$0xff]
    %v1230 = vld [vmem:[%s1193 + $0x150] sm:$0xff]
    %v1231 = vld [vmem:[%s1193 + $0x158] sm:$0xff]
    %v1232 = vld [vmem:[%s1193 + $0x160] sm:$0xff]
    %v1233 = vld [vmem:[%s1193 + $0x168] sm:$0xff]
    %v1234 = vld [vmem:[%s1193 + $0x170] sm:$0xff]
    %v1235 = vld [vmem:[%s1193 + $0x178] sm:$0xff]
    %v1236 = vld [vmem:[%s1193 + $0x180] sm:$0xff]
    %v1237 = vld [vmem:[%s1193 + $0x188] sm:$0xff]
    %v1238 = vld [vmem:[%s1193 + $0x190] sm:$0xff]
    %v1239 = vld [vmem:[%s1193 + $0x198] sm:$0xff]
    %v1240 = vld [vmem:[%s1193 + $0x1a0] sm:$0xff]
    %v1241 = vld [vmem:[%s1193 + $0x1a8] sm:$0xff]
    %v1242 = vpack.c.bf16 %v1197, %v1194
    %v1243 = vpack.c.bf16 %v1198, %v1195
    %v1244 = vpack.c.bf16 %v1199, %v1196
    %v1245 = vpack.c.bf16 %v1203, %v1200
    %v1246 = vpack.c.bf16 %v1204, %v1201
    %v1247 = vpack.c.bf16 %v1205, %v1202
    %v1248 = vpack.c.bf16 %v1209, %v1206
    %v1249 = vpack.c.bf16 %v1210, %v1207
    %v1250 = vpack.c.bf16 %v1211, %v1208
    %v1251 = vpack.c.bf16 %v1215, %v1212
    %v1252 = vpack.c.bf16 %v1216, %v1213
    %v1253 = vpack.c.bf16 %v1217, %v1214
    %v1254 = vpack.c.bf16 %v1221, %v1218
    %v1255 = vpack.c.bf16 %v1222, %v1219
    %v1256 = vpack.c.bf16 %v1223, %v1220
    %v1257 = vpack.c.bf16 %v1227, %v1224
    %v1258 = vpack.c.bf16 %v1228, %v1225
    %v1259 = vpack.c.bf16 %v1229, %v1226
    %v1260 = vpack.c.bf16 %v1233, %v1230
    %v1261 = vpack.c.bf16 %v1234, %v1231
    %v1262 = vpack.c.bf16 %v1235, %v1232
    %v1263 = vpack.c.bf16 %v1239, %v1236
    %v1264 = vpack.c.bf16 %v1240, %v1237
    %v1265 = vpack.c.bf16 %v1241, %v1238
    %s1266 = scalar_lea.vmem [#allocation8], 384
    %v1267 = vld [vmem:[%s1266] sm:$0xf]
    %v1268 = vld [vmem:[%s1266 + $0x4] sm:$0xf]
    %v1269 = vld [vmem:[%s1266 + $0x8] sm:$0xf]
    %v1270 = vld [vmem:[%s1266 + $0xc] sm:$0xf]
    %v1271 = vld [vmem:[%s1266 + $0x10] sm:$0xf]
    %v1272 = vld [vmem:[%s1266 + $0x14] sm:$0xf]
    %v1273 = vld [vmem:[%s1266 + $0x18] sm:$0xf]
    %v1274 = vld [vmem:[%s1266 + $0x1c] sm:$0xf]
    %v1275 = vld [vmem:[%s1266 + $0x20] sm:$0xf]
    %v1276 = vld [vmem:[%s1266 + $0x24] sm:$0xf]
    %v1277 = vld [vmem:[%s1266 + $0x28] sm:$0xf]
    %v1278 = vld [vmem:[%s1266 + $0x2c] sm:$0xf]
    %v1279 = vld [vmem:[%s1266 + $0x30] sm:$0xf]
    %v1280 = vld [vmem:[%s1266 + $0x34] sm:$0xf]
    %v1281 = vld [vmem:[%s1266 + $0x38] sm:$0xf]
    %v1282 = vld [vmem:[%s1266 + $0x3c] sm:$0xf]
    %v1283 = vld [vmem:[%s1266 + $0x40] sm:$0xf]
    %v1284 = vld [vmem:[%s1266 + $0x44] sm:$0xf]
    %v1285 = vld [vmem:[%s1266 + $0x48] sm:$0xf]
    %v1286 = vld [vmem:[%s1266 + $0x4c] sm:$0xf]
    %v1287 = vld [vmem:[%s1266 + $0x50] sm:$0xf]
    %v1288 = vld [vmem:[%s1266 + $0x54] sm:$0xf]
    %v1289 = vld [vmem:[%s1266 + $0x58] sm:$0xf]
    %v1290 = vld [vmem:[%s1266 + $0x5c] sm:$0xf]
    %v1291 = vld [vmem:[%s1266 + $0x60] sm:$0xf]
    %v1292 = vld [vmem:[%s1266 + $0x64] sm:$0xf]
    %v1293 = vld [vmem:[%s1266 + $0x68] sm:$0xf]
    %v1294 = vld [vmem:[%s1266 + $0x6c] sm:$0xf]
    %v1295 = vld [vmem:[%s1266 + $0x70] sm:$0xf]
    %v1296 = vld [vmem:[%s1266 + $0x74] sm:$0xf]
    %v1297 = vld [vmem:[%s1266 + $0x78] sm:$0xf]
    %v1298 = vld [vmem:[%s1266 + $0x7c] sm:$0xf]
    %v1299 = vld [vmem:[%s1266 + $0x80] sm:$0xf]
    %v1300 = vld [vmem:[%s1266 + $0x84] sm:$0xf]
    %v1301 = vld [vmem:[%s1266 + $0x88] sm:$0xf]
    %v1302 = vld [vmem:[%s1266 + $0x8c] sm:$0xf]
    %v1303 = vld [vmem:[%s1266 + $0x90] sm:$0xf]
    %v1304 = vld [vmem:[%s1266 + $0x94] sm:$0xf]
    %v1305 = vld [vmem:[%s1266 + $0x98] sm:$0xf]
    %v1306 = vld [vmem:[%s1266 + $0x9c] sm:$0xf]
    %v1307 = vld [vmem:[%s1266 + $0xa0] sm:$0xf]
    %v1308 = vld [vmem:[%s1266 + $0xa4] sm:$0xf]
    %v1309 = vld [vmem:[%s1266 + $0xa8] sm:$0xf]
    %v1310 = vld [vmem:[%s1266 + $0xac] sm:$0xf]
    %v1311 = vld [vmem:[%s1266 + $0xb0] sm:$0xf]
    %v1312 = vld [vmem:[%s1266 + $0xb4] sm:$0xf]
    %v1313 = vld [vmem:[%s1266 + $0xb8] sm:$0xf]
    %v1314 = vld [vmem:[%s1266 + $0xbc] sm:$0xf]
    %v1363 = vunpack.c.l.b16 %v1267
    %v1364 = vunpack.c.l.b16 %v1268
    %v1365 = vunpack.c.l.b16 %v1269
    %v1366 = vunpack.c.l.b16 %v1270
    %v1367 = vunpack.c.l.b16 %v1271
    %v1368 = vunpack.c.l.b16 %v1272
    %v1369 = vunpack.c.l.b16 %v1273
    %v1370 = vunpack.c.l.b16 %v1274
    %v1371 = vunpack.c.l.b16 %v1275
    %v1372 = vunpack.c.l.b16 %v1276
    %v1373 = vunpack.c.l.b16 %v1277
    %v1374 = vunpack.c.l.b16 %v1278
    %v1375 = vunpack.c.l.b16 %v1279
    %v1376 = vunpack.c.l.b16 %v1280
    %v1377 = vunpack.c.l.b16 %v1281
    %v1378 = vunpack.c.l.b16 %v1282
    %v1379 = vunpack.c.l.b16 %v1283
    %v1380 = vunpack.c.l.b16 %v1284
    %v1381 = vunpack.c.l.b16 %v1285
    %v1382 = vunpack.c.l.b16 %v1286
    %v1383 = vunpack.c.l.b16 %v1287
    %v1384 = vunpack.c.l.b16 %v1288
    %v1385 = vunpack.c.l.b16 %v1289
    %v1386 = vunpack.c.l.b16 %v1290
    %v1387 = vunpack.c.l.b16 %v1291
    %v1388 = vunpack.c.l.b16 %v1292
    %v1389 = vunpack.c.l.b16 %v1293
    %v1390 = vunpack.c.l.b16 %v1294
    %v1391 = vunpack.c.l.b16 %v1295
    %v1392 = vunpack.c.l.b16 %v1296
    %v1393 = vunpack.c.l.b16 %v1297
    %v1394 = vunpack.c.l.b16 %v1298
    %v1395 = vunpack.c.l.b16 %v1299
    %v1396 = vunpack.c.l.b16 %v1300
    %v1397 = vunpack.c.l.b16 %v1301
    %v1398 = vunpack.c.l.b16 %v1302
    %v1399 = vunpack.c.l.b16 %v1303
    %v1400 = vunpack.c.l.b16 %v1304
    %v1401 = vunpack.c.l.b16 %v1305
    %v1402 = vunpack.c.l.b16 %v1306
    %v1403 = vunpack.c.l.b16 %v1307
    %v1404 = vunpack.c.l.b16 %v1308
    %v1405 = vunpack.c.l.b16 %v1309
    %v1406 = vunpack.c.l.b16 %v1310
    %v1407 = vunpack.c.l.b16 %v1311
    %v1408 = vunpack.c.l.b16 %v1312
    %v1409 = vunpack.c.l.b16 %v1313
    %v1410 = vunpack.c.l.b16 %v1314
    %v1411 = vpack.c.b16 %v1364, %v1363
    %v1412 = vpack.c.b16 %v1366, %v1365
    %v1413 = vpack.c.b16 %v1368, %v1367
    %v1414 = vpack.c.b16 %v1370, %v1369
    %v1415 = vpack.c.b16 %v1372, %v1371
    %v1416 = vpack.c.b16 %v1374, %v1373
    %v1417 = vpack.c.b16 %v1376, %v1375
    %v1418 = vpack.c.b16 %v1378, %v1377
    %v1419 = vpack.c.b16 %v1380, %v1379
    %v1420 = vpack.c.b16 %v1382, %v1381
    %v1421 = vpack.c.b16 %v1384, %v1383
    %v1422 = vpack.c.b16 %v1386, %v1385
    %v1423 = vpack.c.b16 %v1388, %v1387
    %v1424 = vpack.c.b16 %v1390, %v1389
    %v1425 = vpack.c.b16 %v1392, %v1391
    %v1426 = vpack.c.b16 %v1394, %v1393
    %v1427 = vpack.c.b16 %v1396, %v1395
    %v1428 = vpack.c.b16 %v1398, %v1397
    %v1429 = vpack.c.b16 %v1400, %v1399
    %v1430 = vpack.c.b16 %v1402, %v1401
    %v1431 = vpack.c.b16 %v1404, %v1403
    %v1432 = vpack.c.b16 %v1406, %v1405
    %v1433 = vpack.c.b16 %v1408, %v1407
    %v1434 = vpack.c.b16 %v1410, %v1409
    %1459 = vmatprep.subr.bf16.mxu0 0
    %1460 = vmatpush1.bf16.msra.mxu0 %v1411
    %1461 = vmatprep.subr.bf16.mxu0 0
    %1462 = vmatpush1.bf16.msra.mxu0 %v1412
    %1463 = vmatprep.subr.bf16.mxu0 0
    %1464 = vmatpush1.bf16.msra.mxu0 %v1413
    %1465 = vmatprep.subr.bf16.mxu0 0
    %1466 = vmatpush1.bf16.msra.mxu0 %v1414
    %1467 = vmatprep.subr.bf16.mxu0 0
    %1468 = vmatpush1.bf16.msra.mxu0 %v1415
    %1469 = vmatprep.subr.bf16.mxu0 0
    %1470 = vmatpush1.bf16.msra.mxu0 %v1416
    %1471 = vmatprep.subr.bf16.mxu0 0
    %1472 = vmatpush1.bf16.msra.mxu0 %v1417
    %1473 = vmatprep.subr.bf16.mxu0 0
    %1474 = vmatpush1.bf16.msra.mxu0 %v1418
    %1475 = vmatprep.subr.bf16.mxu0 0
    %1476 = vmatpush1.bf16.msra.mxu0 %v1419
    %1477 = vmatprep.subr.bf16.mxu0 0
    %1478 = vmatpush1.bf16.msra.mxu0 %v1420
    %1479 = vmatprep.subr.bf16.mxu0 0
    %1480 = vmatpush1.bf16.msra.mxu0 %v1421
    %1481 = vmatprep.subr.bf16.mxu0 0
    %1482 = vmatpush1.bf16.msra.mxu0 %v1422
    %1483 = vmatprep.subr.bf16.mxu0 0
    %1484 = vmatpush1.bf16.msra.mxu0 %v1423
    %1485 = vmatprep.subr.bf16.mxu0 0
    %1486 = vmatpush1.bf16.msra.mxu0 %v1424
    %1487 = vmatprep.subr.bf16.mxu0 0
    %1488 = vmatpush1.bf16.msra.mxu0 %v1425
    %1489 = vmatprep.subr.bf16.mxu0 0
    %1490 = vmatpush1.bf16.msra.mxu0 %v1426
    %1491 = vmatprep.mubr.bf16.mxu0 %v1243
    %1492 = vmatmul.mubr.bf16.gmra.mrb[0].mxu0 %v1242
    %v1493 = vpop.f32.mrb[0].mxu0
    %v1494 = vadd.f32 0.0, %v1493
    %v1495 = vpop.f32.mrb[0].mxu0
    %v1496 = vpop.f32.mrb[0].mxu0
    %v1497 = vadd.f32 0.0, %v1496
    %v1498 = vpop.f32.mrb[0].mxu0
    %1499 = vmatprep.mubr.bf16.mxu0 %v1246
    %1500 = vmatmul.mubr.bf16.gmra.mrb[0].mxu0 %v1245
    %v1501 = vpop.f32.mrb[0].mxu0
    %v1502 = vadd.f32 0.0, %v1501
    %v1503 = vpop.f32.mrb[0].mxu0
    %v1504 = vpop.f32.mrb[0].mxu0
    %v1505 = vadd.f32 0.0, %v1504
    %v1506 = vpop.f32.mrb[0].mxu0
    %1507 = vmatprep.mubr.bf16.mxu0 %v1249
    %1508 = vmatmul.mubr.bf16.gmra.mrb[0].mxu0 %v1248
    %v1509 = vpop.f32.mrb[0].mxu0
    %v1510 = vadd.f32 0.0, %v1509
    %v1511 = vpop.f32.mrb[0].mxu0
    %v1512 = vpop.f32.mrb[0].mxu0
    %v1513 = vadd.f32 0.0, %v1512
    %v1514 = vpop.f32.mrb[0].mxu0
    %1515 = vmatprep.mubr.bf16.mxu0 %v1252
    %1516 = vmatmul.mubr.bf16.gmra.mrb[0].mxu0 %v1251
    %v1517 = vpop.f32.mrb[0].mxu0
    %v1518 = vadd.f32 0.0, %v1517
    %v1519 = vpop.f32.mrb[0].mxu0
    %v1520 = vpop.f32.mrb[0].mxu0
    %v1521 = vadd.f32 0.0, %v1520
    %v1522 = vpop.f32.mrb[0].mxu0
    %1523 = vmatprep.mubr.bf16.mxu0 %v1255
    %1524 = vmatmul.mubr.bf16.gmra.mrb[0].mxu0 %v1254
    %v1525 = vpop.f32.mrb[0].mxu0
    %v1526 = vadd.f32 0.0, %v1525
    %v1527 = vpop.f32.mrb[0].mxu0
    %v1528 = vpop.f32.mrb[0].mxu0
    %v1529 = vadd.f32 0.0, %v1528
    %v1530 = vpop.f32.mrb[0].mxu0
    %1531 = vmatprep.mubr.bf16.mxu0 %v1258
    %1532 = vmatmul.mubr.bf16.gmra.mrb[0].mxu0 %v1257
    %v1533 = vpop.f32.mrb[0].mxu0
    %v1534 = vadd.f32 0.0, %v1533
    %v1535 = vpop.f32.mrb[0].mxu0
    %v1536 = vpop.f32.mrb[0].mxu0
    %v1537 = vadd.f32 0.0, %v1536
    %v1538 = vpop.f32.mrb[0].mxu0
    %1539 = vmatprep.mubr.bf16.mxu0 %v1261
    %1540 = vmatmul.mubr.bf16.gmra.mrb[0].mxu0 %v1260
    %v1541 = vpop.f32.mrb[0].mxu0
    %v1542 = vadd.f32 0.0, %v1541
    %v1543 = vpop.f32.mrb[0].mxu0
    %v1544 = vpop.f32.mrb[0].mxu0
    %v1545 = vadd.f32 0.0, %v1544
    %v1546 = vpop.f32.mrb[0].mxu0
    %1547 = vmatprep.mubr.bf16.mxu0 %v1264
    %1548 = vmatmul.mubr.bf16.gmra.mrb[0].mxu0 %v1263
    %v1549 = vpop.f32.mrb[0].mxu0
    %v1550 = vadd.f32 0.0, %v1549
    %v1551 = vpop.f32.mrb[0].mxu0
    %v1552 = vpop.f32.mrb[0].mxu0
    %v1553 = vadd.f32 0.0, %v1552
    %v1554 = vpop.f32.mrb[0].mxu0
    %1555 = vdwg.mxu0
    %1556 = vmatprep.subr.bf16.mxu0 0
    %1557 = vmatpush1.bf16.msra.mxu0 %v1427
    %1558 = vmatprep.subr.bf16.mxu0 0
    %1559 = vmatpush1.bf16.msra.mxu0 %v1428
    %1560 = vmatprep.subr.bf16.mxu0 0
    %1561 = vmatpush1.bf16.msra.mxu0 %v1429
    %1562 = vmatprep.subr.bf16.mxu0 0
    %1563 = vmatpush1.bf16.msra.mxu0 %v1430
    %1564 = vmatprep.subr.bf16.mxu0 0
    %1565 = vmatpush1.bf16.msra.mxu0 %v1431
    %1566 = vmatprep.subr.bf16.mxu0 0
    %1567 = vmatpush1.bf16.msra.mxu0 %v1432
    %1568 = vmatprep.subr.bf16.mxu0 0
    %1569 = vmatpush1.bf16.msra.mxu0 %v1433
    %1570 = vmatprep.subr.bf16.mxu0 0
    %1571 = vmatpush1.bf16.msra.mxu0 %v1434
    %1572 = vmatprep.subr.bf16.mxu0 0
    %1573 = vmatpush1.bf16.msra.mxu0 0
    %1574 = vmatprep.subr.bf16.mxu0 0
    %1575 = vmatpush1.bf16.msra.mxu0 0
    %1576 = vmatprep.subr.bf16.mxu0 0
    %1577 = vmatpush1.bf16.msra.mxu0 0
    %1578 = vmatprep.subr.bf16.mxu0 0
    %1579 = vmatpush1.bf16.msra.mxu0 0
    %1580 = vmatprep.subr.bf16.mxu0 0
    %1581 = vmatpush1.bf16.msra.mxu0 0
    %1582 = vmatprep.subr.bf16.mxu0 0
    %1583 = vmatpush1.bf16.msra.mxu0 0
    %1584 = vmatprep.subr.bf16.mxu0 0
    %1585 = vmatpush1.bf16.msra.mxu0 0
    %1586 = vmatprep.subr.bf16.mxu0 0
    %1587 = vmatpush1.bf16.msra.mxu0 0
    %1588 = vmatprep.mubr.bf16.mxu0 0
    %1589 = vmatmul.mubr.bf16.gmra.mrb[0].mxu0 %v1244
    %v1590 = vpop.f32.mrb[0].mxu0
    %v1591 = vadd.f32 %v1494, %v1590
    %v1592 = vpop.f32.mrb[0].mxu0
    %v1593 = vpop.f32.mrb[0].mxu0
    %v1594 = vadd.f32 %v1497, %v1593
    %v1595 = vpop.f32.mrb[0].mxu0
    %1596 = vmatprep.mubr.bf16.mxu0 0
    %1597 = vmatmul.mubr.bf16.gmra.mrb[0].mxu0 %v1247
    %v1598 = vpop.f32.mrb[0].mxu0
    %v1599 = vadd.f32 %v1502, %v1598
    %v1600 = vpop.f32.mrb[0].mxu0
    %v1601 = vpop.f32.mrb[0].mxu0
    %v1602 = vadd.f32 %v1505, %v1601
    %v1603 = vpop.f32.mrb[0].mxu0
    %1604 = vmatprep.mubr.bf16.mxu0 0
    %1605 = vmatmul.mubr.bf16.gmra.mrb[0].mxu0 %v1250
    %v1606 = vpop.f32.mrb[0].mxu0
    %v1607 = vadd.f32 %v1510, %v1606
    %v1608 = vpop.f32.mrb[0].mxu0
    %v1609 = vpop.f32.mrb[0].mxu0
    %v1610 = vadd.f32 %v1513, %v1609
    %v1611 = vpop.f32.mrb[0].mxu0
    %1612 = vmatprep.mubr.bf16.mxu0 0
    %1613 = vmatmul.mubr.bf16.gmra.mrb[0].mxu0 %v1253
    %v1614 = vpop.f32.mrb[0].mxu0
    %v1615 = vadd.f32 %v1518, %v1614
    %v1616 = vpop.f32.mrb[0].mxu0
    %v1617 = vpop.f32.mrb[0].mxu0
    %v1618 = vadd.f32 %v1521, %v1617
    %v1619 = vpop.f32.mrb[0].mxu0
    %1620 = vmatprep.mubr.bf16.mxu0 0
    %1621 = vmatmul.mubr.bf16.gmra.mrb[0].mxu0 %v1256
    %v1622 = vpop.f32.mrb[0].mxu0
    %v1623 = vadd.f32 %v1526, %v1622
    %v1624 = vpop.f32.mrb[0].mxu0
    %v1625 = vpop.f32.mrb[0].mxu0
    %v1626 = vadd.f32 %v1529, %v1625
    %v1627 = vpop.f32.mrb[0].mxu0
    %1628 = vmatprep.mubr.bf16.mxu0 0
    %1629 = vmatmul.mubr.bf16.gmra.mrb[0].mxu0 %v1259
    %v1630 = vpop.f32.mrb[0].mxu0
    %v1631 = vadd.f32 %v1534, %v1630
    %v1632 = vpop.f32.mrb[0].mxu0
    %v1633 = vpop.f32.mrb[0].mxu0
    %v1634 = vadd.f32 %v1537, %v1633
    %v1635 = vpop.f32.mrb[0].mxu0
    %1636 = vmatprep.mubr.bf16.mxu0 0
    %1637 = vmatmul.mubr.bf16.gmra.mrb[0].mxu0 %v1262
    %v1638 = vpop.f32.mrb[0].mxu0
    %v1639 = vadd.f32 %v1542, %v1638
    %v1640 = vpop.f32.mrb[0].mxu0
    %v1641 = vpop.f32.mrb[0].mxu0
    %v1642 = vadd.f32 %v1545, %v1641
    %v1643 = vpop.f32.mrb[0].mxu0
    %1644 = vmatprep.mubr.bf16.mxu0 0
    %1645 = vmatmul.mubr.bf16.gmra.mrb[0].mxu0 %v1265
    %v1646 = vpop.f32.mrb[0].mxu0
    %v1647 = vadd.f32 %v1550, %v1646
    %v1648 = vpop.f32.mrb[0].mxu0
    %v1649 = vpop.f32.mrb[0].mxu0
    %v1650 = vadd.f32 %v1553, %v1649
    %v1651 = vpop.f32.mrb[0].mxu0
    %1652 = vdwg.mxu0
    %v1653 = vadd.f32 %v1131, %v1591
    %v1654 = vadd.f32 %v1134, %v1594
    %v1655 = vadd.f32 %v1139, %v1599
    %v1656 = vadd.f32 %v1142, %v1602
    %v1657 = vadd.f32 %v1147, %v1607
    %v1658 = vadd.f32 %v1150, %v1610
    %v1659 = vadd.f32 %v1155, %v1615
    %v1660 = vadd.f32 %v1158, %v1618
    %v1661 = vadd.f32 %v1163, %v1623
    %v1662 = vadd.f32 %v1166, %v1626
    %v1663 = vadd.f32 %v1171, %v1631
    %v1664 = vadd.f32 %v1174, %v1634
    %v1665 = vadd.f32 %v1179, %v1639
    %v1666 = vadd.f32 %v1182, %v1642
    %v1667 = vadd.f32 %v1187, %v1647
    %v1668 = vadd.f32 %v1190, %v1650
    %1669 = vmatprep.subr.mxu0 0.0
    %1670 = vmatpush1.msra.mxu0 %v1653
    %1671 = vmatprep.subr.mxu0 0.0
    %1672 = vmatpush1.msra.mxu0 %v1654
    %1673 = vmatprep.subr.mxu0 0.0
    %1674 = vmatpush1.msra.mxu0 %v1655
    %1675 = vmatprep.subr.mxu0 0.0
    %1676 = vmatpush1.msra.mxu0 %v1656
    %1677 = vmatprep.subr.mxu0 0.0
    %1678 = vmatpush1.msra.mxu0 %v1657
    %1679 = vmatprep.subr.mxu0 0.0
    %1680 = vmatpush1.msra.mxu0 %v1658
    %1681 = vmatprep.subr.mxu0 0.0
    %1682 = vmatpush1.msra.mxu0 %v1659
    %1683 = vmatprep.subr.mxu0 0.0
    %1684 = vmatpush1.msra.mxu0 %v1660
    %1685 = vmatprep.subr.mxu0 0.0
    %1686 = vmatpush1.msra.mxu0 %v1661
    %1687 = vmatprep.subr.mxu0 0.0
    %1688 = vmatpush1.msra.mxu0 %v1662
    %1689 = vmatprep.subr.mxu0 0.0
    %1690 = vmatpush1.msra.mxu0 %v1663
    %1691 = vmatprep.subr.mxu0 0.0
    %1692 = vmatpush1.msra.mxu0 %v1664
    %1693 = vmatprep.subr.mxu0 0.0
    %1694 = vmatpush1.msra.mxu0 %v1665
    %1695 = vmatprep.subr.mxu0 0.0
    %1696 = vmatpush1.msra.mxu0 %v1666
    %1697 = vmatprep.subr.mxu0 0.0
    %1698 = vmatpush1.msra.mxu0 %v1667
    %1699 = vmatprep.subr.mxu0 0.0
    %1700 = vmatpush1.msra.mxu0 %v1668
    %1701 = vmatprep.subr.mxu0 0.0
    %1702 = vmatpush1.msra.mxu0 0.0
    %1703 = vmatprep.subr.mxu0 0.0
    %1704 = vmatpush1.msra.mxu0 0.0
    %1705 = vmatprep.subr.mxu0 0.0
    %1706 = vmatpush1.msra.mxu0 0.0
    %1707 = vmatprep.subr.mxu0 0.0
    %1708 = vmatpush1.msra.mxu0 0.0
    %1709 = vmatprep.subr.mxu0 0.0
    %1710 = vmatpush1.msra.mxu0 0.0
    %1711 = vmatprep.subr.mxu0 0.0
    %1712 = vmatpush1.msra.mxu0 0.0
    %1713 = vmatprep.subr.mxu0 0.0
    %1714 = vmatpush1.msra.mxu0 0.0
    %1715 = vmatprep.subr.mxu0 0.0
    %1716 = vmatpush1.msra.mxu0 0.0
    %1717 = vmatprep.subr.mxu0 0.0
    %1718 = vmatpush1.msra.mxu0 0.0
    %1719 = vmatprep.subr.mxu0 0.0
    %1720 = vmatpush1.msra.mxu0 0.0
    %1721 = vmatprep.subr.mxu0 0.0
    %1722 = vmatpush1.msra.mxu0 0.0
    %1723 = vmatprep.subr.mxu0 0.0
    %1724 = vmatpush1.msra.mxu0 0.0
    %1725 = vmatprep.subr.mxu0 0.0
    %1726 = vmatpush1.msra.mxu0 0.0
    %1727 = vmatprep.subr.mxu0 0.0
    %1728 = vmatpush1.msra.mxu0 0.0
    %1729 = vmatprep.subr.mxu0 0.0
    %1730 = vmatpush1.msra.mxu0 0.0
    %1731 = vmatprep.subr.mxu0 0.0
    %1732 = vmatpush1.msra.mxu0 0.0
    %1733 = vmatprep.mubr.f32.mxu0 0.0
    %1734 = vmatmul.mubr.f32.gmra.mrb[0].mxu0 1.0
    %v1735 = vpop.f32.mrb[0].mxu0
    %v1736 = vadd.f32 0.0, %v1735
    %v1737 = vpop.f32.mrb[0].mxu0
    %1738 = vdwg.mxu0
    %v1739 = vmul.f32 %v1736, 0.0078125
    %v1740 = vlaneseq
    %v1741 = vshrl.u32 %v1740, 7
    %v1742 = vsub.s32 0, %v1741
    %v1743 = vrot.slane %v1739, %v1742
    %v1744 = vsub.f32 %v1653, %v1743
    %v1745 = vsub.f32 %v1654, %v1743
    %v1746 = vsub.f32 %v1655, %v1743
    %v1747 = vsub.f32 %v1656, %v1743
    %v1748 = vsub.f32 %v1657, %v1743
    %v1749 = vsub.f32 %v1658, %v1743
    %v1750 = vsub.f32 %v1659, %v1743
    %v1751 = vsub.f32 %v1660, %v1743
    %v1752 = vsub.f32 %v1661, %v1743
    %v1753 = vsub.f32 %v1662, %v1743
    %v1754 = vsub.f32 %v1663, %v1743
    %v1755 = vsub.f32 %v1664, %v1743
    %v1756 = vsub.f32 %v1665, %v1743
    %v1757 = vsub.f32 %v1666, %v1743
    %v1758 = vsub.f32 %v1667, %v1743
    %v1759 = vsub.f32 %v1668, %v1743
    %v1760 = vmul.f32 %v1744, %v1744
    %v1761 = vmul.f32 %v1745, %v1745
    %v1762 = vmul.f32 %v1746, %v1746
    %v1763 = vmul.f32 %v1747, %v1747
    %v1764 = vmul.f32 %v1748, %v1748
    %v1765 = vmul.f32 %v1749, %v1749
    %v1766 = vmul.f32 %v1750, %v1750
    %v1767 = vmul.f32 %v1751, %v1751
    %v1768 = vmul.f32 %v1752, %v1752
    %v1769 = vmul.f32 %v1753, %v1753
    %v1770 = vmul.f32 %v1754, %v1754
    %v1771 = vmul.f32 %v1755, %v1755
    %v1772 = vmul.f32 %v1756, %v1756
    %v1773 = vmul.f32 %v1757, %v1757
    %v1774 = vmul.f32 %v1758, %v1758
    %v1775 = vmul.f32 %v1759, %v1759
    %1776 = vmatprep.subr.mxu0 0.0
    %1777 = vmatpush1.msra.mxu0 %v1760
    %1778 = vmatprep.subr.mxu0 0.0
    %1779 = vmatpush1.msra.mxu0 %v1761
    %1780 = vmatprep.subr.mxu0 0.0
    %1781 = vmatpush1.msra.mxu0 %v1762
    %1782 = vmatprep.subr.mxu0 0.0
    %1783 = vmatpush1.msra.mxu0 %v1763
    %1784 = vmatprep.subr.mxu0 0.0
    %1785 = vmatpush1.msra.mxu0 %v1764
    %1786 = vmatprep.subr.mxu0 0.0
    %1787 = vmatpush1.msra.mxu0 %v1765
    %1788 = vmatprep.subr.mxu0 0.0
    %1789 = vmatpush1.msra.mxu0 %v1766
    %1790 = vmatprep.subr.mxu0 0.0
    %1791 = vmatpush1.msra.mxu0 %v1767
    %1792 = vmatprep.subr.mxu0 0.0
    %1793 = vmatpush1.msra.mxu0 %v1768
    %1794 = vmatprep.subr.mxu0 0.0
    %1795 = vmatpush1.msra.mxu0 %v1769
    %1796 = vmatprep.subr.mxu0 0.0
    %1797 = vmatpush1.msra.mxu0 %v1770
    %1798 = vmatprep.subr.mxu0 0.0
    %1799 = vmatpush1.msra.mxu0 %v1771
    %1800 = vmatprep.subr.mxu0 0.0
    %1801 = vmatpush1.msra.mxu0 %v1772
    %1802 = vmatprep.subr.mxu0 0.0
    %1803 = vmatpush1.msra.mxu0 %v1773
    %1804 = vmatprep.subr.mxu0 0.0
    %1805 = vmatpush1.msra.mxu0 %v1774
    %1806 = vmatprep.subr.mxu0 0.0
    %1807 = vmatpush1.msra.mxu0 %v1775
    %1808 = vmatprep.subr.mxu0 0.0
    %1809 = vmatpush1.msra.mxu0 0.0
    %1810 = vmatprep.subr.mxu0 0.0
    %1811 = vmatpush1.msra.mxu0 0.0
    %1812 = vmatprep.subr.mxu0 0.0
    %1813 = vmatpush1.msra.mxu0 0.0
    %1814 = vmatprep.subr.mxu0 0.0
    %1815 = vmatpush1.msra.mxu0 0.0
    %1816 = vmatprep.subr.mxu0 0.0
    %1817 = vmatpush1.msra.mxu0 0.0
    %1818 = vmatprep.subr.mxu0 0.0
    %1819 = vmatpush1.msra.mxu0 0.0
    %1820 = vmatprep.subr.mxu0 0.0
    %1821 = vmatpush1.msra.mxu0 0.0
    %1822 = vmatprep.subr.mxu0 0.0
    %1823 = vmatpush1.msra.mxu0 0.0
    %1824 = vmatprep.subr.mxu0 0.0
    %1825 = vmatpush1.msra.mxu0 0.0
    %1826 = vmatprep.subr.mxu0 0.0
    %1827 = vmatpush1.msra.mxu0 0.0
    %1828 = vmatprep.subr.mxu0 0.0
    %1829 = vmatpush1.msra.mxu0 0.0
    %1830 = vmatprep.subr.mxu0 0.0
    %1831 = vmatpush1.msra.mxu0 0.0
    %1832 = vmatprep.subr.mxu0 0.0
    %1833 = vmatpush1.msra.mxu0 0.0
    %1834 = vmatprep.subr.mxu0 0.0
    %1835 = vmatpush1.msra.mxu0 0.0
    %1836 = vmatprep.subr.mxu0 0.0
    %1837 = vmatpush1.msra.mxu0 0.0
    %1838 = vmatprep.subr.mxu0 0.0
    %1839 = vmatpush1.msra.mxu0 0.0
    %1840 = vmatprep.mubr.f32.mxu0 0.0
    %1841 = vmatmul.mubr.f32.gmra.mrb[0].mxu0 1.0
    %v1842 = vpop.f32.mrb[0].mxu0
    %v1843 = vadd.f32 0.0, %v1842
    %v1844 = vpop.f32.mrb[0].mxu0
    %1845 = vdwg.mxu0
    %v1846 = vmul.f32 %v1843, 0.0078125
    %v1847 = vadd.f32 %v1846, 1e-05
    %v1848 = vrsqrt.pop %v1847
    %v1849 = vlaneseq
    %v1850 = vshrl.u32 %v1849, 7
    %v1851 = vsub.s32 0, %v1850
    %v1852 = vrot.slane %v1848, %v1851
    %v1853 = vmul.f32 %v1744, %v1852
    %v1854 = vmul.f32 %v1745, %v1852
    %v1855 = vmul.f32 %v1746, %v1852
    %v1856 = vmul.f32 %v1747, %v1852
    %v1857 = vmul.f32 %v1748, %v1852
    %v1858 = vmul.f32 %v1749, %v1852
    %v1859 = vmul.f32 %v1750, %v1852
    %v1860 = vmul.f32 %v1751, %v1852
    %v1861 = vmul.f32 %v1752, %v1852
    %v1862 = vmul.f32 %v1753, %v1852
    %v1863 = vmul.f32 %v1754, %v1852
    %v1864 = vmul.f32 %v1755, %v1852
    %v1865 = vmul.f32 %v1756, %v1852
    %v1866 = vmul.f32 %v1757, %v1852
    %v1867 = vmul.f32 %v1758, %v1852
    %v1868 = vmul.f32 %v1759, %v1852
    %v1870 = vlaneseq
    %v1871 = vshrl.u32 %v1870, 7
    %v1872 = vsub.s32 0, %v1871
    %v1873 = vrot.slane %v51, %v1872
    %v1875 = vmul.f32 %v1853, %v1873
    %v1876 = vmul.f32 %v1854, %v1873
    %v1877 = vmul.f32 %v1855, %v1873
    %v1878 = vmul.f32 %v1856, %v1873
    %v1879 = vmul.f32 %v1857, %v1873
    %v1880 = vmul.f32 %v1858, %v1873
    %v1881 = vmul.f32 %v1859, %v1873
    %v1882 = vmul.f32 %v1860, %v1873
    %v1883 = vmul.f32 %v1861, %v1873
    %v1884 = vmul.f32 %v1862, %v1873
    %v1885 = vmul.f32 %v1863, %v1873
    %v1886 = vmul.f32 %v1864, %v1873
    %v1887 = vmul.f32 %v1865, %v1873
    %v1888 = vmul.f32 %v1866, %v1873
    %v1889 = vmul.f32 %v1867, %v1873
    %v1890 = vmul.f32 %v1868, %v1873
    %v1892 = vlaneseq
    %v1893 = vshrl.u32 %v1892, 7
    %v1894 = vsub.s32 0, %v1893
    %v1895 = vrot.slane %v52, %v1894
    %v1897 = vadd.f32 %v1875, %v1895
    %v1898 = vadd.f32 %v1876, %v1895
    %v1899 = vadd.f32 %v1877, %v1895
    %v1900 = vadd.f32 %v1878, %v1895
    %v1901 = vadd.f32 %v1879, %v1895
    %v1902 = vadd.f32 %v1880, %v1895
    %v1903 = vadd.f32 %v1881, %v1895
    %v1904 = vadd.f32 %v1882, %v1895
    %v1905 = vadd.f32 %v1883, %v1895
    %v1906 = vadd.f32 %v1884, %v1895
    %v1907 = vadd.f32 %v1885, %v1895
    %v1908 = vadd.f32 %v1886, %v1895
    %v1909 = vadd.f32 %v1887, %v1895
    %v1910 = vadd.f32 %v1888, %v1895
    %v1911 = vadd.f32 %v1889, %v1895
    %v1912 = vadd.f32 %v1890, %v1895
    %vm1913 = vcmp.ge.f32.partialorder %v1897, 0.0
    %vm1914 = vcmp.ge.f32.partialorder %v1898, 0.0
    %vm1915 = vcmp.ge.f32.partialorder %v1899, 0.0
    %vm1916 = vcmp.ge.f32.partialorder %v1900, 0.0
    %vm1917 = vcmp.ge.f32.partialorder %v1901, 0.0
    %vm1918 = vcmp.ge.f32.partialorder %v1902, 0.0
    %vm1919 = vcmp.ge.f32.partialorder %v1903, 0.0
    %vm1920 = vcmp.ge.f32.partialorder %v1904, 0.0
    %vm1921 = vcmp.ge.f32.partialorder %v1905, 0.0
    %vm1922 = vcmp.ge.f32.partialorder %v1906, 0.0
    %vm1923 = vcmp.ge.f32.partialorder %v1907, 0.0
    %vm1924 = vcmp.ge.f32.partialorder %v1908, 0.0
    %vm1925 = vcmp.ge.f32.partialorder %v1909, 0.0
    %vm1926 = vcmp.ge.f32.partialorder %v1910, 0.0
    %vm1927 = vcmp.ge.f32.partialorder %v1911, 0.0
    %vm1928 = vcmp.ge.f32.partialorder %v1912, 0.0
    %v1929 = vstv %s53
    %v1930 = vmul.f32 %v1929, %v1897
    %v1931 = vmul.f32 %v1929, %v1898
    %v1932 = vmul.f32 %v1929, %v1899
    %v1933 = vmul.f32 %v1929, %v1900
    %v1934 = vmul.f32 %v1929, %v1901
    %v1935 = vmul.f32 %v1929, %v1902
    %v1936 = vmul.f32 %v1929, %v1903
    %v1937 = vmul.f32 %v1929, %v1904
    %v1938 = vmul.f32 %v1929, %v1905
    %v1939 = vmul.f32 %v1929, %v1906
    %v1940 = vmul.f32 %v1929, %v1907
    %v1941 = vmul.f32 %v1929, %v1908
    %v1942 = vmul.f32 %v1929, %v1909
    %v1943 = vmul.f32 %v1929, %v1910
    %v1944 = vmul.f32 %v1929, %v1911
    %v1945 = vmul.f32 %v1929, %v1912
    %v1946 = vsel %vm1913, %v1897, %v1930
    %v1947 = vsel %vm1914, %v1898, %v1931
    %v1948 = vsel %vm1915, %v1899, %v1932
    %v1949 = vsel %vm1916, %v1900, %v1933
    %v1950 = vsel %vm1917, %v1901, %v1934
    %v1951 = vsel %vm1918, %v1902, %v1935
    %v1952 = vsel %vm1919, %v1903, %v1936
    %v1953 = vsel %vm1920, %v1904, %v1937
    %v1954 = vsel %vm1921, %v1905, %v1938
    %v1955 = vsel %vm1922, %v1906, %v1939
    %v1956 = vsel %vm1923, %v1907, %v1940
    %v1957 = vsel %vm1924, %v1908, %v1941
    %v1958 = vsel %vm1925, %v1909, %v1942
    %v1959 = vsel %vm1926, %v1910, %v1943
    %v1960 = vsel %vm1927, %v1911, %v1944
    %v1961 = vsel %vm1928, %v1912, %v1945
    %1962 = vst [vmem:[%s67 + $0x8] sm:$0xff] %v1946
    %1963 = vst [vmem:[%s67 + $0x20] sm:$0xff] %v1947
    %1964 = vst [vmem:[%s67 + $0x38] sm:$0xff] %v1948
    %1965 = vst [vmem:[%s67 + $0x50] sm:$0xff] %v1949
    %1966 = vst [vmem:[%s67 + $0x68] sm:$0xff] %v1950
    %1967 = vst [vmem:[%s67 + $0x80] sm:$0xff] %v1951
    %1968 = vst [vmem:[%s67 + $0x98] sm:$0xff] %v1952
    %1969 = vst [vmem:[%s67 + $0xb0] sm:$0xff] %v1953
    %1970 = vst [vmem:[%s67 + $0xf8] sm:$0xff] %v1954
    %1971 = vst [vmem:[%s67 + $0x110] sm:$0xff] %v1955
    %1972 = vst [vmem:[%s67 + $0x128] sm:$0xff] %v1956
    %1973 = vst [vmem:[%s67 + $0x140] sm:$0xff] %v1957
    %1974 = vst [vmem:[%s67 + $0x158] sm:$0xff] %v1958
    %1975 = vst [vmem:[%s67 + $0x170] sm:$0xff] %v1959
    %1976 = vst [vmem:[%s67 + $0x188] sm:$0xff] %v1960
    %1977 = vst [vmem:[%s67 + $0x1a0] sm:$0xff] %v1961
    %v1994 = vrot.slane %v1946, 7
    %v1995 = vrot.slane %v1947, 7
    %v1996 = vrot.slane %v1948, 7
    %v1997 = vrot.slane %v1949, 7
    %v1998 = vrot.slane %v1950, 7
    %v1999 = vrot.slane %v1951, 7
    %v2000 = vrot.slane %v1952, 7
    %v2001 = vrot.slane %v1953, 7
    %v2002 = vrot.slane %v1954, 7
    %v2003 = vrot.slane %v1955, 7
    %v2004 = vrot.slane %v1956, 7
    %v2005 = vrot.slane %v1957, 7
    %v2006 = vrot.slane %v1958, 7
    %v2007 = vrot.slane %v1959, 7
    %v2008 = vrot.slane %v1960, 7
    %v2009 = vrot.slane %v1961, 7
    %2026 = vst [vmem:[%s67] sm:$0xfe] %v1994
    %2027 = vst [vmem:[%s67 + $0x18] sm:$0xfe] %v1995
    %2028 = vst [vmem:[%s67 + $0x30] sm:$0xfe] %v1996
    %2029 = vst [vmem:[%s67 + $0x48] sm:$0xfe] %v1997
    %2030 = vst [vmem:[%s67 + $0x60] sm:$0xfe] %v1998
    %2031 = vst [vmem:[%s67 + $0x78] sm:$0xfe] %v1999
    %2032 = vst [vmem:[%s67 + $0x90] sm:$0xfe] %v2000
    %2033 = vst [vmem:[%s67 + $0xa8] sm:$0xfe] %v2001
    %2034 = vst [vmem:[%s67 + $0xf0] sm:$0xfe] %v2002
    %2035 = vst [vmem:[%s67 + $0x108] sm:$0xfe] %v2003
    %2036 = vst [vmem:[%s67 + $0x120] sm:$0xfe] %v2004
    %2037 = vst [vmem:[%s67 + $0x138] sm:$0xfe] %v2005
    %2038 = vst [vmem:[%s67 + $0x150] sm:$0xfe] %v2006
    %2039 = vst [vmem:[%s67 + $0x168] sm:$0xfe] %v2007
    %2040 = vst [vmem:[%s67 + $0x180] sm:$0xfe] %v2008
    %2041 = vst [vmem:[%s67 + $0x198] sm:$0xfe] %v2009
    %v2042 = vrot.slane %v1946, 1
    %v2043 = vrot.slane %v1947, 1
    %v2044 = vrot.slane %v1948, 1
    %v2045 = vrot.slane %v1949, 1
    %v2046 = vrot.slane %v1950, 1
    %v2047 = vrot.slane %v1951, 1
    %v2048 = vrot.slane %v1952, 1
    %v2049 = vrot.slane %v1953, 1
    %v2050 = vrot.slane %v1954, 1
    %v2051 = vrot.slane %v1955, 1
    %v2052 = vrot.slane %v1956, 1
    %v2053 = vrot.slane %v1957, 1
    %v2054 = vrot.slane %v1958, 1
    %v2055 = vrot.slane %v1959, 1
    %v2056 = vrot.slane %v1960, 1
    %v2057 = vrot.slane %v1961, 1
    %2074 = vst [vmem:[%s67 + $0x10] sm:$0x7f] %v2042
    %2075 = vst [vmem:[%s67 + $0x28] sm:$0x7f] %v2043
    %2076 = vst [vmem:[%s67 + $0x40] sm:$0x7f] %v2044
    %2077 = vst [vmem:[%s67 + $0x58] sm:$0x7f] %v2045
    %2078 = vst [vmem:[%s67 + $0x70] sm:$0x7f] %v2046
    %2079 = vst [vmem:[%s67 + $0x88] sm:$0x7f] %v2047
    %2080 = vst [vmem:[%s67 + $0xa0] sm:$0x7f] %v2048
    %2081 = vst [vmem:[%s67 + $0xb8] sm:$0x7f] %v2049
    %2082 = vst [vmem:[%s67 + $0x100] sm:$0x7f] %v2050
    %2083 = vst [vmem:[%s67 + $0x118] sm:$0x7f] %v2051
    %2084 = vst [vmem:[%s67 + $0x130] sm:$0x7f] %v2052
    %2085 = vst [vmem:[%s67 + $0x148] sm:$0x7f] %v2053
    %2086 = vst [vmem:[%s67 + $0x160] sm:$0x7f] %v2054
    %2087 = vst [vmem:[%s67 + $0x178] sm:$0x7f] %v2055
    %2088 = vst [vmem:[%s67 + $0x190] sm:$0x7f] %v2056
    %2089 = vst [vmem:[%s67 + $0x1a8] sm:$0x7f] %v2057
    %v2090 = vld [vmem:[#allocation2] sm:$0xff]
    %v2091 = vld [vmem:[#allocation2 + $0x8] sm:$0xff]
    %v2092 = vld [vmem:[#allocation2 + $0x10] sm:$0xff]
    %v2093 = vld [vmem:[#allocation2 + $0x18] sm:$0xff]
    %v2094 = vld [vmem:[#allocation2 + $0x20] sm:$0xff]
    %v2095 = vld [vmem:[#allocation2 + $0x28] sm:$0xff]
    %v2096 = vld [vmem:[#allocation2 + $0x30] sm:$0xff]
    %v2097 = vld [vmem:[#allocation2 + $0x38] sm:$0xff]
    %v2098 = vld [vmem:[#allocation2 + $0x40] sm:$0xff]
    %v2099 = vld [vmem:[#allocation2 + $0x48] sm:$0xff]
    %v2100 = vld [vmem:[#allocation2 + $0x50] sm:$0xff]
    %v2101 = vld [vmem:[#allocation2 + $0x58] sm:$0xff]
    %v2102 = vld [vmem:[#allocation2 + $0x60] sm:$0xff]
    %v2103 = vld [vmem:[#allocation2 + $0x68] sm:$0xff]
    %v2104 = vld [vmem:[#allocation2 + $0x70] sm:$0xff]
    %v2105 = vld [vmem:[#allocation2 + $0x78] sm:$0xff]
    %v2106 = vld [vmem:[#allocation2 + $0x80] sm:$0xff]
    %v2107 = vld [vmem:[#allocation2 + $0x88] sm:$0xff]
    %v2108 = vld [vmem:[#allocation2 + $0x90] sm:$0xff]
    %v2109 = vld [vmem:[#allocation2 + $0x98] sm:$0xff]
    %v2110 = vld [vmem:[#allocation2 + $0xa0] sm:$0xff]
    %v2111 = vld [vmem:[#allocation2 + $0xa8] sm:$0xff]
    %v2112 = vld [vmem:[#allocation2 + $0xb0] sm:$0xff]
    %v2113 = vld [vmem:[#allocation2 + $0xb8] sm:$0xff]
    %v2114 = vld [vmem:[#allocation2 + $0xf0] sm:$0xff]
    %v2115 = vld [vmem:[#allocation2 + $0xf8] sm:$0xff]
    %v2116 = vld [vmem:[#allocation2 + $0x100] sm:$0xff]
    %v2117 = vld [vmem:[#allocation2 + $0x108] sm:$0xff]
    %v2118 = vld [vmem:[#allocation2 + $0x110] sm:$0xff]
    %v2119 = vld [vmem:[#allocation2 + $0x118] sm:$0xff]
    %v2120 = vld [vmem:[#allocation2 + $0x120] sm:$0xff]
    %v2121 = vld [vmem:[#allocation2 + $0x128] sm:$0xff]
    %v2122 = vld [vmem:[#allocation2 + $0x130] sm:$0xff]
    %v2123 = vld [vmem:[#allocation2 + $0x138] sm:$0xff]
    %v2124 = vld [vmem:[#allocation2 + $0x140] sm:$0xff]
    %v2125 = vld [vmem:[#allocation2 + $0x148] sm:$0xff]
    %v2126 = vld [vmem:[#allocation2 + $0x150] sm:$0xff]
    %v2127 = vld [vmem:[#allocation2 + $0x158] sm:$0xff]
    %v2128 = vld [vmem:[#allocation2 + $0x160] sm:$0xff]
    %v2129 = vld [vmem:[#allocation2 + $0x168] sm:$0xff]
    %v2130 = vld [vmem:[#allocation2 + $0x170] sm:$0xff]
    %v2131 = vld [vmem:[#allocation2 + $0x178] sm:$0xff]
    %v2132 = vld [vmem:[#allocation2 + $0x180] sm:$0xff]
    %v2133 = vld [vmem:[#allocation2 + $0x188] sm:$0xff]
    %v2134 = vld [vmem:[#allocation2 + $0x190] sm:$0xff]
    %v2135 = vld [vmem:[#allocation2 + $0x198] sm:$0xff]
    %v2136 = vld [vmem:[#allocation2 + $0x1a0] sm:$0xff]
    %v2137 = vld [vmem:[#allocation2 + $0x1a8] sm:$0xff]
    %v2138 = vpack.c.bf16 %v2093, %v2090
    %v2139 = vpack.c.bf16 %v2094, %v2091
    %v2140 = vpack.c.bf16 %v2095, %v2092
    %v2141 = vpack.c.bf16 %v2099, %v2096
    %v2142 = vpack.c.bf16 %v2100, %v2097
    %v2143 = vpack.c.bf16 %v2101, %v2098
    %v2144 = vpack.c.bf16 %v2105, %v2102
    %v2145 = vpack.c.bf16 %v2106, %v2103
    %v2146 = vpack.c.bf16 %v2107, %v2104
    %v2147 = vpack.c.bf16 %v2111, %v2108
    %v2148 = vpack.c.bf16 %v2112, %v2109
    %v2149 = vpack.c.bf16 %v2113, %v2110
    %v2150 = vpack.c.bf16 %v2117, %v2114
    %v2151 = vpack.c.bf16 %v2118, %v2115
    %v2152 = vpack.c.bf16 %v2119, %v2116
    %v2153 = vpack.c.bf16 %v2123, %v2120
    %v2154 = vpack.c.bf16 %v2124, %v2121
    %v2155 = vpack.c.bf16 %v2125, %v2122
    %v2156 = vpack.c.bf16 %v2129, %v2126
    %v2157 = vpack.c.bf16 %v2130, %v2127
    %v2158 = vpack.c.bf16 %v2131, %v2128
    %v2159 = vpack.c.bf16 %v2135, %v2132
    %v2160 = vpack.c.bf16 %v2136, %v2133
    %v2161 = vpack.c.bf16 %v2137, %v2134
    %v2162 = vld [vmem:[#allocation8] sm:$0xf]
    %v2163 = vld [vmem:[#allocation8 + $0x4] sm:$0xf]
    %v2164 = vld [vmem:[#allocation8 + $0x8] sm:$0xf]
    %v2165 = vld [vmem:[#allocation8 + $0xc] sm:$0xf]
    %v2166 = vld [vmem:[#allocation8 + $0x10] sm:$0xf]
    %v2167 = vld [vmem:[#allocation8 + $0x14] sm:$0xf]
    %v2168 = vld [vmem:[#allocation8 + $0x18] sm:$0xf]
    %v2169 = vld [vmem:[#allocation8 + $0x1c] sm:$0xf]
    %v2170 = vld [vmem:[#allocation8 + $0x20] sm:$0xf]
    %v2171 = vld [vmem:[#allocation8 + $0x24] sm:$0xf]
    %v2172 = vld [vmem:[#allocation8 + $0x28] sm:$0xf]
    %v2173 = vld [vmem:[#allocation8 + $0x2c] sm:$0xf]
    %v2174 = vld [vmem:[#allocation8 + $0x30] sm:$0xf]
    %v2175 = vld [vmem:[#allocation8 + $0x34] sm:$0xf]
    %v2176 = vld [vmem:[#allocation8 + $0x38] sm:$0xf]
    %v2177 = vld [vmem:[#allocation8 + $0x3c] sm:$0xf]
    %v2178 = vld [vmem:[#allocation8 + $0x40] sm:$0xf]
    %v2179 = vld [vmem:[#allocation8 + $0x44] sm:$0xf]
    %v2180 = vld [vmem:[#allocation8 + $0x48] sm:$0xf]
    %v2181 = vld [vmem:[#allocation8 + $0x4c] sm:$0xf]
    %v2182 = vld [vmem:[#allocation8 + $0x50] sm:$0xf]
    %v2183 = vld [vmem:[#allocation8 + $0x54] sm:$0xf]
    %v2184 = vld [vmem:[#allocation8 + $0x58] sm:$0xf]
    %v2185 = vld [vmem:[#allocation8 + $0x5c] sm:$0xf]
    %v2186 = vld [vmem:[#allocation8 + $0x60] sm:$0xf]
    %v2187 = vld [vmem:[#allocation8 + $0x64] sm:$0xf]
    %v2188 = vld [vmem:[#allocation8 + $0x68] sm:$0xf]
    %v2189 = vld [vmem:[#allocation8 + $0x6c] sm:$0xf]
    %v2190 = vld [vmem:[#allocation8 + $0x70] sm:$0xf]
    %v2191 = vld [vmem:[#allocation8 + $0x74] sm:$0xf]
    %v2192 = vld [vmem:[#allocation8 + $0x78] sm:$0xf]
    %v2193 = vld [vmem:[#allocation8 + $0x7c] sm:$0xf]
    %v2194 = vld [vmem:[#allocation8 + $0x80] sm:$0xf]
    %v2195 = vld [vmem:[#allocation8 + $0x84] sm:$0xf]
    %v2196 = vld [vmem:[#allocation8 + $0x88] sm:$0xf]
    %v2197 = vld [vmem:[#allocation8 + $0x8c] sm:$0xf]
    %v2198 = vld [vmem:[#allocation8 + $0x90] sm:$0xf]
    %v2199 = vld [vmem:[#allocation8 + $0x94] sm:$0xf]
    %v2200 = vld [vmem:[#allocation8 + $0x98] sm:$0xf]
    %v2201 = vld [vmem:[#allocation8 + $0x9c] sm:$0xf]
    %v2202 = vld [vmem:[#allocation8 + $0xa0] sm:$0xf]
    %v2203 = vld [vmem:[#allocation8 + $0xa4] sm:$0xf]
    %v2204 = vld [vmem:[#allocation8 + $0xa8] sm:$0xf]
    %v2205 = vld [vmem:[#allocation8 + $0xac] sm:$0xf]
    %v2206 = vld [vmem:[#allocation8 + $0xb0] sm:$0xf]
    %v2207 = vld [vmem:[#allocation8 + $0xb4] sm:$0xf]
    %v2208 = vld [vmem:[#allocation8 + $0xb8] sm:$0xf]
    %v2209 = vld [vmem:[#allocation8 + $0xbc] sm:$0xf]
    %v2210 = vld [vmem:[%s67] sm:$0xff]
    %v2211 = vld [vmem:[%s67 + $0x8] sm:$0xff]
    %v2212 = vld [vmem:[%s67 + $0x10] sm:$0xff]
    %v2213 = vld [vmem:[%s67 + $0x18] sm:$0xff]
    %v2214 = vld [vmem:[%s67 + $0x20] sm:$0xff]
    %v2215 = vld [vmem:[%s67 + $0x28] sm:$0xff]
    %v2216 = vld [vmem:[%s67 + $0x30] sm:$0xff]
    %v2217 = vld [vmem:[%s67 + $0x38] sm:$0xff]
    %v2218 = vld [vmem:[%s67 + $0x40] sm:$0xff]
    %v2219 = vld [vmem:[%s67 + $0x48] sm:$0xff]
    %v2220 = vld [vmem:[%s67 + $0x50] sm:$0xff]
    %v2221 = vld [vmem:[%s67 + $0x58] sm:$0xff]
    %v2222 = vld [vmem:[%s67 + $0x60] sm:$0xff]
    %v2223 = vld [vmem:[%s67 + $0x68] sm:$0xff]
    %v2224 = vld [vmem:[%s67 + $0x70] sm:$0xff]
    %v2225 = vld [vmem:[%s67 + $0x78] sm:$0xff]
    %v2226 = vld [vmem:[%s67 + $0x80] sm:$0xff]
    %v2227 = vld [vmem:[%s67 + $0x88] sm:$0xff]
    %v2228 = vld [vmem:[%s67 + $0x90] sm:$0xff]
    %v2229 = vld [vmem:[%s67 + $0x98] sm:$0xff]
    %v2230 = vld [vmem:[%s67 + $0xa0] sm:$0xff]
    %v2231 = vld [vmem:[%s67 + $0xa8] sm:$0xff]
    %v2232 = vld [vmem:[%s67 + $0xb0] sm:$0xff]
    %v2233 = vld [vmem:[%s67 + $0xb8] sm:$0xff]
    %v2234 = vld [vmem:[%s67 + $0xf0] sm:$0xff]
    %v2235 = vld [vmem:[%s67 + $0xf8] sm:$0xff]
    %v2236 = vld [vmem:[%s67 + $0x100] sm:$0xff]
    %v2237 = vld [vmem:[%s67 + $0x108] sm:$0xff]
    %v2238 = vld [vmem:[%s67 + $0x110] sm:$0xff]
    %v2239 = vld [vmem:[%s67 + $0x118] sm:$0xff]
    %v2240 = vld [vmem:[%s67 + $0x120] sm:$0xff]
    %v2241 = vld [vmem:[%s67 + $0x128] sm:$0xff]
    %v2242 = vld [vmem:[%s67 + $0x130] sm:$0xff]
    %v2243 = vld [vmem:[%s67 + $0x138] sm:$0xff]
    %v2244 = vld [vmem:[%s67 + $0x140] sm:$0xff]
    %v2245 = vld [vmem:[%s67 + $0x148] sm:$0xff]
    %v2246 = vld [vmem:[%s67 + $0x150] sm:$0xff]
    %v2247 = vld [vmem:[%s67 + $0x158] sm:$0xff]
    %v2248 = vld [vmem:[%s67 + $0x160] sm:$0xff]
    %v2249 = vld [vmem:[%s67 + $0x168] sm:$0xff]
    %v2250 = vld [vmem:[%s67 + $0x170] sm:$0xff]
    %v2251 = vld [vmem:[%s67 + $0x178] sm:$0xff]
    %v2252 = vld [vmem:[%s67 + $0x180] sm:$0xff]
    %v2253 = vld [vmem:[%s67 + $0x188] sm:$0xff]
    %v2254 = vld [vmem:[%s67 + $0x190] sm:$0xff]
    %v2255 = vld [vmem:[%s67 + $0x198] sm:$0xff]
    %v2256 = vld [vmem:[%s67 + $0x1a0] sm:$0xff]
    %v2257 = vld [vmem:[%s67 + $0x1a8] sm:$0xff]
    %v2258 = vpack.c.bf16 %v2213, %v2210
    %v2259 = vpack.c.bf16 %v2214, %v2211
    %v2260 = vpack.c.bf16 %v2215, %v2212
    %v2261 = vpack.c.bf16 %v2219, %v2216
    %v2262 = vpack.c.bf16 %v2220, %v2217
    %v2263 = vpack.c.bf16 %v2221, %v2218
    %v2264 = vpack.c.bf16 %v2225, %v2222
    %v2265 = vpack.c.bf16 %v2226, %v2223
    %v2266 = vpack.c.bf16 %v2227, %v2224
    %v2267 = vpack.c.bf16 %v2231, %v2228
    %v2268 = vpack.c.bf16 %v2232, %v2229
    %v2269 = vpack.c.bf16 %v2233, %v2230
    %v2270 = vpack.c.bf16 %v2237, %v2234
    %v2271 = vpack.c.bf16 %v2238, %v2235
    %v2272 = vpack.c.bf16 %v2239, %v2236
    %v2273 = vpack.c.bf16 %v2243, %v2240
    %v2274 = vpack.c.bf16 %v2244, %v2241
    %v2275 = vpack.c.bf16 %v2245, %v2242
    %v2276 = vpack.c.bf16 %v2249, %v2246
    %v2277 = vpack.c.bf16 %v2250, %v2247
    %v2278 = vpack.c.bf16 %v2251, %v2248
    %v2279 = vpack.c.bf16 %v2255, %v2252
    %v2280 = vpack.c.bf16 %v2256, %v2253
    %v2281 = vpack.c.bf16 %v2257, %v2254
    %v2282 = vld [vmem:[%s468] sm:$0xf]
    %v2283 = vld [vmem:[%s468 + $0x4] sm:$0xf]
    %v2284 = vld [vmem:[%s468 + $0x8] sm:$0xf]
    %v2285 = vld [vmem:[%s468 + $0xc] sm:$0xf]
    %v2286 = vld [vmem:[%s468 + $0x10] sm:$0xf]
    %v2287 = vld [vmem:[%s468 + $0x14] sm:$0xf]
    %v2288 = vld [vmem:[%s468 + $0x18] sm:$0xf]
    %v2289 = vld [vmem:[%s468 + $0x1c] sm:$0xf]
    %v2290 = vld [vmem:[%s468 + $0x20] sm:$0xf]
    %v2291 = vld [vmem:[%s468 + $0x24] sm:$0xf]
    %v2292 = vld [vmem:[%s468 + $0x28] sm:$0xf]
    %v2293 = vld [vmem:[%s468 + $0x2c] sm:$0xf]
    %v2294 = vld [vmem:[%s468 + $0x30] sm:$0xf]
    %v2295 = vld [vmem:[%s468 + $0x34] sm:$0xf]
    %v2296 = vld [vmem:[%s468 + $0x38] sm:$0xf]
    %v2297 = vld [vmem:[%s468 + $0x3c] sm:$0xf]
    %v2298 = vld [vmem:[%s468 + $0x40] sm:$0xf]
    %v2299 = vld [vmem:[%s468 + $0x44] sm:$0xf]
    %v2300 = vld [vmem:[%s468 + $0x48] sm:$0xf]
    %v2301 = vld [vmem:[%s468 + $0x4c] sm:$0xf]
    %v2302 = vld [vmem:[%s468 + $0x50] sm:$0xf]
    %v2303 = vld [vmem:[%s468 + $0x54] sm:$0xf]
    %v2304 = vld [vmem:[%s468 + $0x58] sm:$0xf]
    %v2305 = vld [vmem:[%s468 + $0x5c] sm:$0xf]
    %v2306 = vld [vmem:[%s468 + $0x60] sm:$0xf]
    %v2307 = vld [vmem:[%s468 + $0x64] sm:$0xf]
    %v2308 = vld [vmem:[%s468 + $0x68] sm:$0xf]
    %v2309 = vld [vmem:[%s468 + $0x6c] sm:$0xf]
    %v2310 = vld [vmem:[%s468 + $0x70] sm:$0xf]
    %v2311 = vld [vmem:[%s468 + $0x74] sm:$0xf]
    %v2312 = vld [vmem:[%s468 + $0x78] sm:$0xf]
    %v2313 = vld [vmem:[%s468 + $0x7c] sm:$0xf]
    %v2314 = vld [vmem:[%s468 + $0x80] sm:$0xf]
    %v2315 = vld [vmem:[%s468 + $0x84] sm:$0xf]
    %v2316 = vld [vmem:[%s468 + $0x88] sm:$0xf]
    %v2317 = vld [vmem:[%s468 + $0x8c] sm:$0xf]
    %v2318 = vld [vmem:[%s468 + $0x90] sm:$0xf]
    %v2319 = vld [vmem:[%s468 + $0x94] sm:$0xf]
    %v2320 = vld [vmem:[%s468 + $0x98] sm:$0xf]
    %v2321 = vld [vmem:[%s468 + $0x9c] sm:$0xf]
    %v2322 = vld [vmem:[%s468 + $0xa0] sm:$0xf]
    %v2323 = vld [vmem:[%s468 + $0xa4] sm:$0xf]
    %v2324 = vld [vmem:[%s468 + $0xa8] sm:$0xf]
    %v2325 = vld [vmem:[%s468 + $0xac] sm:$0xf]
    %v2326 = vld [vmem:[%s468 + $0xb0] sm:$0xf]
    %v2327 = vld [vmem:[%s468 + $0xb4] sm:$0xf]
    %v2328 = vld [vmem:[%s468 + $0xb8] sm:$0xf]
    %v2329 = vld [vmem:[%s468 + $0xbc] sm:$0xf]
    %v2378 = vunpack.c.l.b16 %v2282
    %v2379 = vunpack.c.l.b16 %v2283
    %v2380 = vunpack.c.l.b16 %v2284
    %v2381 = vunpack.c.l.b16 %v2285
    %v2382 = vunpack.c.l.b16 %v2286
    %v2383 = vunpack.c.l.b16 %v2287
    %v2384 = vunpack.c.l.b16 %v2288
    %v2385 = vunpack.c.l.b16 %v2289
    %v2386 = vunpack.c.l.b16 %v2290
    %v2387 = vunpack.c.l.b16 %v2291
    %v2388 = vunpack.c.l.b16 %v2292
    %v2389 = vunpack.c.l.b16 %v2293
    %v2390 = vunpack.c.l.b16 %v2294
    %v2391 = vunpack.c.l.b16 %v2295
    %v2392 = vunpack.c.l.b16 %v2296
    %v2393 = vunpack.c.l.b16 %v2297
    %v2394 = vunpack.c.l.b16 %v2298
    %v2395 = vunpack.c.l.b16 %v2299
    %v2396 = vunpack.c.l.b16 %v2300
    %v2397 = vunpack.c.l.b16 %v2301
    %v2398 = vunpack.c.l.b16 %v2302
    %v2399 = vunpack.c.l.b16 %v2303
    %v2400 = vunpack.c.l.b16 %v2304
    %v2401 = vunpack.c.l.b16 %v2305
    %v2402 = vunpack.c.l.b16 %v2306
    %v2403 = vunpack.c.l.b16 %v2307
    %v2404 = vunpack.c.l.b16 %v2308
    %v2405 = vunpack.c.l.b16 %v2309
    %v2406 = vunpack.c.l.b16 %v2310
    %v2407 = vunpack.c.l.b16 %v2311
    %v2408 = vunpack.c.l.b16 %v2312
    %v2409 = vunpack.c.l.b16 %v2313
    %v2410 = vunpack.c.l.b16 %v2314
    %v2411 = vunpack.c.l.b16 %v2315
    %v2412 = vunpack.c.l.b16 %v2316
    %v2413 = vunpack.c.l.b16 %v2317
    %v2414 = vunpack.c.l.b16 %v2318
    %v2415 = vunpack.c.l.b16 %v2319
    %v2416 = vunpack.c.l.b16 %v2320
    %v2417 = vunpack.c.l.b16 %v2321
    %v2418 = vunpack.c.l.b16 %v2322
    %v2419 = vunpack.c.l.b16 %v2323
    %v2420 = vunpack.c.l.b16 %v2324
    %v2421 = vunpack.c.l.b16 %v2325
    %v2422 = vunpack.c.l.b16 %v2326
    %v2423 = vunpack.c.l.b16 %v2327
    %v2424 = vunpack.c.l.b16 %v2328
    %v2425 = vunpack.c.l.b16 %v2329
    %v2426 = vpack.c.b16 %v2379, %v2378
    %v2427 = vpack.c.b16 %v2381, %v2380
    %v2428 = vpack.c.b16 %v2383, %v2382
    %v2429 = vpack.c.b16 %v2385, %v2384
    %v2430 = vpack.c.b16 %v2387, %v2386
    %v2431 = vpack.c.b16 %v2389, %v2388
    %v2432 = vpack.c.b16 %v2391, %v2390
    %v2433 = vpack.c.b16 %v2393, %v2392
    %v2434 = vpack.c.b16 %v2395, %v2394
    %v2435 = vpack.c.b16 %v2397, %v2396
    %v2436 = vpack.c.b16 %v2399, %v2398
    %v2437 = vpack.c.b16 %v2401, %v2400
    %v2438 = vpack.c.b16 %v2403, %v2402
    %v2439 = vpack.c.b16 %v2405, %v2404
    %v2440 = vpack.c.b16 %v2407, %v2406
    %v2441 = vpack.c.b16 %v2409, %v2408
    %v2442 = vpack.c.b16 %v2411, %v2410
    %v2443 = vpack.c.b16 %v2413, %v2412
    %v2444 = vpack.c.b16 %v2415, %v2414
    %v2445 = vpack.c.b16 %v2417, %v2416
    %v2446 = vpack.c.b16 %v2419, %v2418
    %v2447 = vpack.c.b16 %v2421, %v2420
    %v2448 = vpack.c.b16 %v2423, %v2422
    %v2449 = vpack.c.b16 %v2425, %v2424
    %2474 = vmatprep.subr.bf16.mxu0 0
    %2475 = vmatpush1.bf16.msra.mxu0 %v2426
    %2476 = vmatprep.subr.bf16.mxu0 0
    %2477 = vmatpush1.bf16.msra.mxu0 %v2427
    %2478 = vmatprep.subr.bf16.mxu0 0
    %2479 = vmatpush1.bf16.msra.mxu0 %v2428
    %2480 = vmatprep.subr.bf16.mxu0 0
    %2481 = vmatpush1.bf16.msra.mxu0 %v2429
    %2482 = vmatprep.subr.bf16.mxu0 0
    %2483 = vmatpush1.bf16.msra.mxu0 %v2430
    %2484 = vmatprep.subr.bf16.mxu0 0
    %2485 = vmatpush1.bf16.msra.mxu0 %v2431
    %2486 = vmatprep.subr.bf16.mxu0 0
    %2487 = vmatpush1.bf16.msra.mxu0 %v2432
    %2488 = vmatprep.subr.bf16.mxu0 0
    %2489 = vmatpush1.bf16.msra.mxu0 %v2433
    %2490 = vmatprep.subr.bf16.mxu0 0
    %2491 = vmatpush1.bf16.msra.mxu0 %v2434
    %2492 = vmatprep.subr.bf16.mxu0 0
    %2493 = vmatpush1.bf16.msra.mxu0 %v2435
    %2494 = vmatprep.subr.bf16.mxu0 0
    %2495 = vmatpush1.bf16.msra.mxu0 %v2436
    %2496 = vmatprep.subr.bf16.mxu0 0
    %2497 = vmatpush1.bf16.msra.mxu0 %v2437
    %2498 = vmatprep.subr.bf16.mxu0 0
    %2499 = vmatpush1.bf16.msra.mxu0 %v2438
    %2500 = vmatprep.subr.bf16.mxu0 0
    %2501 = vmatpush1.bf16.msra.mxu0 %v2439
    %2502 = vmatprep.subr.bf16.mxu0 0
    %2503 = vmatpush1.bf16.msra.mxu0 %v2440
    %2504 = vmatprep.subr.bf16.mxu0 0
    %2505 = vmatpush1.bf16.msra.mxu0 %v2441
    %2506 = vmatprep.mubr.bf16.mxu0 %v2259
    %2507 = vmatmul.mubr.bf16.gmra.mrb[0].mxu0 %v2258
    %v2508 = vpop.f32.mrb[0].mxu0
    %v2509 = vadd.f32 0.0, %v2508
    %v2510 = vpop.f32.mrb[0].mxu0
    %v2511 = vpop.f32.mrb[0].mxu0
    %v2512 = vadd.f32 0.0, %v2511
    %v2513 = vpop.f32.mrb[0].mxu0
    %2514 = vmatprep.mubr.bf16.mxu0 %v2262
    %2515 = vmatmul.mubr.bf16.gmra.mrb[0].mxu0 %v2261
    %v2516 = vpop.f32.mrb[0].mxu0
    %v2517 = vadd.f32 0.0, %v2516
    %v2518 = vpop.f32.mrb[0].mxu0
    %v2519 = vpop.f32.mrb[0].mxu0
    %v2520 = vadd.f32 0.0, %v2519
    %v2521 = vpop.f32.mrb[0].mxu0
    %2522 = vmatprep.mubr.bf16.mxu0 %v2265
    %2523 = vmatmul.mubr.bf16.gmra.mrb[0].mxu0 %v2264
    %v2524 = vpop.f32.mrb[0].mxu0
    %v2525 = vadd.f32 0.0, %v2524
    %v2526 = vpop.f32.mrb[0].mxu0
    %v2527 = vpop.f32.mrb[0].mxu0
    %v2528 = vadd.f32 0.0, %v2527
    %v2529 = vpop.f32.mrb[0].mxu0
    %2530 = vmatprep.mubr.bf16.mxu0 %v2268
    %2531 = vmatmul.mubr.bf16.gmra.mrb[0].mxu0 %v2267
    %v2532 = vpop.f32.mrb[0].mxu0
    %v2533 = vadd.f32 0.0, %v2532
    %v2534 = vpop.f32.mrb[0].mxu0
    %v2535 = vpop.f32.mrb[0].mxu0
    %v2536 = vadd.f32 0.0, %v2535
    %v2537 = vpop.f32.mrb[0].mxu0
    %2538 = vmatprep.mubr.bf16.mxu0 %v2271
    %2539 = vmatmul.mubr.bf16.gmra.mrb[0].mxu0 %v2270
    %v2540 = vpop.f32.mrb[0].mxu0
    %v2541 = vadd.f32 0.0, %v2540
    %v2542 = vpop.f32.mrb[0].mxu0
    %v2543 = vpop.f32.mrb[0].mxu0
    %v2544 = vadd.f32 0.0, %v2543
    %v2545 = vpop.f32.mrb[0].mxu0
    %2546 = vmatprep.mubr.bf16.mxu0 %v2274
    %2547 = vmatmul.mubr.bf16.gmra.mrb[0].mxu0 %v2273
    %v2548 = vpop.f32.mrb[0].mxu0
    %v2549 = vadd.f32 0.0, %v2548
    %v2550 = vpop.f32.mrb[0].mxu0
    %v2551 = vpop.f32.mrb[0].mxu0
    %v2552 = vadd.f32 0.0, %v2551
    %v2553 = vpop.f32.mrb[0].mxu0
    %2554 = vmatprep.mubr.bf16.mxu0 %v2277
    %2555 = vmatmul.mubr.bf16.gmra.mrb[0].mxu0 %v2276
    %v2556 = vpop.f32.mrb[0].mxu0
    %v2557 = vadd.f32 0.0, %v2556
    %v2558 = vpop.f32.mrb[0].mxu0
    %v2559 = vpop.f32.mrb[0].mxu0
    %v2560 = vadd.f32 0.0, %v2559
    %v2561 = vpop.f32.mrb[0].mxu0
    %2562 = vmatprep.mubr.bf16.mxu0 %v2280
    %2563 = vmatmul.mubr.bf16.gmra.mrb[0].mxu0 %v2279
    %v2564 = vpop.f32.mrb[0].mxu0
    %v2565 = vadd.f32 0.0, %v2564
    %v2566 = vpop.f32.mrb[0].mxu0
    %v2567 = vpop.f32.mrb[0].mxu0
    %v2568 = vadd.f32 0.0, %v2567
    %v2569 = vpop.f32.mrb[0].mxu0
    %2570 = vdwg.mxu0
    %2571 = vmatprep.subr.bf16.mxu0 0
    %2572 = vmatpush1.bf16.msra.mxu0 %v2442
    %2573 = vmatprep.subr.bf16.mxu0 0
    %2574 = vmatpush1.bf16.msra.mxu0 %v2443
    %2575 = vmatprep.subr.bf16.mxu0 0
    %2576 = vmatpush1.bf16.msra.mxu0 %v2444
    %2577 = vmatprep.subr.bf16.mxu0 0
    %2578 = vmatpush1.bf16.msra.mxu0 %v2445
    %2579 = vmatprep.subr.bf16.mxu0 0
    %2580 = vmatpush1.bf16.msra.mxu0 %v2446
    %2581 = vmatprep.subr.bf16.mxu0 0
    %2582 = vmatpush1.bf16.msra.mxu0 %v2447
    %2583 = vmatprep.subr.bf16.mxu0 0
    %2584 = vmatpush1.bf16.msra.mxu0 %v2448
    %2585 = vmatprep.subr.bf16.mxu0 0
    %2586 = vmatpush1.bf16.msra.mxu0 %v2449
    %2587 = vmatprep.subr.bf16.mxu0 0
    %2588 = vmatpush1.bf16.msra.mxu0 0
    %2589 = vmatprep.subr.bf16.mxu0 0
    %2590 = vmatpush1.bf16.msra.mxu0 0
    %2591 = vmatprep.subr.bf16.mxu0 0
    %2592 = vmatpush1.bf16.msra.mxu0 0
    %2593 = vmatprep.subr.bf16.mxu0 0
    %2594 = vmatpush1.bf16.msra.mxu0 0
    %2595 = vmatprep.subr.bf16.mxu0 0
    %2596 = vmatpush1.bf16.msra.mxu0 0
    %2597 = vmatprep.subr.bf16.mxu0 0
    %2598 = vmatpush1.bf16.msra.mxu0 0
    %2599 = vmatprep.subr.bf16.mxu0 0
    %2600 = vmatpush1.bf16.msra.mxu0 0
    %2601 = vmatprep.subr.bf16.mxu0 0
    %2602 = vmatpush1.bf16.msra.mxu0 0
    %2603 = vmatprep.mubr.bf16.mxu0 0
    %2604 = vmatmul.mubr.bf16.gmra.mrb[0].mxu0 %v2260
    %v2605 = vpop.f32.mrb[0].mxu0
    %v2606 = vadd.f32 %v2509, %v2605
    %v2607 = vpop.f32.mrb[0].mxu0
    %v2608 = vpop.f32.mrb[0].mxu0
    %v2609 = vadd.f32 %v2512, %v2608
    %v2610 = vpop.f32.mrb[0].mxu0
    %2611 = vmatprep.mubr.bf16.mxu0 0
    %2612 = vmatmul.mubr.bf16.gmra.mrb[0].mxu0 %v2263
    %v2613 = vpop.f32.mrb[0].mxu0
    %v2614 = vadd.f32 %v2517, %v2613
    %v2615 = vpop.f32.mrb[0].mxu0
    %v2616 = vpop.f32.mrb[0].mxu0
    %v2617 = vadd.f32 %v2520, %v2616
    %v2618 = vpop.f32.mrb[0].mxu0
    %2619 = vmatprep.mubr.bf16.mxu0 0
    %2620 = vmatmul.mubr.bf16.gmra.mrb[0].mxu0 %v2266
    %v2621 = vpop.f32.mrb[0].mxu0
    %v2622 = vadd.f32 %v2525, %v2621
    %v2623 = vpop.f32.mrb[0].mxu0
    %v2624 = vpop.f32.mrb[0].mxu0
    %v2625 = vadd.f32 %v2528, %v2624
    %v2626 = vpop.f32.mrb[0].mxu0
    %2627 = vmatprep.mubr.bf16.mxu0 0
    %2628 = vmatmul.mubr.bf16.gmra.mrb[0].mxu0 %v2269
    %v2629 = vpop.f32.mrb[0].mxu0
    %v2630 = vadd.f32 %v2533, %v2629
    %v2631 = vpop.f32.mrb[0].mxu0
    %v2632 = vpop.f32.mrb[0].mxu0
    %v2633 = vadd.f32 %v2536, %v2632
    %v2634 = vpop.f32.mrb[0].mxu0
    %2635 = vmatprep.mubr.bf16.mxu0 0
    %2636 = vmatmul.mubr.bf16.gmra.mrb[0].mxu0 %v2272
    %v2637 = vpop.f32.mrb[0].mxu0
    %v2638 = vadd.f32 %v2541, %v2637
    %v2639 = vpop.f32.mrb[0].mxu0
    %v2640 = vpop.f32.mrb[0].mxu0
    %v2641 = vadd.f32 %v2544, %v2640
    %v2642 = vpop.f32.mrb[0].mxu0
    %2643 = vmatprep.mubr.bf16.mxu0 0
    %2644 = vmatmul.mubr.bf16.gmra.mrb[0].mxu0 %v2275
    %v2645 = vpop.f32.mrb[0].mxu0
    %v2646 = vadd.f32 %v2549, %v2645
    %v2647 = vpop.f32.mrb[0].mxu0
    %v2648 = vpop.f32.mrb[0].mxu0
    %v2649 = vadd.f32 %v2552, %v2648
    %v2650 = vpop.f32.mrb[0].mxu0
    %2651 = vmatprep.mubr.bf16.mxu0 0
    %2652 = vmatmul.mubr.bf16.gmra.mrb[0].mxu0 %v2278
    %v2653 = vpop.f32.mrb[0].mxu0
    %v2654 = vadd.f32 %v2557, %v2653
    %v2655 = vpop.f32.mrb[0].mxu0
    %v2656 = vpop.f32.mrb[0].mxu0
    %v2657 = vadd.f32 %v2560, %v2656
    %v2658 = vpop.f32.mrb[0].mxu0
    %2659 = vmatprep.mubr.bf16.mxu0 0
    %2660 = vmatmul.mubr.bf16.gmra.mrb[0].mxu0 %v2281
    %v2661 = vpop.f32.mrb[0].mxu0
    %v2662 = vadd.f32 %v2565, %v2661
    %v2663 = vpop.f32.mrb[0].mxu0
    %v2664 = vpop.f32.mrb[0].mxu0
    %v2665 = vadd.f32 %v2568, %v2664
    %v2666 = vpop.f32.mrb[0].mxu0
    %2667 = vdwg.mxu0
    %v2716 = vunpack.c.l.b16 %v2162
    %v2717 = vunpack.c.l.b16 %v2163
    %v2718 = vunpack.c.l.b16 %v2164
    %v2719 = vunpack.c.l.b16 %v2165
    %v2720 = vunpack.c.l.b16 %v2166
    %v2721 = vunpack.c.l.b16 %v2167
    %v2722 = vunpack.c.l.b16 %v2168
    %v2723 = vunpack.c.l.b16 %v2169
    %v2724 = vunpack.c.l.b16 %v2170
    %v2725 = vunpack.c.l.b16 %v2171
    %v2726 = vunpack.c.l.b16 %v2172
    %v2727 = vunpack.c.l.b16 %v2173
    %v2728 = vunpack.c.l.b16 %v2174
    %v2729 = vunpack.c.l.b16 %v2175
    %v2730 = vunpack.c.l.b16 %v2176
    %v2731 = vunpack.c.l.b16 %v2177
    %v2732 = vunpack.c.l.b16 %v2178
    %v2733 = vunpack.c.l.b16 %v2179
    %v2734 = vunpack.c.l.b16 %v2180
    %v2735 = vunpack.c.l.b16 %v2181
    %v2736 = vunpack.c.l.b16 %v2182
    %v2737 = vunpack.c.l.b16 %v2183
    %v2738 = vunpack.c.l.b16 %v2184
    %v2739 = vunpack.c.l.b16 %v2185
    %v2740 = vunpack.c.l.b16 %v2186
    %v2741 = vunpack.c.l.b16 %v2187
    %v2742 = vunpack.c.l.b16 %v2188
    %v2743 = vunpack.c.l.b16 %v2189
    %v2744 = vunpack.c.l.b16 %v2190
    %v2745 = vunpack.c.l.b16 %v2191
    %v2746 = vunpack.c.l.b16 %v2192
    %v2747 = vunpack.c.l.b16 %v2193
    %v2748 = vunpack.c.l.b16 %v2194
    %v2749 = vunpack.c.l.b16 %v2195
    %v2750 = vunpack.c.l.b16 %v2196
    %v2751 = vunpack.c.l.b16 %v2197
    %v2752 = vunpack.c.l.b16 %v2198
    %v2753 = vunpack.c.l.b16 %v2199
    %v2754 = vunpack.c.l.b16 %v2200
    %v2755 = vunpack.c.l.b16 %v2201
    %v2756 = vunpack.c.l.b16 %v2202
    %v2757 = vunpack.c.l.b16 %v2203
    %v2758 = vunpack.c.l.b16 %v2204
    %v2759 = vunpack.c.l.b16 %v2205
    %v2760 = vunpack.c.l.b16 %v2206
    %v2761 = vunpack.c.l.b16 %v2207
    %v2762 = vunpack.c.l.b16 %v2208
    %v2763 = vunpack.c.l.b16 %v2209
    %v2764 = vpack.c.b16 %v2717, %v2716
    %v2765 = vpack.c.b16 %v2719, %v2718
    %v2766 = vpack.c.b16 %v2721, %v2720
    %v2767 = vpack.c.b16 %v2723, %v2722
    %v2768 = vpack.c.b16 %v2725, %v2724
    %v2769 = vpack.c.b16 %v2727, %v2726
    %v2770 = vpack.c.b16 %v2729, %v2728
    %v2771 = vpack.c.b16 %v2731, %v2730
    %v2772 = vpack.c.b16 %v2733, %v2732
    %v2773 = vpack.c.b16 %v2735, %v2734
    %v2774 = vpack.c.b16 %v2737, %v2736
    %v2775 = vpack.c.b16 %v2739, %v2738
    %v2776 = vpack.c.b16 %v2741, %v2740
    %v2777 = vpack.c.b16 %v2743, %v2742
    %v2778 = vpack.c.b16 %v2745, %v2744
    %v2779 = vpack.c.b16 %v2747, %v2746
    %v2780 = vpack.c.b16 %v2749, %v2748
    %v2781 = vpack.c.b16 %v2751, %v2750
    %v2782 = vpack.c.b16 %v2753, %v2752
    %v2783 = vpack.c.b16 %v2755, %v2754
    %v2784 = vpack.c.b16 %v2757, %v2756
    %v2785 = vpack.c.b16 %v2759, %v2758
    %v2786 = vpack.c.b16 %v2761, %v2760
    %v2787 = vpack.c.b16 %v2763, %v2762
    %2812 = vmatprep.subr.bf16.mxu0 0
    %2813 = vmatpush1.bf16.msra.mxu0 %v2764
    %2814 = vmatprep.subr.bf16.mxu0 0
    %2815 = vmatpush1.bf16.msra.mxu0 %v2765
    %2816 = vmatprep.subr.bf16.mxu0 0
    %2817 = vmatpush1.bf16.msra.mxu0 %v2766
    %2818 = vmatprep.subr.bf16.mxu0 0
    %2819 = vmatpush1.bf16.msra.mxu0 %v2767
    %2820 = vmatprep.subr.bf16.mxu0 0
    %2821 = vmatpush1.bf16.msra.mxu0 %v2768
    %2822 = vmatprep.subr.bf16.mxu0 0
    %2823 = vmatpush1.bf16.msra.mxu0 %v2769
    %2824 = vmatprep.subr.bf16.mxu0 0
    %2825 = vmatpush1.bf16.msra.mxu0 %v2770
    %2826 = vmatprep.subr.bf16.mxu0 0
    %2827 = vmatpush1.bf16.msra.mxu0 %v2771
    %2828 = vmatprep.subr.bf16.mxu0 0
    %2829 = vmatpush1.bf16.msra.mxu0 %v2772
    %2830 = vmatprep.subr.bf16.mxu0 0
    %2831 = vmatpush1.bf16.msra.mxu0 %v2773
    %2832 = vmatprep.subr.bf16.mxu0 0
    %2833 = vmatpush1.bf16.msra.mxu0 %v2774
    %2834 = vmatprep.subr.bf16.mxu0 0
    %2835 = vmatpush1.bf16.msra.mxu0 %v2775
    %2836 = vmatprep.subr.bf16.mxu0 0
    %2837 = vmatpush1.bf16.msra.mxu0 %v2776
    %2838 = vmatprep.subr.bf16.mxu0 0
    %2839 = vmatpush1.bf16.msra.mxu0 %v2777
    %2840 = vmatprep.subr.bf16.mxu0 0
    %2841 = vmatpush1.bf16.msra.mxu0 %v2778
    %2842 = vmatprep.subr.bf16.mxu0 0
    %2843 = vmatpush1.bf16.msra.mxu0 %v2779
    %2844 = vmatprep.mubr.bf16.mxu0 %v2139
    %2845 = vmatmul.mubr.bf16.gmra.mrb[0].mxu0 %v2138
    %v2846 = vpop.f32.mrb[0].mxu0
    %v2847 = vadd.f32 %v2606, %v2846
    %v2848 = vpop.f32.mrb[0].mxu0
    %v2849 = vpop.f32.mrb[0].mxu0
    %v2850 = vadd.f32 %v2609, %v2849
    %v2851 = vpop.f32.mrb[0].mxu0
    %2852 = vmatprep.mubr.bf16.mxu0 %v2142
    %2853 = vmatmul.mubr.bf16.gmra.mrb[0].mxu0 %v2141
    %v2854 = vpop.f32.mrb[0].mxu0
    %v2855 = vadd.f32 %v2614, %v2854
    %v2856 = vpop.f32.mrb[0].mxu0
    %v2857 = vpop.f32.mrb[0].mxu0
    %v2858 = vadd.f32 %v2617, %v2857
    %v2859 = vpop.f32.mrb[0].mxu0
    %2860 = vmatprep.mubr.bf16.mxu0 %v2145
    %2861 = vmatmul.mubr.bf16.gmra.mrb[0].mxu0 %v2144
    %v2862 = vpop.f32.mrb[0].mxu0
    %v2863 = vadd.f32 %v2622, %v2862
    %v2864 = vpop.f32.mrb[0].mxu0
    %v2865 = vpop.f32.mrb[0].mxu0
    %v2866 = vadd.f32 %v2625, %v2865
    %v2867 = vpop.f32.mrb[0].mxu0
    %2868 = vmatprep.mubr.bf16.mxu0 %v2148
    %2869 = vmatmul.mubr.bf16.gmra.mrb[0].mxu0 %v2147
    %v2870 = vpop.f32.mrb[0].mxu0
    %v2871 = vadd.f32 %v2630, %v2870
    %v2872 = vpop.f32.mrb[0].mxu0
    %v2873 = vpop.f32.mrb[0].mxu0
    %v2874 = vadd.f32 %v2633, %v2873
    %v2875 = vpop.f32.mrb[0].mxu0
    %2876 = vmatprep.mubr.bf16.mxu0 %v2151
    %2877 = vmatmul.mubr.bf16.gmra.mrb[0].mxu0 %v2150
    %v2878 = vpop.f32.mrb[0].mxu0
    %v2879 = vadd.f32 %v2638, %v2878
    %v2880 = vpop.f32.mrb[0].mxu0
    %v2881 = vpop.f32.mrb[0].mxu0
    %v2882 = vadd.f32 %v2641, %v2881
    %v2883 = vpop.f32.mrb[0].mxu0
    %2884 = vmatprep.mubr.bf16.mxu0 %v2154
    %2885 = vmatmul.mubr.bf16.gmra.mrb[0].mxu0 %v2153
    %v2886 = vpop.f32.mrb[0].mxu0
    %v2887 = vadd.f32 %v2646, %v2886
    %v2888 = vpop.f32.mrb[0].mxu0
    %v2889 = vpop.f32.mrb[0].mxu0
    %v2890 = vadd.f32 %v2649, %v2889
    %v2891 = vpop.f32.mrb[0].mxu0
    %2892 = vmatprep.mubr.bf16.mxu0 %v2157
    %2893 = vmatmul.mubr.bf16.gmra.mrb[0].mxu0 %v2156
    %v2894 = vpop.f32.mrb[0].mxu0
    %v2895 = vadd.f32 %v2654, %v2894
    %v2896 = vpop.f32.mrb[0].mxu0
    %v2897 = vpop.f32.mrb[0].mxu0
    %v2898 = vadd.f32 %v2657, %v2897
    %v2899 = vpop.f32.mrb[0].mxu0
    %2900 = vmatprep.mubr.bf16.mxu0 %v2160
    %2901 = vmatmul.mubr.bf16.gmra.mrb[0].mxu0 %v2159
    %v2902 = vpop.f32.mrb[0].mxu0
    %v2903 = vadd.f32 %v2662, %v2902
    %v2904 = vpop.f32.mrb[0].mxu0
    %v2905 = vpop.f32.mrb[0].mxu0
    %v2906 = vadd.f32 %v2665, %v2905
    %v2907 = vpop.f32.mrb[0].mxu0
    %2908 = vdwg.mxu0
    %2909 = vmatprep.subr.bf16.mxu0 0
    %2910 = vmatpush1.bf16.msra.mxu0 %v2780
    %2911 = vmatprep.subr.bf16.mxu0 0
    %2912 = vmatpush1.bf16.msra.mxu0 %v2781
    %2913 = vmatprep.subr.bf16.mxu0 0
    %2914 = vmatpush1.bf16.msra.mxu0 %v2782
    %2915 = vmatprep.subr.bf16.mxu0 0
    %2916 = vmatpush1.bf16.msra.mxu0 %v2783
    %2917 = vmatprep.subr.bf16.mxu0 0
    %2918 = vmatpush1.bf16.msra.mxu0 %v2784
    %2919 = vmatprep.subr.bf16.mxu0 0
    %2920 = vmatpush1.bf16.msra.mxu0 %v2785
    %2921 = vmatprep.subr.bf16.mxu0 0
    %2922 = vmatpush1.bf16.msra.mxu0 %v2786
    %2923 = vmatprep.subr.bf16.mxu0 0
    %2924 = vmatpush1.bf16.msra.mxu0 %v2787
    %2925 = vmatprep.subr.bf16.mxu0 0
    %2926 = vmatpush1.bf16.msra.mxu0 0
    %2927 = vmatprep.subr.bf16.mxu0 0
    %2928 = vmatpush1.bf16.msra.mxu0 0
    %2929 = vmatprep.subr.bf16.mxu0 0
    %2930 = vmatpush1.bf16.msra.mxu0 0
    %2931 = vmatprep.subr.bf16.mxu0 0
    %2932 = vmatpush1.bf16.msra.mxu0 0
    %2933 = vmatprep.subr.bf16.mxu0 0
    %2934 = vmatpush1.bf16.msra.mxu0 0
    %2935 = vmatprep.subr.bf16.mxu0 0
    %2936 = vmatpush1.bf16.msra.mxu0 0
    %2937 = vmatprep.subr.bf16.mxu0 0
    %2938 = vmatpush1.bf16.msra.mxu0 0
    %2939 = vmatprep.subr.bf16.mxu0 0
    %2940 = vmatpush1.bf16.msra.mxu0 0
    %2941 = vmatprep.mubr.bf16.mxu0 0
    %2942 = vmatmul.mubr.bf16.gmra.mrb[0].mxu0 %v2140
    %v2943 = vpop.f32.mrb[0].mxu0
    %v2944 = vadd.f32 %v2847, %v2943
    %v2945 = vpop.f32.mrb[0].mxu0
    %v2946 = vpop.f32.mrb[0].mxu0
    %v2947 = vadd.f32 %v2850, %v2946
    %v2948 = vpop.f32.mrb[0].mxu0
    %2949 = vmatprep.mubr.bf16.mxu0 0
    %2950 = vmatmul.mubr.bf16.gmra.mrb[0].mxu0 %v2143
    %v2951 = vpop.f32.mrb[0].mxu0
    %v2952 = vadd.f32 %v2855, %v2951
    %v2953 = vpop.f32.mrb[0].mxu0
    %v2954 = vpop.f32.mrb[0].mxu0
    %v2955 = vadd.f32 %v2858, %v2954
    %v2956 = vpop.f32.mrb[0].mxu0
    %2957 = vmatprep.mubr.bf16.mxu0 0
    %2958 = vmatmul.mubr.bf16.gmra.mrb[0].mxu0 %v2146
    %v2959 = vpop.f32.mrb[0].mxu0
    %v2960 = vadd.f32 %v2863, %v2959
    %v2961 = vpop.f32.mrb[0].mxu0
    %v2962 = vpop.f32.mrb[0].mxu0
    %v2963 = vadd.f32 %v2866, %v2962
    %v2964 = vpop.f32.mrb[0].mxu0
    %2965 = vmatprep.mubr.bf16.mxu0 0
    %2966 = vmatmul.mubr.bf16.gmra.mrb[0].mxu0 %v2149
    %v2967 = vpop.f32.mrb[0].mxu0
    %v2968 = vadd.f32 %v2871, %v2967
    %v2969 = vpop.f32.mrb[0].mxu0
    %v2970 = vpop.f32.mrb[0].mxu0
    %v2971 = vadd.f32 %v2874, %v2970
    %v2972 = vpop.f32.mrb[0].mxu0
    %2973 = vmatprep.mubr.bf16.mxu0 0
    %2974 = vmatmul.mubr.bf16.gmra.mrb[0].mxu0 %v2152
    %v2975 = vpop.f32.mrb[0].mxu0
    %v2976 = vadd.f32 %v2879, %v2975
    %v2977 = vpop.f32.mrb[0].mxu0
    %v2978 = vpop.f32.mrb[0].mxu0
    %v2979 = vadd.f32 %v2882, %v2978
    %v2980 = vpop.f32.mrb[0].mxu0
    %2981 = vmatprep.mubr.bf16.mxu0 0
    %2982 = vmatmul.mubr.bf16.gmra.mrb[0].mxu0 %v2155
    %v2983 = vpop.f32.mrb[0].mxu0
    %v2984 = vadd.f32 %v2887, %v2983
    %v2985 = vpop.f32.mrb[0].mxu0
    %v2986 = vpop.f32.mrb[0].mxu0
    %v2987 = vadd.f32 %v2890, %v2986
    %v2988 = vpop.f32.mrb[0].mxu0
    %2989 = vmatprep.mubr.bf16.mxu0 0
    %2990 = vmatmul.mubr.bf16.gmra.mrb[0].mxu0 %v2158
    %v2991 = vpop.f32.mrb[0].mxu0
    %v2992 = vadd.f32 %v2895, %v2991
    %v2993 = vpop.f32.mrb[0].mxu0
    %v2994 = vpop.f32.mrb[0].mxu0
    %v2995 = vadd.f32 %v2898, %v2994
    %v2996 = vpop.f32.mrb[0].mxu0
    %2997 = vmatprep.mubr.bf16.mxu0 0
    %2998 = vmatmul.mubr.bf16.gmra.mrb[0].mxu0 %v2161
    %v2999 = vpop.f32.mrb[0].mxu0
    %v3000 = vadd.f32 %v2903, %v2999
    %v3001 = vpop.f32.mrb[0].mxu0
    %v3002 = vpop.f32.mrb[0].mxu0
    %v3003 = vadd.f32 %v2906, %v3002
    %v3004 = vpop.f32.mrb[0].mxu0
    %3005 = vdwg.mxu0
    %v3006 = vld [vmem:[%s1193] sm:$0xff]
    %v3007 = vld [vmem:[%s1193 + $0x8] sm:$0xff]
    %v3008 = vld [vmem:[%s1193 + $0x10] sm:$0xff]
    %v3009 = vld [vmem:[%s1193 + $0x18] sm:$0xff]
    %v3010 = vld [vmem:[%s1193 + $0x20] sm:$0xff]
    %v3011 = vld [vmem:[%s1193 + $0x28] sm:$0xff]
    %v3012 = vld [vmem:[%s1193 + $0x30] sm:$0xff]
    %v3013 = vld [vmem:[%s1193 + $0x38] sm:$0xff]
    %v3014 = vld [vmem:[%s1193 + $0x40] sm:$0xff]
    %v3015 = vld [vmem:[%s1193 + $0x48] sm:$0xff]
    %v3016 = vld [vmem:[%s1193 + $0x50] sm:$0xff]
    %v3017 = vld [vmem:[%s1193 + $0x58] sm:$0xff]
    %v3018 = vld [vmem:[%s1193 + $0x60] sm:$0xff]
    %v3019 = vld [vmem:[%s1193 + $0x68] sm:$0xff]
    %v3020 = vld [vmem:[%s1193 + $0x70] sm:$0xff]
    %v3021 = vld [vmem:[%s1193 + $0x78] sm:$0xff]
    %v3022 = vld [vmem:[%s1193 + $0x80] sm:$0xff]
    %v3023 = vld [vmem:[%s1193 + $0x88] sm:$0xff]
    %v3024 = vld [vmem:[%s1193 + $0x90] sm:$0xff]
    %v3025 = vld [vmem:[%s1193 + $0x98] sm:$0xff]
    %v3026 = vld [vmem:[%s1193 + $0xa0] sm:$0xff]
    %v3027 = vld [vmem:[%s1193 + $0xa8] sm:$0xff]
    %v3028 = vld [vmem:[%s1193 + $0xb0] sm:$0xff]
    %v3029 = vld [vmem:[%s1193 + $0xb8] sm:$0xff]
    %v3030 = vld [vmem:[%s1193 + $0xf0] sm:$0xff]
    %v3031 = vld [vmem:[%s1193 + $0xf8] sm:$0xff]
    %v3032 = vld [vmem:[%s1193 + $0x100] sm:$0xff]
    %v3033 = vld [vmem:[%s1193 + $0x108] sm:$0xff]
    %v3034 = vld [vmem:[%s1193 + $0x110] sm:$0xff]
    %v3035 = vld [vmem:[%s1193 + $0x118] sm:$0xff]
    %v3036 = vld [vmem:[%s1193 + $0x120] sm:$0xff]
    %v3037 = vld [vmem:[%s1193 + $0x128] sm:$0xff]
    %v3038 = vld [vmem:[%s1193 + $0x130] sm:$0xff]
    %v3039 = vld [vmem:[%s1193 + $0x138] sm:$0xff]
    %v3040 = vld [vmem:[%s1193 + $0x140] sm:$0xff]
    %v3041 = vld [vmem:[%s1193 + $0x148] sm:$0xff]
    %v3042 = vld [vmem:[%s1193 + $0x150] sm:$0xff]
    %v3043 = vld [vmem:[%s1193 + $0x158] sm:$0xff]
    %v3044 = vld [vmem:[%s1193 + $0x160] sm:$0xff]
    %v3045 = vld [vmem:[%s1193 + $0x168] sm:$0xff]
    %v3046 = vld [vmem:[%s1193 + $0x170] sm:$0xff]
    %v3047 = vld [vmem:[%s1193 + $0x178] sm:$0xff]
    %v3048 = vld [vmem:[%s1193 + $0x180] sm:$0xff]
    %v3049 = vld [vmem:[%s1193 + $0x188] sm:$0xff]
    %v3050 = vld [vmem:[%s1193 + $0x190] sm:$0xff]
    %v3051 = vld [vmem:[%s1193 + $0x198] sm:$0xff]
    %v3052 = vld [vmem:[%s1193 + $0x1a0] sm:$0xff]
    %v3053 = vld [vmem:[%s1193 + $0x1a8] sm:$0xff]
    %v3054 = vpack.c.bf16 %v3009, %v3006
    %v3055 = vpack.c.bf16 %v3010, %v3007
    %v3056 = vpack.c.bf16 %v3011, %v3008
    %v3057 = vpack.c.bf16 %v3015, %v3012
    %v3058 = vpack.c.bf16 %v3016, %v3013
    %v3059 = vpack.c.bf16 %v3017, %v3014
    %v3060 = vpack.c.bf16 %v3021, %v3018
    %v3061 = vpack.c.bf16 %v3022, %v3019
    %v3062 = vpack.c.bf16 %v3023, %v3020
    %v3063 = vpack.c.bf16 %v3027, %v3024
    %v3064 = vpack.c.bf16 %v3028, %v3025
    %v3065 = vpack.c.bf16 %v3029, %v3026
    %v3066 = vpack.c.bf16 %v3033, %v3030
    %v3067 = vpack.c.bf16 %v3034, %v3031
    %v3068 = vpack.c.bf16 %v3035, %v3032
    %v3069 = vpack.c.bf16 %v3039, %v3036
    %v3070 = vpack.c.bf16 %v3040, %v3037
    %v3071 = vpack.c.bf16 %v3041, %v3038
    %v3072 = vpack.c.bf16 %v3045, %v3042
    %v3073 = vpack.c.bf16 %v3046, %v3043
    %v3074 = vpack.c.bf16 %v3047, %v3044
    %v3075 = vpack.c.bf16 %v3051, %v3048
    %v3076 = vpack.c.bf16 %v3052, %v3049
    %v3077 = vpack.c.bf16 %v3053, %v3050
    %v3078 = vld [vmem:[%s1266] sm:$0xf]
    %v3079 = vld [vmem:[%s1266 + $0x4] sm:$0xf]
    %v3080 = vld [vmem:[%s1266 + $0x8] sm:$0xf]
    %v3081 = vld [vmem:[%s1266 + $0xc] sm:$0xf]
    %v3082 = vld [vmem:[%s1266 + $0x10] sm:$0xf]
    %v3083 = vld [vmem:[%s1266 + $0x14] sm:$0xf]
    %v3084 = vld [vmem:[%s1266 + $0x18] sm:$0xf]
    %v3085 = vld [vmem:[%s1266 + $0x1c] sm:$0xf]
    %v3086 = vld [vmem:[%s1266 + $0x20] sm:$0xf]
    %v3087 = vld [vmem:[%s1266 + $0x24] sm:$0xf]
    %v3088 = vld [vmem:[%s1266 + $0x28] sm:$0xf]
    %v3089 = vld [vmem:[%s1266 + $0x2c] sm:$0xf]
    %v3090 = vld [vmem:[%s1266 + $0x30] sm:$0xf]
    %v3091 = vld [vmem:[%s1266 + $0x34] sm:$0xf]
    %v3092 = vld [vmem:[%s1266 + $0x38] sm:$0xf]
    %v3093 = vld [vmem:[%s1266 + $0x3c] sm:$0xf]
    %v3094 = vld [vmem:[%s1266 + $0x40] sm:$0xf]
    %v3095 = vld [vmem:[%s1266 + $0x44] sm:$0xf]
    %v3096 = vld [vmem:[%s1266 + $0x48] sm:$0xf]
    %v3097 = vld [vmem:[%s1266 + $0x4c] sm:$0xf]
    %v3098 = vld [vmem:[%s1266 + $0x50] sm:$0xf]
    %v3099 = vld [vmem:[%s1266 + $0x54] sm:$0xf]
    %v3100 = vld [vmem:[%s1266 + $0x58] sm:$0xf]
    %v3101 = vld [vmem:[%s1266 + $0x5c] sm:$0xf]
    %v3102 = vld [vmem:[%s1266 + $0x60] sm:$0xf]
    %v3103 = vld [vmem:[%s1266 + $0x64] sm:$0xf]
    %v3104 = vld [vmem:[%s1266 + $0x68] sm:$0xf]
    %v3105 = vld [vmem:[%s1266 + $0x6c] sm:$0xf]
    %v3106 = vld [vmem:[%s1266 + $0x70] sm:$0xf]
    %v3107 = vld [vmem:[%s1266 + $0x74] sm:$0xf]
    %v3108 = vld [vmem:[%s1266 + $0x78] sm:$0xf]
    %v3109 = vld [vmem:[%s1266 + $0x7c] sm:$0xf]
    %v3110 = vld [vmem:[%s1266 + $0x80] sm:$0xf]
    %v3111 = vld [vmem:[%s1266 + $0x84] sm:$0xf]
    %v3112 = vld [vmem:[%s1266 + $0x88] sm:$0xf]
    %v3113 = vld [vmem:[%s1266 + $0x8c] sm:$0xf]
    %v3114 = vld [vmem:[%s1266 + $0x90] sm:$0xf]
    %v3115 = vld [vmem:[%s1266 + $0x94] sm:$0xf]
    %v3116 = vld [vmem:[%s1266 + $0x98] sm:$0xf]
    %v3117 = vld [vmem:[%s1266 + $0x9c] sm:$0xf]
    %v3118 = vld [vmem:[%s1266 + $0xa0] sm:$0xf]
    %v3119 = vld [vmem:[%s1266 + $0xa4] sm:$0xf]
    %v3120 = vld [vmem:[%s1266 + $0xa8] sm:$0xf]
    %v3121 = vld [vmem:[%s1266 + $0xac] sm:$0xf]
    %v3122 = vld [vmem:[%s1266 + $0xb0] sm:$0xf]
    %v3123 = vld [vmem:[%s1266 + $0xb4] sm:$0xf]
    %v3124 = vld [vmem:[%s1266 + $0xb8] sm:$0xf]
    %v3125 = vld [vmem:[%s1266 + $0xbc] sm:$0xf]
    %v3174 = vunpack.c.l.b16 %v3078
    %v3175 = vunpack.c.l.b16 %v3079
    %v3176 = vunpack.c.l.b16 %v3080
    %v3177 = vunpack.c.l.b16 %v3081
    %v3178 = vunpack.c.l.b16 %v3082
    %v3179 = vunpack.c.l.b16 %v3083
    %v3180 = vunpack.c.l.b16 %v3084
    %v3181 = vunpack.c.l.b16 %v3085
    %v3182 = vunpack.c.l.b16 %v3086
    %v3183 = vunpack.c.l.b16 %v3087
    %v3184 = vunpack.c.l.b16 %v3088
    %v3185 = vunpack.c.l.b16 %v3089
    %v3186 = vunpack.c.l.b16 %v3090
    %v3187 = vunpack.c.l.b16 %v3091
    %v3188 = vunpack.c.l.b16 %v3092
    %v3189 = vunpack.c.l.b16 %v3093
    %v3190 = vunpack.c.l.b16 %v3094
    %v3191 = vunpack.c.l.b16 %v3095
    %v3192 = vunpack.c.l.b16 %v3096
    %v3193 = vunpack.c.l.b16 %v3097
    %v3194 = vunpack.c.l.b16 %v3098
    %v3195 = vunpack.c.l.b16 %v3099
    %v3196 = vunpack.c.l.b16 %v3100
    %v3197 = vunpack.c.l.b16 %v3101
    %v3198 = vunpack.c.l.b16 %v3102
    %v3199 = vunpack.c.l.b16 %v3103
    %v3200 = vunpack.c.l.b16 %v3104
    %v3201 = vunpack.c.l.b16 %v3105
    %v3202 = vunpack.c.l.b16 %v3106
    %v3203 = vunpack.c.l.b16 %v3107
    %v3204 = vunpack.c.l.b16 %v3108
    %v3205 = vunpack.c.l.b16 %v3109
    %v3206 = vunpack.c.l.b16 %v3110
    %v3207 = vunpack.c.l.b16 %v3111
    %v3208 = vunpack.c.l.b16 %v3112
    %v3209 = vunpack.c.l.b16 %v3113
    %v3210 = vunpack.c.l.b16 %v3114
    %v3211 = vunpack.c.l.b16 %v3115
    %v3212 = vunpack.c.l.b16 %v3116
    %v3213 = vunpack.c.l.b16 %v3117
    %v3214 = vunpack.c.l.b16 %v3118
    %v3215 = vunpack.c.l.b16 %v3119
    %v3216 = vunpack.c.l.b16 %v3120
    %v3217 = vunpack.c.l.b16 %v3121
    %v3218 = vunpack.c.l.b16 %v3122
    %v3219 = vunpack.c.l.b16 %v3123
    %v3220 = vunpack.c.l.b16 %v3124
    %v3221 = vunpack.c.l.b16 %v3125
    %v3222 = vpack.c.b16 %v3175, %v3174
    %v3223 = vpack.c.b16 %v3177, %v3176
    %v3224 = vpack.c.b16 %v3179, %v3178
    %v3225 = vpack.c.b16 %v3181, %v3180
    %v3226 = vpack.c.b16 %v3183, %v3182
    %v3227 = vpack.c.b16 %v3185, %v3184
    %v3228 = vpack.c.b16 %v3187, %v3186
    %v3229 = vpack.c.b16 %v3189, %v3188
    %v3230 = vpack.c.b16 %v3191, %v3190
    %v3231 = vpack.c.b16 %v3193, %v3192
    %v3232 = vpack.c.b16 %v3195, %v3194
    %v3233 = vpack.c.b16 %v3197, %v3196
    %v3234 = vpack.c.b16 %v3199, %v3198
    %v3235 = vpack.c.b16 %v3201, %v3200
    %v3236 = vpack.c.b16 %v3203, %v3202
    %v3237 = vpack.c.b16 %v3205, %v3204
    %v3238 = vpack.c.b16 %v3207, %v3206
    %v3239 = vpack.c.b16 %v3209, %v3208
    %v3240 = vpack.c.b16 %v3211, %v3210
    %v3241 = vpack.c.b16 %v3213, %v3212
    %v3242 = vpack.c.b16 %v3215, %v3214
    %v3243 = vpack.c.b16 %v3217, %v3216
    %v3244 = vpack.c.b16 %v3219, %v3218
    %v3245 = vpack.c.b16 %v3221, %v3220
    %3270 = vmatprep.subr.bf16.mxu0 0
    %3271 = vmatpush1.bf16.msra.mxu0 %v3222
    %3272 = vmatprep.subr.bf16.mxu0 0
    %3273 = vmatpush1.bf16.msra.mxu0 %v3223
    %3274 = vmatprep.subr.bf16.mxu0 0
    %3275 = vmatpush1.bf16.msra.mxu0 %v3224
    %3276 = vmatprep.subr.bf16.mxu0 0
    %3277 = vmatpush1.bf16.msra.mxu0 %v3225
    %3278 = vmatprep.subr.bf16.mxu0 0
    %3279 = vmatpush1.bf16.msra.mxu0 %v3226
    %3280 = vmatprep.subr.bf16.mxu0 0
    %3281 = vmatpush1.bf16.msra.mxu0 %v3227
    %3282 = vmatprep.subr.bf16.mxu0 0
    %3283 = vmatpush1.bf16.msra.mxu0 %v3228
    %3284 = vmatprep.subr.bf16.mxu0 0
    %3285 = vmatpush1.bf16.msra.mxu0 %v3229
    %3286 = vmatprep.subr.bf16.mxu0 0
    %3287 = vmatpush1.bf16.msra.mxu0 %v3230
    %3288 = vmatprep.subr.bf16.mxu0 0
    %3289 = vmatpush1.bf16.msra.mxu0 %v3231
    %3290 = vmatprep.subr.bf16.mxu0 0
    %3291 = vmatpush1.bf16.msra.mxu0 %v3232
    %3292 = vmatprep.subr.bf16.mxu0 0
    %3293 = vmatpush1.bf16.msra.mxu0 %v3233
    %3294 = vmatprep.subr.bf16.mxu0 0
    %3295 = vmatpush1.bf16.msra.mxu0 %v3234
    %3296 = vmatprep.subr.bf16.mxu0 0
    %3297 = vmatpush1.bf16.msra.mxu0 %v3235
    %3298 = vmatprep.subr.bf16.mxu0 0
    %3299 = vmatpush1.bf16.msra.mxu0 %v3236
    %3300 = vmatprep.subr.bf16.mxu0 0
    %3301 = vmatpush1.bf16.msra.mxu0 %v3237
    %3302 = vmatprep.mubr.bf16.mxu0 %v3055
    %3303 = vmatmul.mubr.bf16.gmra.mrb[0].mxu0 %v3054
    %v3304 = vpop.f32.mrb[0].mxu0
    %v3305 = vadd.f32 0.0, %v3304
    %v3306 = vpop.f32.mrb[0].mxu0
    %v3307 = vpop.f32.mrb[0].mxu0
    %v3308 = vadd.f32 0.0, %v3307
    %v3309 = vpop.f32.mrb[0].mxu0
    %3310 = vmatprep.mubr.bf16.mxu0 %v3058
    %3311 = vmatmul.mubr.bf16.gmra.mrb[0].mxu0 %v3057
    %v3312 = vpop.f32.mrb[0].mxu0
    %v3313 = vadd.f32 0.0, %v3312
    %v3314 = vpop.f32.mrb[0].mxu0
    %v3315 = vpop.f32.mrb[0].mxu0
    %v3316 = vadd.f32 0.0, %v3315
    %v3317 = vpop.f32.mrb[0].mxu0
    %3318 = vmatprep.mubr.bf16.mxu0 %v3061
    %3319 = vmatmul.mubr.bf16.gmra.mrb[0].mxu0 %v3060
    %v3320 = vpop.f32.mrb[0].mxu0
    %v3321 = vadd.f32 0.0, %v3320
    %v3322 = vpop.f32.mrb[0].mxu0
    %v3323 = vpop.f32.mrb[0].mxu0
    %v3324 = vadd.f32 0.0, %v3323
    %v3325 = vpop.f32.mrb[0].mxu0
    %3326 = vmatprep.mubr.bf16.mxu0 %v3064
    %3327 = vmatmul.mubr.bf16.gmra.mrb[0].mxu0 %v3063
    %v3328 = vpop.f32.mrb[0].mxu0
    %v3329 = vadd.f32 0.0, %v3328
    %v3330 = vpop.f32.mrb[0].mxu0
    %v3331 = vpop.f32.mrb[0].mxu0
    %v3332 = vadd.f32 0.0, %v3331
    %v3333 = vpop.f32.mrb[0].mxu0
    %3334 = vmatprep.mubr.bf16.mxu0 %v3067
    %3335 = vmatmul.mubr.bf16.gmra.mrb[0].mxu0 %v3066
    %v3336 = vpop.f32.mrb[0].mxu0
    %v3337 = vadd.f32 0.0, %v3336
    %v3338 = vpop.f32.mrb[0].mxu0
    %v3339 = vpop.f32.mrb[0].mxu0
    %v3340 = vadd.f32 0.0, %v3339
    %v3341 = vpop.f32.mrb[0].mxu0
    %3342 = vmatprep.mubr.bf16.mxu0 %v3070
    %3343 = vmatmul.mubr.bf16.gmra.mrb[0].mxu0 %v3069
    %v3344 = vpop.f32.mrb[0].mxu0
    %v3345 = vadd.f32 0.0, %v3344
    %v3346 = vpop.f32.mrb[0].mxu0
    %v3347 = vpop.f32.mrb[0].mxu0
    %v3348 = vadd.f32 0.0, %v3347
    %v3349 = vpop.f32.mrb[0].mxu0
    %3350 = vmatprep.mubr.bf16.mxu0 %v3073
    %3351 = vmatmul.mubr.bf16.gmra.mrb[0].mxu0 %v3072
    %v3352 = vpop.f32.mrb[0].mxu0
    %v3353 = vadd.f32 0.0, %v3352
    %v3354 = vpop.f32.mrb[0].mxu0
    %v3355 = vpop.f32.mrb[0].mxu0
    %v3356 = vadd.f32 0.0, %v3355
    %v3357 = vpop.f32.mrb[0].mxu0
    %3358 = vmatprep.mubr.bf16.mxu0 %v3076
    %3359 = vmatmul.mubr.bf16.gmra.mrb[0].mxu0 %v3075
    %v3360 = vpop.f32.mrb[0].mxu0
    %v3361 = vadd.f32 0.0, %v3360
    %v3362 = vpop.f32.mrb[0].mxu0
    %v3363 = vpop.f32.mrb[0].mxu0
    %v3364 = vadd.f32 0.0, %v3363
    %v3365 = vpop.f32.mrb[0].mxu0
    %3366 = vdwg.mxu0
    %3367 = vmatprep.subr.bf16.mxu0 0
    %3368 = vmatpush1.bf16.msra.mxu0 %v3238
    %3369 = vmatprep.subr.bf16.mxu0 0
    %3370 = vmatpush1.bf16.msra.mxu0 %v3239
    %3371 = vmatprep.subr.bf16.mxu0 0
    %3372 = vmatpush1.bf16.msra.mxu0 %v3240
    %3373 = vmatprep.subr.bf16.mxu0 0
    %3374 = vmatpush1.bf16.msra.mxu0 %v3241
    %3375 = vmatprep.subr.bf16.mxu0 0
    %3376 = vmatpush1.bf16.msra.mxu0 %v3242
    %3377 = vmatprep.subr.bf16.mxu0 0
    %3378 = vmatpush1.bf16.msra.mxu0 %v3243
    %3379 = vmatprep.subr.bf16.mxu0 0
    %3380 = vmatpush1.bf16.msra.mxu0 %v3244
    %3381 = vmatprep.subr.bf16.mxu0 0
    %3382 = vmatpush1.bf16.msra.mxu0 %v3245
    %3383 = vmatprep.subr.bf16.mxu0 0
    %3384 = vmatpush1.bf16.msra.mxu0 0
    %3385 = vmatprep.subr.bf16.mxu0 0
    %3386 = vmatpush1.bf16.msra.mxu0 0
    %3387 = vmatprep.subr.bf16.mxu0 0
    %3388 = vmatpush1.bf16.msra.mxu0 0
    %3389 = vmatprep.subr.bf16.mxu0 0
    %3390 = vmatpush1.bf16.msra.mxu0 0
    %3391 = vmatprep.subr.bf16.mxu0 0
    %3392 = vmatpush1.bf16.msra.mxu0 0
    %3393 = vmatprep.subr.bf16.mxu0 0
    %3394 = vmatpush1.bf16.msra.mxu0 0
    %3395 = vmatprep.subr.bf16.mxu0 0
    %3396 = vmatpush1.bf16.msra.mxu0 0
    %3397 = vmatprep.subr.bf16.mxu0 0
    %3398 = vmatpush1.bf16.msra.mxu0 0
    %3399 = vmatprep.mubr.bf16.mxu0 0
    %3400 = vmatmul.mubr.bf16.gmra.mrb[0].mxu0 %v3056
    %v3401 = vpop.f32.mrb[0].mxu0
    %v3402 = vadd.f32 %v3305, %v3401
    %v3403 = vpop.f32.mrb[0].mxu0
    %v3404 = vpop.f32.mrb[0].mxu0
    %v3405 = vadd.f32 %v3308, %v3404
    %v3406 = vpop.f32.mrb[0].mxu0
    %3407 = vmatprep.mubr.bf16.mxu0 0
    %3408 = vmatmul.mubr.bf16.gmra.mrb[0].mxu0 %v3059
    %v3409 = vpop.f32.mrb[0].mxu0
    %v3410 = vadd.f32 %v3313, %v3409
    %v3411 = vpop.f32.mrb[0].mxu0
    %v3412 = vpop.f32.mrb[0].mxu0
    %v3413 = vadd.f32 %v3316, %v3412
    %v3414 = vpop.f32.mrb[0].mxu0
    %3415 = vmatprep.mubr.bf16.mxu0 0
    %3416 = vmatmul.mubr.bf16.gmra.mrb[0].mxu0 %v3062
    %v3417 = vpop.f32.mrb[0].mxu0
    %v3418 = vadd.f32 %v3321, %v3417
    %v3419 = vpop.f32.mrb[0].mxu0
    %v3420 = vpop.f32.mrb[0].mxu0
    %v3421 = vadd.f32 %v3324, %v3420
    %v3422 = vpop.f32.mrb[0].mxu0
    %3423 = vmatprep.mubr.bf16.mxu0 0
    %3424 = vmatmul.mubr.bf16.gmra.mrb[0].mxu0 %v3065
    %v3425 = vpop.f32.mrb[0].mxu0
    %v3426 = vadd.f32 %v3329, %v3425
    %v3427 = vpop.f32.mrb[0].mxu0
    %v3428 = vpop.f32.mrb[0].mxu0
    %v3429 = vadd.f32 %v3332, %v3428
    %v3430 = vpop.f32.mrb[0].mxu0
    %3431 = vmatprep.mubr.bf16.mxu0 0
    %3432 = vmatmul.mubr.bf16.gmra.mrb[0].mxu0 %v3068
    %v3433 = vpop.f32.mrb[0].mxu0
    %v3434 = vadd.f32 %v3337, %v3433
    %v3435 = vpop.f32.mrb[0].mxu0
    %v3436 = vpop.f32.mrb[0].mxu0
    %v3437 = vadd.f32 %v3340, %v3436
    %v3438 = vpop.f32.mrb[0].mxu0
    %3439 = vmatprep.mubr.bf16.mxu0 0
    %3440 = vmatmul.mubr.bf16.gmra.mrb[0].mxu0 %v3071
    %v3441 = vpop.f32.mrb[0].mxu0
    %v3442 = vadd.f32 %v3345, %v3441
    %v3443 = vpop.f32.mrb[0].mxu0
    %v3444 = vpop.f32.mrb[0].mxu0
    %v3445 = vadd.f32 %v3348, %v3444
    %v3446 = vpop.f32.mrb[0].mxu0
    %3447 = vmatprep.mubr.bf16.mxu0 0
    %3448 = vmatmul.mubr.bf16.gmra.mrb[0].mxu0 %v3074
    %v3449 = vpop.f32.mrb[0].mxu0
    %v3450 = vadd.f32 %v3353, %v3449
    %v3451 = vpop.f32.mrb[0].mxu0
    %v3452 = vpop.f32.mrb[0].mxu0
    %v3453 = vadd.f32 %v3356, %v3452
    %v3454 = vpop.f32.mrb[0].mxu0
    %3455 = vmatprep.mubr.bf16.mxu0 0
    %3456 = vmatmul.mubr.bf16.gmra.mrb[0].mxu0 %v3077
    %v3457 = vpop.f32.mrb[0].mxu0
    %v3458 = vadd.f32 %v3361, %v3457
    %v3459 = vpop.f32.mrb[0].mxu0
    %v3460 = vpop.f32.mrb[0].mxu0
    %v3461 = vadd.f32 %v3364, %v3460
    %v3462 = vpop.f32.mrb[0].mxu0
    %3463 = vdwg.mxu0
    %v3464 = vadd.f32 %v2944, %v3402
    %v3465 = vadd.f32 %v2947, %v3405
    %v3466 = vadd.f32 %v2952, %v3410
    %v3467 = vadd.f32 %v2955, %v3413
    %v3468 = vadd.f32 %v2960, %v3418
    %v3469 = vadd.f32 %v2963, %v3421
    %v3470 = vadd.f32 %v2968, %v3426
    %v3471 = vadd.f32 %v2971, %v3429
    %v3472 = vadd.f32 %v2976, %v3434
    %v3473 = vadd.f32 %v2979, %v3437
    %v3474 = vadd.f32 %v2984, %v3442
    %v3475 = vadd.f32 %v2987, %v3445
    %v3476 = vadd.f32 %v2992, %v3450
    %v3477 = vadd.f32 %v2995, %v3453
    %v3478 = vadd.f32 %v3000, %v3458
    %v3479 = vadd.f32 %v3003, %v3461
    %3480 = vmatprep.subr.mxu0 0.0
    %3481 = vmatpush1.msra.mxu0 %v3464
    %3482 = vmatprep.subr.mxu0 0.0
    %3483 = vmatpush1.msra.mxu0 %v3465
    %3484 = vmatprep.subr.mxu0 0.0
    %3485 = vmatpush1.msra.mxu0 %v3466
    %3486 = vmatprep.subr.mxu0 0.0
    %3487 = vmatpush1.msra.mxu0 %v3467
    %3488 = vmatprep.subr.mxu0 0.0
    %3489 = vmatpush1.msra.mxu0 %v3468
    %3490 = vmatprep.subr.mxu0 0.0
    %3491 = vmatpush1.msra.mxu0 %v3469
    %3492 = vmatprep.subr.mxu0 0.0
    %3493 = vmatpush1.msra.mxu0 %v3470
    %3494 = vmatprep.subr.mxu0 0.0
    %3495 = vmatpush1.msra.mxu0 %v3471
    %3496 = vmatprep.subr.mxu0 0.0
    %3497 = vmatpush1.msra.mxu0 %v3472
    %3498 = vmatprep.subr.mxu0 0.0
    %3499 = vmatpush1.msra.mxu0 %v3473
    %3500 = vmatprep.subr.mxu0 0.0
    %3501 = vmatpush1.msra.mxu0 %v3474
    %3502 = vmatprep.subr.mxu0 0.0
    %3503 = vmatpush1.msra.mxu0 %v3475
    %3504 = vmatprep.subr.mxu0 0.0
    %3505 = vmatpush1.msra.mxu0 %v3476
    %3506 = vmatprep.subr.mxu0 0.0
    %3507 = vmatpush1.msra.mxu0 %v3477
    %3508 = vmatprep.subr.mxu0 0.0
    %3509 = vmatpush1.msra.mxu0 %v3478
    %3510 = vmatprep.subr.mxu0 0.0
    %3511 = vmatpush1.msra.mxu0 %v3479
    %3512 = vmatprep.subr.mxu0 0.0
    %3513 = vmatpush1.msra.mxu0 0.0
    %3514 = vmatprep.subr.mxu0 0.0
    %3515 = vmatpush1.msra.mxu0 0.0
    %3516 = vmatprep.subr.mxu0 0.0
    %3517 = vmatpush1.msra.mxu0 0.0
    %3518 = vmatprep.subr.mxu0 0.0
    %3519 = vmatpush1.msra.mxu0 0.0
    %3520 = vmatprep.subr.mxu0 0.0
    %3521 = vmatpush1.msra.mxu0 0.0
    %3522 = vmatprep.subr.mxu0 0.0
    %3523 = vmatpush1.msra.mxu0 0.0
    %3524 = vmatprep.subr.mxu0 0.0
    %3525 = vmatpush1.msra.mxu0 0.0
    %3526 = vmatprep.subr.mxu0 0.0
    %3527 = vmatpush1.msra.mxu0 0.0
    %3528 = vmatprep.subr.mxu0 0.0
    %3529 = vmatpush1.msra.mxu0 0.0
    %3530 = vmatprep.subr.mxu0 0.0
    %3531 = vmatpush1.msra.mxu0 0.0
    %3532 = vmatprep.subr.mxu0 0.0
    %3533 = vmatpush1.msra.mxu0 0.0
    %3534 = vmatprep.subr.mxu0 0.0
    %3535 = vmatpush1.msra.mxu0 0.0
    %3536 = vmatprep.subr.mxu0 0.0
    %3537 = vmatpush1.msra.mxu0 0.0
    %3538 = vmatprep.subr.mxu0 0.0
    %3539 = vmatpush1.msra.mxu0 0.0
    %3540 = vmatprep.subr.mxu0 0.0
    %3541 = vmatpush1.msra.mxu0 0.0
    %3542 = vmatprep.subr.mxu0 0.0
    %3543 = vmatpush1.msra.mxu0 0.0
    %3544 = vmatprep.mubr.f32.mxu0 0.0
    %3545 = vmatmul.mubr.f32.gmra.mrb[0].mxu0 1.0
    %v3546 = vpop.f32.mrb[0].mxu0
    %v3547 = vadd.f32 0.0, %v3546
    %v3548 = vpop.f32.mrb[0].mxu0
    %3549 = vdwg.mxu0
    %v3550 = vmul.f32 %v3547, 0.0078125
    %v3551 = vlaneseq
    %v3552 = vshrl.u32 %v3551, 7
    %v3553 = vsub.s32 0, %v3552
    %v3554 = vrot.slane %v3550, %v3553
    %v3555 = vsub.f32 %v3464, %v3554
    %v3556 = vsub.f32 %v3465, %v3554
    %v3557 = vsub.f32 %v3466, %v3554
    %v3558 = vsub.f32 %v3467, %v3554
    %v3559 = vsub.f32 %v3468, %v3554
    %v3560 = vsub.f32 %v3469, %v3554
    %v3561 = vsub.f32 %v3470, %v3554
    %v3562 = vsub.f32 %v3471, %v3554
    %v3563 = vsub.f32 %v3472, %v3554
    %v3564 = vsub.f32 %v3473, %v3554
    %v3565 = vsub.f32 %v3474, %v3554
    %v3566 = vsub.f32 %v3475, %v3554
    %v3567 = vsub.f32 %v3476, %v3554
    %v3568 = vsub.f32 %v3477, %v3554
    %v3569 = vsub.f32 %v3478, %v3554
    %v3570 = vsub.f32 %v3479, %v3554
    %v3571 = vmul.f32 %v3555, %v3555
    %v3572 = vmul.f32 %v3556, %v3556
    %v3573 = vmul.f32 %v3557, %v3557
    %v3574 = vmul.f32 %v3558, %v3558
    %v3575 = vmul.f32 %v3559, %v3559
    %v3576 = vmul.f32 %v3560, %v3560
    %v3577 = vmul.f32 %v3561, %v3561
    %v3578 = vmul.f32 %v3562, %v3562
    %v3579 = vmul.f32 %v3563, %v3563
    %v3580 = vmul.f32 %v3564, %v3564
    %v3581 = vmul.f32 %v3565, %v3565
    %v3582 = vmul.f32 %v3566, %v3566
    %v3583 = vmul.f32 %v3567, %v3567
    %v3584 = vmul.f32 %v3568, %v3568
    %v3585 = vmul.f32 %v3569, %v3569
    %v3586 = vmul.f32 %v3570, %v3570
    %3587 = vmatprep.subr.mxu0 0.0
    %3588 = vmatpush1.msra.mxu0 %v3571
    %3589 = vmatprep.subr.mxu0 0.0
    %3590 = vmatpush1.msra.mxu0 %v3572
    %3591 = vmatprep.subr.mxu0 0.0
    %3592 = vmatpush1.msra.mxu0 %v3573
    %3593 = vmatprep.subr.mxu0 0.0
    %3594 = vmatpush1.msra.mxu0 %v3574
    %3595 = vmatprep.subr.mxu0 0.0
    %3596 = vmatpush1.msra.mxu0 %v3575
    %3597 = vmatprep.subr.mxu0 0.0
    %3598 = vmatpush1.msra.mxu0 %v3576
    %3599 = vmatprep.subr.mxu0 0.0
    %3600 = vmatpush1.msra.mxu0 %v3577
    %3601 = vmatprep.subr.mxu0 0.0
    %3602 = vmatpush1.msra.mxu0 %v3578
    %3603 = vmatprep.subr.mxu0 0.0
    %3604 = vmatpush1.msra.mxu0 %v3579
    %3605 = vmatprep.subr.mxu0 0.0
    %3606 = vmatpush1.msra.mxu0 %v3580
    %3607 = vmatprep.subr.mxu0 0.0
    %3608 = vmatpush1.msra.mxu0 %v3581
    %3609 = vmatprep.subr.mxu0 0.0
    %3610 = vmatpush1.msra.mxu0 %v3582
    %3611 = vmatprep.subr.mxu0 0.0
    %3612 = vmatpush1.msra.mxu0 %v3583
    %3613 = vmatprep.subr.mxu0 0.0
    %3614 = vmatpush1.msra.mxu0 %v3584
    %3615 = vmatprep.subr.mxu0 0.0
    %3616 = vmatpush1.msra.mxu0 %v3585
    %3617 = vmatprep.subr.mxu0 0.0
    %3618 = vmatpush1.msra.mxu0 %v3586
    %3619 = vmatprep.subr.mxu0 0.0
    %3620 = vmatpush1.msra.mxu0 0.0
    %3621 = vmatprep.subr.mxu0 0.0
    %3622 = vmatpush1.msra.mxu0 0.0
    %3623 = vmatprep.subr.mxu0 0.0
    %3624 = vmatpush1.msra.mxu0 0.0
    %3625 = vmatprep.subr.mxu0 0.0
    %3626 = vmatpush1.msra.mxu0 0.0
    %3627 = vmatprep.subr.mxu0 0.0
    %3628 = vmatpush1.msra.mxu0 0.0
    %3629 = vmatprep.subr.mxu0 0.0
    %3630 = vmatpush1.msra.mxu0 0.0
    %3631 = vmatprep.subr.mxu0 0.0
    %3632 = vmatpush1.msra.mxu0 0.0
    %3633 = vmatprep.subr.mxu0 0.0
    %3634 = vmatpush1.msra.mxu0 0.0
    %3635 = vmatprep.subr.mxu0 0.0
    %3636 = vmatpush1.msra.mxu0 0.0
    %3637 = vmatprep.subr.mxu0 0.0
    %3638 = vmatpush1.msra.mxu0 0.0
    %3639 = vmatprep.subr.mxu0 0.0
    %3640 = vmatpush1.msra.mxu0 0.0
    %3641 = vmatprep.subr.mxu0 0.0
    %3642 = vmatpush1.msra.mxu0 0.0
    %3643 = vmatprep.subr.mxu0 0.0
    %3644 = vmatpush1.msra.mxu0 0.0
    %3645 = vmatprep.subr.mxu0 0.0
    %3646 = vmatpush1.msra.mxu0 0.0
    %3647 = vmatprep.subr.mxu0 0.0
    %3648 = vmatpush1.msra.mxu0 0.0
    %3649 = vmatprep.subr.mxu0 0.0
    %3650 = vmatpush1.msra.mxu0 0.0
    %3651 = vmatprep.mubr.f32.mxu0 0.0
    %3652 = vmatmul.mubr.f32.gmra.mrb[0].mxu0 1.0
    %v3653 = vpop.f32.mrb[0].mxu0
    %v3654 = vadd.f32 0.0, %v3653
    %v3655 = vpop.f32.mrb[0].mxu0
    %3656 = vdwg.mxu0
    %v3657 = vmul.f32 %v3654, 0.0078125
    %v3658 = vadd.f32 %v3657, 1e-05
    %v3659 = vrsqrt.pop %v3658
    %v3660 = vlaneseq
    %v3661 = vshrl.u32 %v3660, 7
    %v3662 = vsub.s32 0, %v3661
    %v3663 = vrot.slane %v3659, %v3662
    %v3664 = vmul.f32 %v3555, %v3663
    %v3665 = vmul.f32 %v3556, %v3663
    %v3666 = vmul.f32 %v3557, %v3663
    %v3667 = vmul.f32 %v3558, %v3663
    %v3668 = vmul.f32 %v3559, %v3663
    %v3669 = vmul.f32 %v3560, %v3663
    %v3670 = vmul.f32 %v3561, %v3663
    %v3671 = vmul.f32 %v3562, %v3663
    %v3672 = vmul.f32 %v3563, %v3663
    %v3673 = vmul.f32 %v3564, %v3663
    %v3674 = vmul.f32 %v3565, %v3663
    %v3675 = vmul.f32 %v3566, %v3663
    %v3676 = vmul.f32 %v3567, %v3663
    %v3677 = vmul.f32 %v3568, %v3663
    %v3678 = vmul.f32 %v3569, %v3663
    %v3679 = vmul.f32 %v3570, %v3663
    %v3680 = vmul.f32 %v3664, %v1873
    %v3681 = vmul.f32 %v3665, %v1873
    %v3682 = vmul.f32 %v3666, %v1873
    %v3683 = vmul.f32 %v3667, %v1873
    %v3684 = vmul.f32 %v3668, %v1873
    %v3685 = vmul.f32 %v3669, %v1873
    %v3686 = vmul.f32 %v3670, %v1873
    %v3687 = vmul.f32 %v3671, %v1873
    %v3688 = vmul.f32 %v3672, %v1873
    %v3689 = vmul.f32 %v3673, %v1873
    %v3690 = vmul.f32 %v3674, %v1873
    %v3691 = vmul.f32 %v3675, %v1873
    %v3692 = vmul.f32 %v3676, %v1873
    %v3693 = vmul.f32 %v3677, %v1873
    %v3694 = vmul.f32 %v3678, %v1873
    %v3695 = vmul.f32 %v3679, %v1873
    %v3696 = vadd.f32 %v3680, %v1895
    %v3697 = vadd.f32 %v3681, %v1895
    %v3698 = vadd.f32 %v3682, %v1895
    %v3699 = vadd.f32 %v3683, %v1895
    %v3700 = vadd.f32 %v3684, %v1895
    %v3701 = vadd.f32 %v3685, %v1895
    %v3702 = vadd.f32 %v3686, %v1895
    %v3703 = vadd.f32 %v3687, %v1895
    %v3704 = vadd.f32 %v3688, %v1895
    %v3705 = vadd.f32 %v3689, %v1895
    %v3706 = vadd.f32 %v3690, %v1895
    %v3707 = vadd.f32 %v3691, %v1895
    %v3708 = vadd.f32 %v3692, %v1895
    %v3709 = vadd.f32 %v3693, %v1895
    %v3710 = vadd.f32 %v3694, %v1895
    %v3711 = vadd.f32 %v3695, %v1895
    %v3712 = vld [vmem:[#allocation3] sm:$0xff]
    %v3713 = vld [vmem:[#allocation3 + $0x8] sm:$0xff]
    %v3714 = vld [vmem:[#allocation3 + $0x10] sm:$0xff]
    %v3715 = vld [vmem:[#allocation3 + $0x18] sm:$0xff]
    %v3716 = vld [vmem:[#allocation3 + $0x20] sm:$0xff]
    %v3717 = vld [vmem:[#allocation3 + $0x28] sm:$0xff]
    %v3718 = vld [vmem:[#allocation3 + $0x30] sm:$0xff]
    %v3719 = vld [vmem:[#allocation3 + $0x38] sm:$0xff]
    %v3720 = vld [vmem:[#allocation3 + $0x40] sm:$0xff]
    %v3721 = vld [vmem:[#allocation3 + $0x48] sm:$0xff]
    %v3722 = vld [vmem:[#allocation3 + $0x50] sm:$0xff]
    %v3723 = vld [vmem:[#allocation3 + $0x58] sm:$0xff]
    %v3724 = vld [vmem:[#allocation3 + $0x60] sm:$0xff]
    %v3725 = vld [vmem:[#allocation3 + $0x68] sm:$0xff]
    %v3726 = vld [vmem:[#allocation3 + $0x70] sm:$0xff]
    %v3727 = vld [vmem:[#allocation3 + $0x78] sm:$0xff]
    %v3728 = vadd.f32 %v3696, %v3712
    %v3729 = vadd.f32 %v3697, %v3713
    %v3730 = vadd.f32 %v3698, %v3714
    %v3731 = vadd.f32 %v3699, %v3715
    %v3732 = vadd.f32 %v3700, %v3716
    %v3733 = vadd.f32 %v3701, %v3717
    %v3734 = vadd.f32 %v3702, %v3718
    %v3735 = vadd.f32 %v3703, %v3719
    %v3736 = vadd.f32 %v3704, %v3720
    %v3737 = vadd.f32 %v3705, %v3721
    %v3738 = vadd.f32 %v3706, %v3722
    %v3739 = vadd.f32 %v3707, %v3723
    %v3740 = vadd.f32 %v3708, %v3724
    %v3741 = vadd.f32 %v3709, %v3725
    %v3742 = vadd.f32 %v3710, %v3726
    %v3743 = vadd.f32 %v3711, %v3727
    %3744 = vst [vmem:[#allocation3] sm:$0xff] %v3728
    %3745 = vst [vmem:[#allocation3 + $0x8] sm:$0xff] %v3729
    %3746 = vst [vmem:[#allocation3 + $0x10] sm:$0xff] %v3730
    %3747 = vst [vmem:[#allocation3 + $0x18] sm:$0xff] %v3731
    %3748 = vst [vmem:[#allocation3 + $0x20] sm:$0xff] %v3732
    %3749 = vst [vmem:[#allocation3 + $0x28] sm:$0xff] %v3733
    %3750 = vst [vmem:[#allocation3 + $0x30] sm:$0xff] %v3734
    %3751 = vst [vmem:[#allocation3 + $0x38] sm:$0xff] %v3735
    %3752 = vst [vmem:[#allocation3 + $0x40] sm:$0xff] %v3736
    %3753 = vst [vmem:[#allocation3 + $0x48] sm:$0xff] %v3737
    %3754 = vst [vmem:[#allocation3 + $0x50] sm:$0xff] %v3738
    %3755 = vst [vmem:[#allocation3 + $0x58] sm:$0xff] %v3739
    %3756 = vst [vmem:[#allocation3 + $0x60] sm:$0xff] %v3740
    %3757 = vst [vmem:[#allocation3 + $0x68] sm:$0xff] %v3741
    %3758 = vst [vmem:[#allocation3 + $0x70] sm:$0xff] %v3742
    %3759 = vst [vmem:[#allocation3 + $0x78] sm:$0xff] %v3743
    %3760 = vst [vmem:[%s67 + $0x8] sm:$0xff] %v3728
    %3761 = vst [vmem:[%s67 + $0x20] sm:$0xff] %v3729
    %3762 = vst [vmem:[%s67 + $0x38] sm:$0xff] %v3730
    %3763 = vst [vmem:[%s67 + $0x50] sm:$0xff] %v3731
    %3764 = vst [vmem:[%s67 + $0x68] sm:$0xff] %v3732
    %3765 = vst [vmem:[%s67 + $0x80] sm:$0xff] %v3733
    %3766 = vst [vmem:[%s67 + $0x98] sm:$0xff] %v3734
    %3767 = vst [vmem:[%s67 + $0xb0] sm:$0xff] %v3735
    %3768 = vst [vmem:[%s67 + $0xf8] sm:$0xff] %v3736
    %3769 = vst [vmem:[%s67 + $0x110] sm:$0xff] %v3737
    %3770 = vst [vmem:[%s67 + $0x128] sm:$0xff] %v3738
    %3771 = vst [vmem:[%s67 + $0x140] sm:$0xff] %v3739
    %3772 = vst [vmem:[%s67 + $0x158] sm:$0xff] %v3740
    %3773 = vst [vmem:[%s67 + $0x170] sm:$0xff] %v3741
    %3774 = vst [vmem:[%s67 + $0x188] sm:$0xff] %v3742
    %3775 = vst [vmem:[%s67 + $0x1a0] sm:$0xff] %v3743
    %v3792 = vrot.slane %v3728, 7
    %v3793 = vrot.slane %v3729, 7
    %v3794 = vrot.slane %v3730, 7
    %v3795 = vrot.slane %v3731, 7
    %v3796 = vrot.slane %v3732, 7
    %v3797 = vrot.slane %v3733, 7
    %v3798 = vrot.slane %v3734, 7
    %v3799 = vrot.slane %v3735, 7
    %v3800 = vrot.slane %v3736, 7
    %v3801 = vrot.slane %v3737, 7
    %v3802 = vrot.slane %v3738, 7
    %v3803 = vrot.slane %v3739, 7
    %v3804 = vrot.slane %v3740, 7
    %v3805 = vrot.slane %v3741, 7
    %v3806 = vrot.slane %v3742, 7
    %v3807 = vrot.slane %v3743, 7
    %3824 = vst [vmem:[%s67] sm:$0xfe] %v3792
    %3825 = vst [vmem:[%s67 + $0x18] sm:$0xfe] %v3793
    %3826 = vst [vmem:[%s67 + $0x30] sm:$0xfe] %v3794
    %3827 = vst [vmem:[%s67 + $0x48] sm:$0xfe] %v3795
    %3828 = vst [vmem:[%s67 + $0x60] sm:$0xfe] %v3796
    %3829 = vst [vmem:[%s67 + $0x78] sm:$0xfe] %v3797
    %3830 = vst [vmem:[%s67 + $0x90] sm:$0xfe] %v3798
    %3831 = vst [vmem:[%s67 + $0xa8] sm:$0xfe] %v3799
    %3832 = vst [vmem:[%s67 + $0xf0] sm:$0xfe] %v3800
    %3833 = vst [vmem:[%s67 + $0x108] sm:$0xfe] %v3801
    %3834 = vst [vmem:[%s67 + $0x120] sm:$0xfe] %v3802
    %3835 = vst [vmem:[%s67 + $0x138] sm:$0xfe] %v3803
    %3836 = vst [vmem:[%s67 + $0x150] sm:$0xfe] %v3804
    %3837 = vst [vmem:[%s67 + $0x168] sm:$0xfe] %v3805
    %3838 = vst [vmem:[%s67 + $0x180] sm:$0xfe] %v3806
    %3839 = vst [vmem:[%s67 + $0x198] sm:$0xfe] %v3807
    %v3840 = vrot.slane %v3728, 1
    %v3841 = vrot.slane %v3729, 1
    %v3842 = vrot.slane %v3730, 1
    %v3843 = vrot.slane %v3731, 1
    %v3844 = vrot.slane %v3732, 1
    %v3845 = vrot.slane %v3733, 1
    %v3846 = vrot.slane %v3734, 1
    %v3847 = vrot.slane %v3735, 1
    %v3848 = vrot.slane %v3736, 1
    %v3849 = vrot.slane %v3737, 1
    %v3850 = vrot.slane %v3738, 1
    %v3851 = vrot.slane %v3739, 1
    %v3852 = vrot.slane %v3740, 1
    %v3853 = vrot.slane %v3741, 1
    %v3854 = vrot.slane %v3742, 1
    %v3855 = vrot.slane %v3743, 1
    %3872 = vst [vmem:[%s67 + $0x10] sm:$0x7f] %v3840
    %3873 = vst [vmem:[%s67 + $0x28] sm:$0x7f] %v3841
    %3874 = vst [vmem:[%s67 + $0x40] sm:$0x7f] %v3842
    %3875 = vst [vmem:[%s67 + $0x58] sm:$0x7f] %v3843
    %3876 = vst [vmem:[%s67 + $0x70] sm:$0x7f] %v3844
    %3877 = vst [vmem:[%s67 + $0x88] sm:$0x7f] %v3845
    %3878 = vst [vmem:[%s67 + $0xa0] sm:$0x7f] %v3846
    %3879 = vst [vmem:[%s67 + $0xb8] sm:$0x7f] %v3847
    %3880 = vst [vmem:[%s67 + $0x100] sm:$0x7f] %v3848
    %3881 = vst [vmem:[%s67 + $0x118] sm:$0x7f] %v3849
    %3882 = vst [vmem:[%s67 + $0x130] sm:$0x7f] %v3850
    %3883 = vst [vmem:[%s67 + $0x148] sm:$0x7f] %v3851
    %3884 = vst [vmem:[%s67 + $0x160] sm:$0x7f] %v3852
    %3885 = vst [vmem:[%s67 + $0x178] sm:$0x7f] %v3853
    %3886 = vst [vmem:[%s67 + $0x190] sm:$0x7f] %v3854
    %3887 = vst [vmem:[%s67 + $0x1a8] sm:$0x7f] %v3855
    %v3888 = vld [vmem:[#allocation2] sm:$0xff]
    %v3889 = vld [vmem:[#allocation2 + $0x8] sm:$0xff]
    %v3890 = vld [vmem:[#allocation2 + $0x10] sm:$0xff]
    %v3891 = vld [vmem:[#allocation2 + $0x18] sm:$0xff]
    %v3892 = vld [vmem:[#allocation2 + $0x20] sm:$0xff]
    %v3893 = vld [vmem:[#allocation2 + $0x28] sm:$0xff]
    %v3894 = vld [vmem:[#allocation2 + $0x30] sm:$0xff]
    %v3895 = vld [vmem:[#allocation2 + $0x38] sm:$0xff]
    %v3896 = vld [vmem:[#allocation2 + $0x40] sm:$0xff]
    %v3897 = vld [vmem:[#allocation2 + $0x48] sm:$0xff]
    %v3898 = vld [vmem:[#allocation2 + $0x50] sm:$0xff]
    %v3899 = vld [vmem:[#allocation2 + $0x58] sm:$0xff]
    %v3900 = vld [vmem:[#allocation2 + $0x60] sm:$0xff]
    %v3901 = vld [vmem:[#allocation2 + $0x68] sm:$0xff]
    %v3902 = vld [vmem:[#allocation2 + $0x70] sm:$0xff]
    %v3903 = vld [vmem:[#allocation2 + $0x78] sm:$0xff]
    %v3904 = vld [vmem:[#allocation2 + $0x80] sm:$0xff]
    %v3905 = vld [vmem:[#allocation2 + $0x88] sm:$0xff]
    %v3906 = vld [vmem:[#allocation2 + $0x90] sm:$0xff]
    %v3907 = vld [vmem:[#allocation2 + $0x98] sm:$0xff]
    %v3908 = vld [vmem:[#allocation2 + $0xa0] sm:$0xff]
    %v3909 = vld [vmem:[#allocation2 + $0xa8] sm:$0xff]
    %v3910 = vld [vmem:[#allocation2 + $0xb0] sm:$0xff]
    %v3911 = vld [vmem:[#allocation2 + $0xb8] sm:$0xff]
    %v3912 = vld [vmem:[#allocation2 + $0xf0] sm:$0xff]
    %v3913 = vld [vmem:[#allocation2 + $0xf8] sm:$0xff]
    %v3914 = vld [vmem:[#allocation2 + $0x100] sm:$0xff]
    %v3915 = vld [vmem:[#allocation2 + $0x108] sm:$0xff]
    %v3916 = vld [vmem:[#allocation2 + $0x110] sm:$0xff]
    %v3917 = vld [vmem:[#allocation2 + $0x118] sm:$0xff]
    %v3918 = vld [vmem:[#allocation2 + $0x120] sm:$0xff]
    %v3919 = vld [vmem:[#allocation2 + $0x128] sm:$0xff]
    %v3920 = vld [vmem:[#allocation2 + $0x130] sm:$0xff]
    %v3921 = vld [vmem:[#allocation2 + $0x138] sm:$0xff]
    %v3922 = vld [vmem:[#allocation2 + $0x140] sm:$0xff]
    %v3923 = vld [vmem:[#allocation2 + $0x148] sm:$0xff]
    %v3924 = vld [vmem:[#allocation2 + $0x150] sm:$0xff]
    %v3925 = vld [vmem:[#allocation2 + $0x158] sm:$0xff]
    %v3926 = vld [vmem:[#allocation2 + $0x160] sm:$0xff]
    %v3927 = vld [vmem:[#allocation2 + $0x168] sm:$0xff]
    %v3928 = vld [vmem:[#allocation2 + $0x170] sm:$0xff]
    %v3929 = vld [vmem:[#allocation2 + $0x178] sm:$0xff]
    %v3930 = vld [vmem:[#allocation2 + $0x180] sm:$0xff]
    %v3931 = vld [vmem:[#allocation2 + $0x188] sm:$0xff]
    %v3932 = vld [vmem:[#allocation2 + $0x190] sm:$0xff]
    %v3933 = vld [vmem:[#allocation2 + $0x198] sm:$0xff]
    %v3934 = vld [vmem:[#allocation2 + $0x1a0] sm:$0xff]
    %v3935 = vld [vmem:[#allocation2 + $0x1a8] sm:$0xff]
    %v3936 = vpack.c.bf16 %v3891, %v3888
    %v3937 = vpack.c.bf16 %v3892, %v3889
    %v3938 = vpack.c.bf16 %v3893, %v3890
    %v3939 = vpack.c.bf16 %v3897, %v3894
    %v3940 = vpack.c.bf16 %v3898, %v3895
    %v3941 = vpack.c.bf16 %v3899, %v3896
    %v3942 = vpack.c.bf16 %v3903, %v3900
    %v3943 = vpack.c.bf16 %v3904, %v3901
    %v3944 = vpack.c.bf16 %v3905, %v3902
    %v3945 = vpack.c.bf16 %v3909, %v3906
    %v3946 = vpack.c.bf16 %v3910, %v3907
    %v3947 = vpack.c.bf16 %v3911, %v3908
    %v3948 = vpack.c.bf16 %v3915, %v3912
    %v3949 = vpack.c.bf16 %v3916, %v3913
    %v3950 = vpack.c.bf16 %v3917, %v3914
    %v3951 = vpack.c.bf16 %v3921, %v3918
    %v3952 = vpack.c.bf16 %v3922, %v3919
    %v3953 = vpack.c.bf16 %v3923, %v3920
    %v3954 = vpack.c.bf16 %v3927, %v3924
    %v3955 = vpack.c.bf16 %v3928, %v3925
    %v3956 = vpack.c.bf16 %v3929, %v3926
    %v3957 = vpack.c.bf16 %v3933, %v3930
    %v3958 = vpack.c.bf16 %v3934, %v3931
    %v3959 = vpack.c.bf16 %v3935, %v3932
    %v3960 = vld [vmem:[#allocation8] sm:$0xf]
    %v3961 = vld [vmem:[#allocation8 + $0x4] sm:$0xf]
    %v3962 = vld [vmem:[#allocation8 + $0x8] sm:$0xf]
    %v3963 = vld [vmem:[#allocation8 + $0xc] sm:$0xf]
    %v3964 = vld [vmem:[#allocation8 + $0x10] sm:$0xf]
    %v3965 = vld [vmem:[#allocation8 + $0x14] sm:$0xf]
    %v3966 = vld [vmem:[#allocation8 + $0x18] sm:$0xf]
    %v3967 = vld [vmem:[#allocation8 + $0x1c] sm:$0xf]
    %v3968 = vld [vmem:[#allocation8 + $0x20] sm:$0xf]
    %v3969 = vld [vmem:[#allocation8 + $0x24] sm:$0xf]
    %v3970 = vld [vmem:[#allocation8 + $0x28] sm:$0xf]
    %v3971 = vld [vmem:[#allocation8 + $0x2c] sm:$0xf]
    %v3972 = vld [vmem:[#allocation8 + $0x30] sm:$0xf]
    %v3973 = vld [vmem:[#allocation8 + $0x34] sm:$0xf]
    %v3974 = vld [vmem:[#allocation8 + $0x38] sm:$0xf]
    %v3975 = vld [vmem:[#allocation8 + $0x3c] sm:$0xf]
    %v3976 = vld [vmem:[#allocation8 + $0x40] sm:$0xf]
    %v3977 = vld [vmem:[#allocation8 + $0x44] sm:$0xf]
    %v3978 = vld [vmem:[#allocation8 + $0x48] sm:$0xf]
    %v3979 = vld [vmem:[#allocation8 + $0x4c] sm:$0xf]
    %v3980 = vld [vmem:[#allocation8 + $0x50] sm:$0xf]
    %v3981 = vld [vmem:[#allocation8 + $0x54] sm:$0xf]
    %v3982 = vld [vmem:[#allocation8 + $0x58] sm:$0xf]
    %v3983 = vld [vmem:[#allocation8 + $0x5c] sm:$0xf]
    %v3984 = vld [vmem:[#allocation8 + $0x60] sm:$0xf]
    %v3985 = vld [vmem:[#allocation8 + $0x64] sm:$0xf]
    %v3986 = vld [vmem:[#allocation8 + $0x68] sm:$0xf]
    %v3987 = vld [vmem:[#allocation8 + $0x6c] sm:$0xf]
    %v3988 = vld [vmem:[#allocation8 + $0x70] sm:$0xf]
    %v3989 = vld [vmem:[#allocation8 + $0x74] sm:$0xf]
    %v3990 = vld [vmem:[#allocation8 + $0x78] sm:$0xf]
    %v3991 = vld [vmem:[#allocation8 + $0x7c] sm:$0xf]
    %v3992 = vld [vmem:[#allocation8 + $0x80] sm:$0xf]
    %v3993 = vld [vmem:[#allocation8 + $0x84] sm:$0xf]
    %v3994 = vld [vmem:[#allocation8 + $0x88] sm:$0xf]
    %v3995 = vld [vmem:[#allocation8 + $0x8c] sm:$0xf]
    %v3996 = vld [vmem:[#allocation8 + $0x90] sm:$0xf]
    %v3997 = vld [vmem:[#allocation8 + $0x94] sm:$0xf]
    %v3998 = vld [vmem:[#allocation8 + $0x98] sm:$0xf]
    %v3999 = vld [vmem:[#allocation8 + $0x9c] sm:$0xf]
    %v4000 = vld [vmem:[#allocation8 + $0xa0] sm:$0xf]
    %v4001 = vld [vmem:[#allocation8 + $0xa4] sm:$0xf]
    %v4002 = vld [vmem:[#allocation8 + $0xa8] sm:$0xf]
    %v4003 = vld [vmem:[#allocation8 + $0xac] sm:$0xf]
    %v4004 = vld [vmem:[#allocation8 + $0xb0] sm:$0xf]
    %v4005 = vld [vmem:[#allocation8 + $0xb4] sm:$0xf]
    %v4006 = vld [vmem:[#allocation8 + $0xb8] sm:$0xf]
    %v4007 = vld [vmem:[#allocation8 + $0xbc] sm:$0xf]
    %v4008 = vld [vmem:[%s67] sm:$0xff]
    %v4009 = vld [vmem:[%s67 + $0x8] sm:$0xff]
    %v4010 = vld [vmem:[%s67 + $0x10] sm:$0xff]
    %v4011 = vld [vmem:[%s67 + $0x18] sm:$0xff]
    %v4012 = vld [vmem:[%s67 + $0x20] sm:$0xff]
    %v4013 = vld [vmem:[%s67 + $0x28] sm:$0xff]
    %v4014 = vld [vmem:[%s67 + $0x30] sm:$0xff]
    %v4015 = vld [vmem:[%s67 + $0x38] sm:$0xff]
    %v4016 = vld [vmem:[%s67 + $0x40] sm:$0xff]
    %v4017 = vld [vmem:[%s67 + $0x48] sm:$0xff]
    %v4018 = vld [vmem:[%s67 + $0x50] sm:$0xff]
    %v4019 = vld [vmem:[%s67 + $0x58] sm:$0xff]
    %v4020 = vld [vmem:[%s67 + $0x60] sm:$0xff]
    %v4021 = vld [vmem:[%s67 + $0x68] sm:$0xff]
    %v4022 = vld [vmem:[%s67 + $0x70] sm:$0xff]
    %v4023 = vld [vmem:[%s67 + $0x78] sm:$0xff]
    %v4024 = vld [vmem:[%s67 + $0x80] sm:$0xff]
    %v4025 = vld [vmem:[%s67 + $0x88] sm:$0xff]
    %v4026 = vld [vmem:[%s67 + $0x90] sm:$0xff]
    %v4027 = vld [vmem:[%s67 + $0x98] sm:$0xff]
    %v4028 = vld [vmem:[%s67 + $0xa0] sm:$0xff]
    %v4029 = vld [vmem:[%s67 + $0xa8] sm:$0xff]
    %v4030 = vld [vmem:[%s67 + $0xb0] sm:$0xff]
    %v4031 = vld [vmem:[%s67 + $0xb8] sm:$0xff]
    %v4032 = vld [vmem:[%s67 + $0xf0] sm:$0xff]
    %v4033 = vld [vmem:[%s67 + $0xf8] sm:$0xff]
    %v4034 = vld [vmem:[%s67 + $0x100] sm:$0xff]
    %v4035 = vld [vmem:[%s67 + $0x108] sm:$0xff]
    %v4036 = vld [vmem:[%s67 + $0x110] sm:$0xff]
    %v4037 = vld [vmem:[%s67 + $0x118] sm:$0xff]
    %v4038 = vld [vmem:[%s67 + $0x120] sm:$0xff]
    %v4039 = vld [vmem:[%s67 + $0x128] sm:$0xff]
    %v4040 = vld [vmem:[%s67 + $0x130] sm:$0xff]
    %v4041 = vld [vmem:[%s67 + $0x138] sm:$0xff]
    %v4042 = vld [vmem:[%s67 + $0x140] sm:$0xff]
    %v4043 = vld [vmem:[%s67 + $0x148] sm:$0xff]
    %v4044 = vld [vmem:[%s67 + $0x150] sm:$0xff]
    %v4045 = vld [vmem:[%s67 + $0x158] sm:$0xff]
    %v4046 = vld [vmem:[%s67 + $0x160] sm:$0xff]
    %v4047 = vld [vmem:[%s67 + $0x168] sm:$0xff]
    %v4048 = vld [vmem:[%s67 + $0x170] sm:$0xff]
    %v4049 = vld [vmem:[%s67 + $0x178] sm:$0xff]
    %v4050 = vld [vmem:[%s67 + $0x180] sm:$0xff]
    %v4051 = vld [vmem:[%s67 + $0x188] sm:$0xff]
    %v4052 = vld [vmem:[%s67 + $0x190] sm:$0xff]
    %v4053 = vld [vmem:[%s67 + $0x198] sm:$0xff]
    %v4054 = vld [vmem:[%s67 + $0x1a0] sm:$0xff]
    %v4055 = vld [vmem:[%s67 + $0x1a8] sm:$0xff]
    %v4056 = vpack.c.bf16 %v4011, %v4008
    %v4057 = vpack.c.bf16 %v4012, %v4009
    %v4058 = vpack.c.bf16 %v4013, %v4010
    %v4059 = vpack.c.bf16 %v4017, %v4014
    %v4060 = vpack.c.bf16 %v4018, %v4015
    %v4061 = vpack.c.bf16 %v4019, %v4016
    %v4062 = vpack.c.bf16 %v4023, %v4020
    %v4063 = vpack.c.bf16 %v4024, %v4021
    %v4064 = vpack.c.bf16 %v4025, %v4022
    %v4065 = vpack.c.bf16 %v4029, %v4026
    %v4066 = vpack.c.bf16 %v4030, %v4027
    %v4067 = vpack.c.bf16 %v4031, %v4028
    %v4068 = vpack.c.bf16 %v4035, %v4032
    %v4069 = vpack.c.bf16 %v4036, %v4033
    %v4070 = vpack.c.bf16 %v4037, %v4034
    %v4071 = vpack.c.bf16 %v4041, %v4038
    %v4072 = vpack.c.bf16 %v4042, %v4039
    %v4073 = vpack.c.bf16 %v4043, %v4040
    %v4074 = vpack.c.bf16 %v4047, %v4044
    %v4075 = vpack.c.bf16 %v4048, %v4045
    %v4076 = vpack.c.bf16 %v4049, %v4046
    %v4077 = vpack.c.bf16 %v4053, %v4050
    %v4078 = vpack.c.bf16 %v4054, %v4051
    %v4079 = vpack.c.bf16 %v4055, %v4052
    %v4080 = vld [vmem:[%s468] sm:$0xf]
    %v4081 = vld [vmem:[%s468 + $0x4] sm:$0xf]
    %v4082 = vld [vmem:[%s468 + $0x8] sm:$0xf]
    %v4083 = vld [vmem:[%s468 + $0xc] sm:$0xf]
    %v4084 = vld [vmem:[%s468 + $0x10] sm:$0xf]
    %v4085 = vld [vmem:[%s468 + $0x14] sm:$0xf]
    %v4086 = vld [vmem:[%s468 + $0x18] sm:$0xf]
    %v4087 = vld [vmem:[%s468 + $0x1c] sm:$0xf]
    %v4088 = vld [vmem:[%s468 + $0x20] sm:$0xf]
    %v4089 = vld [vmem:[%s468 + $0x24] sm:$0xf]
    %v4090 = vld [vmem:[%s468 + $0x28] sm:$0xf]
    %v4091 = vld [vmem:[%s468 + $0x2c] sm:$0xf]
    %v4092 = vld [vmem:[%s468 + $0x30] sm:$0xf]
    %v4093 = vld [vmem:[%s468 + $0x34] sm:$0xf]
    %v4094 = vld [vmem:[%s468 + $0x38] sm:$0xf]
    %v4095 = vld [vmem:[%s468 + $0x3c] sm:$0xf]
    %v4096 = vld [vmem:[%s468 + $0x40] sm:$0xf]
    %v4097 = vld [vmem:[%s468 + $0x44] sm:$0xf]
    %v4098 = vld [vmem:[%s468 + $0x48] sm:$0xf]
    %v4099 = vld [vmem:[%s468 + $0x4c] sm:$0xf]
    %v4100 = vld [vmem:[%s468 + $0x50] sm:$0xf]
    %v4101 = vld [vmem:[%s468 + $0x54] sm:$0xf]
    %v4102 = vld [vmem:[%s468 + $0x58] sm:$0xf]
    %v4103 = vld [vmem:[%s468 + $0x5c] sm:$0xf]
    %v4104 = vld [vmem:[%s468 + $0x60] sm:$0xf]
    %v4105 = vld [vmem:[%s468 + $0x64] sm:$0xf]
    %v4106 = vld [vmem:[%s468 + $0x68] sm:$0xf]
    %v4107 = vld [vmem:[%s468 + $0x6c] sm:$0xf]
    %v4108 = vld [vmem:[%s468 + $0x70] sm:$0xf]
    %v4109 = vld [vmem:[%s468 + $0x74] sm:$0xf]
    %v4110 = vld [vmem:[%s468 + $0x78] sm:$0xf]
    %v4111 = vld [vmem:[%s468 + $0x7c] sm:$0xf]
    %v4112 = vld [vmem:[%s468 + $0x80] sm:$0xf]
    %v4113 = vld [vmem:[%s468 + $0x84] sm:$0xf]
    %v4114 = vld [vmem:[%s468 + $0x88] sm:$0xf]
    %v4115 = vld [vmem:[%s468 + $0x8c] sm:$0xf]
    %v4116 = vld [vmem:[%s468 + $0x90] sm:$0xf]
    %v4117 = vld [vmem:[%s468 + $0x94] sm:$0xf]
    %v4118 = vld [vmem:[%s468 + $0x98] sm:$0xf]
    %v4119 = vld [vmem:[%s468 + $0x9c] sm:$0xf]
    %v4120 = vld [vmem:[%s468 + $0xa0] sm:$0xf]
    %v4121 = vld [vmem:[%s468 + $0xa4] sm:$0xf]
    %v4122 = vld [vmem:[%s468 + $0xa8] sm:$0xf]
    %v4123 = vld [vmem:[%s468 + $0xac] sm:$0xf]
    %v4124 = vld [vmem:[%s468 + $0xb0] sm:$0xf]
    %v4125 = vld [vmem:[%s468 + $0xb4] sm:$0xf]
    %v4126 = vld [vmem:[%s468 + $0xb8] sm:$0xf]
    %v4127 = vld [vmem:[%s468 + $0xbc] sm:$0xf]
    %v4176 = vunpack.c.l.b16 %v4080
    %v4177 = vunpack.c.l.b16 %v4081
    %v4178 = vunpack.c.l.b16 %v4082
    %v4179 = vunpack.c.l.b16 %v4083
    %v4180 = vunpack.c.l.b16 %v4084
    %v4181 = vunpack.c.l.b16 %v4085
    %v4182 = vunpack.c.l.b16 %v4086
    %v4183 = vunpack.c.l.b16 %v4087
    %v4184 = vunpack.c.l.b16 %v4088
    %v4185 = vunpack.c.l.b16 %v4089
    %v4186 = vunpack.c.l.b16 %v4090
    %v4187 = vunpack.c.l.b16 %v4091
    %v4188 = vunpack.c.l.b16 %v4092
    %v4189 = vunpack.c.l.b16 %v4093
    %v4190 = vunpack.c.l.b16 %v4094
    %v4191 = vunpack.c.l.b16 %v4095
    %v4192 = vunpack.c.l.b16 %v4096
    %v4193 = vunpack.c.l.b16 %v4097
    %v4194 = vunpack.c.l.b16 %v4098
    %v4195 = vunpack.c.l.b16 %v4099
    %v4196 = vunpack.c.l.b16 %v4100
    %v4197 = vunpack.c.l.b16 %v4101
    %v4198 = vunpack.c.l.b16 %v4102
    %v4199 = vunpack.c.l.b16 %v4103
    %v4200 = vunpack.c.l.b16 %v4104
    %v4201 = vunpack.c.l.b16 %v4105
    %v4202 = vunpack.c.l.b16 %v4106
    %v4203 = vunpack.c.l.b16 %v4107
    %v4204 = vunpack.c.l.b16 %v4108
    %v4205 = vunpack.c.l.b16 %v4109
    %v4206 = vunpack.c.l.b16 %v4110
    %v4207 = vunpack.c.l.b16 %v4111
    %v4208 = vunpack.c.l.b16 %v4112
    %v4209 = vunpack.c.l.b16 %v4113
    %v4210 = vunpack.c.l.b16 %v4114
    %v4211 = vunpack.c.l.b16 %v4115
    %v4212 = vunpack.c.l.b16 %v4116
    %v4213 = vunpack.c.l.b16 %v4117
    %v4214 = vunpack.c.l.b16 %v4118
    %v4215 = vunpack.c.l.b16 %v4119
    %v4216 = vunpack.c.l.b16 %v4120
    %v4217 = vunpack.c.l.b16 %v4121
    %v4218 = vunpack.c.l.b16 %v4122
    %v4219 = vunpack.c.l.b16 %v4123
    %v4220 = vunpack.c.l.b16 %v4124
    %v4221 = vunpack.c.l.b16 %v4125
    %v4222 = vunpack.c.l.b16 %v4126
    %v4223 = vunpack.c.l.b16 %v4127
    %v4224 = vpack.c.b16 %v4177, %v4176
    %v4225 = vpack.c.b16 %v4179, %v4178
    %v4226 = vpack.c.b16 %v4181, %v4180
    %v4227 = vpack.c.b16 %v4183, %v4182
    %v4228 = vpack.c.b16 %v4185, %v4184
    %v4229 = vpack.c.b16 %v4187, %v4186
    %v4230 = vpack.c.b16 %v4189, %v4188
    %v4231 = vpack.c.b16 %v4191, %v4190
    %v4232 = vpack.c.b16 %v4193, %v4192
    %v4233 = vpack.c.b16 %v4195, %v4194
    %v4234 = vpack.c.b16 %v4197, %v4196
    %v4235 = vpack.c.b16 %v4199, %v4198
    %v4236 = vpack.c.b16 %v4201, %v4200
    %v4237 = vpack.c.b16 %v4203, %v4202
    %v4238 = vpack.c.b16 %v4205, %v4204
    %v4239 = vpack.c.b16 %v4207, %v4206
    %v4240 = vpack.c.b16 %v4209, %v4208
    %v4241 = vpack.c.b16 %v4211, %v4210
    %v4242 = vpack.c.b16 %v4213, %v4212
    %v4243 = vpack.c.b16 %v4215, %v4214
    %v4244 = vpack.c.b16 %v4217, %v4216
    %v4245 = vpack.c.b16 %v4219, %v4218
    %v4246 = vpack.c.b16 %v4221, %v4220
    %v4247 = vpack.c.b16 %v4223, %v4222
    %4272 = vmatprep.subr.bf16.mxu0 0
    %4273 = vmatpush1.bf16.msra.mxu0 %v4224
    %4274 = vmatprep.subr.bf16.mxu0 0
    %4275 = vmatpush1.bf16.msra.mxu0 %v4225
    %4276 = vmatprep.subr.bf16.mxu0 0
    %4277 = vmatpush1.bf16.msra.mxu0 %v4226
    %4278 = vmatprep.subr.bf16.mxu0 0
    %4279 = vmatpush1.bf16.msra.mxu0 %v4227
    %4280 = vmatprep.subr.bf16.mxu0 0
    %4281 = vmatpush1.bf16.msra.mxu0 %v4228
    %4282 = vmatprep.subr.bf16.mxu0 0
    %4283 = vmatpush1.bf16.msra.mxu0 %v4229
    %4284 = vmatprep.subr.bf16.mxu0 0
    %4285 = vmatpush1.bf16.msra.mxu0 %v4230
    %4286 = vmatprep.subr.bf16.mxu0 0
    %4287 = vmatpush1.bf16.msra.mxu0 %v4231
    %4288 = vmatprep.subr.bf16.mxu0 0
    %4289 = vmatpush1.bf16.msra.mxu0 %v4232
    %4290 = vmatprep.subr.bf16.mxu0 0
    %4291 = vmatpush1.bf16.msra.mxu0 %v4233
    %4292 = vmatprep.subr.bf16.mxu0 0
    %4293 = vmatpush1.bf16.msra.mxu0 %v4234
    %4294 = vmatprep.subr.bf16.mxu0 0
    %4295 = vmatpush1.bf16.msra.mxu0 %v4235
    %4296 = vmatprep.subr.bf16.mxu0 0
    %4297 = vmatpush1.bf16.msra.mxu0 %v4236
    %4298 = vmatprep.subr.bf16.mxu0 0
    %4299 = vmatpush1.bf16.msra.mxu0 %v4237
    %4300 = vmatprep.subr.bf16.mxu0 0
    %4301 = vmatpush1.bf16.msra.mxu0 %v4238
    %4302 = vmatprep.subr.bf16.mxu0 0
    %4303 = vmatpush1.bf16.msra.mxu0 %v4239
    %4304 = vmatprep.mubr.bf16.mxu0 %v4057
    %4305 = vmatmul.mubr.bf16.gmra.mrb[0].mxu0 %v4056
    %v4306 = vpop.f32.mrb[0].mxu0
    %v4307 = vadd.f32 0.0, %v4306
    %v4308 = vpop.f32.mrb[0].mxu0
    %v4309 = vpop.f32.mrb[0].mxu0
    %v4310 = vadd.f32 0.0, %v4309
    %v4311 = vpop.f32.mrb[0].mxu0
    %4312 = vmatprep.mubr.bf16.mxu0 %v4060
    %4313 = vmatmul.mubr.bf16.gmra.mrb[0].mxu0 %v4059
    %v4314 = vpop.f32.mrb[0].mxu0
    %v4315 = vadd.f32 0.0, %v4314
    %v4316 = vpop.f32.mrb[0].mxu0
    %v4317 = vpop.f32.mrb[0].mxu0
    %v4318 = vadd.f32 0.0, %v4317
    %v4319 = vpop.f32.mrb[0].mxu0
    %4320 = vmatprep.mubr.bf16.mxu0 %v4063
    %4321 = vmatmul.mubr.bf16.gmra.mrb[0].mxu0 %v4062
    %v4322 = vpop.f32.mrb[0].mxu0
    %v4323 = vadd.f32 0.0, %v4322
    %v4324 = vpop.f32.mrb[0].mxu0
    %v4325 = vpop.f32.mrb[0].mxu0
    %v4326 = vadd.f32 0.0, %v4325
    %v4327 = vpop.f32.mrb[0].mxu0
    %4328 = vmatprep.mubr.bf16.mxu0 %v4066
    %4329 = vmatmul.mubr.bf16.gmra.mrb[0].mxu0 %v4065
    %v4330 = vpop.f32.mrb[0].mxu0
    %v4331 = vadd.f32 0.0, %v4330
    %v4332 = vpop.f32.mrb[0].mxu0
    %v4333 = vpop.f32.mrb[0].mxu0
    %v4334 = vadd.f32 0.0, %v4333
    %v4335 = vpop.f32.mrb[0].mxu0
    %4336 = vmatprep.mubr.bf16.mxu0 %v4069
    %4337 = vmatmul.mubr.bf16.gmra.mrb[0].mxu0 %v4068
    %v4338 = vpop.f32.mrb[0].mxu0
    %v4339 = vadd.f32 0.0, %v4338
    %v4340 = vpop.f32.mrb[0].mxu0
    %v4341 = vpop.f32.mrb[0].mxu0
    %v4342 = vadd.f32 0.0, %v4341
    %v4343 = vpop.f32.mrb[0].mxu0
    %4344 = vmatprep.mubr.bf16.mxu0 %v4072
    %4345 = vmatmul.mubr.bf16.gmra.mrb[0].mxu0 %v4071
    %v4346 = vpop.f32.mrb[0].mxu0
    %v4347 = vadd.f32 0.0, %v4346
    %v4348 = vpop.f32.mrb[0].mxu0
    %v4349 = vpop.f32.mrb[0].mxu0
    %v4350 = vadd.f32 0.0, %v4349
    %v4351 = vpop.f32.mrb[0].mxu0
    %4352 = vmatprep.mubr.bf16.mxu0 %v4075
    %4353 = vmatmul.mubr.bf16.gmra.mrb[0].mxu0 %v4074
    %v4354 = vpop.f32.mrb[0].mxu0
    %v4355 = vadd.f32 0.0, %v4354
    %v4356 = vpop.f32.mrb[0].mxu0
    %v4357 = vpop.f32.mrb[0].mxu0
    %v4358 = vadd.f32 0.0, %v4357
    %v4359 = vpop.f32.mrb[0].mxu0
    %4360 = vmatprep.mubr.bf16.mxu0 %v4078
    %4361 = vmatmul.mubr.bf16.gmra.mrb[0].mxu0 %v4077
    %v4362 = vpop.f32.mrb[0].mxu0
    %v4363 = vadd.f32 0.0, %v4362
    %v4364 = vpop.f32.mrb[0].mxu0
    %v4365 = vpop.f32.mrb[0].mxu0
    %v4366 = vadd.f32 0.0, %v4365
    %v4367 = vpop.f32.mrb[0].mxu0
    %4368 = vdwg.mxu0
    %4369 = vmatprep.subr.bf16.mxu0 0
    %4370 = vmatpush1.bf16.msra.mxu0 %v4240
    %4371 = vmatprep.subr.bf16.mxu0 0
    %4372 = vmatpush1.bf16.msra.mxu0 %v4241
    %4373 = vmatprep.subr.bf16.mxu0 0
    %4374 = vmatpush1.bf16.msra.mxu0 %v4242
    %4375 = vmatprep.subr.bf16.mxu0 0
    %4376 = vmatpush1.bf16.msra.mxu0 %v4243
    %4377 = vmatprep.subr.bf16.mxu0 0
    %4378 = vmatpush1.bf16.msra.mxu0 %v4244
    %4379 = vmatprep.subr.bf16.mxu0 0
    %4380 = vmatpush1.bf16.msra.mxu0 %v4245
    %4381 = vmatprep.subr.bf16.mxu0 0
    %4382 = vmatpush1.bf16.msra.mxu0 %v4246
    %4383 = vmatprep.subr.bf16.mxu0 0
    %4384 = vmatpush1.bf16.msra.mxu0 %v4247
    %4385 = vmatprep.subr.bf16.mxu0 0
    %4386 = vmatpush1.bf16.msra.mxu0 0
    %4387 = vmatprep.subr.bf16.mxu0 0
    %4388 = vmatpush1.bf16.msra.mxu0 0
    %4389 = vmatprep.subr.bf16.mxu0 0
    %4390 = vmatpush1.bf16.msra.mxu0 0
    %4391 = vmatprep.subr.bf16.mxu0 0
    %4392 = vmatpush1.bf16.msra.mxu0 0
    %4393 = vmatprep.subr.bf16.mxu0 0
    %4394 = vmatpush1.bf16.msra.mxu0 0
    %4395 = vmatprep.subr.bf16.mxu0 0
    %4396 = vmatpush1.bf16.msra.mxu0 0
    %4397 = vmatprep.subr.bf16.mxu0 0
    %4398 = vmatpush1.bf16.msra.mxu0 0
    %4399 = vmatprep.subr.bf16.mxu0 0
    %4400 = vmatpush1.bf16.msra.mxu0 0
    %4401 = vmatprep.mubr.bf16.mxu0 0
    %4402 = vmatmul.mubr.bf16.gmra.mrb[0].mxu0 %v4058
    %v4403 = vpop.f32.mrb[0].mxu0
    %v4404 = vadd.f32 %v4307, %v4403
    %v4405 = vpop.f32.mrb[0].mxu0
    %v4406 = vpop.f32.mrb[0].mxu0
    %v4407 = vadd.f32 %v4310, %v4406
    %v4408 = vpop.f32.mrb[0].mxu0
    %4409 = vmatprep.mubr.bf16.mxu0 0
    %4410 = vmatmul.mubr.bf16.gmra.mrb[0].mxu0 %v4061
    %v4411 = vpop.f32.mrb[0].mxu0
    %v4412 = vadd.f32 %v4315, %v4411
    %v4413 = vpop.f32.mrb[0].mxu0
    %v4414 = vpop.f32.mrb[0].mxu0
    %v4415 = vadd.f32 %v4318, %v4414
    %v4416 = vpop.f32.mrb[0].mxu0
    %4417 = vmatprep.mubr.bf16.mxu0 0
    %4418 = vmatmul.mubr.bf16.gmra.mrb[0].mxu0 %v4064
    %v4419 = vpop.f32.mrb[0].mxu0
    %v4420 = vadd.f32 %v4323, %v4419
    %v4421 = vpop.f32.mrb[0].mxu0
    %v4422 = vpop.f32.mrb[0].mxu0
    %v4423 = vadd.f32 %v4326, %v4422
    %v4424 = vpop.f32.mrb[0].mxu0
    %4425 = vmatprep.mubr.bf16.mxu0 0
    %4426 = vmatmul.mubr.bf16.gmra.mrb[0].mxu0 %v4067
    %v4427 = vpop.f32.mrb[0].mxu0
    %v4428 = vadd.f32 %v4331, %v4427
    %v4429 = vpop.f32.mrb[0].mxu0
    %v4430 = vpop.f32.mrb[0].mxu0
    %v4431 = vadd.f32 %v4334, %v4430
    %v4432 = vpop.f32.mrb[0].mxu0
    %4433 = vmatprep.mubr.bf16.mxu0 0
    %4434 = vmatmul.mubr.bf16.gmra.mrb[0].mxu0 %v4070
    %v4435 = vpop.f32.mrb[0].mxu0
    %v4436 = vadd.f32 %v4339, %v4435
    %v4437 = vpop.f32.mrb[0].mxu0
    %v4438 = vpop.f32.mrb[0].mxu0
    %v4439 = vadd.f32 %v4342, %v4438
    %v4440 = vpop.f32.mrb[0].mxu0
    %4441 = vmatprep.mubr.bf16.mxu0 0
    %4442 = vmatmul.mubr.bf16.gmra.mrb[0].mxu0 %v4073
    %v4443 = vpop.f32.mrb[0].mxu0
    %v4444 = vadd.f32 %v4347, %v4443
    %v4445 = vpop.f32.mrb[0].mxu0
    %v4446 = vpop.f32.mrb[0].mxu0
    %v4447 = vadd.f32 %v4350, %v4446
    %v4448 = vpop.f32.mrb[0].mxu0
    %4449 = vmatprep.mubr.bf16.mxu0 0
    %4450 = vmatmul.mubr.bf16.gmra.mrb[0].mxu0 %v4076
    %v4451 = vpop.f32.mrb[0].mxu0
    %v4452 = vadd.f32 %v4355, %v4451
    %v4453 = vpop.f32.mrb[0].mxu0
    %v4454 = vpop.f32.mrb[0].mxu0
    %v4455 = vadd.f32 %v4358, %v4454
    %v4456 = vpop.f32.mrb[0].mxu0
    %4457 = vmatprep.mubr.bf16.mxu0 0
    %4458 = vmatmul.mubr.bf16.gmra.mrb[0].mxu0 %v4079
    %v4459 = vpop.f32.mrb[0].mxu0
    %v4460 = vadd.f32 %v4363, %v4459
    %v4461 = vpop.f32.mrb[0].mxu0
    %v4462 = vpop.f32.mrb[0].mxu0
    %v4463 = vadd.f32 %v4366, %v4462
    %v4464 = vpop.f32.mrb[0].mxu0
    %4465 = vdwg.mxu0
    %v4514 = vunpack.c.l.b16 %v3960
    %v4515 = vunpack.c.l.b16 %v3961
    %v4516 = vunpack.c.l.b16 %v3962
    %v4517 = vunpack.c.l.b16 %v3963
    %v4518 = vunpack.c.l.b16 %v3964
    %v4519 = vunpack.c.l.b16 %v3965
    %v4520 = vunpack.c.l.b16 %v3966
    %v4521 = vunpack.c.l.b16 %v3967
    %v4522 = vunpack.c.l.b16 %v3968
    %v4523 = vunpack.c.l.b16 %v3969
    %v4524 = vunpack.c.l.b16 %v3970
    %v4525 = vunpack.c.l.b16 %v3971
    %v4526 = vunpack.c.l.b16 %v3972
    %v4527 = vunpack.c.l.b16 %v3973
    %v4528 = vunpack.c.l.b16 %v3974
    %v4529 = vunpack.c.l.b16 %v3975
    %v4530 = vunpack.c.l.b16 %v3976
    %v4531 = vunpack.c.l.b16 %v3977
    %v4532 = vunpack.c.l.b16 %v3978
    %v4533 = vunpack.c.l.b16 %v3979
    %v4534 = vunpack.c.l.b16 %v3980
    %v4535 = vunpack.c.l.b16 %v3981
    %v4536 = vunpack.c.l.b16 %v3982
    %v4537 = vunpack.c.l.b16 %v3983
    %v4538 = vunpack.c.l.b16 %v3984
    %v4539 = vunpack.c.l.b16 %v3985
    %v4540 = vunpack.c.l.b16 %v3986
    %v4541 = vunpack.c.l.b16 %v3987
    %v4542 = vunpack.c.l.b16 %v3988
    %v4543 = vunpack.c.l.b16 %v3989
    %v4544 = vunpack.c.l.b16 %v3990
    %v4545 = vunpack.c.l.b16 %v3991
    %v4546 = vunpack.c.l.b16 %v3992
    %v4547 = vunpack.c.l.b16 %v3993
    %v4548 = vunpack.c.l.b16 %v3994
    %v4549 = vunpack.c.l.b16 %v3995
    %v4550 = vunpack.c.l.b16 %v3996
    %v4551 = vunpack.c.l.b16 %v3997
    %v4552 = vunpack.c.l.b16 %v3998
    %v4553 = vunpack.c.l.b16 %v3999
    %v4554 = vunpack.c.l.b16 %v4000
    %v4555 = vunpack.c.l.b16 %v4001
    %v4556 = vunpack.c.l.b16 %v4002
    %v4557 = vunpack.c.l.b16 %v4003
    %v4558 = vunpack.c.l.b16 %v4004
    %v4559 = vunpack.c.l.b16 %v4005
    %v4560 = vunpack.c.l.b16 %v4006
    %v4561 = vunpack.c.l.b16 %v4007
    %v4562 = vpack.c.b16 %v4515, %v4514
    %v4563 = vpack.c.b16 %v4517, %v4516
    %v4564 = vpack.c.b16 %v4519, %v4518
    %v4565 = vpack.c.b16 %v4521, %v4520
    %v4566 = vpack.c.b16 %v4523, %v4522
    %v4567 = vpack.c.b16 %v4525, %v4524
    %v4568 = vpack.c.b16 %v4527, %v4526
    %v4569 = vpack.c.b16 %v4529, %v4528
    %v4570 = vpack.c.b16 %v4531, %v4530
    %v4571 = vpack.c.b16 %v4533, %v4532
    %v4572 = vpack.c.b16 %v4535, %v4534
    %v4573 = vpack.c.b16 %v4537, %v4536
    %v4574 = vpack.c.b16 %v4539, %v4538
    %v4575 = vpack.c.b16 %v4541, %v4540
    %v4576 = vpack.c.b16 %v4543, %v4542
    %v4577 = vpack.c.b16 %v4545, %v4544
    %v4578 = vpack.c.b16 %v4547, %v4546
    %v4579 = vpack.c.b16 %v4549, %v4548
    %v4580 = vpack.c.b16 %v4551, %v4550
    %v4581 = vpack.c.b16 %v4553, %v4552
    %v4582 = vpack.c.b16 %v4555, %v4554
    %v4583 = vpack.c.b16 %v4557, %v4556
    %v4584 = vpack.c.b16 %v4559, %v4558
    %v4585 = vpack.c.b16 %v4561, %v4560
    %4610 = vmatprep.subr.bf16.mxu0 0
    %4611 = vmatpush1.bf16.msra.mxu0 %v4562
    %4612 = vmatprep.subr.bf16.mxu0 0
    %4613 = vmatpush1.bf16.msra.mxu0 %v4563
    %4614 = vmatprep.subr.bf16.mxu0 0
    %4615 = vmatpush1.bf16.msra.mxu0 %v4564
    %4616 = vmatprep.subr.bf16.mxu0 0
    %4617 = vmatpush1.bf16.msra.mxu0 %v4565
    %4618 = vmatprep.subr.bf16.mxu0 0
    %4619 = vmatpush1.bf16.msra.mxu0 %v4566
    %4620 = vmatprep.subr.bf16.mxu0 0
    %4621 = vmatpush1.bf16.msra.mxu0 %v4567
    %4622 = vmatprep.subr.bf16.mxu0 0
    %4623 = vmatpush1.bf16.msra.mxu0 %v4568
    %4624 = vmatprep.subr.bf16.mxu0 0
    %4625 = vmatpush1.bf16.msra.mxu0 %v4569
    %4626 = vmatprep.subr.bf16.mxu0 0
    %4627 = vmatpush1.bf16.msra.mxu0 %v4570
    %4628 = vmatprep.subr.bf16.mxu0 0
    %4629 = vmatpush1.bf16.msra.mxu0 %v4571
    %4630 = vmatprep.subr.bf16.mxu0 0
    %4631 = vmatpush1.bf16.msra.mxu0 %v4572
    %4632 = vmatprep.subr.bf16.mxu0 0
    %4633 = vmatpush1.bf16.msra.mxu0 %v4573
    %4634 = vmatprep.subr.bf16.mxu0 0
    %4635 = vmatpush1.bf16.msra.mxu0 %v4574
    %4636 = vmatprep.subr.bf16.mxu0 0
    %4637 = vmatpush1.bf16.msra.mxu0 %v4575
    %4638 = vmatprep.subr.bf16.mxu0 0
    %4639 = vmatpush1.bf16.msra.mxu0 %v4576
    %4640 = vmatprep.subr.bf16.mxu0 0
    %4641 = vmatpush1.bf16.msra.mxu0 %v4577
    %4642 = vmatprep.mubr.bf16.mxu0 %v3937
    %4643 = vmatmul.mubr.bf16.gmra.mrb[0].mxu0 %v3936
    %v4644 = vpop.f32.mrb[0].mxu0
    %v4645 = vadd.f32 %v4404, %v4644
    %v4646 = vpop.f32.mrb[0].mxu0
    %v4647 = vpop.f32.mrb[0].mxu0
    %v4648 = vadd.f32 %v4407, %v4647
    %v4649 = vpop.f32.mrb[0].mxu0
    %4650 = vmatprep.mubr.bf16.mxu0 %v3940
    %4651 = vmatmul.mubr.bf16.gmra.mrb[0].mxu0 %v3939
    %v4652 = vpop.f32.mrb[0].mxu0
    %v4653 = vadd.f32 %v4412, %v4652
    %v4654 = vpop.f32.mrb[0].mxu0
    %v4655 = vpop.f32.mrb[0].mxu0
    %v4656 = vadd.f32 %v4415, %v4655
    %v4657 = vpop.f32.mrb[0].mxu0
    %4658 = vmatprep.mubr.bf16.mxu0 %v3943
    %4659 = vmatmul.mubr.bf16.gmra.mrb[0].mxu0 %v3942
    %v4660 = vpop.f32.mrb[0].mxu0
    %v4661 = vadd.f32 %v4420, %v4660
    %v4662 = vpop.f32.mrb[0].mxu0
    %v4663 = vpop.f32.mrb[0].mxu0
    %v4664 = vadd.f32 %v4423, %v4663
    %v4665 = vpop.f32.mrb[0].mxu0
    %4666 = vmatprep.mubr.bf16.mxu0 %v3946
    %4667 = vmatmul.mubr.bf16.gmra.mrb[0].mxu0 %v3945
    %v4668 = vpop.f32.mrb[0].mxu0
    %v4669 = vadd.f32 %v4428, %v4668
    %v4670 = vpop.f32.mrb[0].mxu0
    %v4671 = vpop.f32.mrb[0].mxu0
    %v4672 = vadd.f32 %v4431, %v4671
    %v4673 = vpop.f32.mrb[0].mxu0
    %4674 = vmatprep.mubr.bf16.mxu0 %v3949
    %4675 = vmatmul.mubr.bf16.gmra.mrb[0].mxu0 %v3948
    %v4676 = vpop.f32.mrb[0].mxu0
    %v4677 = vadd.f32 %v4436, %v4676
    %v4678 = vpop.f32.mrb[0].mxu0
    %v4679 = vpop.f32.mrb[0].mxu0
    %v4680 = vadd.f32 %v4439, %v4679
    %v4681 = vpop.f32.mrb[0].mxu0
    %4682 = vmatprep.mubr.bf16.mxu0 %v3952
    %4683 = vmatmul.mubr.bf16.gmra.mrb[0].mxu0 %v3951
    %v4684 = vpop.f32.mrb[0].mxu0
    %v4685 = vadd.f32 %v4444, %v4684
    %v4686 = vpop.f32.mrb[0].mxu0
    %v4687 = vpop.f32.mrb[0].mxu0
    %v4688 = vadd.f32 %v4447, %v4687
    %v4689 = vpop.f32.mrb[0].mxu0
    %4690 = vmatprep.mubr.bf16.mxu0 %v3955
    %4691 = vmatmul.mubr.bf16.gmra.mrb[0].mxu0 %v3954
    %v4692 = vpop.f32.mrb[0].mxu0
    %v4693 = vadd.f32 %v4452, %v4692
    %v4694 = vpop.f32.mrb[0].mxu0
    %v4695 = vpop.f32.mrb[0].mxu0
    %v4696 = vadd.f32 %v4455, %v4695
    %v4697 = vpop.f32.mrb[0].mxu0
    %4698 = vmatprep.mubr.bf16.mxu0 %v3958
    %4699 = vmatmul.mubr.bf16.gmra.mrb[0].mxu0 %v3957
    %v4700 = vpop.f32.mrb[0].mxu0
    %v4701 = vadd.f32 %v4460, %v4700
    %v4702 = vpop.f32.mrb[0].mxu0
    %v4703 = vpop.f32.mrb[0].mxu0
    %v4704 = vadd.f32 %v4463, %v4703
    %v4705 = vpop.f32.mrb[0].mxu0
    %4706 = vdwg.mxu0
    %4707 = vmatprep.subr.bf16.mxu0 0
    %4708 = vmatpush1.bf16.msra.mxu0 %v4578
    %4709 = vmatprep.subr.bf16.mxu0 0
    %4710 = vmatpush1.bf16.msra.mxu0 %v4579
    %4711 = vmatprep.subr.bf16.mxu0 0
    %4712 = vmatpush1.bf16.msra.mxu0 %v4580
    %4713 = vmatprep.subr.bf16.mxu0 0
    %4714 = vmatpush1.bf16.msra.mxu0 %v4581
    %4715 = vmatprep.subr.bf16.mxu0 0
    %4716 = vmatpush1.bf16.msra.mxu0 %v4582
    %4717 = vmatprep.subr.bf16.mxu0 0
    %4718 = vmatpush1.bf16.msra.mxu0 %v4583
    %4719 = vmatprep.subr.bf16.mxu0 0
    %4720 = vmatpush1.bf16.msra.mxu0 %v4584
    %4721 = vmatprep.subr.bf16.mxu0 0
    %4722 = vmatpush1.bf16.msra.mxu0 %v4585
    %4723 = vmatprep.subr.bf16.mxu0 0
    %4724 = vmatpush1.bf16.msra.mxu0 0
    %4725 = vmatprep.subr.bf16.mxu0 0
    %4726 = vmatpush1.bf16.msra.mxu0 0
    %4727 = vmatprep.subr.bf16.mxu0 0
    %4728 = vmatpush1.bf16.msra.mxu0 0
    %4729 = vmatprep.subr.bf16.mxu0 0
    %4730 = vmatpush1.bf16.msra.mxu0 0
    %4731 = vmatprep.subr.bf16.mxu0 0
    %4732 = vmatpush1.bf16.msra.mxu0 0
    %4733 = vmatprep.subr.bf16.mxu0 0
    %4734 = vmatpush1.bf16.msra.mxu0 0
    %4735 = vmatprep.subr.bf16.mxu0 0
    %4736 = vmatpush1.bf16.msra.mxu0 0
    %4737 = vmatprep.subr.bf16.mxu0 0
    %4738 = vmatpush1.bf16.msra.mxu0 0
    %4739 = vmatprep.mubr.bf16.mxu0 0
    %4740 = vmatmul.mubr.bf16.gmra.mrb[0].mxu0 %v3938
    %v4741 = vpop.f32.mrb[0].mxu0
    %v4742 = vadd.f32 %v4645, %v4741
    %v4743 = vpop.f32.mrb[0].mxu0
    %v4744 = vpop.f32.mrb[0].mxu0
    %v4745 = vadd.f32 %v4648, %v4744
    %v4746 = vpop.f32.mrb[0].mxu0
    %4747 = vmatprep.mubr.bf16.mxu0 0
    %4748 = vmatmul.mubr.bf16.gmra.mrb[0].mxu0 %v3941
    %v4749 = vpop.f32.mrb[0].mxu0
    %v4750 = vadd.f32 %v4653, %v4749
    %v4751 = vpop.f32.mrb[0].mxu0
    %v4752 = vpop.f32.mrb[0].mxu0
    %v4753 = vadd.f32 %v4656, %v4752
    %v4754 = vpop.f32.mrb[0].mxu0
    %4755 = vmatprep.mubr.bf16.mxu0 0
    %4756 = vmatmul.mubr.bf16.gmra.mrb[0].mxu0 %v3944
    %v4757 = vpop.f32.mrb[0].mxu0
    %v4758 = vadd.f32 %v4661, %v4757
    %v4759 = vpop.f32.mrb[0].mxu0
    %v4760 = vpop.f32.mrb[0].mxu0
    %v4761 = vadd.f32 %v4664, %v4760
    %v4762 = vpop.f32.mrb[0].mxu0
    %4763 = vmatprep.mubr.bf16.mxu0 0
    %4764 = vmatmul.mubr.bf16.gmra.mrb[0].mxu0 %v3947
    %v4765 = vpop.f32.mrb[0].mxu0
    %v4766 = vadd.f32 %v4669, %v4765
    %v4767 = vpop.f32.mrb[0].mxu0
    %v4768 = vpop.f32.mrb[0].mxu0
    %v4769 = vadd.f32 %v4672, %v4768
    %v4770 = vpop.f32.mrb[0].mxu0
    %4771 = vmatprep.mubr.bf16.mxu0 0
    %4772 = vmatmul.mubr.bf16.gmra.mrb[0].mxu0 %v3950
    %v4773 = vpop.f32.mrb[0].mxu0
    %v4774 = vadd.f32 %v4677, %v4773
    %v4775 = vpop.f32.mrb[0].mxu0
    %v4776 = vpop.f32.mrb[0].mxu0
    %v4777 = vadd.f32 %v4680, %v4776
    %v4778 = vpop.f32.mrb[0].mxu0
    %4779 = vmatprep.mubr.bf16.mxu0 0
    %4780 = vmatmul.mubr.bf16.gmra.mrb[0].mxu0 %v3953
    %v4781 = vpop.f32.mrb[0].mxu0
    %v4782 = vadd.f32 %v4685, %v4781
    %v4783 = vpop.f32.mrb[0].mxu0
    %v4784 = vpop.f32.mrb[0].mxu0
    %v4785 = vadd.f32 %v4688, %v4784
    %v4786 = vpop.f32.mrb[0].mxu0
    %4787 = vmatprep.mubr.bf16.mxu0 0
    %4788 = vmatmul.mubr.bf16.gmra.mrb[0].mxu0 %v3956
    %v4789 = vpop.f32.mrb[0].mxu0
    %v4790 = vadd.f32 %v4693, %v4789
    %v4791 = vpop.f32.mrb[0].mxu0
    %v4792 = vpop.f32.mrb[0].mxu0
    %v4793 = vadd.f32 %v4696, %v4792
    %v4794 = vpop.f32.mrb[0].mxu0
    %4795 = vmatprep.mubr.bf16.mxu0 0
    %4796 = vmatmul.mubr.bf16.gmra.mrb[0].mxu0 %v3959
    %v4797 = vpop.f32.mrb[0].mxu0
    %v4798 = vadd.f32 %v4701, %v4797
    %v4799 = vpop.f32.mrb[0].mxu0
    %v4800 = vpop.f32.mrb[0].mxu0
    %v4801 = vadd.f32 %v4704, %v4800
    %v4802 = vpop.f32.mrb[0].mxu0
    %4803 = vdwg.mxu0
    %v4804 = vld [vmem:[%s1193] sm:$0xff]
    %v4805 = vld [vmem:[%s1193 + $0x8] sm:$0xff]
    %v4806 = vld [vmem:[%s1193 + $0x10] sm:$0xff]
    %v4807 = vld [vmem:[%s1193 + $0x18] sm:$0xff]
    %v4808 = vld [vmem:[%s1193 + $0x20] sm:$0xff]
    %v4809 = vld [vmem:[%s1193 + $0x28] sm:$0xff]
    %v4810 = vld [vmem:[%s1193 + $0x30] sm:$0xff]
    %v4811 = vld [vmem:[%s1193 + $0x38] sm:$0xff]
    %v4812 = vld [vmem:[%s1193 + $0x40] sm:$0xff]
    %v4813 = vld [vmem:[%s1193 + $0x48] sm:$0xff]
    %v4814 = vld [vmem:[%s1193 + $0x50] sm:$0xff]
    %v4815 = vld [vmem:[%s1193 + $0x58] sm:$0xff]
    %v4816 = vld [vmem:[%s1193 + $0x60] sm:$0xff]
    %v4817 = vld [vmem:[%s1193 + $0x68] sm:$0xff]
    %v4818 = vld [vmem:[%s1193 + $0x70] sm:$0xff]
    %v4819 = vld [vmem:[%s1193 + $0x78] sm:$0xff]
    %v4820 = vld [vmem:[%s1193 + $0x80] sm:$0xff]
    %v4821 = vld [vmem:[%s1193 + $0x88] sm:$0xff]
    %v4822 = vld [vmem:[%s1193 + $0x90] sm:$0xff]
    %v4823 = vld [vmem:[%s1193 + $0x98] sm:$0xff]
    %v4824 = vld [vmem:[%s1193 + $0xa0] sm:$0xff]
    %v4825 = vld [vmem:[%s1193 + $0xa8] sm:$0xff]
    %v4826 = vld [vmem:[%s1193 + $0xb0] sm:$0xff]
    %v4827 = vld [vmem:[%s1193 + $0xb8] sm:$0xff]
    %v4828 = vld [vmem:[%s1193 + $0xf0] sm:$0xff]
    %v4829 = vld [vmem:[%s1193 + $0xf8] sm:$0xff]
    %v4830 = vld [vmem:[%s1193 + $0x100] sm:$0xff]
    %v4831 = vld [vmem:[%s1193 + $0x108] sm:$0xff]
    %v4832 = vld [vmem:[%s1193 + $0x110] sm:$0xff]
    %v4833 = vld [vmem:[%s1193 + $0x118] sm:$0xff]
    %v4834 = vld [vmem:[%s1193 + $0x120] sm:$0xff]
    %v4835 = vld [vmem:[%s1193 + $0x128] sm:$0xff]
    %v4836 = vld [vmem:[%s1193 + $0x130] sm:$0xff]
    %v4837 = vld [vmem:[%s1193 + $0x138] sm:$0xff]
    %v4838 = vld [vmem:[%s1193 + $0x140] sm:$0xff]
    %v4839 = vld [vmem:[%s1193 + $0x148] sm:$0xff]
    %v4840 = vld [vmem:[%s1193 + $0x150] sm:$0xff]
    %v4841 = vld [vmem:[%s1193 + $0x158] sm:$0xff]
    %v4842 = vld [vmem:[%s1193 + $0x160] sm:$0xff]
    %v4843 = vld [vmem:[%s1193 + $0x168] sm:$0xff]
    %v4844 = vld [vmem:[%s1193 + $0x170] sm:$0xff]
    %v4845 = vld [vmem:[%s1193 + $0x178] sm:$0xff]
    %v4846 = vld [vmem:[%s1193 + $0x180] sm:$0xff]
    %v4847 = vld [vmem:[%s1193 + $0x188] sm:$0xff]
    %v4848 = vld [vmem:[%s1193 + $0x190] sm:$0xff]
    %v4849 = vld [vmem:[%s1193 + $0x198] sm:$0xff]
    %v4850 = vld [vmem:[%s1193 + $0x1a0] sm:$0xff]
    %v4851 = vld [vmem:[%s1193 + $0x1a8] sm:$0xff]
    %v4852 = vpack.c.bf16 %v4807, %v4804
    %v4853 = vpack.c.bf16 %v4808, %v4805
    %v4854 = vpack.c.bf16 %v4809, %v4806
    %v4855 = vpack.c.bf16 %v4813, %v4810
    %v4856 = vpack.c.bf16 %v4814, %v4811
    %v4857 = vpack.c.bf16 %v4815, %v4812
    %v4858 = vpack.c.bf16 %v4819, %v4816
    %v4859 = vpack.c.bf16 %v4820, %v4817
    %v4860 = vpack.c.bf16 %v4821, %v4818
    %v4861 = vpack.c.bf16 %v4825, %v4822
    %v4862 = vpack.c.bf16 %v4826, %v4823
    %v4863 = vpack.c.bf16 %v4827, %v4824
    %v4864 = vpack.c.bf16 %v4831, %v4828
    %v4865 = vpack.c.bf16 %v4832, %v4829
    %v4866 = vpack.c.bf16 %v4833, %v4830
    %v4867 = vpack.c.bf16 %v4837, %v4834
    %v4868 = vpack.c.bf16 %v4838, %v4835
    %v4869 = vpack.c.bf16 %v4839, %v4836
    %v4870 = vpack.c.bf16 %v4843, %v4840
    %v4871 = vpack.c.bf16 %v4844, %v4841
    %v4872 = vpack.c.bf16 %v4845, %v4842
    %v4873 = vpack.c.bf16 %v4849, %v4846
    %v4874 = vpack.c.bf16 %v4850, %v4847
    %v4875 = vpack.c.bf16 %v4851, %v4848
    %v4876 = vld [vmem:[%s1266] sm:$0xf]
    %v4877 = vld [vmem:[%s1266 + $0x4] sm:$0xf]
    %v4878 = vld [vmem:[%s1266 + $0x8] sm:$0xf]
    %v4879 = vld [vmem:[%s1266 + $0xc] sm:$0xf]
    %v4880 = vld [vmem:[%s1266 + $0x10] sm:$0xf]
    %v4881 = vld [vmem:[%s1266 + $0x14] sm:$0xf]
    %v4882 = vld [vmem:[%s1266 + $0x18] sm:$0xf]
    %v4883 = vld [vmem:[%s1266 + $0x1c] sm:$0xf]
    %v4884 = vld [vmem:[%s1266 + $0x20] sm:$0xf]
    %v4885 = vld [vmem:[%s1266 + $0x24] sm:$0xf]
    %v4886 = vld [vmem:[%s1266 + $0x28] sm:$0xf]
    %v4887 = vld [vmem:[%s1266 + $0x2c] sm:$0xf]
    %v4888 = vld [vmem:[%s1266 + $0x30] sm:$0xf]
    %v4889 = vld [vmem:[%s1266 + $0x34] sm:$0xf]
    %v4890 = vld [vmem:[%s1266 + $0x38] sm:$0xf]
    %v4891 = vld [vmem:[%s1266 + $0x3c] sm:$0xf]
    %v4892 = vld [vmem:[%s1266 + $0x40] sm:$0xf]
    %v4893 = vld [vmem:[%s1266 + $0x44] sm:$0xf]
    %v4894 = vld [vmem:[%s1266 + $0x48] sm:$0xf]
    %v4895 = vld [vmem:[%s1266 + $0x4c] sm:$0xf]
    %v4896 = vld [vmem:[%s1266 + $0x50] sm:$0xf]
    %v4897 = vld [vmem:[%s1266 + $0x54] sm:$0xf]
    %v4898 = vld [vmem:[%s1266 + $0x58] sm:$0xf]
    %v4899 = vld [vmem:[%s1266 + $0x5c] sm:$0xf]
    %v4900 = vld [vmem:[%s1266 + $0x60] sm:$0xf]
    %v4901 = vld [vmem:[%s1266 + $0x64] sm:$0xf]
    %v4902 = vld [vmem:[%s1266 + $0x68] sm:$0xf]
    %v4903 = vld [vmem:[%s1266 + $0x6c] sm:$0xf]
    %v4904 = vld [vmem:[%s1266 + $0x70] sm:$0xf]
    %v4905 = vld [vmem:[%s1266 + $0x74] sm:$0xf]
    %v4906 = vld [vmem:[%s1266 + $0x78] sm:$0xf]
    %v4907 = vld [vmem:[%s1266 + $0x7c] sm:$0xf]
    %v4908 = vld [vmem:[%s1266 + $0x80] sm:$0xf]
    %v4909 = vld [vmem:[%s1266 + $0x84] sm:$0xf]
    %v4910 = vld [vmem:[%s1266 + $0x88] sm:$0xf]
    %v4911 = vld [vmem:[%s1266 + $0x8c] sm:$0xf]
    %v4912 = vld [vmem:[%s1266 + $0x90] sm:$0xf]
    %v4913 = vld [vmem:[%s1266 + $0x94] sm:$0xf]
    %v4914 = vld [vmem:[%s1266 + $0x98] sm:$0xf]
    %v4915 = vld [vmem:[%s1266 + $0x9c] sm:$0xf]
    %v4916 = vld [vmem:[%s1266 + $0xa0] sm:$0xf]
    %v4917 = vld [vmem:[%s1266 + $0xa4] sm:$0xf]
    %v4918 = vld [vmem:[%s1266 + $0xa8] sm:$0xf]
    %v4919 = vld [vmem:[%s1266 + $0xac] sm:$0xf]
    %v4920 = vld [vmem:[%s1266 + $0xb0] sm:$0xf]
    %v4921 = vld [vmem:[%s1266 + $0xb4] sm:$0xf]
    %v4922 = vld [vmem:[%s1266 + $0xb8] sm:$0xf]
    %v4923 = vld [vmem:[%s1266 + $0xbc] sm:$0xf]
    %v4972 = vunpack.c.l.b16 %v4876
    %v4973 = vunpack.c.l.b16 %v4877
    %v4974 = vunpack.c.l.b16 %v4878
    %v4975 = vunpack.c.l.b16 %v4879
    %v4976 = vunpack.c.l.b16 %v4880
    %v4977 = vunpack.c.l.b16 %v4881
    %v4978 = vunpack.c.l.b16 %v4882
    %v4979 = vunpack.c.l.b16 %v4883
    %v4980 = vunpack.c.l.b16 %v4884
    %v4981 = vunpack.c.l.b16 %v4885
    %v4982 = vunpack.c.l.b16 %v4886
    %v4983 = vunpack.c.l.b16 %v4887
    %v4984 = vunpack.c.l.b16 %v4888
    %v4985 = vunpack.c.l.b16 %v4889
    %v4986 = vunpack.c.l.b16 %v4890
    %v4987 = vunpack.c.l.b16 %v4891
    %v4988 = vunpack.c.l.b16 %v4892
    %v4989 = vunpack.c.l.b16 %v4893
    %v4990 = vunpack.c.l.b16 %v4894
    %v4991 = vunpack.c.l.b16 %v4895
    %v4992 = vunpack.c.l.b16 %v4896
    %v4993 = vunpack.c.l.b16 %v4897
    %v4994 = vunpack.c.l.b16 %v4898
    %v4995 = vunpack.c.l.b16 %v4899
    %v4996 = vunpack.c.l.b16 %v4900
    %v4997 = vunpack.c.l.b16 %v4901
    %v4998 = vunpack.c.l.b16 %v4902
    %v4999 = vunpack.c.l.b16 %v4903
    %v5000 = vunpack.c.l.b16 %v4904
    %v5001 = vunpack.c.l.b16 %v4905
    %v5002 = vunpack.c.l.b16 %v4906
    %v5003 = vunpack.c.l.b16 %v4907
    %v5004 = vunpack.c.l.b16 %v4908
    %v5005 = vunpack.c.l.b16 %v4909
    %v5006 = vunpack.c.l.b16 %v4910
    %v5007 = vunpack.c.l.b16 %v4911
    %v5008 = vunpack.c.l.b16 %v4912
    %v5009 = vunpack.c.l.b16 %v4913
    %v5010 = vunpack.c.l.b16 %v4914
    %v5011 = vunpack.c.l.b16 %v4915
    %v5012 = vunpack.c.l.b16 %v4916
    %v5013 = vunpack.c.l.b16 %v4917
    %v5014 = vunpack.c.l.b16 %v4918
    %v5015 = vunpack.c.l.b16 %v4919
    %v5016 = vunpack.c.l.b16 %v4920
    %v5017 = vunpack.c.l.b16 %v4921
    %v5018 = vunpack.c.l.b16 %v4922
    %v5019 = vunpack.c.l.b16 %v4923
    %v5020 = vpack.c.b16 %v4973, %v4972
    %v5021 = vpack.c.b16 %v4975, %v4974
    %v5022 = vpack.c.b16 %v4977, %v4976
    %v5023 = vpack.c.b16 %v4979, %v4978
    %v5024 = vpack.c.b16 %v4981, %v4980
    %v5025 = vpack.c.b16 %v4983, %v4982
    %v5026 = vpack.c.b16 %v4985, %v4984
    %v5027 = vpack.c.b16 %v4987, %v4986
    %v5028 = vpack.c.b16 %v4989, %v4988
    %v5029 = vpack.c.b16 %v4991, %v4990
    %v5030 = vpack.c.b16 %v4993, %v4992
    %v5031 = vpack.c.b16 %v4995, %v4994
    %v5032 = vpack.c.b16 %v4997, %v4996
    %v5033 = vpack.c.b16 %v4999, %v4998
    %v5034 = vpack.c.b16 %v5001, %v5000
    %v5035 = vpack.c.b16 %v5003, %v5002
    %v5036 = vpack.c.b16 %v5005, %v5004
    %v5037 = vpack.c.b16 %v5007, %v5006
    %v5038 = vpack.c.b16 %v5009, %v5008
    %v5039 = vpack.c.b16 %v5011, %v5010
    %v5040 = vpack.c.b16 %v5013, %v5012
    %v5041 = vpack.c.b16 %v5015, %v5014
    %v5042 = vpack.c.b16 %v5017, %v5016
    %v5043 = vpack.c.b16 %v5019, %v5018
    %5068 = vmatprep.subr.bf16.mxu0 0
    %5069 = vmatpush1.bf16.msra.mxu0 %v5020
    %5070 = vmatprep.subr.bf16.mxu0 0
    %5071 = vmatpush1.bf16.msra.mxu0 %v5021
    %5072 = vmatprep.subr.bf16.mxu0 0
    %5073 = vmatpush1.bf16.msra.mxu0 %v5022
    %5074 = vmatprep.subr.bf16.mxu0 0
    %5075 = vmatpush1.bf16.msra.mxu0 %v5023
    %5076 = vmatprep.subr.bf16.mxu0 0
    %5077 = vmatpush1.bf16.msra.mxu0 %v5024
    %5078 = vmatprep.subr.bf16.mxu0 0
    %5079 = vmatpush1.bf16.msra.mxu0 %v5025
    %5080 = vmatprep.subr.bf16.mxu0 0
    %5081 = vmatpush1.bf16.msra.mxu0 %v5026
    %5082 = vmatprep.subr.bf16.mxu0 0
    %5083 = vmatpush1.bf16.msra.mxu0 %v5027
    %5084 = vmatprep.subr.bf16.mxu0 0
    %5085 = vmatpush1.bf16.msra.mxu0 %v5028
    %5086 = vmatprep.subr.bf16.mxu0 0
    %5087 = vmatpush1.bf16.msra.mxu0 %v5029
    %5088 = vmatprep.subr.bf16.mxu0 0
    %5089 = vmatpush1.bf16.msra.mxu0 %v5030
    %5090 = vmatprep.subr.bf16.mxu0 0
    %5091 = vmatpush1.bf16.msra.mxu0 %v5031
    %5092 = vmatprep.subr.bf16.mxu0 0
    %5093 = vmatpush1.bf16.msra.mxu0 %v5032
    %5094 = vmatprep.subr.bf16.mxu0 0
    %5095 = vmatpush1.bf16.msra.mxu0 %v5033
    %5096 = vmatprep.subr.bf16.mxu0 0
    %5097 = vmatpush1.bf16.msra.mxu0 %v5034
    %5098 = vmatprep.subr.bf16.mxu0 0
    %5099 = vmatpush1.bf16.msra.mxu0 %v5035
    %5100 = vmatprep.mubr.bf16.mxu0 %v4853
    %5101 = vmatmul.mubr.bf16.gmra.mrb[0].mxu0 %v4852
    %v5102 = vpop.f32.mrb[0].mxu0
    %v5103 = vadd.f32 0.0, %v5102
    %v5104 = vpop.f32.mrb[0].mxu0
    %v5105 = vpop.f32.mrb[0].mxu0
    %v5106 = vadd.f32 0.0, %v5105
    %v5107 = vpop.f32.mrb[0].mxu0
    %5108 = vmatprep.mubr.bf16.mxu0 %v4856
    %5109 = vmatmul.mubr.bf16.gmra.mrb[0].mxu0 %v4855
    %v5110 = vpop.f32.mrb[0].mxu0
    %v5111 = vadd.f32 0.0, %v5110
    %v5112 = vpop.f32.mrb[0].mxu0
    %v5113 = vpop.f32.mrb[0].mxu0
    %v5114 = vadd.f32 0.0, %v5113
    %v5115 = vpop.f32.mrb[0].mxu0
    %5116 = vmatprep.mubr.bf16.mxu0 %v4859
    %5117 = vmatmul.mubr.bf16.gmra.mrb[0].mxu0 %v4858
    %v5118 = vpop.f32.mrb[0].mxu0
    %v5119 = vadd.f32 0.0, %v5118
    %v5120 = vpop.f32.mrb[0].mxu0
    %v5121 = vpop.f32.mrb[0].mxu0
    %v5122 = vadd.f32 0.0, %v5121
    %v5123 = vpop.f32.mrb[0].mxu0
    %5124 = vmatprep.mubr.bf16.mxu0 %v4862
    %5125 = vmatmul.mubr.bf16.gmra.mrb[0].mxu0 %v4861
    %v5126 = vpop.f32.mrb[0].mxu0
    %v5127 = vadd.f32 0.0, %v5126
    %v5128 = vpop.f32.mrb[0].mxu0
    %v5129 = vpop.f32.mrb[0].mxu0
    %v5130 = vadd.f32 0.0, %v5129
    %v5131 = vpop.f32.mrb[0].mxu0
    %5132 = vmatprep.mubr.bf16.mxu0 %v4865
    %5133 = vmatmul.mubr.bf16.gmra.mrb[0].mxu0 %v4864
    %v5134 = vpop.f32.mrb[0].mxu0
    %v5135 = vadd.f32 0.0, %v5134
    %v5136 = vpop.f32.mrb[0].mxu0
    %v5137 = vpop.f32.mrb[0].mxu0
    %v5138 = vadd.f32 0.0, %v5137
    %v5139 = vpop.f32.mrb[0].mxu0
    %5140 = vmatprep.mubr.bf16.mxu0 %v4868
    %5141 = vmatmul.mubr.bf16.gmra.mrb[0].mxu0 %v4867
    %v5142 = vpop.f32.mrb[0].mxu0
    %v5143 = vadd.f32 0.0, %v5142
    %v5144 = vpop.f32.mrb[0].mxu0
    %v5145 = vpop.f32.mrb[0].mxu0
    %v5146 = vadd.f32 0.0, %v5145
    %v5147 = vpop.f32.mrb[0].mxu0
    %5148 = vmatprep.mubr.bf16.mxu0 %v4871
    %5149 = vmatmul.mubr.bf16.gmra.mrb[0].mxu0 %v4870
    %v5150 = vpop.f32.mrb[0].mxu0
    %v5151 = vadd.f32 0.0, %v5150
    %v5152 = vpop.f32.mrb[0].mxu0
    %v5153 = vpop.f32.mrb[0].mxu0
    %v5154 = vadd.f32 0.0, %v5153
    %v5155 = vpop.f32.mrb[0].mxu0
    %5156 = vmatprep.mubr.bf16.mxu0 %v4874
    %5157 = vmatmul.mubr.bf16.gmra.mrb[0].mxu0 %v4873
    %v5158 = vpop.f32.mrb[0].mxu0
    %v5159 = vadd.f32 0.0, %v5158
    %v5160 = vpop.f32.mrb[0].mxu0
    %v5161 = vpop.f32.mrb[0].mxu0
    %v5162 = vadd.f32 0.0, %v5161
    %v5163 = vpop.f32.mrb[0].mxu0
    %5164 = vdwg.mxu0
    %5165 = vmatprep.subr.bf16.mxu0 0
    %5166 = vmatpush1.bf16.msra.mxu0 %v5036
    %5167 = vmatprep.subr.bf16.mxu0 0
    %5168 = vmatpush1.bf16.msra.mxu0 %v5037
    %5169 = vmatprep.subr.bf16.mxu0 0
    %5170 = vmatpush1.bf16.msra.mxu0 %v5038
    %5171 = vmatprep.subr.bf16.mxu0 0
    %5172 = vmatpush1.bf16.msra.mxu0 %v5039
    %5173 = vmatprep.subr.bf16.mxu0 0
    %5174 = vmatpush1.bf16.msra.mxu0 %v5040
    %5175 = vmatprep.subr.bf16.mxu0 0
    %5176 = vmatpush1.bf16.msra.mxu0 %v5041
    %5177 = vmatprep.subr.bf16.mxu0 0
    %5178 = vmatpush1.bf16.msra.mxu0 %v5042
    %5179 = vmatprep.subr.bf16.mxu0 0
    %5180 = vmatpush1.bf16.msra.mxu0 %v5043
    %5181 = vmatprep.subr.bf16.mxu0 0
    %5182 = vmatpush1.bf16.msra.mxu0 0
    %5183 = vmatprep.subr.bf16.mxu0 0
    %5184 = vmatpush1.bf16.msra.mxu0 0
    %5185 = vmatprep.subr.bf16.mxu0 0
    %5186 = vmatpush1.bf16.msra.mxu0 0
    %5187 = vmatprep.subr.bf16.mxu0 0
    %5188 = vmatpush1.bf16.msra.mxu0 0
    %5189 = vmatprep.subr.bf16.mxu0 0
    %5190 = vmatpush1.bf16.msra.mxu0 0
    %5191 = vmatprep.subr.bf16.mxu0 0
    %5192 = vmatpush1.bf16.msra.mxu0 0
    %5193 = vmatprep.subr.bf16.mxu0 0
    %5194 = vmatpush1.bf16.msra.mxu0 0
    %5195 = vmatprep.subr.bf16.mxu0 0
    %5196 = vmatpush1.bf16.msra.mxu0 0
    %5197 = vmatprep.mubr.bf16.mxu0 0
    %5198 = vmatmul.mubr.bf16.gmra.mrb[0].mxu0 %v4854
    %v5199 = vpop.f32.mrb[0].mxu0
    %v5200 = vadd.f32 %v5103, %v5199
    %v5201 = vpop.f32.mrb[0].mxu0
    %v5202 = vpop.f32.mrb[0].mxu0
    %v5203 = vadd.f32 %v5106, %v5202
    %v5204 = vpop.f32.mrb[0].mxu0
    %5205 = vmatprep.mubr.bf16.mxu0 0
    %5206 = vmatmul.mubr.bf16.gmra.mrb[0].mxu0 %v4857
    %v5207 = vpop.f32.mrb[0].mxu0
    %v5208 = vadd.f32 %v5111, %v5207
    %v5209 = vpop.f32.mrb[0].mxu0
    %v5210 = vpop.f32.mrb[0].mxu0
    %v5211 = vadd.f32 %v5114, %v5210
    %v5212 = vpop.f32.mrb[0].mxu0
    %5213 = vmatprep.mubr.bf16.mxu0 0
    %5214 = vmatmul.mubr.bf16.gmra.mrb[0].mxu0 %v4860
    %v5215 = vpop.f32.mrb[0].mxu0
    %v5216 = vadd.f32 %v5119, %v5215
    %v5217 = vpop.f32.mrb[0].mxu0
    %v5218 = vpop.f32.mrb[0].mxu0
    %v5219 = vadd.f32 %v5122, %v5218
    %v5220 = vpop.f32.mrb[0].mxu0
    %5221 = vmatprep.mubr.bf16.mxu0 0
    %5222 = vmatmul.mubr.bf16.gmra.mrb[0].mxu0 %v4863
    %v5223 = vpop.f32.mrb[0].mxu0
    %v5224 = vadd.f32 %v5127, %v5223
    %v5225 = vpop.f32.mrb[0].mxu0
    %v5226 = vpop.f32.mrb[0].mxu0
    %v5227 = vadd.f32 %v5130, %v5226
    %v5228 = vpop.f32.mrb[0].mxu0
    %5229 = vmatprep.mubr.bf16.mxu0 0
    %5230 = vmatmul.mubr.bf16.gmra.mrb[0].mxu0 %v4866
    %v5231 = vpop.f32.mrb[0].mxu0
    %v5232 = vadd.f32 %v5135, %v5231
    %v5233 = vpop.f32.mrb[0].mxu0
    %v5234 = vpop.f32.mrb[0].mxu0
    %v5235 = vadd.f32 %v5138, %v5234
    %v5236 = vpop.f32.mrb[0].mxu0
    %5237 = vmatprep.mubr.bf16.mxu0 0
    %5238 = vmatmul.mubr.bf16.gmra.mrb[0].mxu0 %v4869
    %v5239 = vpop.f32.mrb[0].mxu0
    %v5240 = vadd.f32 %v5143, %v5239
    %v5241 = vpop.f32.mrb[0].mxu0
    %v5242 = vpop.f32.mrb[0].mxu0
    %v5243 = vadd.f32 %v5146, %v5242
    %v5244 = vpop.f32.mrb[0].mxu0
    %5245 = vmatprep.mubr.bf16.mxu0 0
    %5246 = vmatmul.mubr.bf16.gmra.mrb[0].mxu0 %v4872
    %v5247 = vpop.f32.mrb[0].mxu0
    %v5248 = vadd.f32 %v5151, %v5247
    %v5249 = vpop.f32.mrb[0].mxu0
    %v5250 = vpop.f32.mrb[0].mxu0
    %v5251 = vadd.f32 %v5154, %v5250
    %v5252 = vpop.f32.mrb[0].mxu0
    %5253 = vmatprep.mubr.bf16.mxu0 0
    %5254 = vmatmul.mubr.bf16.gmra.mrb[0].mxu0 %v4875
    %v5255 = vpop.f32.mrb[0].mxu0
    %v5256 = vadd.f32 %v5159, %v5255
    %v5257 = vpop.f32.mrb[0].mxu0
    %v5258 = vpop.f32.mrb[0].mxu0
    %v5259 = vadd.f32 %v5162, %v5258
    %v5260 = vpop.f32.mrb[0].mxu0
    %5261 = vdwg.mxu0
    %v5262 = vadd.f32 %v4742, %v5200
    %v5263 = vadd.f32 %v4745, %v5203
    %v5264 = vadd.f32 %v4750, %v5208
    %v5265 = vadd.f32 %v4753, %v5211
    %v5266 = vadd.f32 %v4758, %v5216
    %v5267 = vadd.f32 %v4761, %v5219
    %v5268 = vadd.f32 %v4766, %v5224
    %v5269 = vadd.f32 %v4769, %v5227
    %v5270 = vadd.f32 %v4774, %v5232
    %v5271 = vadd.f32 %v4777, %v5235
    %v5272 = vadd.f32 %v4782, %v5240
    %v5273 = vadd.f32 %v4785, %v5243
    %v5274 = vadd.f32 %v4790, %v5248
    %v5275 = vadd.f32 %v4793, %v5251
    %v5276 = vadd.f32 %v4798, %v5256
    %v5277 = vadd.f32 %v4801, %v5259
    %5278 = vmatprep.subr.mxu0 0.0
    %5279 = vmatpush1.msra.mxu0 %v5262
    %5280 = vmatprep.subr.mxu0 0.0
    %5281 = vmatpush1.msra.mxu0 %v5263
    %5282 = vmatprep.subr.mxu0 0.0
    %5283 = vmatpush1.msra.mxu0 %v5264
    %5284 = vmatprep.subr.mxu0 0.0
    %5285 = vmatpush1.msra.mxu0 %v5265
    %5286 = vmatprep.subr.mxu0 0.0
    %5287 = vmatpush1.msra.mxu0 %v5266
    %5288 = vmatprep.subr.mxu0 0.0
    %5289 = vmatpush1.msra.mxu0 %v5267
    %5290 = vmatprep.subr.mxu0 0.0
    %5291 = vmatpush1.msra.mxu0 %v5268
    %5292 = vmatprep.subr.mxu0 0.0
    %5293 = vmatpush1.msra.mxu0 %v5269
    %5294 = vmatprep.subr.mxu0 0.0
    %5295 = vmatpush1.msra.mxu0 %v5270
    %5296 = vmatprep.subr.mxu0 0.0
    %5297 = vmatpush1.msra.mxu0 %v5271
    %5298 = vmatprep.subr.mxu0 0.0
    %5299 = vmatpush1.msra.mxu0 %v5272
    %5300 = vmatprep.subr.mxu0 0.0
    %5301 = vmatpush1.msra.mxu0 %v5273
    %5302 = vmatprep.subr.mxu0 0.0
    %5303 = vmatpush1.msra.mxu0 %v5274
    %5304 = vmatprep.subr.mxu0 0.0
    %5305 = vmatpush1.msra.mxu0 %v5275
    %5306 = vmatprep.subr.mxu0 0.0
    %5307 = vmatpush1.msra.mxu0 %v5276
    %5308 = vmatprep.subr.mxu0 0.0
    %5309 = vmatpush1.msra.mxu0 %v5277
    %5310 = vmatprep.subr.mxu0 0.0
    %5311 = vmatpush1.msra.mxu0 0.0
    %5312 = vmatprep.subr.mxu0 0.0
    %5313 = vmatpush1.msra.mxu0 0.0
    %5314 = vmatprep.subr.mxu0 0.0
    %5315 = vmatpush1.msra.mxu0 0.0
    %5316 = vmatprep.subr.mxu0 0.0
    %5317 = vmatpush1.msra.mxu0 0.0
    %5318 = vmatprep.subr.mxu0 0.0
    %5319 = vmatpush1.msra.mxu0 0.0
    %5320 = vmatprep.subr.mxu0 0.0
    %5321 = vmatpush1.msra.mxu0 0.0
    %5322 = vmatprep.subr.mxu0 0.0
    %5323 = vmatpush1.msra.mxu0 0.0
    %5324 = vmatprep.subr.mxu0 0.0
    %5325 = vmatpush1.msra.mxu0 0.0
    %5326 = vmatprep.subr.mxu0 0.0
    %5327 = vmatpush1.msra.mxu0 0.0
    %5328 = vmatprep.subr.mxu0 0.0
    %5329 = vmatpush1.msra.mxu0 0.0
    %5330 = vmatprep.subr.mxu0 0.0
    %5331 = vmatpush1.msra.mxu0 0.0
    %5332 = vmatprep.subr.mxu0 0.0
    %5333 = vmatpush1.msra.mxu0 0.0
    %5334 = vmatprep.subr.mxu0 0.0
    %5335 = vmatpush1.msra.mxu0 0.0
    %5336 = vmatprep.subr.mxu0 0.0
    %5337 = vmatpush1.msra.mxu0 0.0
    %5338 = vmatprep.subr.mxu0 0.0
    %5339 = vmatpush1.msra.mxu0 0.0
    %5340 = vmatprep.subr.mxu0 0.0
    %5341 = vmatpush1.msra.mxu0 0.0
    %5342 = vmatprep.mubr.f32.mxu0 0.0
    %5343 = vmatmul.mubr.f32.gmra.mrb[0].mxu0 1.0
    %v5344 = vpop.f32.mrb[0].mxu0
    %v5345 = vadd.f32 0.0, %v5344
    %v5346 = vpop.f32.mrb[0].mxu0
    %5347 = vdwg.mxu0
    %v5348 = vmul.f32 %v5345, 0.0078125
    %v5349 = vlaneseq
    %v5350 = vshrl.u32 %v5349, 7
    %v5351 = vsub.s32 0, %v5350
    %v5352 = vrot.slane %v5348, %v5351
    %v5353 = vsub.f32 %v5262, %v5352
    %v5354 = vsub.f32 %v5263, %v5352
    %v5355 = vsub.f32 %v5264, %v5352
    %v5356 = vsub.f32 %v5265, %v5352
    %v5357 = vsub.f32 %v5266, %v5352
    %v5358 = vsub.f32 %v5267, %v5352
    %v5359 = vsub.f32 %v5268, %v5352
    %v5360 = vsub.f32 %v5269, %v5352
    %v5361 = vsub.f32 %v5270, %v5352
    %v5362 = vsub.f32 %v5271, %v5352
    %v5363 = vsub.f32 %v5272, %v5352
    %v5364 = vsub.f32 %v5273, %v5352
    %v5365 = vsub.f32 %v5274, %v5352
    %v5366 = vsub.f32 %v5275, %v5352
    %v5367 = vsub.f32 %v5276, %v5352
    %v5368 = vsub.f32 %v5277, %v5352
    %v5369 = vmul.f32 %v5353, %v5353
    %v5370 = vmul.f32 %v5354, %v5354
    %v5371 = vmul.f32 %v5355, %v5355
    %v5372 = vmul.f32 %v5356, %v5356
    %v5373 = vmul.f32 %v5357, %v5357
    %v5374 = vmul.f32 %v5358, %v5358
    %v5375 = vmul.f32 %v5359, %v5359
    %v5376 = vmul.f32 %v5360, %v5360
    %v5377 = vmul.f32 %v5361, %v5361
    %v5378 = vmul.f32 %v5362, %v5362
    %v5379 = vmul.f32 %v5363, %v5363
    %v5380 = vmul.f32 %v5364, %v5364
    %v5381 = vmul.f32 %v5365, %v5365
    %v5382 = vmul.f32 %v5366, %v5366
    %v5383 = vmul.f32 %v5367, %v5367
    %v5384 = vmul.f32 %v5368, %v5368
    %5385 = vmatprep.subr.mxu0 0.0
    %5386 = vmatpush1.msra.mxu0 %v5369
    %5387 = vmatprep.subr.mxu0 0.0
    %5388 = vmatpush1.msra.mxu0 %v5370
    %5389 = vmatprep.subr.mxu0 0.0
    %5390 = vmatpush1.msra.mxu0 %v5371
    %5391 = vmatprep.subr.mxu0 0.0
    %5392 = vmatpush1.msra.mxu0 %v5372
    %5393 = vmatprep.subr.mxu0 0.0
    %5394 = vmatpush1.msra.mxu0 %v5373
    %5395 = vmatprep.subr.mxu0 0.0
    %5396 = vmatpush1.msra.mxu0 %v5374
    %5397 = vmatprep.subr.mxu0 0.0
    %5398 = vmatpush1.msra.mxu0 %v5375
    %5399 = vmatprep.subr.mxu0 0.0
    %5400 = vmatpush1.msra.mxu0 %v5376
    %5401 = vmatprep.subr.mxu0 0.0
    %5402 = vmatpush1.msra.mxu0 %v5377
    %5403 = vmatprep.subr.mxu0 0.0
    %5404 = vmatpush1.msra.mxu0 %v5378
    %5405 = vmatprep.subr.mxu0 0.0
    %5406 = vmatpush1.msra.mxu0 %v5379
    %5407 = vmatprep.subr.mxu0 0.0
    %5408 = vmatpush1.msra.mxu0 %v5380
    %5409 = vmatprep.subr.mxu0 0.0
    %5410 = vmatpush1.msra.mxu0 %v5381
    %5411 = vmatprep.subr.mxu0 0.0
    %5412 = vmatpush1.msra.mxu0 %v5382
    %5413 = vmatprep.subr.mxu0 0.0
    %5414 = vmatpush1.msra.mxu0 %v5383
    %5415 = vmatprep.subr.mxu0 0.0
    %5416 = vmatpush1.msra.mxu0 %v5384
    %5417 = vmatprep.subr.mxu0 0.0
    %5418 = vmatpush1.msra.mxu0 0.0
    %5419 = vmatprep.subr.mxu0 0.0
    %5420 = vmatpush1.msra.mxu0 0.0
    %5421 = vmatprep.subr.mxu0 0.0
    %5422 = vmatpush1.msra.mxu0 0.0
    %5423 = vmatprep.subr.mxu0 0.0
    %5424 = vmatpush1.msra.mxu0 0.0
    %5425 = vmatprep.subr.mxu0 0.0
    %5426 = vmatpush1.msra.mxu0 0.0
    %5427 = vmatprep.subr.mxu0 0.0
    %5428 = vmatpush1.msra.mxu0 0.0
    %5429 = vmatprep.subr.mxu0 0.0
    %5430 = vmatpush1.msra.mxu0 0.0
    %5431 = vmatprep.subr.mxu0 0.0
    %5432 = vmatpush1.msra.mxu0 0.0
    %5433 = vmatprep.subr.mxu0 0.0
    %5434 = vmatpush1.msra.mxu0 0.0
    %5435 = vmatprep.subr.mxu0 0.0
    %5436 = vmatpush1.msra.mxu0 0.0
    %5437 = vmatprep.subr.mxu0 0.0
    %5438 = vmatpush1.msra.mxu0 0.0
    %5439 = vmatprep.subr.mxu0 0.0
    %5440 = vmatpush1.msra.mxu0 0.0
    %5441 = vmatprep.subr.mxu0 0.0
    %5442 = vmatpush1.msra.mxu0 0.0
    %5443 = vmatprep.subr.mxu0 0.0
    %5444 = vmatpush1.msra.mxu0 0.0
    %5445 = vmatprep.subr.mxu0 0.0
    %5446 = vmatpush1.msra.mxu0 0.0
    %5447 = vmatprep.subr.mxu0 0.0
    %5448 = vmatpush1.msra.mxu0 0.0
    %5449 = vmatprep.mubr.f32.mxu0 0.0
    %5450 = vmatmul.mubr.f32.gmra.mrb[0].mxu0 1.0
    %v5451 = vpop.f32.mrb[0].mxu0
    %v5452 = vadd.f32 0.0, %v5451
    %v5453 = vpop.f32.mrb[0].mxu0
    %5454 = vdwg.mxu0
    %v5455 = vmul.f32 %v5452, 0.0078125
    %v5456 = vadd.f32 %v5455, 1e-05
    %v5457 = vrsqrt.pop %v5456
    %v5458 = vlaneseq
    %v5459 = vshrl.u32 %v5458, 7
    %v5460 = vsub.s32 0, %v5459
    %v5461 = vrot.slane %v5457, %v5460
    %v5462 = vmul.f32 %v5353, %v5461
    %v5463 = vmul.f32 %v5354, %v5461
    %v5464 = vmul.f32 %v5355, %v5461
    %v5465 = vmul.f32 %v5356, %v5461
    %v5466 = vmul.f32 %v5357, %v5461
    %v5467 = vmul.f32 %v5358, %v5461
    %v5468 = vmul.f32 %v5359, %v5461
    %v5469 = vmul.f32 %v5360, %v5461
    %v5470 = vmul.f32 %v5361, %v5461
    %v5471 = vmul.f32 %v5362, %v5461
    %v5472 = vmul.f32 %v5363, %v5461
    %v5473 = vmul.f32 %v5364, %v5461
    %v5474 = vmul.f32 %v5365, %v5461
    %v5475 = vmul.f32 %v5366, %v5461
    %v5476 = vmul.f32 %v5367, %v5461
    %v5477 = vmul.f32 %v5368, %v5461
    %v5478 = vmul.f32 %v5462, %v1873
    %v5479 = vmul.f32 %v5463, %v1873
    %v5480 = vmul.f32 %v5464, %v1873
    %v5481 = vmul.f32 %v5465, %v1873
    %v5482 = vmul.f32 %v5466, %v1873
    %v5483 = vmul.f32 %v5467, %v1873
    %v5484 = vmul.f32 %v5468, %v1873
    %v5485 = vmul.f32 %v5469, %v1873
    %v5486 = vmul.f32 %v5470, %v1873
    %v5487 = vmul.f32 %v5471, %v1873
    %v5488 = vmul.f32 %v5472, %v1873
    %v5489 = vmul.f32 %v5473, %v1873
    %v5490 = vmul.f32 %v5474, %v1873
    %v5491 = vmul.f32 %v5475, %v1873
    %v5492 = vmul.f32 %v5476, %v1873
    %v5493 = vmul.f32 %v5477, %v1873
    %v5494 = vadd.f32 %v5478, %v1895
    %v5495 = vadd.f32 %v5479, %v1895
    %v5496 = vadd.f32 %v5480, %v1895
    %v5497 = vadd.f32 %v5481, %v1895
    %v5498 = vadd.f32 %v5482, %v1895
    %v5499 = vadd.f32 %v5483, %v1895
    %v5500 = vadd.f32 %v5484, %v1895
    %v5501 = vadd.f32 %v5485, %v1895
    %v5502 = vadd.f32 %v5486, %v1895
    %v5503 = vadd.f32 %v5487, %v1895
    %v5504 = vadd.f32 %v5488, %v1895
    %v5505 = vadd.f32 %v5489, %v1895
    %v5506 = vadd.f32 %v5490, %v1895
    %v5507 = vadd.f32 %v5491, %v1895
    %v5508 = vadd.f32 %v5492, %v1895
    %v5509 = vadd.f32 %v5493, %v1895
    %vm5510 = vcmp.ge.f32.partialorder %v5494, 0.0
    %vm5511 = vcmp.ge.f32.partialorder %v5495, 0.0
    %vm5512 = vcmp.ge.f32.partialorder %v5496, 0.0
    %vm5513 = vcmp.ge.f32.partialorder %v5497, 0.0
    %vm5514 = vcmp.ge.f32.partialorder %v5498, 0.0
    %vm5515 = vcmp.ge.f32.partialorder %v5499, 0.0
    %vm5516 = vcmp.ge.f32.partialorder %v5500, 0.0
    %vm5517 = vcmp.ge.f32.partialorder %v5501, 0.0
    %vm5518 = vcmp.ge.f32.partialorder %v5502, 0.0
    %vm5519 = vcmp.ge.f32.partialorder %v5503, 0.0
    %vm5520 = vcmp.ge.f32.partialorder %v5504, 0.0
    %vm5521 = vcmp.ge.f32.partialorder %v5505, 0.0
    %vm5522 = vcmp.ge.f32.partialorder %v5506, 0.0
    %vm5523 = vcmp.ge.f32.partialorder %v5507, 0.0
    %vm5524 = vcmp.ge.f32.partialorder %v5508, 0.0
    %vm5525 = vcmp.ge.f32.partialorder %v5509, 0.0
    %v5526 = vmul.f32 %v1929, %v5494
    %v5527 = vmul.f32 %v1929, %v5495
    %v5528 = vmul.f32 %v1929, %v5496
    %v5529 = vmul.f32 %v1929, %v5497
    %v5530 = vmul.f32 %v1929, %v5498
    %v5531 = vmul.f32 %v1929, %v5499
    %v5532 = vmul.f32 %v1929, %v5500
    %v5533 = vmul.f32 %v1929, %v5501
    %v5534 = vmul.f32 %v1929, %v5502
    %v5535 = vmul.f32 %v1929, %v5503
    %v5536 = vmul.f32 %v1929, %v5504
    %v5537 = vmul.f32 %v1929, %v5505
    %v5538 = vmul.f32 %v1929, %v5506
    %v5539 = vmul.f32 %v1929, %v5507
    %v5540 = vmul.f32 %v1929, %v5508
    %v5541 = vmul.f32 %v1929, %v5509
    %v5542 = vsel %vm5510, %v5494, %v5526
    %v5543 = vsel %vm5511, %v5495, %v5527
    %v5544 = vsel %vm5512, %v5496, %v5528
    %v5545 = vsel %vm5513, %v5497, %v5529
    %v5546 = vsel %vm5514, %v5498, %v5530
    %v5547 = vsel %vm5515, %v5499, %v5531
    %v5548 = vsel %vm5516, %v5500, %v5532
    %v5549 = vsel %vm5517, %v5501, %v5533
    %v5550 = vsel %vm5518, %v5502, %v5534
    %v5551 = vsel %vm5519, %v5503, %v5535
    %v5552 = vsel %vm5520, %v5504, %v5536
    %v5553 = vsel %vm5521, %v5505, %v5537
    %v5554 = vsel %vm5522, %v5506, %v5538
    %v5555 = vsel %vm5523, %v5507, %v5539
    %v5556 = vsel %vm5524, %v5508, %v5540
    %v5557 = vsel %vm5525, %v5509, %v5541
    %5558 = vst [vmem:[%s67 + $0x8] sm:$0xff] %v5542
    %5559 = vst [vmem:[%s67 + $0x20] sm:$0xff] %v5543
    %5560 = vst [vmem:[%s67 + $0x38] sm:$0xff] %v5544
    %5561 = vst [vmem:[%s67 + $0x50] sm:$0xff] %v5545
    %5562 = vst [vmem:[%s67 + $0x68] sm:$0xff] %v5546
    %5563 = vst [vmem:[%s67 + $0x80] sm:$0xff] %v5547
    %5564 = vst [vmem:[%s67 + $0x98] sm:$0xff] %v5548
    %5565 = vst [vmem:[%s67 + $0xb0] sm:$0xff] %v5549
    %5566 = vst [vmem:[%s67 + $0xf8] sm:$0xff] %v5550
    %5567 = vst [vmem:[%s67 + $0x110] sm:$0xff] %v5551
    %5568 = vst [vmem:[%s67 + $0x128] sm:$0xff] %v5552
    %5569 = vst [vmem:[%s67 + $0x140] sm:$0xff] %v5553
    %5570 = vst [vmem:[%s67 + $0x158] sm:$0xff] %v5554
    %5571 = vst [vmem:[%s67 + $0x170] sm:$0xff] %v5555
    %5572 = vst [vmem:[%s67 + $0x188] sm:$0xff] %v5556
    %5573 = vst [vmem:[%s67 + $0x1a0] sm:$0xff] %v5557
    %v5590 = vrot.slane %v5542, 7
    %v5591 = vrot.slane %v5543, 7
    %v5592 = vrot.slane %v5544, 7
    %v5593 = vrot.slane %v5545, 7
    %v5594 = vrot.slane %v5546, 7
    %v5595 = vrot.slane %v5547, 7
    %v5596 = vrot.slane %v5548, 7
    %v5597 = vrot.slane %v5549, 7
    %v5598 = vrot.slane %v5550, 7
    %v5599 = vrot.slane %v5551, 7
    %v5600 = vrot.slane %v5552, 7
    %v5601 = vrot.slane %v5553, 7
    %v5602 = vrot.slane %v5554, 7
    %v5603 = vrot.slane %v5555, 7
    %v5604 = vrot.slane %v5556, 7
    %v5605 = vrot.slane %v5557, 7
    %5622 = vst [vmem:[%s67] sm:$0xfe] %v5590
    %5623 = vst [vmem:[%s67 + $0x18] sm:$0xfe] %v5591
    %5624 = vst [vmem:[%s67 + $0x30] sm:$0xfe] %v5592
    %5625 = vst [vmem:[%s67 + $0x48] sm:$0xfe] %v5593
    %5626 = vst [vmem:[%s67 + $0x60] sm:$0xfe] %v5594
    %5627 = vst [vmem:[%s67 + $0x78] sm:$0xfe] %v5595
    %5628 = vst [vmem:[%s67 + $0x90] sm:$0xfe] %v5596
    %5629 = vst [vmem:[%s67 + $0xa8] sm:$0xfe] %v5597
    %5630 = vst [vmem:[%s67 + $0xf0] sm:$0xfe] %v5598
    %5631 = vst [vmem:[%s67 + $0x108] sm:$0xfe] %v5599
    %5632 = vst [vmem:[%s67 + $0x120] sm:$0xfe] %v5600
    %5633 = vst [vmem:[%s67 + $0x138] sm:$0xfe] %v5601
    %5634 = vst [vmem:[%s67 + $0x150] sm:$0xfe] %v5602
    %5635 = vst [vmem:[%s67 + $0x168] sm:$0xfe] %v5603
    %5636 = vst [vmem:[%s67 + $0x180] sm:$0xfe] %v5604
    %5637 = vst [vmem:[%s67 + $0x198] sm:$0xfe] %v5605
    %v5638 = vrot.slane %v5542, 1
    %v5639 = vrot.slane %v5543, 1
    %v5640 = vrot.slane %v5544, 1
    %v5641 = vrot.slane %v5545, 1
    %v5642 = vrot.slane %v5546, 1
    %v5643 = vrot.slane %v5547, 1
    %v5644 = vrot.slane %v5548, 1
    %v5645 = vrot.slane %v5549, 1
    %v5646 = vrot.slane %v5550, 1
    %v5647 = vrot.slane %v5551, 1
    %v5648 = vrot.slane %v5552, 1
    %v5649 = vrot.slane %v5553, 1
    %v5650 = vrot.slane %v5554, 1
    %v5651 = vrot.slane %v5555, 1
    %v5652 = vrot.slane %v5556, 1
    %v5653 = vrot.slane %v5557, 1
    %5670 = vst [vmem:[%s67 + $0x10] sm:$0x7f] %v5638
    %5671 = vst [vmem:[%s67 + $0x28] sm:$0x7f] %v5639
    %5672 = vst [vmem:[%s67 + $0x40] sm:$0x7f] %v5640
    %5673 = vst [vmem:[%s67 + $0x58] sm:$0x7f] %v5641
    %5674 = vst [vmem:[%s67 + $0x70] sm:$0x7f] %v5642
    %5675 = vst [vmem:[%s67 + $0x88] sm:$0x7f] %v5643
    %5676 = vst [vmem:[%s67 + $0xa0] sm:$0x7f] %v5644
    %5677 = vst [vmem:[%s67 + $0xb8] sm:$0x7f] %v5645
    %5678 = vst [vmem:[%s67 + $0x100] sm:$0x7f] %v5646
    %5679 = vst [vmem:[%s67 + $0x118] sm:$0x7f] %v5647
    %5680 = vst [vmem:[%s67 + $0x130] sm:$0x7f] %v5648
    %5681 = vst [vmem:[%s67 + $0x148] sm:$0x7f] %v5649
    %5682 = vst [vmem:[%s67 + $0x160] sm:$0x7f] %v5650
    %5683 = vst [vmem:[%s67 + $0x178] sm:$0x7f] %v5651
    %5684 = vst [vmem:[%s67 + $0x190] sm:$0x7f] %v5652
    %5685 = vst [vmem:[%s67 + $0x1a8] sm:$0x7f] %v5653
    %v5686 = vld [vmem:[#allocation2] sm:$0xff]
    %v5687 = vld [vmem:[#allocation2 + $0x8] sm:$0xff]
    %v5688 = vld [vmem:[#allocation2 + $0x10] sm:$0xff]
    %v5689 = vld [vmem:[#allocation2 + $0x18] sm:$0xff]
    %v5690 = vld [vmem:[#allocation2 + $0x20] sm:$0xff]
    %v5691 = vld [vmem:[#allocation2 + $0x28] sm:$0xff]
    %v5692 = vld [vmem:[#allocation2 + $0x30] sm:$0xff]
    %v5693 = vld [vmem:[#allocation2 + $0x38] sm:$0xff]
    %v5694 = vld [vmem:[#allocation2 + $0x40] sm:$0xff]
    %v5695 = vld [vmem:[#allocation2 + $0x48] sm:$0xff]
    %v5696 = vld [vmem:[#allocation2 + $0x50] sm:$0xff]
    %v5697 = vld [vmem:[#allocation2 + $0x58] sm:$0xff]
    %v5698 = vld [vmem:[#allocation2 + $0x60] sm:$0xff]
    %v5699 = vld [vmem:[#allocation2 + $0x68] sm:$0xff]
    %v5700 = vld [vmem:[#allocation2 + $0x70] sm:$0xff]
    %v5701 = vld [vmem:[#allocation2 + $0x78] sm:$0xff]
    %v5702 = vld [vmem:[#allocation2 + $0x80] sm:$0xff]
    %v5703 = vld [vmem:[#allocation2 + $0x88] sm:$0xff]
    %v5704 = vld [vmem:[#allocation2 + $0x90] sm:$0xff]
    %v5705 = vld [vmem:[#allocation2 + $0x98] sm:$0xff]
    %v5706 = vld [vmem:[#allocation2 + $0xa0] sm:$0xff]
    %v5707 = vld [vmem:[#allocation2 + $0xa8] sm:$0xff]
    %v5708 = vld [vmem:[#allocation2 + $0xb0] sm:$0xff]
    %v5709 = vld [vmem:[#allocation2 + $0xb8] sm:$0xff]
    %v5710 = vld [vmem:[#allocation2 + $0xf0] sm:$0xff]
    %v5711 = vld [vmem:[#allocation2 + $0xf8] sm:$0xff]
    %v5712 = vld [vmem:[#allocation2 + $0x100] sm:$0xff]
    %v5713 = vld [vmem:[#allocation2 + $0x108] sm:$0xff]
    %v5714 = vld [vmem:[#allocation2 + $0x110] sm:$0xff]
    %v5715 = vld [vmem:[#allocation2 + $0x118] sm:$0xff]
    %v5716 = vld [vmem:[#allocation2 + $0x120] sm:$0xff]
    %v5717 = vld [vmem:[#allocation2 + $0x128] sm:$0xff]
    %v5718 = vld [vmem:[#allocation2 + $0x130] sm:$0xff]
    %v5719 = vld [vmem:[#allocation2 + $0x138] sm:$0xff]
    %v5720 = vld [vmem:[#allocation2 + $0x140] sm:$0xff]
    %v5721 = vld [vmem:[#allocation2 + $0x148] sm:$0xff]
    %v5722 = vld [vmem:[#allocation2 + $0x150] sm:$0xff]
    %v5723 = vld [vmem:[#allocation2 + $0x158] sm:$0xff]
    %v5724 = vld [vmem:[#allocation2 + $0x160] sm:$0xff]
    %v5725 = vld [vmem:[#allocation2 + $0x168] sm:$0xff]
    %v5726 = vld [vmem:[#allocation2 + $0x170] sm:$0xff]
    %v5727 = vld [vmem:[#allocation2 + $0x178] sm:$0xff]
    %v5728 = vld [vmem:[#allocation2 + $0x180] sm:$0xff]
    %v5729 = vld [vmem:[#allocation2 + $0x188] sm:$0xff]
    %v5730 = vld [vmem:[#allocation2 + $0x190] sm:$0xff]
    %v5731 = vld [vmem:[#allocation2 + $0x198] sm:$0xff]
    %v5732 = vld [vmem:[#allocation2 + $0x1a0] sm:$0xff]
    %v5733 = vld [vmem:[#allocation2 + $0x1a8] sm:$0xff]
    %v5734 = vpack.c.bf16 %v5689, %v5686
    %v5735 = vpack.c.bf16 %v5690, %v5687
    %v5736 = vpack.c.bf16 %v5691, %v5688
    %v5737 = vpack.c.bf16 %v5695, %v5692
    %v5738 = vpack.c.bf16 %v5696, %v5693
    %v5739 = vpack.c.bf16 %v5697, %v5694
    %v5740 = vpack.c.bf16 %v5701, %v5698
    %v5741 = vpack.c.bf16 %v5702, %v5699
    %v5742 = vpack.c.bf16 %v5703, %v5700
    %v5743 = vpack.c.bf16 %v5707, %v5704
    %v5744 = vpack.c.bf16 %v5708, %v5705
    %v5745 = vpack.c.bf16 %v5709, %v5706
    %v5746 = vpack.c.bf16 %v5713, %v5710
    %v5747 = vpack.c.bf16 %v5714, %v5711
    %v5748 = vpack.c.bf16 %v5715, %v5712
    %v5749 = vpack.c.bf16 %v5719, %v5716
    %v5750 = vpack.c.bf16 %v5720, %v5717
    %v5751 = vpack.c.bf16 %v5721, %v5718
    %v5752 = vpack.c.bf16 %v5725, %v5722
    %v5753 = vpack.c.bf16 %v5726, %v5723
    %v5754 = vpack.c.bf16 %v5727, %v5724
    %v5755 = vpack.c.bf16 %v5731, %v5728
    %v5756 = vpack.c.bf16 %v5732, %v5729
    %v5757 = vpack.c.bf16 %v5733, %v5730
    %v5758 = vld [vmem:[#allocation8] sm:$0xf]
    %v5759 = vld [vmem:[#allocation8 + $0x4] sm:$0xf]
    %v5760 = vld [vmem:[#allocation8 + $0x8] sm:$0xf]
    %v5761 = vld [vmem:[#allocation8 + $0xc] sm:$0xf]
    %v5762 = vld [vmem:[#allocation8 + $0x10] sm:$0xf]
    %v5763 = vld [vmem:[#allocation8 + $0x14] sm:$0xf]
    %v5764 = vld [vmem:[#allocation8 + $0x18] sm:$0xf]
    %v5765 = vld [vmem:[#allocation8 + $0x1c] sm:$0xf]
    %v5766 = vld [vmem:[#allocation8 + $0x20] sm:$0xf]
    %v5767 = vld [vmem:[#allocation8 + $0x24] sm:$0xf]
    %v5768 = vld [vmem:[#allocation8 + $0x28] sm:$0xf]
    %v5769 = vld [vmem:[#allocation8 + $0x2c] sm:$0xf]
    %v5770 = vld [vmem:[#allocation8 + $0x30] sm:$0xf]
    %v5771 = vld [vmem:[#allocation8 + $0x34] sm:$0xf]
    %v5772 = vld [vmem:[#allocation8 + $0x38] sm:$0xf]
    %v5773 = vld [vmem:[#allocation8 + $0x3c] sm:$0xf]
    %v5774 = vld [vmem:[#allocation8 + $0x40] sm:$0xf]
    %v5775 = vld [vmem:[#allocation8 + $0x44] sm:$0xf]
    %v5776 = vld [vmem:[#allocation8 + $0x48] sm:$0xf]
    %v5777 = vld [vmem:[#allocation8 + $0x4c] sm:$0xf]
    %v5778 = vld [vmem:[#allocation8 + $0x50] sm:$0xf]
    %v5779 = vld [vmem:[#allocation8 + $0x54] sm:$0xf]
    %v5780 = vld [vmem:[#allocation8 + $0x58] sm:$0xf]
    %v5781 = vld [vmem:[#allocation8 + $0x5c] sm:$0xf]
    %v5782 = vld [vmem:[#allocation8 + $0x60] sm:$0xf]
    %v5783 = vld [vmem:[#allocation8 + $0x64] sm:$0xf]
    %v5784 = vld [vmem:[#allocation8 + $0x68] sm:$0xf]
    %v5785 = vld [vmem:[#allocation8 + $0x6c] sm:$0xf]
    %v5786 = vld [vmem:[#allocation8 + $0x70] sm:$0xf]
    %v5787 = vld [vmem:[#allocation8 + $0x74] sm:$0xf]
    %v5788 = vld [vmem:[#allocation8 + $0x78] sm:$0xf]
    %v5789 = vld [vmem:[#allocation8 + $0x7c] sm:$0xf]
    %v5790 = vld [vmem:[#allocation8 + $0x80] sm:$0xf]
    %v5791 = vld [vmem:[#allocation8 + $0x84] sm:$0xf]
    %v5792 = vld [vmem:[#allocation8 + $0x88] sm:$0xf]
    %v5793 = vld [vmem:[#allocation8 + $0x8c] sm:$0xf]
    %v5794 = vld [vmem:[#allocation8 + $0x90] sm:$0xf]
    %v5795 = vld [vmem:[#allocation8 + $0x94] sm:$0xf]
    %v5796 = vld [vmem:[#allocation8 + $0x98] sm:$0xf]
    %v5797 = vld [vmem:[#allocation8 + $0x9c] sm:$0xf]
    %v5798 = vld [vmem:[#allocation8 + $0xa0] sm:$0xf]
    %v5799 = vld [vmem:[#allocation8 + $0xa4] sm:$0xf]
    %v5800 = vld [vmem:[#allocation8 + $0xa8] sm:$0xf]
    %v5801 = vld [vmem:[#allocation8 + $0xac] sm:$0xf]
    %v5802 = vld [vmem:[#allocation8 + $0xb0] sm:$0xf]
    %v5803 = vld [vmem:[#allocation8 + $0xb4] sm:$0xf]
    %v5804 = vld [vmem:[#allocation8 + $0xb8] sm:$0xf]
    %v5805 = vld [vmem:[#allocation8 + $0xbc] sm:$0xf]
    %v5806 = vld [vmem:[%s67] sm:$0xff]
    %v5807 = vld [vmem:[%s67 + $0x8] sm:$0xff]
    %v5808 = vld [vmem:[%s67 + $0x10] sm:$0xff]
    %v5809 = vld [vmem:[%s67 + $0x18] sm:$0xff]
    %v5810 = vld [vmem:[%s67 + $0x20] sm:$0xff]
    %v5811 = vld [vmem:[%s67 + $0x28] sm:$0xff]
    %v5812 = vld [vmem:[%s67 + $0x30] sm:$0xff]
    %v5813 = vld [vmem:[%s67 + $0x38] sm:$0xff]
    %v5814 = vld [vmem:[%s67 + $0x40] sm:$0xff]
    %v5815 = vld [vmem:[%s67 + $0x48] sm:$0xff]
    %v5816 = vld [vmem:[%s67 + $0x50] sm:$0xff]
    %v5817 = vld [vmem:[%s67 + $0x58] sm:$0xff]
    %v5818 = vld [vmem:[%s67 + $0x60] sm:$0xff]
    %v5819 = vld [vmem:[%s67 + $0x68] sm:$0xff]
    %v5820 = vld [vmem:[%s67 + $0x70] sm:$0xff]
    %v5821 = vld [vmem:[%s67 + $0x78] sm:$0xff]
    %v5822 = vld [vmem:[%s67 + $0x80] sm:$0xff]
    %v5823 = vld [vmem:[%s67 + $0x88] sm:$0xff]
    %v5824 = vld [vmem:[%s67 + $0x90] sm:$0xff]
    %v5825 = vld [vmem:[%s67 + $0x98] sm:$0xff]
    %v5826 = vld [vmem:[%s67 + $0xa0] sm:$0xff]
    %v5827 = vld [vmem:[%s67 + $0xa8] sm:$0xff]
    %v5828 = vld [vmem:[%s67 + $0xb0] sm:$0xff]
    %v5829 = vld [vmem:[%s67 + $0xb8] sm:$0xff]
    %v5830 = vld [vmem:[%s67 + $0xf0] sm:$0xff]
    %v5831 = vld [vmem:[%s67 + $0xf8] sm:$0xff]
    %v5832 = vld [vmem:[%s67 + $0x100] sm:$0xff]
    %v5833 = vld [vmem:[%s67 + $0x108] sm:$0xff]
    %v5834 = vld [vmem:[%s67 + $0x110] sm:$0xff]
    %v5835 = vld [vmem:[%s67 + $0x118] sm:$0xff]
    %v5836 = vld [vmem:[%s67 + $0x120] sm:$0xff]
    %v5837 = vld [vmem:[%s67 + $0x128] sm:$0xff]
    %v5838 = vld [vmem:[%s67 + $0x130] sm:$0xff]
    %v5839 = vld [vmem:[%s67 + $0x138] sm:$0xff]
    %v5840 = vld [vmem:[%s67 + $0x140] sm:$0xff]
    %v5841 = vld [vmem:[%s67 + $0x148] sm:$0xff]
    %v5842 = vld [vmem:[%s67 + $0x150] sm:$0xff]
    %v5843 = vld [vmem:[%s67 + $0x158] sm:$0xff]
    %v5844 = vld [vmem:[%s67 + $0x160] sm:$0xff]
    %v5845 = vld [vmem:[%s67 + $0x168] sm:$0xff]
    %v5846 = vld [vmem:[%s67 + $0x170] sm:$0xff]
    %v5847 = vld [vmem:[%s67 + $0x178] sm:$0xff]
    %v5848 = vld [vmem:[%s67 + $0x180] sm:$0xff]
    %v5849 = vld [vmem:[%s67 + $0x188] sm:$0xff]
    %v5850 = vld [vmem:[%s67 + $0x190] sm:$0xff]
    %v5851 = vld [vmem:[%s67 + $0x198] sm:$0xff]
    %v5852 = vld [vmem:[%s67 + $0x1a0] sm:$0xff]
    %v5853 = vld [vmem:[%s67 + $0x1a8] sm:$0xff]
    %v5854 = vpack.c.bf16 %v5809, %v5806
    %v5855 = vpack.c.bf16 %v5810, %v5807
    %v5856 = vpack.c.bf16 %v5811, %v5808
    %v5857 = vpack.c.bf16 %v5815, %v5812
    %v5858 = vpack.c.bf16 %v5816, %v5813
    %v5859 = vpack.c.bf16 %v5817, %v5814
    %v5860 = vpack.c.bf16 %v5821, %v5818
    %v5861 = vpack.c.bf16 %v5822, %v5819
    %v5862 = vpack.c.bf16 %v5823, %v5820
    %v5863 = vpack.c.bf16 %v5827, %v5824
    %v5864 = vpack.c.bf16 %v5828, %v5825
    %v5865 = vpack.c.bf16 %v5829, %v5826
    %v5866 = vpack.c.bf16 %v5833, %v5830
    %v5867 = vpack.c.bf16 %v5834, %v5831
    %v5868 = vpack.c.bf16 %v5835, %v5832
    %v5869 = vpack.c.bf16 %v5839, %v5836
    %v5870 = vpack.c.bf16 %v5840, %v5837
    %v5871 = vpack.c.bf16 %v5841, %v5838
    %v5872 = vpack.c.bf16 %v5845, %v5842
    %v5873 = vpack.c.bf16 %v5846, %v5843
    %v5874 = vpack.c.bf16 %v5847, %v5844
    %v5875 = vpack.c.bf16 %v5851, %v5848
    %v5876 = vpack.c.bf16 %v5852, %v5849
    %v5877 = vpack.c.bf16 %v5853, %v5850
    %v5878 = vld [vmem:[%s468] sm:$0xf]
    %v5879 = vld [vmem:[%s468 + $0x4] sm:$0xf]
    %v5880 = vld [vmem:[%s468 + $0x8] sm:$0xf]
    %v5881 = vld [vmem:[%s468 + $0xc] sm:$0xf]
    %v5882 = vld [vmem:[%s468 + $0x10] sm:$0xf]
    %v5883 = vld [vmem:[%s468 + $0x14] sm:$0xf]
    %v5884 = vld [vmem:[%s468 + $0x18] sm:$0xf]
    %v5885 = vld [vmem:[%s468 + $0x1c] sm:$0xf]
    %v5886 = vld [vmem:[%s468 + $0x20] sm:$0xf]
    %v5887 = vld [vmem:[%s468 + $0x24] sm:$0xf]
    %v5888 = vld [vmem:[%s468 + $0x28] sm:$0xf]
    %v5889 = vld [vmem:[%s468 + $0x2c] sm:$0xf]
    %v5890 = vld [vmem:[%s468 + $0x30] sm:$0xf]
    %v5891 = vld [vmem:[%s468 + $0x34] sm:$0xf]
    %v5892 = vld [vmem:[%s468 + $0x38] sm:$0xf]
    %v5893 = vld [vmem:[%s468 + $0x3c] sm:$0xf]
    %v5894 = vld [vmem:[%s468 + $0x40] sm:$0xf]
    %v5895 = vld [vmem:[%s468 + $0x44] sm:$0xf]
    %v5896 = vld [vmem:[%s468 + $0x48] sm:$0xf]
    %v5897 = vld [vmem:[%s468 + $0x4c] sm:$0xf]
    %v5898 = vld [vmem:[%s468 + $0x50] sm:$0xf]
    %v5899 = vld [vmem:[%s468 + $0x54] sm:$0xf]
    %v5900 = vld [vmem:[%s468 + $0x58] sm:$0xf]
    %v5901 = vld [vmem:[%s468 + $0x5c] sm:$0xf]
    %v5902 = vld [vmem:[%s468 + $0x60] sm:$0xf]
    %v5903 = vld [vmem:[%s468 + $0x64] sm:$0xf]
    %v5904 = vld [vmem:[%s468 + $0x68] sm:$0xf]
    %v5905 = vld [vmem:[%s468 + $0x6c] sm:$0xf]
    %v5906 = vld [vmem:[%s468 + $0x70] sm:$0xf]
    %v5907 = vld [vmem:[%s468 + $0x74] sm:$0xf]
    %v5908 = vld [vmem:[%s468 + $0x78] sm:$0xf]
    %v5909 = vld [vmem:[%s468 + $0x7c] sm:$0xf]
    %v5910 = vld [vmem:[%s468 + $0x80] sm:$0xf]
    %v5911 = vld [vmem:[%s468 + $0x84] sm:$0xf]
    %v5912 = vld [vmem:[%s468 + $0x88] sm:$0xf]
    %v5913 = vld [vmem:[%s468 + $0x8c] sm:$0xf]
    %v5914 = vld [vmem:[%s468 + $0x90] sm:$0xf]
    %v5915 = vld [vmem:[%s468 + $0x94] sm:$0xf]
    %v5916 = vld [vmem:[%s468 + $0x98] sm:$0xf]
    %v5917 = vld [vmem:[%s468 + $0x9c] sm:$0xf]
    %v5918 = vld [vmem:[%s468 + $0xa0] sm:$0xf]
    %v5919 = vld [vmem:[%s468 + $0xa4] sm:$0xf]
    %v5920 = vld [vmem:[%s468 + $0xa8] sm:$0xf]
    %v5921 = vld [vmem:[%s468 + $0xac] sm:$0xf]
    %v5922 = vld [vmem:[%s468 + $0xb0] sm:$0xf]
    %v5923 = vld [vmem:[%s468 + $0xb4] sm:$0xf]
    %v5924 = vld [vmem:[%s468 + $0xb8] sm:$0xf]
    %v5925 = vld [vmem:[%s468 + $0xbc] sm:$0xf]
    %v5974 = vunpack.c.l.b16 %v5878
    %v5975 = vunpack.c.l.b16 %v5879
    %v5976 = vunpack.c.l.b16 %v5880
    %v5977 = vunpack.c.l.b16 %v5881
    %v5978 = vunpack.c.l.b16 %v5882
    %v5979 = vunpack.c.l.b16 %v5883
    %v5980 = vunpack.c.l.b16 %v5884
    %v5981 = vunpack.c.l.b16 %v5885
    %v5982 = vunpack.c.l.b16 %v5886
    %v5983 = vunpack.c.l.b16 %v5887
    %v5984 = vunpack.c.l.b16 %v5888
    %v5985 = vunpack.c.l.b16 %v5889
    %v5986 = vunpack.c.l.b16 %v5890
    %v5987 = vunpack.c.l.b16 %v5891
    %v5988 = vunpack.c.l.b16 %v5892
    %v5989 = vunpack.c.l.b16 %v5893
    %v5990 = vunpack.c.l.b16 %v5894
    %v5991 = vunpack.c.l.b16 %v5895
    %v5992 = vunpack.c.l.b16 %v5896
    %v5993 = vunpack.c.l.b16 %v5897
    %v5994 = vunpack.c.l.b16 %v5898
    %v5995 = vunpack.c.l.b16 %v5899
    %v5996 = vunpack.c.l.b16 %v5900
    %v5997 = vunpack.c.l.b16 %v5901
    %v5998 = vunpack.c.l.b16 %v5902
    %v5999 = vunpack.c.l.b16 %v5903
    %v6000 = vunpack.c.l.b16 %v5904
    %v6001 = vunpack.c.l.b16 %v5905
    %v6002 = vunpack.c.l.b16 %v5906
    %v6003 = vunpack.c.l.b16 %v5907
    %v6004 = vunpack.c.l.b16 %v5908
    %v6005 = vunpack.c.l.b16 %v5909
    %v6006 = vunpack.c.l.b16 %v5910
    %v6007 = vunpack.c.l.b16 %v5911
    %v6008 = vunpack.c.l.b16 %v5912
    %v6009 = vunpack.c.l.b16 %v5913
    %v6010 = vunpack.c.l.b16 %v5914
    %v6011 = vunpack.c.l.b16 %v5915
    %v6012 = vunpack.c.l.b16 %v5916
    %v6013 = vunpack.c.l.b16 %v5917
    %v6014 = vunpack.c.l.b16 %v5918
    %v6015 = vunpack.c.l.b16 %v5919
    %v6016 = vunpack.c.l.b16 %v5920
    %v6017 = vunpack.c.l.b16 %v5921
    %v6018 = vunpack.c.l.b16 %v5922
    %v6019 = vunpack.c.l.b16 %v5923
    %v6020 = vunpack.c.l.b16 %v5924
    %v6021 = vunpack.c.l.b16 %v5925
    %v6022 = vpack.c.b16 %v5975, %v5974
    %v6023 = vpack.c.b16 %v5977, %v5976
    %v6024 = vpack.c.b16 %v5979, %v5978
    %v6025 = vpack.c.b16 %v5981, %v5980
    %v6026 = vpack.c.b16 %v5983, %v5982
    %v6027 = vpack.c.b16 %v5985, %v5984
    %v6028 = vpack.c.b16 %v5987, %v5986
    %v6029 = vpack.c.b16 %v5989, %v5988
    %v6030 = vpack.c.b16 %v5991, %v5990
    %v6031 = vpack.c.b16 %v5993, %v5992
    %v6032 = vpack.c.b16 %v5995, %v5994
    %v6033 = vpack.c.b16 %v5997, %v5996
    %v6034 = vpack.c.b16 %v5999, %v5998
    %v6035 = vpack.c.b16 %v6001, %v6000
    %v6036 = vpack.c.b16 %v6003, %v6002
    %v6037 = vpack.c.b16 %v6005, %v6004
    %v6038 = vpack.c.b16 %v6007, %v6006
    %v6039 = vpack.c.b16 %v6009, %v6008
    %v6040 = vpack.c.b16 %v6011, %v6010
    %v6041 = vpack.c.b16 %v6013, %v6012
    %v6042 = vpack.c.b16 %v6015, %v6014
    %v6043 = vpack.c.b16 %v6017, %v6016
    %v6044 = vpack.c.b16 %v6019, %v6018
    %v6045 = vpack.c.b16 %v6021, %v6020
    %6070 = vmatprep.subr.bf16.mxu0 0
    %6071 = vmatpush1.bf16.msra.mxu0 %v6022
    %6072 = vmatprep.subr.bf16.mxu0 0
    %6073 = vmatpush1.bf16.msra.mxu0 %v6023
    %6074 = vmatprep.subr.bf16.mxu0 0
    %6075 = vmatpush1.bf16.msra.mxu0 %v6024
    %6076 = vmatprep.subr.bf16.mxu0 0
    %6077 = vmatpush1.bf16.msra.mxu0 %v6025
    %6078 = vmatprep.subr.bf16.mxu0 0
    %6079 = vmatpush1.bf16.msra.mxu0 %v6026
    %6080 = vmatprep.subr.bf16.mxu0 0
    %6081 = vmatpush1.bf16.msra.mxu0 %v6027
    %6082 = vmatprep.subr.bf16.mxu0 0
    %6083 = vmatpush1.bf16.msra.mxu0 %v6028
    %6084 = vmatprep.subr.bf16.mxu0 0
    %6085 = vmatpush1.bf16.msra.mxu0 %v6029
    %6086 = vmatprep.subr.bf16.mxu0 0
    %6087 = vmatpush1.bf16.msra.mxu0 %v6030
    %6088 = vmatprep.subr.bf16.mxu0 0
    %6089 = vmatpush1.bf16.msra.mxu0 %v6031
    %6090 = vmatprep.subr.bf16.mxu0 0
    %6091 = vmatpush1.bf16.msra.mxu0 %v6032
    %6092 = vmatprep.subr.bf16.mxu0 0
    %6093 = vmatpush1.bf16.msra.mxu0 %v6033
    %6094 = vmatprep.subr.bf16.mxu0 0
    %6095 = vmatpush1.bf16.msra.mxu0 %v6034
    %6096 = vmatprep.subr.bf16.mxu0 0
    %6097 = vmatpush1.bf16.msra.mxu0 %v6035
    %6098 = vmatprep.subr.bf16.mxu0 0
    %6099 = vmatpush1.bf16.msra.mxu0 %v6036
    %6100 = vmatprep.subr.bf16.mxu0 0
    %6101 = vmatpush1.bf16.msra.mxu0 %v6037
    %6102 = vmatprep.mubr.bf16.mxu0 %v5855
    %6103 = vmatmul.mubr.bf16.gmra.mrb[0].mxu0 %v5854
    %v6104 = vpop.f32.mrb[0].mxu0
    %v6105 = vadd.f32 0.0, %v6104
    %v6106 = vpop.f32.mrb[0].mxu0
    %v6107 = vpop.f32.mrb[0].mxu0
    %v6108 = vadd.f32 0.0, %v6107
    %v6109 = vpop.f32.mrb[0].mxu0
    %6110 = vmatprep.mubr.bf16.mxu0 %v5858
    %6111 = vmatmul.mubr.bf16.gmra.mrb[0].mxu0 %v5857
    %v6112 = vpop.f32.mrb[0].mxu0
    %v6113 = vadd.f32 0.0, %v6112
    %v6114 = vpop.f32.mrb[0].mxu0
    %v6115 = vpop.f32.mrb[0].mxu0
    %v6116 = vadd.f32 0.0, %v6115
    %v6117 = vpop.f32.mrb[0].mxu0
    %6118 = vmatprep.mubr.bf16.mxu0 %v5861
    %6119 = vmatmul.mubr.bf16.gmra.mrb[0].mxu0 %v5860
    %v6120 = vpop.f32.mrb[0].mxu0
    %v6121 = vadd.f32 0.0, %v6120
    %v6122 = vpop.f32.mrb[0].mxu0
    %v6123 = vpop.f32.mrb[0].mxu0
    %v6124 = vadd.f32 0.0, %v6123
    %v6125 = vpop.f32.mrb[0].mxu0
    %6126 = vmatprep.mubr.bf16.mxu0 %v5864
    %6127 = vmatmul.mubr.bf16.gmra.mrb[0].mxu0 %v5863
    %v6128 = vpop.f32.mrb[0].mxu0
    %v6129 = vadd.f32 0.0, %v6128
    %v6130 = vpop.f32.mrb[0].mxu0
    %v6131 = vpop.f32.mrb[0].mxu0
    %v6132 = vadd.f32 0.0, %v6131
    %v6133 = vpop.f32.mrb[0].mxu0
    %6134 = vmatprep.mubr.bf16.mxu0 %v5867
    %6135 = vmatmul.mubr.bf16.gmra.mrb[0].mxu0 %v5866
    %v6136 = vpop.f32.mrb[0].mxu0
    %v6137 = vadd.f32 0.0, %v6136
    %v6138 = vpop.f32.mrb[0].mxu0
    %v6139 = vpop.f32.mrb[0].mxu0
    %v6140 = vadd.f32 0.0, %v6139
    %v6141 = vpop.f32.mrb[0].mxu0
    %6142 = vmatprep.mubr.bf16.mxu0 %v5870
    %6143 = vmatmul.mubr.bf16.gmra.mrb[0].mxu0 %v5869
    %v6144 = vpop.f32.mrb[0].mxu0
    %v6145 = vadd.f32 0.0, %v6144
    %v6146 = vpop.f32.mrb[0].mxu0
    %v6147 = vpop.f32.mrb[0].mxu0
    %v6148 = vadd.f32 0.0, %v6147
    %v6149 = vpop.f32.mrb[0].mxu0
    %6150 = vmatprep.mubr.bf16.mxu0 %v5873
    %6151 = vmatmul.mubr.bf16.gmra.mrb[0].mxu0 %v5872
    %v6152 = vpop.f32.mrb[0].mxu0
    %v6153 = vadd.f32 0.0, %v6152
    %v6154 = vpop.f32.mrb[0].mxu0
    %v6155 = vpop.f32.mrb[0].mxu0
    %v6156 = vadd.f32 0.0, %v6155
    %v6157 = vpop.f32.mrb[0].mxu0
    %6158 = vmatprep.mubr.bf16.mxu0 %v5876
    %6159 = vmatmul.mubr.bf16.gmra.mrb[0].mxu0 %v5875
    %v6160 = vpop.f32.mrb[0].mxu0
    %v6161 = vadd.f32 0.0, %v6160
    %v6162 = vpop.f32.mrb[0].mxu0
    %v6163 = vpop.f32.mrb[0].mxu0
    %v6164 = vadd.f32 0.0, %v6163
    %v6165 = vpop.f32.mrb[0].mxu0
    %6166 = vdwg.mxu0
    %6167 = vmatprep.subr.bf16.mxu0 0
    %6168 = vmatpush1.bf16.msra.mxu0 %v6038
    %6169 = vmatprep.subr.bf16.mxu0 0
    %6170 = vmatpush1.bf16.msra.mxu0 %v6039
    %6171 = vmatprep.subr.bf16.mxu0 0
    %6172 = vmatpush1.bf16.msra.mxu0 %v6040
    %6173 = vmatprep.subr.bf16.mxu0 0
    %6174 = vmatpush1.bf16.msra.mxu0 %v6041
    %6175 = vmatprep.subr.bf16.mxu0 0
    %6176 = vmatpush1.bf16.msra.mxu0 %v6042
    %6177 = vmatprep.subr.bf16.mxu0 0
    %6178 = vmatpush1.bf16.msra.mxu0 %v6043
    %6179 = vmatprep.subr.bf16.mxu0 0
    %6180 = vmatpush1.bf16.msra.mxu0 %v6044
    %6181 = vmatprep.subr.bf16.mxu0 0
    %6182 = vmatpush1.bf16.msra.mxu0 %v6045
    %6183 = vmatprep.subr.bf16.mxu0 0
    %6184 = vmatpush1.bf16.msra.mxu0 0
    %6185 = vmatprep.subr.bf16.mxu0 0
    %6186 = vmatpush1.bf16.msra.mxu0 0
    %6187 = vmatprep.subr.bf16.mxu0 0
    %6188 = vmatpush1.bf16.msra.mxu0 0
    %6189 = vmatprep.subr.bf16.mxu0 0
    %6190 = vmatpush1.bf16.msra.mxu0 0
    %6191 = vmatprep.subr.bf16.mxu0 0
    %6192 = vmatpush1.bf16.msra.mxu0 0
    %6193 = vmatprep.subr.bf16.mxu0 0
    %6194 = vmatpush1.bf16.msra.mxu0 0
    %6195 = vmatprep.subr.bf16.mxu0 0
    %6196 = vmatpush1.bf16.msra.mxu0 0
    %6197 = vmatprep.subr.bf16.mxu0 0
    %6198 = vmatpush1.bf16.msra.mxu0 0
    %6199 = vmatprep.mubr.bf16.mxu0 0
    %6200 = vmatmul.mubr.bf16.gmra.mrb[0].mxu0 %v5856
    %v6201 = vpop.f32.mrb[0].mxu0
    %v6202 = vadd.f32 %v6105, %v6201
    %v6203 = vpop.f32.mrb[0].mxu0
    %v6204 = vpop.f32.mrb[0].mxu0
    %v6205 = vadd.f32 %v6108, %v6204
    %v6206 = vpop.f32.mrb[0].mxu0
    %6207 = vmatprep.mubr.bf16.mxu0 0
    %6208 = vmatmul.mubr.bf16.gmra.mrb[0].mxu0 %v5859
    %v6209 = vpop.f32.mrb[0].mxu0
    %v6210 = vadd.f32 %v6113, %v6209
    %v6211 = vpop.f32.mrb[0].mxu0
    %v6212 = vpop.f32.mrb[0].mxu0
    %v6213 = vadd.f32 %v6116, %v6212
    %v6214 = vpop.f32.mrb[0].mxu0
    %6215 = vmatprep.mubr.bf16.mxu0 0
    %6216 = vmatmul.mubr.bf16.gmra.mrb[0].mxu0 %v5862
    %v6217 = vpop.f32.mrb[0].mxu0
    %v6218 = vadd.f32 %v6121, %v6217
    %v6219 = vpop.f32.mrb[0].mxu0
    %v6220 = vpop.f32.mrb[0].mxu0
    %v6221 = vadd.f32 %v6124, %v6220
    %v6222 = vpop.f32.mrb[0].mxu0
    %6223 = vmatprep.mubr.bf16.mxu0 0
    %6224 = vmatmul.mubr.bf16.gmra.mrb[0].mxu0 %v5865
    %v6225 = vpop.f32.mrb[0].mxu0
    %v6226 = vadd.f32 %v6129, %v6225
    %v6227 = vpop.f32.mrb[0].mxu0
    %v6228 = vpop.f32.mrb[0].mxu0
    %v6229 = vadd.f32 %v6132, %v6228
    %v6230 = vpop.f32.mrb[0].mxu0
    %6231 = vmatprep.mubr.bf16.mxu0 0
    %6232 = vmatmul.mubr.bf16.gmra.mrb[0].mxu0 %v5868
    %v6233 = vpop.f32.mrb[0].mxu0
    %v6234 = vadd.f32 %v6137, %v6233
    %v6235 = vpop.f32.mrb[0].mxu0
    %v6236 = vpop.f32.mrb[0].mxu0
    %v6237 = vadd.f32 %v6140, %v6236
    %v6238 = vpop.f32.mrb[0].mxu0
    %6239 = vmatprep.mubr.bf16.mxu0 0
    %6240 = vmatmul.mubr.bf16.gmra.mrb[0].mxu0 %v5871
    %v6241 = vpop.f32.mrb[0].mxu0
    %v6242 = vadd.f32 %v6145, %v6241
    %v6243 = vpop.f32.mrb[0].mxu0
    %v6244 = vpop.f32.mrb[0].mxu0
    %v6245 = vadd.f32 %v6148, %v6244
    %v6246 = vpop.f32.mrb[0].mxu0
    %6247 = vmatprep.mubr.bf16.mxu0 0
    %6248 = vmatmul.mubr.bf16.gmra.mrb[0].mxu0 %v5874
    %v6249 = vpop.f32.mrb[0].mxu0
    %v6250 = vadd.f32 %v6153, %v6249
    %v6251 = vpop.f32.mrb[0].mxu0
    %v6252 = vpop.f32.mrb[0].mxu0
    %v6253 = vadd.f32 %v6156, %v6252
    %v6254 = vpop.f32.mrb[0].mxu0
    %6255 = vmatprep.mubr.bf16.mxu0 0
    %6256 = vmatmul.mubr.bf16.gmra.mrb[0].mxu0 %v5877
    %v6257 = vpop.f32.mrb[0].mxu0
    %v6258 = vadd.f32 %v6161, %v6257
    %v6259 = vpop.f32.mrb[0].mxu0
    %v6260 = vpop.f32.mrb[0].mxu0
    %v6261 = vadd.f32 %v6164, %v6260
    %v6262 = vpop.f32.mrb[0].mxu0
    %6263 = vdwg.mxu0
    %v6312 = vunpack.c.l.b16 %v5758
    %v6313 = vunpack.c.l.b16 %v5759
    %v6314 = vunpack.c.l.b16 %v5760
    %v6315 = vunpack.c.l.b16 %v5761
    %v6316 = vunpack.c.l.b16 %v5762
    %v6317 = vunpack.c.l.b16 %v5763
    %v6318 = vunpack.c.l.b16 %v5764
    %v6319 = vunpack.c.l.b16 %v5765
    %v6320 = vunpack.c.l.b16 %v5766
    %v6321 = vunpack.c.l.b16 %v5767
    %v6322 = vunpack.c.l.b16 %v5768
    %v6323 = vunpack.c.l.b16 %v5769
    %v6324 = vunpack.c.l.b16 %v5770
    %v6325 = vunpack.c.l.b16 %v5771
    %v6326 = vunpack.c.l.b16 %v5772
    %v6327 = vunpack.c.l.b16 %v5773
    %v6328 = vunpack.c.l.b16 %v5774
    %v6329 = vunpack.c.l.b16 %v5775
    %v6330 = vunpack.c.l.b16 %v5776
    %v6331 = vunpack.c.l.b16 %v5777
    %v6332 = vunpack.c.l.b16 %v5778
    %v6333 = vunpack.c.l.b16 %v5779
    %v6334 = vunpack.c.l.b16 %v5780
    %v6335 = vunpack.c.l.b16 %v5781
    %v6336 = vunpack.c.l.b16 %v5782
    %v6337 = vunpack.c.l.b16 %v5783
    %v6338 = vunpack.c.l.b16 %v5784
    %v6339 = vunpack.c.l.b16 %v5785
    %v6340 = vunpack.c.l.b16 %v5786
    %v6341 = vunpack.c.l.b16 %v5787
    %v6342 = vunpack.c.l.b16 %v5788
    %v6343 = vunpack.c.l.b16 %v5789
    %v6344 = vunpack.c.l.b16 %v5790
    %v6345 = vunpack.c.l.b16 %v5791
    %v6346 = vunpack.c.l.b16 %v5792
    %v6347 = vunpack.c.l.b16 %v5793
    %v6348 = vunpack.c.l.b16 %v5794
    %v6349 = vunpack.c.l.b16 %v5795
    %v6350 = vunpack.c.l.b16 %v5796
    %v6351 = vunpack.c.l.b16 %v5797
    %v6352 = vunpack.c.l.b16 %v5798
    %v6353 = vunpack.c.l.b16 %v5799
    %v6354 = vunpack.c.l.b16 %v5800
    %v6355 = vunpack.c.l.b16 %v5801
    %v6356 = vunpack.c.l.b16 %v5802
    %v6357 = vunpack.c.l.b16 %v5803
    %v6358 = vunpack.c.l.b16 %v5804
    %v6359 = vunpack.c.l.b16 %v5805
    %v6360 = vpack.c.b16 %v6313, %v6312
    %v6361 = vpack.c.b16 %v6315, %v6314
    %v6362 = vpack.c.b16 %v6317, %v6316
    %v6363 = vpack.c.b16 %v6319, %v6318
    %v6364 = vpack.c.b16 %v6321, %v6320
    %v6365 = vpack.c.b16 %v6323, %v6322
    %v6366 = vpack.c.b16 %v6325, %v6324
    %v6367 = vpack.c.b16 %v6327, %v6326
    %v6368 = vpack.c.b16 %v6329, %v6328
    %v6369 = vpack.c.b16 %v6331, %v6330
    %v6370 = vpack.c.b16 %v6333, %v6332
    %v6371 = vpack.c.b16 %v6335, %v6334
    %v6372 = vpack.c.b16 %v6337, %v6336
    %v6373 = vpack.c.b16 %v6339, %v6338
    %v6374 = vpack.c.b16 %v6341, %v6340
    %v6375 = vpack.c.b16 %v6343, %v6342
    %v6376 = vpack.c.b16 %v6345, %v6344
    %v6377 = vpack.c.b16 %v6347, %v6346
    %v6378 = vpack.c.b16 %v6349, %v6348
    %v6379 = vpack.c.b16 %v6351, %v6350
    %v6380 = vpack.c.b16 %v6353, %v6352
    %v6381 = vpack.c.b16 %v6355, %v6354
    %v6382 = vpack.c.b16 %v6357, %v6356
    %v6383 = vpack.c.b16 %v6359, %v6358
    %6408 = vmatprep.subr.bf16.mxu0 0
    %6409 = vmatpush1.bf16.msra.mxu0 %v6360
    %6410 = vmatprep.subr.bf16.mxu0 0
    %6411 = vmatpush1.bf16.msra.mxu0 %v6361
    %6412 = vmatprep.subr.bf16.mxu0 0
    %6413 = vmatpush1.bf16.msra.mxu0 %v6362
    %6414 = vmatprep.subr.bf16.mxu0 0
    %6415 = vmatpush1.bf16.msra.mxu0 %v6363
    %6416 = vmatprep.subr.bf16.mxu0 0
    %6417 = vmatpush1.bf16.msra.mxu0 %v6364
    %6418 = vmatprep.subr.bf16.mxu0 0
    %6419 = vmatpush1.bf16.msra.mxu0 %v6365
    %6420 = vmatprep.subr.bf16.mxu0 0
    %6421 = vmatpush1.bf16.msra.mxu0 %v6366
    %6422 = vmatprep.subr.bf16.mxu0 0
    %6423 = vmatpush1.bf16.msra.mxu0 %v6367
    %6424 = vmatprep.subr.bf16.mxu0 0
    %6425 = vmatpush1.bf16.msra.mxu0 %v6368
    %6426 = vmatprep.subr.bf16.mxu0 0
    %6427 = vmatpush1.bf16.msra.mxu0 %v6369
    %6428 = vmatprep.subr.bf16.mxu0 0
    %6429 = vmatpush1.bf16.msra.mxu0 %v6370
    %6430 = vmatprep.subr.bf16.mxu0 0
    %6431 = vmatpush1.bf16.msra.mxu0 %v6371
    %6432 = vmatprep.subr.bf16.mxu0 0
    %6433 = vmatpush1.bf16.msra.mxu0 %v6372
    %6434 = vmatprep.subr.bf16.mxu0 0
    %6435 = vmatpush1.bf16.msra.mxu0 %v6373
    %6436 = vmatprep.subr.bf16.mxu0 0
    %6437 = vmatpush1.bf16.msra.mxu0 %v6374
    %6438 = vmatprep.subr.bf16.mxu0 0
    %6439 = vmatpush1.bf16.msra.mxu0 %v6375
    %6440 = vmatprep.mubr.bf16.mxu0 %v5735
    %6441 = vmatmul.mubr.bf16.gmra.mrb[0].mxu0 %v5734
    %v6442 = vpop.f32.mrb[0].mxu0
    %v6443 = vadd.f32 %v6202, %v6442
    %v6444 = vpop.f32.mrb[0].mxu0
    %v6445 = vpop.f32.mrb[0].mxu0
    %v6446 = vadd.f32 %v6205, %v6445
    %v6447 = vpop.f32.mrb[0].mxu0
    %6448 = vmatprep.mubr.bf16.mxu0 %v5738
    %6449 = vmatmul.mubr.bf16.gmra.mrb[0].mxu0 %v5737
    %v6450 = vpop.f32.mrb[0].mxu0
    %v6451 = vadd.f32 %v6210, %v6450
    %v6452 = vpop.f32.mrb[0].mxu0
    %v6453 = vpop.f32.mrb[0].mxu0
    %v6454 = vadd.f32 %v6213, %v6453
    %v6455 = vpop.f32.mrb[0].mxu0
    %6456 = vmatprep.mubr.bf16.mxu0 %v5741
    %6457 = vmatmul.mubr.bf16.gmra.mrb[0].mxu0 %v5740
    %v6458 = vpop.f32.mrb[0].mxu0
    %v6459 = vadd.f32 %v6218, %v6458
    %v6460 = vpop.f32.mrb[0].mxu0
    %v6461 = vpop.f32.mrb[0].mxu0
    %v6462 = vadd.f32 %v6221, %v6461
    %v6463 = vpop.f32.mrb[0].mxu0
    %6464 = vmatprep.mubr.bf16.mxu0 %v5744
    %6465 = vmatmul.mubr.bf16.gmra.mrb[0].mxu0 %v5743
    %v6466 = vpop.f32.mrb[0].mxu0
    %v6467 = vadd.f32 %v6226, %v6466
    %v6468 = vpop.f32.mrb[0].mxu0
    %v6469 = vpop.f32.mrb[0].mxu0
    %v6470 = vadd.f32 %v6229, %v6469
    %v6471 = vpop.f32.mrb[0].mxu0
    %6472 = vmatprep.mubr.bf16.mxu0 %v5747
    %6473 = vmatmul.mubr.bf16.gmra.mrb[0].mxu0 %v5746
    %v6474 = vpop.f32.mrb[0].mxu0
    %v6475 = vadd.f32 %v6234, %v6474
    %v6476 = vpop.f32.mrb[0].mxu0
    %v6477 = vpop.f32.mrb[0].mxu0
    %v6478 = vadd.f32 %v6237, %v6477
    %v6479 = vpop.f32.mrb[0].mxu0
    %6480 = vmatprep.mubr.bf16.mxu0 %v5750
    %6481 = vmatmul.mubr.bf16.gmra.mrb[0].mxu0 %v5749
    %v6482 = vpop.f32.mrb[0].mxu0
    %v6483 = vadd.f32 %v6242, %v6482
    %v6484 = vpop.f32.mrb[0].mxu0
    %v6485 = vpop.f32.mrb[0].mxu0
    %v6486 = vadd.f32 %v6245, %v6485
    %v6487 = vpop.f32.mrb[0].mxu0
    %6488 = vmatprep.mubr.bf16.mxu0 %v5753
    %6489 = vmatmul.mubr.bf16.gmra.mrb[0].mxu0 %v5752
    %v6490 = vpop.f32.mrb[0].mxu0
    %v6491 = vadd.f32 %v6250, %v6490
    %v6492 = vpop.f32.mrb[0].mxu0
    %v6493 = vpop.f32.mrb[0].mxu0
    %v6494 = vadd.f32 %v6253, %v6493
    %v6495 = vpop.f32.mrb[0].mxu0
    %6496 = vmatprep.mubr.bf16.mxu0 %v5756
    %6497 = vmatmul.mubr.bf16.gmra.mrb[0].mxu0 %v5755
    %v6498 = vpop.f32.mrb[0].mxu0
    %v6499 = vadd.f32 %v6258, %v6498
    %v6500 = vpop.f32.mrb[0].mxu0
    %v6501 = vpop.f32.mrb[0].mxu0
    %v6502 = vadd.f32 %v6261, %v6501
    %v6503 = vpop.f32.mrb[0].mxu0
    %6504 = vdwg.mxu0
    %6505 = vmatprep.subr.bf16.mxu0 0
    %6506 = vmatpush1.bf16.msra.mxu0 %v6376
    %6507 = vmatprep.subr.bf16.mxu0 0
    %6508 = vmatpush1.bf16.msra.mxu0 %v6377
    %6509 = vmatprep.subr.bf16.mxu0 0
    %6510 = vmatpush1.bf16.msra.mxu0 %v6378
    %6511 = vmatprep.subr.bf16.mxu0 0
    %6512 = vmatpush1.bf16.msra.mxu0 %v6379
    %6513 = vmatprep.subr.bf16.mxu0 0
    %6514 = vmatpush1.bf16.msra.mxu0 %v6380
    %6515 = vmatprep.subr.bf16.mxu0 0
    %6516 = vmatpush1.bf16.msra.mxu0 %v6381
    %6517 = vmatprep.subr.bf16.mxu0 0
    %6518 = vmatpush1.bf16.msra.mxu0 %v6382
    %6519 = vmatprep.subr.bf16.mxu0 0
    %6520 = vmatpush1.bf16.msra.mxu0 %v6383
    %6521 = vmatprep.subr.bf16.mxu0 0
    %6522 = vmatpush1.bf16.msra.mxu0 0
    %6523 = vmatprep.subr.bf16.mxu0 0
    %6524 = vmatpush1.bf16.msra.mxu0 0
    %6525 = vmatprep.subr.bf16.mxu0 0
    %6526 = vmatpush1.bf16.msra.mxu0 0
    %6527 = vmatprep.subr.bf16.mxu0 0
    %6528 = vmatpush1.bf16.msra.mxu0 0
    %6529 = vmatprep.subr.bf16.mxu0 0
    %6530 = vmatpush1.bf16.msra.mxu0 0
    %6531 = vmatprep.subr.bf16.mxu0 0
    %6532 = vmatpush1.bf16.msra.mxu0 0
    %6533 = vmatprep.subr.bf16.mxu0 0
    %6534 = vmatpush1.bf16.msra.mxu0 0
    %6535 = vmatprep.subr.bf16.mxu0 0
    %6536 = vmatpush1.bf16.msra.mxu0 0
    %6537 = vmatprep.mubr.bf16.mxu0 0
    %6538 = vmatmul.mubr.bf16.gmra.mrb[0].mxu0 %v5736
    %v6539 = vpop.f32.mrb[0].mxu0
    %v6540 = vadd.f32 %v6443, %v6539
    %v6541 = vpop.f32.mrb[0].mxu0
    %v6542 = vpop.f32.mrb[0].mxu0
    %v6543 = vadd.f32 %v6446, %v6542
    %v6544 = vpop.f32.mrb[0].mxu0
    %6545 = vmatprep.mubr.bf16.mxu0 0
    %6546 = vmatmul.mubr.bf16.gmra.mrb[0].mxu0 %v5739
    %v6547 = vpop.f32.mrb[0].mxu0
    %v6548 = vadd.f32 %v6451, %v6547
    %v6549 = vpop.f32.mrb[0].mxu0
    %v6550 = vpop.f32.mrb[0].mxu0
    %v6551 = vadd.f32 %v6454, %v6550
    %v6552 = vpop.f32.mrb[0].mxu0
    %6553 = vmatprep.mubr.bf16.mxu0 0
    %6554 = vmatmul.mubr.bf16.gmra.mrb[0].mxu0 %v5742
    %v6555 = vpop.f32.mrb[0].mxu0
    %v6556 = vadd.f32 %v6459, %v6555
    %v6557 = vpop.f32.mrb[0].mxu0
    %v6558 = vpop.f32.mrb[0].mxu0
    %v6559 = vadd.f32 %v6462, %v6558
    %v6560 = vpop.f32.mrb[0].mxu0
    %6561 = vmatprep.mubr.bf16.mxu0 0
    %6562 = vmatmul.mubr.bf16.gmra.mrb[0].mxu0 %v5745
    %v6563 = vpop.f32.mrb[0].mxu0
    %v6564 = vadd.f32 %v6467, %v6563
    %v6565 = vpop.f32.mrb[0].mxu0
    %v6566 = vpop.f32.mrb[0].mxu0
    %v6567 = vadd.f32 %v6470, %v6566
    %v6568 = vpop.f32.mrb[0].mxu0
    %6569 = vmatprep.mubr.bf16.mxu0 0
    %6570 = vmatmul.mubr.bf16.gmra.mrb[0].mxu0 %v5748
    %v6571 = vpop.f32.mrb[0].mxu0
    %v6572 = vadd.f32 %v6475, %v6571
    %v6573 = vpop.f32.mrb[0].mxu0
    %v6574 = vpop.f32.mrb[0].mxu0
    %v6575 = vadd.f32 %v6478, %v6574
    %v6576 = vpop.f32.mrb[0].mxu0
    %6577 = vmatprep.mubr.bf16.mxu0 0
    %6578 = vmatmul.mubr.bf16.gmra.mrb[0].mxu0 %v5751
    %v6579 = vpop.f32.mrb[0].mxu0
    %v6580 = vadd.f32 %v6483, %v6579
    %v6581 = vpop.f32.mrb[0].mxu0
    %v6582 = vpop.f32.mrb[0].mxu0
    %v6583 = vadd.f32 %v6486, %v6582
    %v6584 = vpop.f32.mrb[0].mxu0
    %6585 = vmatprep.mubr.bf16.mxu0 0
    %6586 = vmatmul.mubr.bf16.gmra.mrb[0].mxu0 %v5754
    %v6587 = vpop.f32.mrb[0].mxu0
    %v6588 = vadd.f32 %v6491, %v6587
    %v6589 = vpop.f32.mrb[0].mxu0
    %v6590 = vpop.f32.mrb[0].mxu0
    %v6591 = vadd.f32 %v6494, %v6590
    %v6592 = vpop.f32.mrb[0].mxu0
    %6593 = vmatprep.mubr.bf16.mxu0 0
    %6594 = vmatmul.mubr.bf16.gmra.mrb[0].mxu0 %v5757
    %v6595 = vpop.f32.mrb[0].mxu0
    %v6596 = vadd.f32 %v6499, %v6595
    %v6597 = vpop.f32.mrb[0].mxu0
    %v6598 = vpop.f32.mrb[0].mxu0
    %v6599 = vadd.f32 %v6502, %v6598
    %v6600 = vpop.f32.mrb[0].mxu0
    %6601 = vdwg.mxu0
    %v6602 = vld [vmem:[%s1193] sm:$0xff]
    %v6603 = vld [vmem:[%s1193 + $0x8] sm:$0xff]
    %v6604 = vld [vmem:[%s1193 + $0x10] sm:$0xff]
    %v6605 = vld [vmem:[%s1193 + $0x18] sm:$0xff]
    %v6606 = vld [vmem:[%s1193 + $0x20] sm:$0xff]
    %v6607 = vld [vmem:[%s1193 + $0x28] sm:$0xff]
    %v6608 = vld [vmem:[%s1193 + $0x30] sm:$0xff]
    %v6609 = vld [vmem:[%s1193 + $0x38] sm:$0xff]
    %v6610 = vld [vmem:[%s1193 + $0x40] sm:$0xff]
    %v6611 = vld [vmem:[%s1193 + $0x48] sm:$0xff]
    %v6612 = vld [vmem:[%s1193 + $0x50] sm:$0xff]
    %v6613 = vld [vmem:[%s1193 + $0x58] sm:$0xff]
    %v6614 = vld [vmem:[%s1193 + $0x60] sm:$0xff]
    %v6615 = vld [vmem:[%s1193 + $0x68] sm:$0xff]
    %v6616 = vld [vmem:[%s1193 + $0x70] sm:$0xff]
    %v6617 = vld [vmem:[%s1193 + $0x78] sm:$0xff]
    %v6618 = vld [vmem:[%s1193 + $0x80] sm:$0xff]
    %v6619 = vld [vmem:[%s1193 + $0x88] sm:$0xff]
    %v6620 = vld [vmem:[%s1193 + $0x90] sm:$0xff]
    %v6621 = vld [vmem:[%s1193 + $0x98] sm:$0xff]
    %v6622 = vld [vmem:[%s1193 + $0xa0] sm:$0xff]
    %v6623 = vld [vmem:[%s1193 + $0xa8] sm:$0xff]
    %v6624 = vld [vmem:[%s1193 + $0xb0] sm:$0xff]
    %v6625 = vld [vmem:[%s1193 + $0xb8] sm:$0xff]
    %v6626 = vld [vmem:[%s1193 + $0xf0] sm:$0xff]
    %v6627 = vld [vmem:[%s1193 + $0xf8] sm:$0xff]
    %v6628 = vld [vmem:[%s1193 + $0x100] sm:$0xff]
    %v6629 = vld [vmem:[%s1193 + $0x108] sm:$0xff]
    %v6630 = vld [vmem:[%s1193 + $0x110] sm:$0xff]
    %v6631 = vld [vmem:[%s1193 + $0x118] sm:$0xff]
    %v6632 = vld [vmem:[%s1193 + $0x120] sm:$0xff]
    %v6633 = vld [vmem:[%s1193 + $0x128] sm:$0xff]
    %v6634 = vld [vmem:[%s1193 + $0x130] sm:$0xff]
    %v6635 = vld [vmem:[%s1193 + $0x138] sm:$0xff]
    %v6636 = vld [vmem:[%s1193 + $0x140] sm:$0xff]
    %v6637 = vld [vmem:[%s1193 + $0x148] sm:$0xff]
    %v6638 = vld [vmem:[%s1193 + $0x150] sm:$0xff]
    %v6639 = vld [vmem:[%s1193 + $0x158] sm:$0xff]
    %v6640 = vld [vmem:[%s1193 + $0x160] sm:$0xff]
    %v6641 = vld [vmem:[%s1193 + $0x168] sm:$0xff]
    %v6642 = vld [vmem:[%s1193 + $0x170] sm:$0xff]
    %v6643 = vld [vmem:[%s1193 + $0x178] sm:$0xff]
    %v6644 = vld [vmem:[%s1193 + $0x180] sm:$0xff]
    %v6645 = vld [vmem:[%s1193 + $0x188] sm:$0xff]
    %v6646 = vld [vmem:[%s1193 + $0x190] sm:$0xff]
    %v6647 = vld [vmem:[%s1193 + $0x198] sm:$0xff]
    %v6648 = vld [vmem:[%s1193 + $0x1a0] sm:$0xff]
    %v6649 = vld [vmem:[%s1193 + $0x1a8] sm:$0xff]
    %v6650 = vpack.c.bf16 %v6605, %v6602
    %v6651 = vpack.c.bf16 %v6606, %v6603
    %v6652 = vpack.c.bf16 %v6607, %v6604
    %v6653 = vpack.c.bf16 %v6611, %v6608
    %v6654 = vpack.c.bf16 %v6612, %v6609
    %v6655 = vpack.c.bf16 %v6613, %v6610
    %v6656 = vpack.c.bf16 %v6617, %v6614
    %v6657 = vpack.c.bf16 %v6618, %v6615
    %v6658 = vpack.c.bf16 %v6619, %v6616
    %v6659 = vpack.c.bf16 %v6623, %v6620
    %v6660 = vpack.c.bf16 %v6624, %v6621
    %v6661 = vpack.c.bf16 %v6625, %v6622
    %v6662 = vpack.c.bf16 %v6629, %v6626
    %v6663 = vpack.c.bf16 %v6630, %v6627
    %v6664 = vpack.c.bf16 %v6631, %v6628
    %v6665 = vpack.c.bf16 %v6635, %v6632
    %v6666 = vpack.c.bf16 %v6636, %v6633
    %v6667 = vpack.c.bf16 %v6637, %v6634
    %v6668 = vpack.c.bf16 %v6641, %v6638
    %v6669 = vpack.c.bf16 %v6642, %v6639
    %v6670 = vpack.c.bf16 %v6643, %v6640
    %v6671 = vpack.c.bf16 %v6647, %v6644
    %v6672 = vpack.c.bf16 %v6648, %v6645
    %v6673 = vpack.c.bf16 %v6649, %v6646
    %v6674 = vld [vmem:[%s1266] sm:$0xf]
    %v6675 = vld [vmem:[%s1266 + $0x4] sm:$0xf]
    %v6676 = vld [vmem:[%s1266 + $0x8] sm:$0xf]
    %v6677 = vld [vmem:[%s1266 + $0xc] sm:$0xf]
    %v6678 = vld [vmem:[%s1266 + $0x10] sm:$0xf]
    %v6679 = vld [vmem:[%s1266 + $0x14] sm:$0xf]
    %v6680 = vld [vmem:[%s1266 + $0x18] sm:$0xf]
    %v6681 = vld [vmem:[%s1266 + $0x1c] sm:$0xf]
    %v6682 = vld [vmem:[%s1266 + $0x20] sm:$0xf]
    %v6683 = vld [vmem:[%s1266 + $0x24] sm:$0xf]
    %v6684 = vld [vmem:[%s1266 + $0x28] sm:$0xf]
    %v6685 = vld [vmem:[%s1266 + $0x2c] sm:$0xf]
    %v6686 = vld [vmem:[%s1266 + $0x30] sm:$0xf]
    %v6687 = vld [vmem:[%s1266 + $0x34] sm:$0xf]
    %v6688 = vld [vmem:[%s1266 + $0x38] sm:$0xf]
    %v6689 = vld [vmem:[%s1266 + $0x3c] sm:$0xf]
    %v6690 = vld [vmem:[%s1266 + $0x40] sm:$0xf]
    %v6691 = vld [vmem:[%s1266 + $0x44] sm:$0xf]
    %v6692 = vld [vmem:[%s1266 + $0x48] sm:$0xf]
    %v6693 = vld [vmem:[%s1266 + $0x4c] sm:$0xf]
    %v6694 = vld [vmem:[%s1266 + $0x50] sm:$0xf]
    %v6695 = vld [vmem:[%s1266 + $0x54] sm:$0xf]
    %v6696 = vld [vmem:[%s1266 + $0x58] sm:$0xf]
    %v6697 = vld [vmem:[%s1266 + $0x5c] sm:$0xf]
    %v6698 = vld [vmem:[%s1266 + $0x60] sm:$0xf]
    %v6699 = vld [vmem:[%s1266 + $0x64] sm:$0xf]
    %v6700 = vld [vmem:[%s1266 + $0x68] sm:$0xf]
    %v6701 = vld [vmem:[%s1266 + $0x6c] sm:$0xf]
    %v6702 = vld [vmem:[%s1266 + $0x70] sm:$0xf]
    %v6703 = vld [vmem:[%s1266 + $0x74] sm:$0xf]
    %v6704 = vld [vmem:[%s1266 + $0x78] sm:$0xf]
    %v6705 = vld [vmem:[%s1266 + $0x7c] sm:$0xf]
    %v6706 = vld [vmem:[%s1266 + $0x80] sm:$0xf]
    %v6707 = vld [vmem:[%s1266 + $0x84] sm:$0xf]
    %v6708 = vld [vmem:[%s1266 + $0x88] sm:$0xf]
    %v6709 = vld [vmem:[%s1266 + $0x8c] sm:$0xf]
    %v6710 = vld [vmem:[%s1266 + $0x90] sm:$0xf]
    %v6711 = vld [vmem:[%s1266 + $0x94] sm:$0xf]
    %v6712 = vld [vmem:[%s1266 + $0x98] sm:$0xf]
    %v6713 = vld [vmem:[%s1266 + $0x9c] sm:$0xf]
    %v6714 = vld [vmem:[%s1266 + $0xa0] sm:$0xf]
    %v6715 = vld [vmem:[%s1266 + $0xa4] sm:$0xf]
    %v6716 = vld [vmem:[%s1266 + $0xa8] sm:$0xf]
    %v6717 = vld [vmem:[%s1266 + $0xac] sm:$0xf]
    %v6718 = vld [vmem:[%s1266 + $0xb0] sm:$0xf]
    %v6719 = vld [vmem:[%s1266 + $0xb4] sm:$0xf]
    %v6720 = vld [vmem:[%s1266 + $0xb8] sm:$0xf]
    %v6721 = vld [vmem:[%s1266 + $0xbc] sm:$0xf]
    %v6770 = vunpack.c.l.b16 %v6674
    %v6771 = vunpack.c.l.b16 %v6675
    %v6772 = vunpack.c.l.b16 %v6676
    %v6773 = vunpack.c.l.b16 %v6677
    %v6774 = vunpack.c.l.b16 %v6678
    %v6775 = vunpack.c.l.b16 %v6679
    %v6776 = vunpack.c.l.b16 %v6680
    %v6777 = vunpack.c.l.b16 %v6681
    %v6778 = vunpack.c.l.b16 %v6682
    %v6779 = vunpack.c.l.b16 %v6683
    %v6780 = vunpack.c.l.b16 %v6684
    %v6781 = vunpack.c.l.b16 %v6685
    %v6782 = vunpack.c.l.b16 %v6686
    %v6783 = vunpack.c.l.b16 %v6687
    %v6784 = vunpack.c.l.b16 %v6688
    %v6785 = vunpack.c.l.b16 %v6689
    %v6786 = vunpack.c.l.b16 %v6690
    %v6787 = vunpack.c.l.b16 %v6691
    %v6788 = vunpack.c.l.b16 %v6692
    %v6789 = vunpack.c.l.b16 %v6693
    %v6790 = vunpack.c.l.b16 %v6694
    %v6791 = vunpack.c.l.b16 %v6695
    %v6792 = vunpack.c.l.b16 %v6696
    %v6793 = vunpack.c.l.b16 %v6697
    %v6794 = vunpack.c.l.b16 %v6698
    %v6795 = vunpack.c.l.b16 %v6699
    %v6796 = vunpack.c.l.b16 %v6700
    %v6797 = vunpack.c.l.b16 %v6701
    %v6798 = vunpack.c.l.b16 %v6702
    %v6799 = vunpack.c.l.b16 %v6703
    %v6800 = vunpack.c.l.b16 %v6704
    %v6801 = vunpack.c.l.b16 %v6705
    %v6802 = vunpack.c.l.b16 %v6706
    %v6803 = vunpack.c.l.b16 %v6707
    %v6804 = vunpack.c.l.b16 %v6708
    %v6805 = vunpack.c.l.b16 %v6709
    %v6806 = vunpack.c.l.b16 %v6710
    %v6807 = vunpack.c.l.b16 %v6711
    %v6808 = vunpack.c.l.b16 %v6712
    %v6809 = vunpack.c.l.b16 %v6713
    %v6810 = vunpack.c.l.b16 %v6714
    %v6811 = vunpack.c.l.b16 %v6715
    %v6812 = vunpack.c.l.b16 %v6716
    %v6813 = vunpack.c.l.b16 %v6717
    %v6814 = vunpack.c.l.b16 %v6718
    %v6815 = vunpack.c.l.b16 %v6719
    %v6816 = vunpack.c.l.b16 %v6720
    %v6817 = vunpack.c.l.b16 %v6721
    %v6818 = vpack.c.b16 %v6771, %v6770
    %v6819 = vpack.c.b16 %v6773, %v6772
    %v6820 = vpack.c.b16 %v6775, %v6774
    %v6821 = vpack.c.b16 %v6777, %v6776
    %v6822 = vpack.c.b16 %v6779, %v6778
    %v6823 = vpack.c.b16 %v6781, %v6780
    %v6824 = vpack.c.b16 %v6783, %v6782
    %v6825 = vpack.c.b16 %v6785, %v6784
    %v6826 = vpack.c.b16 %v6787, %v6786
    %v6827 = vpack.c.b16 %v6789, %v6788
    %v6828 = vpack.c.b16 %v6791, %v6790
    %v6829 = vpack.c.b16 %v6793, %v6792
    %v6830 = vpack.c.b16 %v6795, %v6794
    %v6831 = vpack.c.b16 %v6797, %v6796
    %v6832 = vpack.c.b16 %v6799, %v6798
    %v6833 = vpack.c.b16 %v6801, %v6800
    %v6834 = vpack.c.b16 %v6803, %v6802
    %v6835 = vpack.c.b16 %v6805, %v6804
    %v6836 = vpack.c.b16 %v6807, %v6806
    %v6837 = vpack.c.b16 %v6809, %v6808
    %v6838 = vpack.c.b16 %v6811, %v6810
    %v6839 = vpack.c.b16 %v6813, %v6812
    %v6840 = vpack.c.b16 %v6815, %v6814
    %v6841 = vpack.c.b16 %v6817, %v6816
    %6866 = vmatprep.subr.bf16.mxu0 0
    %6867 = vmatpush1.bf16.msra.mxu0 %v6818
    %6868 = vmatprep.subr.bf16.mxu0 0
    %6869 = vmatpush1.bf16.msra.mxu0 %v6819
    %6870 = vmatprep.subr.bf16.mxu0 0
    %6871 = vmatpush1.bf16.msra.mxu0 %v6820
    %6872 = vmatprep.subr.bf16.mxu0 0
    %6873 = vmatpush1.bf16.msra.mxu0 %v6821
    %6874 = vmatprep.subr.bf16.mxu0 0
    %6875 = vmatpush1.bf16.msra.mxu0 %v6822
    %6876 = vmatprep.subr.bf16.mxu0 0
    %6877 = vmatpush1.bf16.msra.mxu0 %v6823
    %6878 = vmatprep.subr.bf16.mxu0 0
    %6879 = vmatpush1.bf16.msra.mxu0 %v6824
    %6880 = vmatprep.subr.bf16.mxu0 0
    %6881 = vmatpush1.bf16.msra.mxu0 %v6825
    %6882 = vmatprep.subr.bf16.mxu0 0
    %6883 = vmatpush1.bf16.msra.mxu0 %v6826
    %6884 = vmatprep.subr.bf16.mxu0 0
    %6885 = vmatpush1.bf16.msra.mxu0 %v6827
    %6886 = vmatprep.subr.bf16.mxu0 0
    %6887 = vmatpush1.bf16.msra.mxu0 %v6828
    %6888 = vmatprep.subr.bf16.mxu0 0
    %6889 = vmatpush1.bf16.msra.mxu0 %v6829
    %6890 = vmatprep.subr.bf16.mxu0 0
    %6891 = vmatpush1.bf16.msra.mxu0 %v6830
    %6892 = vmatprep.subr.bf16.mxu0 0
    %6893 = vmatpush1.bf16.msra.mxu0 %v6831
    %6894 = vmatprep.subr.bf16.mxu0 0
    %6895 = vmatpush1.bf16.msra.mxu0 %v6832
    %6896 = vmatprep.subr.bf16.mxu0 0
    %6897 = vmatpush1.bf16.msra.mxu0 %v6833
    %6898 = vmatprep.mubr.bf16.mxu0 %v6651
    %6899 = vmatmul.mubr.bf16.gmra.mrb[0].mxu0 %v6650
    %v6900 = vpop.f32.mrb[0].mxu0
    %v6901 = vadd.f32 0.0, %v6900
    %v6902 = vpop.f32.mrb[0].mxu0
    %v6903 = vpop.f32.mrb[0].mxu0
    %v6904 = vadd.f32 0.0, %v6903
    %v6905 = vpop.f32.mrb[0].mxu0
    %6906 = vmatprep.mubr.bf16.mxu0 %v6654
    %6907 = vmatmul.mubr.bf16.gmra.mrb[0].mxu0 %v6653
    %v6908 = vpop.f32.mrb[0].mxu0
    %v6909 = vadd.f32 0.0, %v6908
    %v6910 = vpop.f32.mrb[0].mxu0
    %v6911 = vpop.f32.mrb[0].mxu0
    %v6912 = vadd.f32 0.0, %v6911
    %v6913 = vpop.f32.mrb[0].mxu0
    %6914 = vmatprep.mubr.bf16.mxu0 %v6657
    %6915 = vmatmul.mubr.bf16.gmra.mrb[0].mxu0 %v6656
    %v6916 = vpop.f32.mrb[0].mxu0
    %v6917 = vadd.f32 0.0, %v6916
    %v6918 = vpop.f32.mrb[0].mxu0
    %v6919 = vpop.f32.mrb[0].mxu0
    %v6920 = vadd.f32 0.0, %v6919
    %v6921 = vpop.f32.mrb[0].mxu0
    %6922 = vmatprep.mubr.bf16.mxu0 %v6660
    %6923 = vmatmul.mubr.bf16.gmra.mrb[0].mxu0 %v6659
    %v6924 = vpop.f32.mrb[0].mxu0
    %v6925 = vadd.f32 0.0, %v6924
    %v6926 = vpop.f32.mrb[0].mxu0
    %v6927 = vpop.f32.mrb[0].mxu0
    %v6928 = vadd.f32 0.0, %v6927
    %v6929 = vpop.f32.mrb[0].mxu0
    %6930 = vmatprep.mubr.bf16.mxu0 %v6663
    %6931 = vmatmul.mubr.bf16.gmra.mrb[0].mxu0 %v6662
    %v6932 = vpop.f32.mrb[0].mxu0
    %v6933 = vadd.f32 0.0, %v6932
    %v6934 = vpop.f32.mrb[0].mxu0
    %v6935 = vpop.f32.mrb[0].mxu0
    %v6936 = vadd.f32 0.0, %v6935
    %v6937 = vpop.f32.mrb[0].mxu0
    %6938 = vmatprep.mubr.bf16.mxu0 %v6666
    %6939 = vmatmul.mubr.bf16.gmra.mrb[0].mxu0 %v6665
    %v6940 = vpop.f32.mrb[0].mxu0
    %v6941 = vadd.f32 0.0, %v6940
    %v6942 = vpop.f32.mrb[0].mxu0
    %v6943 = vpop.f32.mrb[0].mxu0
    %v6944 = vadd.f32 0.0, %v6943
    %v6945 = vpop.f32.mrb[0].mxu0
    %6946 = vmatprep.mubr.bf16.mxu0 %v6669
    %6947 = vmatmul.mubr.bf16.gmra.mrb[0].mxu0 %v6668
    %v6948 = vpop.f32.mrb[0].mxu0
    %v6949 = vadd.f32 0.0, %v6948
    %v6950 = vpop.f32.mrb[0].mxu0
    %v6951 = vpop.f32.mrb[0].mxu0
    %v6952 = vadd.f32 0.0, %v6951
    %v6953 = vpop.f32.mrb[0].mxu0
    %6954 = vmatprep.mubr.bf16.mxu0 %v6672
    %6955 = vmatmul.mubr.bf16.gmra.mrb[0].mxu0 %v6671
    %v6956 = vpop.f32.mrb[0].mxu0
    %v6957 = vadd.f32 0.0, %v6956
    %v6958 = vpop.f32.mrb[0].mxu0
    %v6959 = vpop.f32.mrb[0].mxu0
    %v6960 = vadd.f32 0.0, %v6959
    %v6961 = vpop.f32.mrb[0].mxu0
    %6962 = vdwg.mxu0
    %6963 = vmatprep.subr.bf16.mxu0 0
    %6964 = vmatpush1.bf16.msra.mxu0 %v6834
    %6965 = vmatprep.subr.bf16.mxu0 0
    %6966 = vmatpush1.bf16.msra.mxu0 %v6835
    %6967 = vmatprep.subr.bf16.mxu0 0
    %6968 = vmatpush1.bf16.msra.mxu0 %v6836
    %6969 = vmatprep.subr.bf16.mxu0 0
    %6970 = vmatpush1.bf16.msra.mxu0 %v6837
    %6971 = vmatprep.subr.bf16.mxu0 0
    %6972 = vmatpush1.bf16.msra.mxu0 %v6838
    %6973 = vmatprep.subr.bf16.mxu0 0
    %6974 = vmatpush1.bf16.msra.mxu0 %v6839
    %6975 = vmatprep.subr.bf16.mxu0 0
    %6976 = vmatpush1.bf16.msra.mxu0 %v6840
    %6977 = vmatprep.subr.bf16.mxu0 0
    %6978 = vmatpush1.bf16.msra.mxu0 %v6841
    %6979 = vmatprep.subr.bf16.mxu0 0
    %6980 = vmatpush1.bf16.msra.mxu0 0
    %6981 = vmatprep.subr.bf16.mxu0 0
    %6982 = vmatpush1.bf16.msra.mxu0 0
    %6983 = vmatprep.subr.bf16.mxu0 0
    %6984 = vmatpush1.bf16.msra.mxu0 0
    %6985 = vmatprep.subr.bf16.mxu0 0
    %6986 = vmatpush1.bf16.msra.mxu0 0
    %6987 = vmatprep.subr.bf16.mxu0 0
    %6988 = vmatpush1.bf16.msra.mxu0 0
    %6989 = vmatprep.subr.bf16.mxu0 0
    %6990 = vmatpush1.bf16.msra.mxu0 0
    %6991 = vmatprep.subr.bf16.mxu0 0
    %6992 = vmatpush1.bf16.msra.mxu0 0
    %6993 = vmatprep.subr.bf16.mxu0 0
    %6994 = vmatpush1.bf16.msra.mxu0 0
    %6995 = vmatprep.mubr.bf16.mxu0 0
    %6996 = vmatmul.mubr.bf16.gmra.mrb[0].mxu0 %v6652
    %v6997 = vpop.f32.mrb[0].mxu0
    %v6998 = vadd.f32 %v6901, %v6997
    %v6999 = vpop.f32.mrb[0].mxu0
    %v7000 = vpop.f32.mrb[0].mxu0
    %v7001 = vadd.f32 %v6904, %v7000
    %v7002 = vpop.f32.mrb[0].mxu0
    %7003 = vmatprep.mubr.bf16.mxu0 0
    %7004 = vmatmul.mubr.bf16.gmra.mrb[0].mxu0 %v6655
    %v7005 = vpop.f32.mrb[0].mxu0
    %v7006 = vadd.f32 %v6909, %v7005
    %v7007 = vpop.f32.mrb[0].mxu0
    %v7008 = vpop.f32.mrb[0].mxu0
    %v7009 = vadd.f32 %v6912, %v7008
    %v7010 = vpop.f32.mrb[0].mxu0
    %7011 = vmatprep.mubr.bf16.mxu0 0
    %7012 = vmatmul.mubr.bf16.gmra.mrb[0].mxu0 %v6658
    %v7013 = vpop.f32.mrb[0].mxu0
    %v7014 = vadd.f32 %v6917, %v7013
    %v7015 = vpop.f32.mrb[0].mxu0
    %v7016 = vpop.f32.mrb[0].mxu0
    %v7017 = vadd.f32 %v6920, %v7016
    %v7018 = vpop.f32.mrb[0].mxu0
    %7019 = vmatprep.mubr.bf16.mxu0 0
    %7020 = vmatmul.mubr.bf16.gmra.mrb[0].mxu0 %v6661
    %v7021 = vpop.f32.mrb[0].mxu0
    %v7022 = vadd.f32 %v6925, %v7021
    %v7023 = vpop.f32.mrb[0].mxu0
    %v7024 = vpop.f32.mrb[0].mxu0
    %v7025 = vadd.f32 %v6928, %v7024
    %v7026 = vpop.f32.mrb[0].mxu0
    %7027 = vmatprep.mubr.bf16.mxu0 0
    %7028 = vmatmul.mubr.bf16.gmra.mrb[0].mxu0 %v6664
    %v7029 = vpop.f32.mrb[0].mxu0
    %v7030 = vadd.f32 %v6933, %v7029
    %v7031 = vpop.f32.mrb[0].mxu0
    %v7032 = vpop.f32.mrb[0].mxu0
    %v7033 = vadd.f32 %v6936, %v7032
    %v7034 = vpop.f32.mrb[0].mxu0
    %7035 = vmatprep.mubr.bf16.mxu0 0
    %7036 = vmatmul.mubr.bf16.gmra.mrb[0].mxu0 %v6667
    %v7037 = vpop.f32.mrb[0].mxu0
    %v7038 = vadd.f32 %v6941, %v7037
    %v7039 = vpop.f32.mrb[0].mxu0
    %v7040 = vpop.f32.mrb[0].mxu0
    %v7041 = vadd.f32 %v6944, %v7040
    %v7042 = vpop.f32.mrb[0].mxu0
    %7043 = vmatprep.mubr.bf16.mxu0 0
    %7044 = vmatmul.mubr.bf16.gmra.mrb[0].mxu0 %v6670
    %v7045 = vpop.f32.mrb[0].mxu0
    %v7046 = vadd.f32 %v6949, %v7045
    %v7047 = vpop.f32.mrb[0].mxu0
    %v7048 = vpop.f32.mrb[0].mxu0
    %v7049 = vadd.f32 %v6952, %v7048
    %v7050 = vpop.f32.mrb[0].mxu0
    %7051 = vmatprep.mubr.bf16.mxu0 0
    %7052 = vmatmul.mubr.bf16.gmra.mrb[0].mxu0 %v6673
    %v7053 = vpop.f32.mrb[0].mxu0
    %v7054 = vadd.f32 %v6957, %v7053
    %v7055 = vpop.f32.mrb[0].mxu0
    %v7056 = vpop.f32.mrb[0].mxu0
    %v7057 = vadd.f32 %v6960, %v7056
    %v7058 = vpop.f32.mrb[0].mxu0
    %7059 = vdwg.mxu0
    %v7060 = vadd.f32 %v6540, %v6998
    %v7061 = vadd.f32 %v6543, %v7001
    %v7062 = vadd.f32 %v6548, %v7006
    %v7063 = vadd.f32 %v6551, %v7009
    %v7064 = vadd.f32 %v6556, %v7014
    %v7065 = vadd.f32 %v6559, %v7017
    %v7066 = vadd.f32 %v6564, %v7022
    %v7067 = vadd.f32 %v6567, %v7025
    %v7068 = vadd.f32 %v6572, %v7030
    %v7069 = vadd.f32 %v6575, %v7033
    %v7070 = vadd.f32 %v6580, %v7038
    %v7071 = vadd.f32 %v6583, %v7041
    %v7072 = vadd.f32 %v6588, %v7046
    %v7073 = vadd.f32 %v6591, %v7049
    %v7074 = vadd.f32 %v6596, %v7054
    %v7075 = vadd.f32 %v6599, %v7057
    %7076 = vmatprep.subr.mxu0 0.0
    %7077 = vmatpush1.msra.mxu0 %v7060
    %7078 = vmatprep.subr.mxu0 0.0
    %7079 = vmatpush1.msra.mxu0 %v7061
    %7080 = vmatprep.subr.mxu0 0.0
    %7081 = vmatpush1.msra.mxu0 %v7062
    %7082 = vmatprep.subr.mxu0 0.0
    %7083 = vmatpush1.msra.mxu0 %v7063
    %7084 = vmatprep.subr.mxu0 0.0
    %7085 = vmatpush1.msra.mxu0 %v7064
    %7086 = vmatprep.subr.mxu0 0.0
    %7087 = vmatpush1.msra.mxu0 %v7065
    %7088 = vmatprep.subr.mxu0 0.0
    %7089 = vmatpush1.msra.mxu0 %v7066
    %7090 = vmatprep.subr.mxu0 0.0
    %7091 = vmatpush1.msra.mxu0 %v7067
    %7092 = vmatprep.subr.mxu0 0.0
    %7093 = vmatpush1.msra.mxu0 %v7068
    %7094 = vmatprep.subr.mxu0 0.0
    %7095 = vmatpush1.msra.mxu0 %v7069
    %7096 = vmatprep.subr.mxu0 0.0
    %7097 = vmatpush1.msra.mxu0 %v7070
    %7098 = vmatprep.subr.mxu0 0.0
    %7099 = vmatpush1.msra.mxu0 %v7071
    %7100 = vmatprep.subr.mxu0 0.0
    %7101 = vmatpush1.msra.mxu0 %v7072
    %7102 = vmatprep.subr.mxu0 0.0
    %7103 = vmatpush1.msra.mxu0 %v7073
    %7104 = vmatprep.subr.mxu0 0.0
    %7105 = vmatpush1.msra.mxu0 %v7074
    %7106 = vmatprep.subr.mxu0 0.0
    %7107 = vmatpush1.msra.mxu0 %v7075
    %7108 = vmatprep.subr.mxu0 0.0
    %7109 = vmatpush1.msra.mxu0 0.0
    %7110 = vmatprep.subr.mxu0 0.0
    %7111 = vmatpush1.msra.mxu0 0.0
    %7112 = vmatprep.subr.mxu0 0.0
    %7113 = vmatpush1.msra.mxu0 0.0
    %7114 = vmatprep.subr.mxu0 0.0
    %7115 = vmatpush1.msra.mxu0 0.0
    %7116 = vmatprep.subr.mxu0 0.0
    %7117 = vmatpush1.msra.mxu0 0.0
    %7118 = vmatprep.subr.mxu0 0.0
    %7119 = vmatpush1.msra.mxu0 0.0
    %7120 = vmatprep.subr.mxu0 0.0
    %7121 = vmatpush1.msra.mxu0 0.0
    %7122 = vmatprep.subr.mxu0 0.0
    %7123 = vmatpush1.msra.mxu0 0.0
    %7124 = vmatprep.subr.mxu0 0.0
    %7125 = vmatpush1.msra.mxu0 0.0
    %7126 = vmatprep.subr.mxu0 0.0
    %7127 = vmatpush1.msra.mxu0 0.0
    %7128 = vmatprep.subr.mxu0 0.0
    %7129 = vmatpush1.msra.mxu0 0.0
    %7130 = vmatprep.subr.mxu0 0.0
    %7131 = vmatpush1.msra.mxu0 0.0
    %7132 = vmatprep.subr.mxu0 0.0
    %7133 = vmatpush1.msra.mxu0 0.0
    %7134 = vmatprep.subr.mxu0 0.0
    %7135 = vmatpush1.msra.mxu0 0.0
    %7136 = vmatprep.subr.mxu0 0.0
    %7137 = vmatpush1.msra.mxu0 0.0
    %7138 = vmatprep.subr.mxu0 0.0
    %7139 = vmatpush1.msra.mxu0 0.0
    %7140 = vmatprep.mubr.f32.mxu0 0.0
    %7141 = vmatmul.mubr.f32.gmra.mrb[0].mxu0 1.0
    %v7142 = vpop.f32.mrb[0].mxu0
    %v7143 = vadd.f32 0.0, %v7142
    %v7144 = vpop.f32.mrb[0].mxu0
    %7145 = vdwg.mxu0
    %v7146 = vmul.f32 %v7143, 0.0078125
    %v7147 = vlaneseq
    %v7148 = vshrl.u32 %v7147, 7
    %v7149 = vsub.s32 0, %v7148
    %v7150 = vrot.slane %v7146, %v7149
    %v7151 = vsub.f32 %v7060, %v7150
    %v7152 = vsub.f32 %v7061, %v7150
    %v7153 = vsub.f32 %v7062, %v7150
    %v7154 = vsub.f32 %v7063, %v7150
    %v7155 = vsub.f32 %v7064, %v7150
    %v7156 = vsub.f32 %v7065, %v7150
    %v7157 = vsub.f32 %v7066, %v7150
    %v7158 = vsub.f32 %v7067, %v7150
    %v7159 = vsub.f32 %v7068, %v7150
    %v7160 = vsub.f32 %v7069, %v7150
    %v7161 = vsub.f32 %v7070, %v7150
    %v7162 = vsub.f32 %v7071, %v7150
    %v7163 = vsub.f32 %v7072, %v7150
    %v7164 = vsub.f32 %v7073, %v7150
    %v7165 = vsub.f32 %v7074, %v7150
    %v7166 = vsub.f32 %v7075, %v7150
    %v7167 = vmul.f32 %v7151, %v7151
    %v7168 = vmul.f32 %v7152, %v7152
    %v7169 = vmul.f32 %v7153, %v7153
    %v7170 = vmul.f32 %v7154, %v7154
    %v7171 = vmul.f32 %v7155, %v7155
    %v7172 = vmul.f32 %v7156, %v7156
    %v7173 = vmul.f32 %v7157, %v7157
    %v7174 = vmul.f32 %v7158, %v7158
    %v7175 = vmul.f32 %v7159, %v7159
    %v7176 = vmul.f32 %v7160, %v7160
    %v7177 = vmul.f32 %v7161, %v7161
    %v7178 = vmul.f32 %v7162, %v7162
    %v7179 = vmul.f32 %v7163, %v7163
    %v7180 = vmul.f32 %v7164, %v7164
    %v7181 = vmul.f32 %v7165, %v7165
    %v7182 = vmul.f32 %v7166, %v7166
    %7183 = vmatprep.subr.mxu0 0.0
    %7184 = vmatpush1.msra.mxu0 %v7167
    %7185 = vmatprep.subr.mxu0 0.0
    %7186 = vmatpush1.msra.mxu0 %v7168
    %7187 = vmatprep.subr.mxu0 0.0
    %7188 = vmatpush1.msra.mxu0 %v7169
    %7189 = vmatprep.subr.mxu0 0.0
    %7190 = vmatpush1.msra.mxu0 %v7170
    %7191 = vmatprep.subr.mxu0 0.0
    %7192 = vmatpush1.msra.mxu0 %v7171
    %7193 = vmatprep.subr.mxu0 0.0
    %7194 = vmatpush1.msra.mxu0 %v7172
    %7195 = vmatprep.subr.mxu0 0.0
    %7196 = vmatpush1.msra.mxu0 %v7173
    %7197 = vmatprep.subr.mxu0 0.0
    %7198 = vmatpush1.msra.mxu0 %v7174
    %7199 = vmatprep.subr.mxu0 0.0
    %7200 = vmatpush1.msra.mxu0 %v7175
    %7201 = vmatprep.subr.mxu0 0.0
    %7202 = vmatpush1.msra.mxu0 %v7176
    %7203 = vmatprep.subr.mxu0 0.0
    %7204 = vmatpush1.msra.mxu0 %v7177
    %7205 = vmatprep.subr.mxu0 0.0
    %7206 = vmatpush1.msra.mxu0 %v7178
    %7207 = vmatprep.subr.mxu0 0.0
    %7208 = vmatpush1.msra.mxu0 %v7179
    %7209 = vmatprep.subr.mxu0 0.0
    %7210 = vmatpush1.msra.mxu0 %v7180
    %7211 = vmatprep.subr.mxu0 0.0
    %7212 = vmatpush1.msra.mxu0 %v7181
    %7213 = vmatprep.subr.mxu0 0.0
    %7214 = vmatpush1.msra.mxu0 %v7182
    %7215 = vmatprep.subr.mxu0 0.0
    %7216 = vmatpush1.msra.mxu0 0.0
    %7217 = vmatprep.subr.mxu0 0.0
    %7218 = vmatpush1.msra.mxu0 0.0
    %7219 = vmatprep.subr.mxu0 0.0
    %7220 = vmatpush1.msra.mxu0 0.0
    %7221 = vmatprep.subr.mxu0 0.0
    %7222 = vmatpush1.msra.mxu0 0.0
    %7223 = vmatprep.subr.mxu0 0.0
    %7224 = vmatpush1.msra.mxu0 0.0
    %7225 = vmatprep.subr.mxu0 0.0
    %7226 = vmatpush1.msra.mxu0 0.0
    %7227 = vmatprep.subr.mxu0 0.0
    %7228 = vmatpush1.msra.mxu0 0.0
    %7229 = vmatprep.subr.mxu0 0.0
    %7230 = vmatpush1.msra.mxu0 0.0
    %7231 = vmatprep.subr.mxu0 0.0
    %7232 = vmatpush1.msra.mxu0 0.0
    %7233 = vmatprep.subr.mxu0 0.0
    %7234 = vmatpush1.msra.mxu0 0.0
    %7235 = vmatprep.subr.mxu0 0.0
    %7236 = vmatpush1.msra.mxu0 0.0
    %7237 = vmatprep.subr.mxu0 0.0
    %7238 = vmatpush1.msra.mxu0 0.0
    %7239 = vmatprep.subr.mxu0 0.0
    %7240 = vmatpush1.msra.mxu0 0.0
    %7241 = vmatprep.subr.mxu0 0.0
    %7242 = vmatpush1.msra.mxu0 0.0
    %7243 = vmatprep.subr.mxu0 0.0
    %7244 = vmatpush1.msra.mxu0 0.0
    %7245 = vmatprep.subr.mxu0 0.0
    %7246 = vmatpush1.msra.mxu0 0.0
    %7247 = vmatprep.mubr.f32.mxu0 0.0
    %7248 = vmatmul.mubr.f32.gmra.mrb[0].mxu0 1.0
    %v7249 = vpop.f32.mrb[0].mxu0
    %v7250 = vadd.f32 0.0, %v7249
    %v7251 = vpop.f32.mrb[0].mxu0
    %7252 = vdwg.mxu0
    %v7253 = vmul.f32 %v7250, 0.0078125
    %v7254 = vadd.f32 %v7253, 1e-05
    %v7255 = vrsqrt.pop %v7254
    %v7256 = vlaneseq
    %v7257 = vshrl.u32 %v7256, 7
    %v7258 = vsub.s32 0, %v7257
    %v7259 = vrot.slane %v7255, %v7258
    %v7260 = vmul.f32 %v7151, %v7259
    %v7261 = vmul.f32 %v7152, %v7259
    %v7262 = vmul.f32 %v7153, %v7259
    %v7263 = vmul.f32 %v7154, %v7259
    %v7264 = vmul.f32 %v7155, %v7259
    %v7265 = vmul.f32 %v7156, %v7259
    %v7266 = vmul.f32 %v7157, %v7259
    %v7267 = vmul.f32 %v7158, %v7259
    %v7268 = vmul.f32 %v7159, %v7259
    %v7269 = vmul.f32 %v7160, %v7259
    %v7270 = vmul.f32 %v7161, %v7259
    %v7271 = vmul.f32 %v7162, %v7259
    %v7272 = vmul.f32 %v7163, %v7259
    %v7273 = vmul.f32 %v7164, %v7259
    %v7274 = vmul.f32 %v7165, %v7259
    %v7275 = vmul.f32 %v7166, %v7259
    %v7276 = vmul.f32 %v7260, %v1873
    %v7277 = vmul.f32 %v7261, %v1873
    %v7278 = vmul.f32 %v7262, %v1873
    %v7279 = vmul.f32 %v7263, %v1873
    %v7280 = vmul.f32 %v7264, %v1873
    %v7281 = vmul.f32 %v7265, %v1873
    %v7282 = vmul.f32 %v7266, %v1873
    %v7283 = vmul.f32 %v7267, %v1873
    %v7284 = vmul.f32 %v7268, %v1873
    %v7285 = vmul.f32 %v7269, %v1873
    %v7286 = vmul.f32 %v7270, %v1873
    %v7287 = vmul.f32 %v7271, %v1873
    %v7288 = vmul.f32 %v7272, %v1873
    %v7289 = vmul.f32 %v7273, %v1873
    %v7290 = vmul.f32 %v7274, %v1873
    %v7291 = vmul.f32 %v7275, %v1873
    %v7292 = vadd.f32 %v7276, %v1895
    %v7293 = vadd.f32 %v7277, %v1895
    %v7294 = vadd.f32 %v7278, %v1895
    %v7295 = vadd.f32 %v7279, %v1895
    %v7296 = vadd.f32 %v7280, %v1895
    %v7297 = vadd.f32 %v7281, %v1895
    %v7298 = vadd.f32 %v7282, %v1895
    %v7299 = vadd.f32 %v7283, %v1895
    %v7300 = vadd.f32 %v7284, %v1895
    %v7301 = vadd.f32 %v7285, %v1895
    %v7302 = vadd.f32 %v7286, %v1895
    %v7303 = vadd.f32 %v7287, %v1895
    %v7304 = vadd.f32 %v7288, %v1895
    %v7305 = vadd.f32 %v7289, %v1895
    %v7306 = vadd.f32 %v7290, %v1895
    %v7307 = vadd.f32 %v7291, %v1895
    %v7308 = vld [vmem:[#allocation3] sm:$0xff]
    %v7309 = vld [vmem:[#allocation3 + $0x8] sm:$0xff]
    %v7310 = vld [vmem:[#allocation3 + $0x10] sm:$0xff]
    %v7311 = vld [vmem:[#allocation3 + $0x18] sm:$0xff]
    %v7312 = vld [vmem:[#allocation3 + $0x20] sm:$0xff]
    %v7313 = vld [vmem:[#allocation3 + $0x28] sm:$0xff]
    %v7314 = vld [vmem:[#allocation3 + $0x30] sm:$0xff]
    %v7315 = vld [vmem:[#allocation3 + $0x38] sm:$0xff]
    %v7316 = vld [vmem:[#allocation3 + $0x40] sm:$0xff]
    %v7317 = vld [vmem:[#allocation3 + $0x48] sm:$0xff]
    %v7318 = vld [vmem:[#allocation3 + $0x50] sm:$0xff]
    %v7319 = vld [vmem:[#allocation3 + $0x58] sm:$0xff]
    %v7320 = vld [vmem:[#allocation3 + $0x60] sm:$0xff]
    %v7321 = vld [vmem:[#allocation3 + $0x68] sm:$0xff]
    %v7322 = vld [vmem:[#allocation3 + $0x70] sm:$0xff]
    %v7323 = vld [vmem:[#allocation3 + $0x78] sm:$0xff]
    %v7324 = vadd.f32 %v7292, %v7308
    %v7325 = vadd.f32 %v7293, %v7309
    %v7326 = vadd.f32 %v7294, %v7310
    %v7327 = vadd.f32 %v7295, %v7311
    %v7328 = vadd.f32 %v7296, %v7312
    %v7329 = vadd.f32 %v7297, %v7313
    %v7330 = vadd.f32 %v7298, %v7314
    %v7331 = vadd.f32 %v7299, %v7315
    %v7332 = vadd.f32 %v7300, %v7316
    %v7333 = vadd.f32 %v7301, %v7317
    %v7334 = vadd.f32 %v7302, %v7318
    %v7335 = vadd.f32 %v7303, %v7319
    %v7336 = vadd.f32 %v7304, %v7320
    %v7337 = vadd.f32 %v7305, %v7321
    %v7338 = vadd.f32 %v7306, %v7322
    %v7339 = vadd.f32 %v7307, %v7323
    %7340 = vst [vmem:[#allocation3] sm:$0xff] %v7324
    %7341 = vst [vmem:[#allocation3 + $0x8] sm:$0xff] %v7325
    %7342 = vst [vmem:[#allocation3 + $0x10] sm:$0xff] %v7326
    %7343 = vst [vmem:[#allocation3 + $0x18] sm:$0xff] %v7327
    %7344 = vst [vmem:[#allocation3 + $0x20] sm:$0xff] %v7328
    %7345 = vst [vmem:[#allocation3 + $0x28] sm:$0xff] %v7329
    %7346 = vst [vmem:[#allocation3 + $0x30] sm:$0xff] %v7330
    %7347 = vst [vmem:[#allocation3 + $0x38] sm:$0xff] %v7331
    %7348 = vst [vmem:[#allocation3 + $0x40] sm:$0xff] %v7332
    %7349 = vst [vmem:[#allocation3 + $0x48] sm:$0xff] %v7333
    %7350 = vst [vmem:[#allocation3 + $0x50] sm:$0xff] %v7334
    %7351 = vst [vmem:[#allocation3 + $0x58] sm:$0xff] %v7335
    %7352 = vst [vmem:[#allocation3 + $0x60] sm:$0xff] %v7336
    %7353 = vst [vmem:[#allocation3 + $0x68] sm:$0xff] %v7337
    %7354 = vst [vmem:[#allocation3 + $0x70] sm:$0xff] %v7338
    %7355 = vst [vmem:[#allocation3 + $0x78] sm:$0xff] %v7339
    %7356 = vst [vmem:[%s67 + $0x8] sm:$0xff] %v7324
    %7357 = vst [vmem:[%s67 + $0x20] sm:$0xff] %v7325
    %7358 = vst [vmem:[%s67 + $0x38] sm:$0xff] %v7326
    %7359 = vst [vmem:[%s67 + $0x50] sm:$0xff] %v7327
    %7360 = vst [vmem:[%s67 + $0x68] sm:$0xff] %v7328
    %7361 = vst [vmem:[%s67 + $0x80] sm:$0xff] %v7329
    %7362 = vst [vmem:[%s67 + $0x98] sm:$0xff] %v7330
    %7363 = vst [vmem:[%s67 + $0xb0] sm:$0xff] %v7331
    %7364 = vst [vmem:[%s67 + $0xf8] sm:$0xff] %v7332
    %7365 = vst [vmem:[%s67 + $0x110] sm:$0xff] %v7333
    %7366 = vst [vmem:[%s67 + $0x128] sm:$0xff] %v7334
    %7367 = vst [vmem:[%s67 + $0x140] sm:$0xff] %v7335
    %7368 = vst [vmem:[%s67 + $0x158] sm:$0xff] %v7336
    %7369 = vst [vmem:[%s67 + $0x170] sm:$0xff] %v7337
    %7370 = vst [vmem:[%s67 + $0x188] sm:$0xff] %v7338
    %7371 = vst [vmem:[%s67 + $0x1a0] sm:$0xff] %v7339
    %v7388 = vrot.slane %v7324, 7
    %v7389 = vrot.slane %v7325, 7
    %v7390 = vrot.slane %v7326, 7
    %v7391 = vrot.slane %v7327, 7
    %v7392 = vrot.slane %v7328, 7
    %v7393 = vrot.slane %v7329, 7
    %v7394 = vrot.slane %v7330, 7
    %v7395 = vrot.slane %v7331, 7
    %v7396 = vrot.slane %v7332, 7
    %v7397 = vrot.slane %v7333, 7
    %v7398 = vrot.slane %v7334, 7
    %v7399 = vrot.slane %v7335, 7
    %v7400 = vrot.slane %v7336, 7
    %v7401 = vrot.slane %v7337, 7
    %v7402 = vrot.slane %v7338, 7
    %v7403 = vrot.slane %v7339, 7
    %7420 = vst [vmem:[%s67] sm:$0xfe] %v7388
    %7421 = vst [vmem:[%s67 + $0x18] sm:$0xfe] %v7389
    %7422 = vst [vmem:[%s67 + $0x30] sm:$0xfe] %v7390
    %7423 = vst [vmem:[%s67 + $0x48] sm:$0xfe] %v7391
    %7424 = vst [vmem:[%s67 + $0x60] sm:$0xfe] %v7392
    %7425 = vst [vmem:[%s67 + $0x78] sm:$0xfe] %v7393
    %7426 = vst [vmem:[%s67 + $0x90] sm:$0xfe] %v7394
    %7427 = vst [vmem:[%s67 + $0xa8] sm:$0xfe] %v7395
    %7428 = vst [vmem:[%s67 + $0xf0] sm:$0xfe] %v7396
    %7429 = vst [vmem:[%s67 + $0x108] sm:$0xfe] %v7397
    %7430 = vst [vmem:[%s67 + $0x120] sm:$0xfe] %v7398
    %7431 = vst [vmem:[%s67 + $0x138] sm:$0xfe] %v7399
    %7432 = vst [vmem:[%s67 + $0x150] sm:$0xfe] %v7400
    %7433 = vst [vmem:[%s67 + $0x168] sm:$0xfe] %v7401
    %7434 = vst [vmem:[%s67 + $0x180] sm:$0xfe] %v7402
    %7435 = vst [vmem:[%s67 + $0x198] sm:$0xfe] %v7403
    %v7436 = vrot.slane %v7324, 1
    %v7437 = vrot.slane %v7325, 1
    %v7438 = vrot.slane %v7326, 1
    %v7439 = vrot.slane %v7327, 1
    %v7440 = vrot.slane %v7328, 1
    %v7441 = vrot.slane %v7329, 1
    %v7442 = vrot.slane %v7330, 1
    %v7443 = vrot.slane %v7331, 1
    %v7444 = vrot.slane %v7332, 1
    %v7445 = vrot.slane %v7333, 1
    %v7446 = vrot.slane %v7334, 1
    %v7447 = vrot.slane %v7335, 1
    %v7448 = vrot.slane %v7336, 1
    %v7449 = vrot.slane %v7337, 1
    %v7450 = vrot.slane %v7338, 1
    %v7451 = vrot.slane %v7339, 1
    %7468 = vst [vmem:[%s67 + $0x10] sm:$0x7f] %v7436
    %7469 = vst [vmem:[%s67 + $0x28] sm:$0x7f] %v7437
    %7470 = vst [vmem:[%s67 + $0x40] sm:$0x7f] %v7438
    %7471 = vst [vmem:[%s67 + $0x58] sm:$0x7f] %v7439
    %7472 = vst [vmem:[%s67 + $0x70] sm:$0x7f] %v7440
    %7473 = vst [vmem:[%s67 + $0x88] sm:$0x7f] %v7441
    %7474 = vst [vmem:[%s67 + $0xa0] sm:$0x7f] %v7442
    %7475 = vst [vmem:[%s67 + $0xb8] sm:$0x7f] %v7443
    %7476 = vst [vmem:[%s67 + $0x100] sm:$0x7f] %v7444
    %7477 = vst [vmem:[%s67 + $0x118] sm:$0x7f] %v7445
    %7478 = vst [vmem:[%s67 + $0x130] sm:$0x7f] %v7446
    %7479 = vst [vmem:[%s67 + $0x148] sm:$0x7f] %v7447
    %7480 = vst [vmem:[%s67 + $0x160] sm:$0x7f] %v7448
    %7481 = vst [vmem:[%s67 + $0x178] sm:$0x7f] %v7449
    %7482 = vst [vmem:[%s67 + $0x190] sm:$0x7f] %v7450
    %7483 = vst [vmem:[%s67 + $0x1a8] sm:$0x7f] %v7451
    %v7484 = vld [vmem:[#allocation2] sm:$0xff]
    %v7485 = vld [vmem:[#allocation2 + $0x8] sm:$0xff]
    %v7486 = vld [vmem:[#allocation2 + $0x10] sm:$0xff]
    %v7487 = vld [vmem:[#allocation2 + $0x18] sm:$0xff]
    %v7488 = vld [vmem:[#allocation2 + $0x20] sm:$0xff]
    %v7489 = vld [vmem:[#allocation2 + $0x28] sm:$0xff]
    %v7490 = vld [vmem:[#allocation2 + $0x30] sm:$0xff]
    %v7491 = vld [vmem:[#allocation2 + $0x38] sm:$0xff]
    %v7492 = vld [vmem:[#allocation2 + $0x40] sm:$0xff]
    %v7493 = vld [vmem:[#allocation2 + $0x48] sm:$0xff]
    %v7494 = vld [vmem:[#allocation2 + $0x50] sm:$0xff]
    %v7495 = vld [vmem:[#allocation2 + $0x58] sm:$0xff]
    %v7496 = vld [vmem:[#allocation2 + $0x60] sm:$0xff]
    %v7497 = vld [vmem:[#allocation2 + $0x68] sm:$0xff]
    %v7498 = vld [vmem:[#allocation2 + $0x70] sm:$0xff]
    %v7499 = vld [vmem:[#allocation2 + $0x78] sm:$0xff]
    %v7500 = vld [vmem:[#allocation2 + $0x80] sm:$0xff]
    %v7501 = vld [vmem:[#allocation2 + $0x88] sm:$0xff]
    %v7502 = vld [vmem:[#allocation2 + $0x90] sm:$0xff]
    %v7503 = vld [vmem:[#allocation2 + $0x98] sm:$0xff]
    %v7504 = vld [vmem:[#allocation2 + $0xa0] sm:$0xff]
    %v7505 = vld [vmem:[#allocation2 + $0xa8] sm:$0xff]
    %v7506 = vld [vmem:[#allocation2 + $0xb0] sm:$0xff]
    %v7507 = vld [vmem:[#allocation2 + $0xb8] sm:$0xff]
    %v7508 = vld [vmem:[#allocation2 + $0xf0] sm:$0xff]
    %v7509 = vld [vmem:[#allocation2 + $0xf8] sm:$0xff]
    %v7510 = vld [vmem:[#allocation2 + $0x100] sm:$0xff]
    %v7511 = vld [vmem:[#allocation2 + $0x108] sm:$0xff]
    %v7512 = vld [vmem:[#allocation2 + $0x110] sm:$0xff]
    %v7513 = vld [vmem:[#allocation2 + $0x118] sm:$0xff]
    %v7514 = vld [vmem:[#allocation2 + $0x120] sm:$0xff]
    %v7515 = vld [vmem:[#allocation2 + $0x128] sm:$0xff]
    %v7516 = vld [vmem:[#allocation2 + $0x130] sm:$0xff]
    %v7517 = vld [vmem:[#allocation2 + $0x138] sm:$0xff]
    %v7518 = vld [vmem:[#allocation2 + $0x140] sm:$0xff]
    %v7519 = vld [vmem:[#allocation2 + $0x148] sm:$0xff]
    %v7520 = vld [vmem:[#allocation2 + $0x150] sm:$0xff]
    %v7521 = vld [vmem:[#allocation2 + $0x158] sm:$0xff]
    %v7522 = vld [vmem:[#allocation2 + $0x160] sm:$0xff]
    %v7523 = vld [vmem:[#allocation2 + $0x168] sm:$0xff]
    %v7524 = vld [vmem:[#allocation2 + $0x170] sm:$0xff]
    %v7525 = vld [vmem:[#allocation2 + $0x178] sm:$0xff]
    %v7526 = vld [vmem:[#allocation2 + $0x180] sm:$0xff]
    %v7527 = vld [vmem:[#allocation2 + $0x188] sm:$0xff]
    %v7528 = vld [vmem:[#allocation2 + $0x190] sm:$0xff]
    %v7529 = vld [vmem:[#allocation2 + $0x198] sm:$0xff]
    %v7530 = vld [vmem:[#allocation2 + $0x1a0] sm:$0xff]
    %v7531 = vld [vmem:[#allocation2 + $0x1a8] sm:$0xff]
    %v7532 = vpack.c.bf16 %v7487, %v7484
    %v7533 = vpack.c.bf16 %v7488, %v7485
    %v7534 = vpack.c.bf16 %v7489, %v7486
    %v7535 = vpack.c.bf16 %v7493, %v7490
    %v7536 = vpack.c.bf16 %v7494, %v7491
    %v7537 = vpack.c.bf16 %v7495, %v7492
    %v7538 = vpack.c.bf16 %v7499, %v7496
    %v7539 = vpack.c.bf16 %v7500, %v7497
    %v7540 = vpack.c.bf16 %v7501, %v7498
    %v7541 = vpack.c.bf16 %v7505, %v7502
    %v7542 = vpack.c.bf16 %v7506, %v7503
    %v7543 = vpack.c.bf16 %v7507, %v7504
    %v7544 = vpack.c.bf16 %v7511, %v7508
    %v7545 = vpack.c.bf16 %v7512, %v7509
    %v7546 = vpack.c.bf16 %v7513, %v7510
    %v7547 = vpack.c.bf16 %v7517, %v7514
    %v7548 = vpack.c.bf16 %v7518, %v7515
    %v7549 = vpack.c.bf16 %v7519, %v7516
    %v7550 = vpack.c.bf16 %v7523, %v7520
    %v7551 = vpack.c.bf16 %v7524, %v7521
    %v7552 = vpack.c.bf16 %v7525, %v7522
    %v7553 = vpack.c.bf16 %v7529, %v7526
    %v7554 = vpack.c.bf16 %v7530, %v7527
    %v7555 = vpack.c.bf16 %v7531, %v7528
    %v7556 = vld [vmem:[#allocation8] sm:$0xf]
    %v7557 = vld [vmem:[#allocation8 + $0x4] sm:$0xf]
    %v7558 = vld [vmem:[#allocation8 + $0x8] sm:$0xf]
    %v7559 = vld [vmem:[#allocation8 + $0xc] sm:$0xf]
    %v7560 = vld [vmem:[#allocation8 + $0x10] sm:$0xf]
    %v7561 = vld [vmem:[#allocation8 + $0x14] sm:$0xf]
    %v7562 = vld [vmem:[#allocation8 + $0x18] sm:$0xf]
    %v7563 = vld [vmem:[#allocation8 + $0x1c] sm:$0xf]
    %v7564 = vld [vmem:[#allocation8 + $0x20] sm:$0xf]
    %v7565 = vld [vmem:[#allocation8 + $0x24] sm:$0xf]
    %v7566 = vld [vmem:[#allocation8 + $0x28] sm:$0xf]
    %v7567 = vld [vmem:[#allocation8 + $0x2c] sm:$0xf]
    %v7568 = vld [vmem:[#allocation8 + $0x30] sm:$0xf]
    %v7569 = vld [vmem:[#allocation8 + $0x34] sm:$0xf]
    %v7570 = vld [vmem:[#allocation8 + $0x38] sm:$0xf]
    %v7571 = vld [vmem:[#allocation8 + $0x3c] sm:$0xf]
    %v7572 = vld [vmem:[#allocation8 + $0x40] sm:$0xf]
    %v7573 = vld [vmem:[#allocation8 + $0x44] sm:$0xf]
    %v7574 = vld [vmem:[#allocation8 + $0x48] sm:$0xf]
    %v7575 = vld [vmem:[#allocation8 + $0x4c] sm:$0xf]
    %v7576 = vld [vmem:[#allocation8 + $0x50] sm:$0xf]
    %v7577 = vld [vmem:[#allocation8 + $0x54] sm:$0xf]
    %v7578 = vld [vmem:[#allocation8 + $0x58] sm:$0xf]
    %v7579 = vld [vmem:[#allocation8 + $0x5c] sm:$0xf]
    %v7580 = vld [vmem:[#allocation8 + $0x60] sm:$0xf]
    %v7581 = vld [vmem:[#allocation8 + $0x64] sm:$0xf]
    %v7582 = vld [vmem:[#allocation8 + $0x68] sm:$0xf]
    %v7583 = vld [vmem:[#allocation8 + $0x6c] sm:$0xf]
    %v7584 = vld [vmem:[#allocation8 + $0x70] sm:$0xf]
    %v7585 = vld [vmem:[#allocation8 + $0x74] sm:$0xf]
    %v7586 = vld [vmem:[#allocation8 + $0x78] sm:$0xf]
    %v7587 = vld [vmem:[#allocation8 + $0x7c] sm:$0xf]
    %v7588 = vld [vmem:[#allocation8 + $0x80] sm:$0xf]
    %v7589 = vld [vmem:[#allocation8 + $0x84] sm:$0xf]
    %v7590 = vld [vmem:[#allocation8 + $0x88] sm:$0xf]
    %v7591 = vld [vmem:[#allocation8 + $0x8c] sm:$0xf]
    %v7592 = vld [vmem:[#allocation8 + $0x90] sm:$0xf]
    %v7593 = vld [vmem:[#allocation8 + $0x94] sm:$0xf]
    %v7594 = vld [vmem:[#allocation8 + $0x98] sm:$0xf]
    %v7595 = vld [vmem:[#allocation8 + $0x9c] sm:$0xf]
    %v7596 = vld [vmem:[#allocation8 + $0xa0] sm:$0xf]
    %v7597 = vld [vmem:[#allocation8 + $0xa4] sm:$0xf]
    %v7598 = vld [vmem:[#allocation8 + $0xa8] sm:$0xf]
    %v7599 = vld [vmem:[#allocation8 + $0xac] sm:$0xf]
    %v7600 = vld [vmem:[#allocation8 + $0xb0] sm:$0xf]
    %v7601 = vld [vmem:[#allocation8 + $0xb4] sm:$0xf]
    %v7602 = vld [vmem:[#allocation8 + $0xb8] sm:$0xf]
    %v7603 = vld [vmem:[#allocation8 + $0xbc] sm:$0xf]
    %v7604 = vld [vmem:[%s67] sm:$0xff]
    %v7605 = vld [vmem:[%s67 + $0x8] sm:$0xff]
    %v7606 = vld [vmem:[%s67 + $0x10] sm:$0xff]
    %v7607 = vld [vmem:[%s67 + $0x18] sm:$0xff]
    %v7608 = vld [vmem:[%s67 + $0x20] sm:$0xff]
    %v7609 = vld [vmem:[%s67 + $0x28] sm:$0xff]
    %v7610 = vld [vmem:[%s67 + $0x30] sm:$0xff]
    %v7611 = vld [vmem:[%s67 + $0x38] sm:$0xff]
    %v7612 = vld [vmem:[%s67 + $0x40] sm:$0xff]
    %v7613 = vld [vmem:[%s67 + $0x48] sm:$0xff]
    %v7614 = vld [vmem:[%s67 + $0x50] sm:$0xff]
    %v7615 = vld [vmem:[%s67 + $0x58] sm:$0xff]
    %v7616 = vld [vmem:[%s67 + $0x60] sm:$0xff]
    %v7617 = vld [vmem:[%s67 + $0x68] sm:$0xff]
    %v7618 = vld [vmem:[%s67 + $0x70] sm:$0xff]
    %v7619 = vld [vmem:[%s67 + $0x78] sm:$0xff]
    %v7620 = vld [vmem:[%s67 + $0x80] sm:$0xff]
    %v7621 = vld [vmem:[%s67 + $0x88] sm:$0xff]
    %v7622 = vld [vmem:[%s67 + $0x90] sm:$0xff]
    %v7623 = vld [vmem:[%s67 + $0x98] sm:$0xff]
    %v7624 = vld [vmem:[%s67 + $0xa0] sm:$0xff]
    %v7625 = vld [vmem:[%s67 + $0xa8] sm:$0xff]
    %v7626 = vld [vmem:[%s67 + $0xb0] sm:$0xff]
    %v7627 = vld [vmem:[%s67 + $0xb8] sm:$0xff]
    %v7628 = vld [vmem:[%s67 + $0xf0] sm:$0xff]
    %v7629 = vld [vmem:[%s67 + $0xf8] sm:$0xff]
    %v7630 = vld [vmem:[%s67 + $0x100] sm:$0xff]
    %v7631 = vld [vmem:[%s67 + $0x108] sm:$0xff]
    %v7632 = vld [vmem:[%s67 + $0x110] sm:$0xff]
    %v7633 = vld [vmem:[%s67 + $0x118] sm:$0xff]
    %v7634 = vld [vmem:[%s67 + $0x120] sm:$0xff]
    %v7635 = vld [vmem:[%s67 + $0x128] sm:$0xff]
    %v7636 = vld [vmem:[%s67 + $0x130] sm:$0xff]
    %v7637 = vld [vmem:[%s67 + $0x138] sm:$0xff]
    %v7638 = vld [vmem:[%s67 + $0x140] sm:$0xff]
    %v7639 = vld [vmem:[%s67 + $0x148] sm:$0xff]
    %v7640 = vld [vmem:[%s67 + $0x150] sm:$0xff]
    %v7641 = vld [vmem:[%s67 + $0x158] sm:$0xff]
    %v7642 = vld [vmem:[%s67 + $0x160] sm:$0xff]
    %v7643 = vld [vmem:[%s67 + $0x168] sm:$0xff]
    %v7644 = vld [vmem:[%s67 + $0x170] sm:$0xff]
    %v7645 = vld [vmem:[%s67 + $0x178] sm:$0xff]
    %v7646 = vld [vmem:[%s67 + $0x180] sm:$0xff]
    %v7647 = vld [vmem:[%s67 + $0x188] sm:$0xff]
    %v7648 = vld [vmem:[%s67 + $0x190] sm:$0xff]
    %v7649 = vld [vmem:[%s67 + $0x198] sm:$0xff]
    %v7650 = vld [vmem:[%s67 + $0x1a0] sm:$0xff]
    %v7651 = vld [vmem:[%s67 + $0x1a8] sm:$0xff]
    %v7652 = vpack.c.bf16 %v7607, %v7604
    %v7653 = vpack.c.bf16 %v7608, %v7605
    %v7654 = vpack.c.bf16 %v7609, %v7606
    %v7655 = vpack.c.bf16 %v7613, %v7610
    %v7656 = vpack.c.bf16 %v7614, %v7611
    %v7657 = vpack.c.bf16 %v7615, %v7612
    %v7658 = vpack.c.bf16 %v7619, %v7616
    %v7659 = vpack.c.bf16 %v7620, %v7617
    %v7660 = vpack.c.bf16 %v7621, %v7618
    %v7661 = vpack.c.bf16 %v7625, %v7622
    %v7662 = vpack.c.bf16 %v7626, %v7623
    %v7663 = vpack.c.bf16 %v7627, %v7624
    %v7664 = vpack.c.bf16 %v7631, %v7628
    %v7665 = vpack.c.bf16 %v7632, %v7629
    %v7666 = vpack.c.bf16 %v7633, %v7630
    %v7667 = vpack.c.bf16 %v7637, %v7634
    %v7668 = vpack.c.bf16 %v7638, %v7635
    %v7669 = vpack.c.bf16 %v7639, %v7636
    %v7670 = vpack.c.bf16 %v7643, %v7640
    %v7671 = vpack.c.bf16 %v7644, %v7641
    %v7672 = vpack.c.bf16 %v7645, %v7642
    %v7673 = vpack.c.bf16 %v7649, %v7646
    %v7674 = vpack.c.bf16 %v7650, %v7647
    %v7675 = vpack.c.bf16 %v7651, %v7648
    %v7676 = vld [vmem:[%s468] sm:$0xf]
    %v7677 = vld [vmem:[%s468 + $0x4] sm:$0xf]
    %v7678 = vld [vmem:[%s468 + $0x8] sm:$0xf]
    %v7679 = vld [vmem:[%s468 + $0xc] sm:$0xf]
    %v7680 = vld [vmem:[%s468 + $0x10] sm:$0xf]
    %v7681 = vld [vmem:[%s468 + $0x14] sm:$0xf]
    %v7682 = vld [vmem:[%s468 + $0x18] sm:$0xf]
    %v7683 = vld [vmem:[%s468 + $0x1c] sm:$0xf]
    %v7684 = vld [vmem:[%s468 + $0x20] sm:$0xf]
    %v7685 = vld [vmem:[%s468 + $0x24] sm:$0xf]
    %v7686 = vld [vmem:[%s468 + $0x28] sm:$0xf]
    %v7687 = vld [vmem:[%s468 + $0x2c] sm:$0xf]
    %v7688 = vld [vmem:[%s468 + $0x30] sm:$0xf]
    %v7689 = vld [vmem:[%s468 + $0x34] sm:$0xf]
    %v7690 = vld [vmem:[%s468 + $0x38] sm:$0xf]
    %v7691 = vld [vmem:[%s468 + $0x3c] sm:$0xf]
    %v7692 = vld [vmem:[%s468 + $0x40] sm:$0xf]
    %v7693 = vld [vmem:[%s468 + $0x44] sm:$0xf]
    %v7694 = vld [vmem:[%s468 + $0x48] sm:$0xf]
    %v7695 = vld [vmem:[%s468 + $0x4c] sm:$0xf]
    %v7696 = vld [vmem:[%s468 + $0x50] sm:$0xf]
    %v7697 = vld [vmem:[%s468 + $0x54] sm:$0xf]
    %v7698 = vld [vmem:[%s468 + $0x58] sm:$0xf]
    %v7699 = vld [vmem:[%s468 + $0x5c] sm:$0xf]
    %v7700 = vld [vmem:[%s468 + $0x60] sm:$0xf]
    %v7701 = vld [vmem:[%s468 + $0x64] sm:$0xf]
    %v7702 = vld [vmem:[%s468 + $0x68] sm:$0xf]
    %v7703 = vld [vmem:[%s468 + $0x6c] sm:$0xf]
    %v7704 = vld [vmem:[%s468 + $0x70] sm:$0xf]
    %v7705 = vld [vmem:[%s468 + $0x74] sm:$0xf]
    %v7706 = vld [vmem:[%s468 + $0x78] sm:$0xf]
    %v7707 = vld [vmem:[%s468 + $0x7c] sm:$0xf]
    %v7708 = vld [vmem:[%s468 + $0x80] sm:$0xf]
    %v7709 = vld [vmem:[%s468 + $0x84] sm:$0xf]
    %v7710 = vld [vmem:[%s468 + $0x88] sm:$0xf]
    %v7711 = vld [vmem:[%s468 + $0x8c] sm:$0xf]
    %v7712 = vld [vmem:[%s468 + $0x90] sm:$0xf]
    %v7713 = vld [vmem:[%s468 + $0x94] sm:$0xf]
    %v7714 = vld [vmem:[%s468 + $0x98] sm:$0xf]
    %v7715 = vld [vmem:[%s468 + $0x9c] sm:$0xf]
    %v7716 = vld [vmem:[%s468 + $0xa0] sm:$0xf]
    %v7717 = vld [vmem:[%s468 + $0xa4] sm:$0xf]
    %v7718 = vld [vmem:[%s468 + $0xa8] sm:$0xf]
    %v7719 = vld [vmem:[%s468 + $0xac] sm:$0xf]
    %v7720 = vld [vmem:[%s468 + $0xb0] sm:$0xf]
    %v7721 = vld [vmem:[%s468 + $0xb4] sm:$0xf]
    %v7722 = vld [vmem:[%s468 + $0xb8] sm:$0xf]
    %v7723 = vld [vmem:[%s468 + $0xbc] sm:$0xf]
    %v7772 = vunpack.c.l.b16 %v7676
    %v7773 = vunpack.c.l.b16 %v7677
    %v7774 = vunpack.c.l.b16 %v7678
    %v7775 = vunpack.c.l.b16 %v7679
    %v7776 = vunpack.c.l.b16 %v7680
    %v7777 = vunpack.c.l.b16 %v7681
    %v7778 = vunpack.c.l.b16 %v7682
    %v7779 = vunpack.c.l.b16 %v7683
    %v7780 = vunpack.c.l.b16 %v7684
    %v7781 = vunpack.c.l.b16 %v7685
    %v7782 = vunpack.c.l.b16 %v7686
    %v7783 = vunpack.c.l.b16 %v7687
    %v7784 = vunpack.c.l.b16 %v7688
    %v7785 = vunpack.c.l.b16 %v7689
    %v7786 = vunpack.c.l.b16 %v7690
    %v7787 = vunpack.c.l.b16 %v7691
    %v7788 = vunpack.c.l.b16 %v7692
    %v7789 = vunpack.c.l.b16 %v7693
    %v7790 = vunpack.c.l.b16 %v7694
    %v7791 = vunpack.c.l.b16 %v7695
    %v7792 = vunpack.c.l.b16 %v7696
    %v7793 = vunpack.c.l.b16 %v7697
    %v7794 = vunpack.c.l.b16 %v7698
    %v7795 = vunpack.c.l.b16 %v7699
    %v7796 = vunpack.c.l.b16 %v7700
    %v7797 = vunpack.c.l.b16 %v7701
    %v7798 = vunpack.c.l.b16 %v7702
    %v7799 = vunpack.c.l.b16 %v7703
    %v7800 = vunpack.c.l.b16 %v7704
    %v7801 = vunpack.c.l.b16 %v7705
    %v7802 = vunpack.c.l.b16 %v7706
    %v7803 = vunpack.c.l.b16 %v7707
    %v7804 = vunpack.c.l.b16 %v7708
    %v7805 = vunpack.c.l.b16 %v7709
    %v7806 = vunpack.c.l.b16 %v7710
    %v7807 = vunpack.c.l.b16 %v7711
    %v7808 = vunpack.c.l.b16 %v7712
    %v7809 = vunpack.c.l.b16 %v7713
    %v7810 = vunpack.c.l.b16 %v7714
    %v7811 = vunpack.c.l.b16 %v7715
    %v7812 = vunpack.c.l.b16 %v7716
    %v7813 = vunpack.c.l.b16 %v7717
    %v7814 = vunpack.c.l.b16 %v7718
    %v7815 = vunpack.c.l.b16 %v7719
    %v7816 = vunpack.c.l.b16 %v7720
    %v7817 = vunpack.c.l.b16 %v7721
    %v7818 = vunpack.c.l.b16 %v7722
    %v7819 = vunpack.c.l.b16 %v7723
    %v7820 = vpack.c.b16 %v7773, %v7772
    %v7821 = vpack.c.b16 %v7775, %v7774
    %v7822 = vpack.c.b16 %v7777, %v7776
    %v7823 = vpack.c.b16 %v7779, %v7778
    %v7824 = vpack.c.b16 %v7781, %v7780
    %v7825 = vpack.c.b16 %v7783, %v7782
    %v7826 = vpack.c.b16 %v7785, %v7784
    %v7827 = vpack.c.b16 %v7787, %v7786
    %v7828 = vpack.c.b16 %v7789, %v7788
    %v7829 = vpack.c.b16 %v7791, %v7790
    %v7830 = vpack.c.b16 %v7793, %v7792
    %v7831 = vpack.c.b16 %v7795, %v7794
    %v7832 = vpack.c.b16 %v7797, %v7796
    %v7833 = vpack.c.b16 %v7799, %v7798
    %v7834 = vpack.c.b16 %v7801, %v7800
    %v7835 = vpack.c.b16 %v7803, %v7802
    %v7836 = vpack.c.b16 %v7805, %v7804
    %v7837 = vpack.c.b16 %v7807, %v7806
    %v7838 = vpack.c.b16 %v7809, %v7808
    %v7839 = vpack.c.b16 %v7811, %v7810
    %v7840 = vpack.c.b16 %v7813, %v7812
    %v7841 = vpack.c.b16 %v7815, %v7814
    %v7842 = vpack.c.b16 %v7817, %v7816
    %v7843 = vpack.c.b16 %v7819, %v7818
    %7868 = vmatprep.subr.bf16.mxu0 0
    %7869 = vmatpush1.bf16.msra.mxu0 %v7820
    %7870 = vmatprep.subr.bf16.mxu0 0
    %7871 = vmatpush1.bf16.msra.mxu0 %v7821
    %7872 = vmatprep.subr.bf16.mxu0 0
    %7873 = vmatpush1.bf16.msra.mxu0 %v7822
    %7874 = vmatprep.subr.bf16.mxu0 0
    %7875 = vmatpush1.bf16.msra.mxu0 %v7823
    %7876 = vmatprep.subr.bf16.mxu0 0
    %7877 = vmatpush1.bf16.msra.mxu0 %v7824
    %7878 = vmatprep.subr.bf16.mxu0 0
    %7879 = vmatpush1.bf16.msra.mxu0 %v7825
    %7880 = vmatprep.subr.bf16.mxu0 0
    %7881 = vmatpush1.bf16.msra.mxu0 %v7826
    %7882 = vmatprep.subr.bf16.mxu0 0
    %7883 = vmatpush1.bf16.msra.mxu0 %v7827
    %7884 = vmatprep.subr.bf16.mxu0 0
    %7885 = vmatpush1.bf16.msra.mxu0 %v7828
    %7886 = vmatprep.subr.bf16.mxu0 0
    %7887 = vmatpush1.bf16.msra.mxu0 %v7829
    %7888 = vmatprep.subr.bf16.mxu0 0
    %7889 = vmatpush1.bf16.msra.mxu0 %v7830
    %7890 = vmatprep.subr.bf16.mxu0 0
    %7891 = vmatpush1.bf16.msra.mxu0 %v7831
    %7892 = vmatprep.subr.bf16.mxu0 0
    %7893 = vmatpush1.bf16.msra.mxu0 %v7832
    %7894 = vmatprep.subr.bf16.mxu0 0
    %7895 = vmatpush1.bf16.msra.mxu0 %v7833
    %7896 = vmatprep.subr.bf16.mxu0 0
    %7897 = vmatpush1.bf16.msra.mxu0 %v7834
    %7898 = vmatprep.subr.bf16.mxu0 0
    %7899 = vmatpush1.bf16.msra.mxu0 %v7835
    %7900 = vmatprep.mubr.bf16.mxu0 %v7653
    %7901 = vmatmul.mubr.bf16.gmra.mrb[0].mxu0 %v7652
    %v7902 = vpop.f32.mrb[0].mxu0
    %v7903 = vadd.f32 0.0, %v7902
    %v7904 = vpop.f32.mrb[0].mxu0
    %v7905 = vpop.f32.mrb[0].mxu0
    %v7906 = vadd.f32 0.0, %v7905
    %v7907 = vpop.f32.mrb[0].mxu0
    %7908 = vmatprep.mubr.bf16.mxu0 %v7656
    %7909 = vmatmul.mubr.bf16.gmra.mrb[0].mxu0 %v7655
    %v7910 = vpop.f32.mrb[0].mxu0
    %v7911 = vadd.f32 0.0, %v7910
    %v7912 = vpop.f32.mrb[0].mxu0
    %v7913 = vpop.f32.mrb[0].mxu0
    %v7914 = vadd.f32 0.0, %v7913
    %v7915 = vpop.f32.mrb[0].mxu0
    %7916 = vmatprep.mubr.bf16.mxu0 %v7659
    %7917 = vmatmul.mubr.bf16.gmra.mrb[0].mxu0 %v7658
    %v7918 = vpop.f32.mrb[0].mxu0
    %v7919 = vadd.f32 0.0, %v7918
    %v7920 = vpop.f32.mrb[0].mxu0
    %v7921 = vpop.f32.mrb[0].mxu0
    %v7922 = vadd.f32 0.0, %v7921
    %v7923 = vpop.f32.mrb[0].mxu0
    %7924 = vmatprep.mubr.bf16.mxu0 %v7662
    %7925 = vmatmul.mubr.bf16.gmra.mrb[0].mxu0 %v7661
    %v7926 = vpop.f32.mrb[0].mxu0
    %v7927 = vadd.f32 0.0, %v7926
    %v7928 = vpop.f32.mrb[0].mxu0
    %v7929 = vpop.f32.mrb[0].mxu0
    %v7930 = vadd.f32 0.0, %v7929
    %v7931 = vpop.f32.mrb[0].mxu0
    %7932 = vmatprep.mubr.bf16.mxu0 %v7665
    %7933 = vmatmul.mubr.bf16.gmra.mrb[0].mxu0 %v7664
    %v7934 = vpop.f32.mrb[0].mxu0
    %v7935 = vadd.f32 0.0, %v7934
    %v7936 = vpop.f32.mrb[0].mxu0
    %v7937 = vpop.f32.mrb[0].mxu0
    %v7938 = vadd.f32 0.0, %v7937
    %v7939 = vpop.f32.mrb[0].mxu0
    %7940 = vmatprep.mubr.bf16.mxu0 %v7668
    %7941 = vmatmul.mubr.bf16.gmra.mrb[0].mxu0 %v7667
    %v7942 = vpop.f32.mrb[0].mxu0
    %v7943 = vadd.f32 0.0, %v7942
    %v7944 = vpop.f32.mrb[0].mxu0
    %v7945 = vpop.f32.mrb[0].mxu0
    %v7946 = vadd.f32 0.0, %v7945
    %v7947 = vpop.f32.mrb[0].mxu0
    %7948 = vmatprep.mubr.bf16.mxu0 %v7671
    %7949 = vmatmul.mubr.bf16.gmra.mrb[0].mxu0 %v7670
    %v7950 = vpop.f32.mrb[0].mxu0
    %v7951 = vadd.f32 0.0, %v7950
    %v7952 = vpop.f32.mrb[0].mxu0
    %v7953 = vpop.f32.mrb[0].mxu0
    %v7954 = vadd.f32 0.0, %v7953
    %v7955 = vpop.f32.mrb[0].mxu0
    %7956 = vmatprep.mubr.bf16.mxu0 %v7674
    %7957 = vmatmul.mubr.bf16.gmra.mrb[0].mxu0 %v7673
    %v7958 = vpop.f32.mrb[0].mxu0
    %v7959 = vadd.f32 0.0, %v7958
    %v7960 = vpop.f32.mrb[0].mxu0
    %v7961 = vpop.f32.mrb[0].mxu0
    %v7962 = vadd.f32 0.0, %v7961
    %v7963 = vpop.f32.mrb[0].mxu0
    %7964 = vdwg.mxu0
    %7965 = vmatprep.subr.bf16.mxu0 0
    %7966 = vmatpush1.bf16.msra.mxu0 %v7836
    %7967 = vmatprep.subr.bf16.mxu0 0
    %7968 = vmatpush1.bf16.msra.mxu0 %v7837
    %7969 = vmatprep.subr.bf16.mxu0 0
    %7970 = vmatpush1.bf16.msra.mxu0 %v7838
    %7971 = vmatprep.subr.bf16.mxu0 0
    %7972 = vmatpush1.bf16.msra.mxu0 %v7839
    %7973 = vmatprep.subr.bf16.mxu0 0
    %7974 = vmatpush1.bf16.msra.mxu0 %v7840
    %7975 = vmatprep.subr.bf16.mxu0 0
    %7976 = vmatpush1.bf16.msra.mxu0 %v7841
    %7977 = vmatprep.subr.bf16.mxu0 0
    %7978 = vmatpush1.bf16.msra.mxu0 %v7842
    %7979 = vmatprep.subr.bf16.mxu0 0
    %7980 = vmatpush1.bf16.msra.mxu0 %v7843
    %7981 = vmatprep.subr.bf16.mxu0 0
    %7982 = vmatpush1.bf16.msra.mxu0 0
    %7983 = vmatprep.subr.bf16.mxu0 0
    %7984 = vmatpush1.bf16.msra.mxu0 0
    %7985 = vmatprep.subr.bf16.mxu0 0
    %7986 = vmatpush1.bf16.msra.mxu0 0
    %7987 = vmatprep.subr.bf16.mxu0 0
    %7988 = vmatpush1.bf16.msra.mxu0 0
    %7989 = vmatprep.subr.bf16.mxu0 0
    %7990 = vmatpush1.bf16.msra.mxu0 0
    %7991 = vmatprep.subr.bf16.mxu0 0
    %7992 = vmatpush1.bf16.msra.mxu0 0
    %7993 = vmatprep.subr.bf16.mxu0 0
    %7994 = vmatpush1.bf16.msra.mxu0 0
    %7995 = vmatprep.subr.bf16.mxu0 0
    %7996 = vmatpush1.bf16.msra.mxu0 0
    %7997 = vmatprep.mubr.bf16.mxu0 0
    %7998 = vmatmul.mubr.bf16.gmra.mrb[0].mxu0 %v7654
    %v7999 = vpop.f32.mrb[0].mxu0
    %v8000 = vadd.f32 %v7903, %v7999
    %v8001 = vpop.f32.mrb[0].mxu0
    %v8002 = vpop.f32.mrb[0].mxu0
    %v8003 = vadd.f32 %v7906, %v8002
    %v8004 = vpop.f32.mrb[0].mxu0
    %8005 = vmatprep.mubr.bf16.mxu0 0
    %8006 = vmatmul.mubr.bf16.gmra.mrb[0].mxu0 %v7657
    %v8007 = vpop.f32.mrb[0].mxu0
    %v8008 = vadd.f32 %v7911, %v8007
    %v8009 = vpop.f32.mrb[0].mxu0
    %v8010 = vpop.f32.mrb[0].mxu0
    %v8011 = vadd.f32 %v7914, %v8010
    %v8012 = vpop.f32.mrb[0].mxu0
    %8013 = vmatprep.mubr.bf16.mxu0 0
    %8014 = vmatmul.mubr.bf16.gmra.mrb[0].mxu0 %v7660
    %v8015 = vpop.f32.mrb[0].mxu0
    %v8016 = vadd.f32 %v7919, %v8015
    %v8017 = vpop.f32.mrb[0].mxu0
    %v8018 = vpop.f32.mrb[0].mxu0
    %v8019 = vadd.f32 %v7922, %v8018
    %v8020 = vpop.f32.mrb[0].mxu0
    %8021 = vmatprep.mubr.bf16.mxu0 0
    %8022 = vmatmul.mubr.bf16.gmra.mrb[0].mxu0 %v7663
    %v8023 = vpop.f32.mrb[0].mxu0
    %v8024 = vadd.f32 %v7927, %v8023
    %v8025 = vpop.f32.mrb[0].mxu0
    %v8026 = vpop.f32.mrb[0].mxu0
    %v8027 = vadd.f32 %v7930, %v8026
    %v8028 = vpop.f32.mrb[0].mxu0
    %8029 = vmatprep.mubr.bf16.mxu0 0
    %8030 = vmatmul.mubr.bf16.gmra.mrb[0].mxu0 %v7666
    %v8031 = vpop.f32.mrb[0].mxu0
    %v8032 = vadd.f32 %v7935, %v8031
    %v8033 = vpop.f32.mrb[0].mxu0
    %v8034 = vpop.f32.mrb[0].mxu0
    %v8035 = vadd.f32 %v7938, %v8034
    %v8036 = vpop.f32.mrb[0].mxu0
    %8037 = vmatprep.mubr.bf16.mxu0 0
    %8038 = vmatmul.mubr.bf16.gmra.mrb[0].mxu0 %v7669
    %v8039 = vpop.f32.mrb[0].mxu0
    %v8040 = vadd.f32 %v7943, %v8039
    %v8041 = vpop.f32.mrb[0].mxu0
    %v8042 = vpop.f32.mrb[0].mxu0
    %v8043 = vadd.f32 %v7946, %v8042
    %v8044 = vpop.f32.mrb[0].mxu0
    %8045 = vmatprep.mubr.bf16.mxu0 0
    %8046 = vmatmul.mubr.bf16.gmra.mrb[0].mxu0 %v7672
    %v8047 = vpop.f32.mrb[0].mxu0
    %v8048 = vadd.f32 %v7951, %v8047
    %v8049 = vpop.f32.mrb[0].mxu0
    %v8050 = vpop.f32.mrb[0].mxu0
    %v8051 = vadd.f32 %v7954, %v8050
    %v8052 = vpop.f32.mrb[0].mxu0
    %8053 = vmatprep.mubr.bf16.mxu0 0
    %8054 = vmatmul.mubr.bf16.gmra.mrb[0].mxu0 %v7675
    %v8055 = vpop.f32.mrb[0].mxu0
    %v8056 = vadd.f32 %v7959, %v8055
    %v8057 = vpop.f32.mrb[0].mxu0
    %v8058 = vpop.f32.mrb[0].mxu0
    %v8059 = vadd.f32 %v7962, %v8058
    %v8060 = vpop.f32.mrb[0].mxu0
    %8061 = vdwg.mxu0
    %v8110 = vunpack.c.l.b16 %v7556
    %v8111 = vunpack.c.l.b16 %v7557
    %v8112 = vunpack.c.l.b16 %v7558
    %v8113 = vunpack.c.l.b16 %v7559
    %v8114 = vunpack.c.l.b16 %v7560
    %v8115 = vunpack.c.l.b16 %v7561
    %v8116 = vunpack.c.l.b16 %v7562
    %v8117 = vunpack.c.l.b16 %v7563
    %v8118 = vunpack.c.l.b16 %v7564
    %v8119 = vunpack.c.l.b16 %v7565
    %v8120 = vunpack.c.l.b16 %v7566
    %v8121 = vunpack.c.l.b16 %v7567
    %v8122 = vunpack.c.l.b16 %v7568
    %v8123 = vunpack.c.l.b16 %v7569
    %v8124 = vunpack.c.l.b16 %v7570
    %v8125 = vunpack.c.l.b16 %v7571
    %v8126 = vunpack.c.l.b16 %v7572
    %v8127 = vunpack.c.l.b16 %v7573
    %v8128 = vunpack.c.l.b16 %v7574
    %v8129 = vunpack.c.l.b16 %v7575
    %v8130 = vunpack.c.l.b16 %v7576
    %v8131 = vunpack.c.l.b16 %v7577
    %v8132 = vunpack.c.l.b16 %v7578
    %v8133 = vunpack.c.l.b16 %v7579
    %v8134 = vunpack.c.l.b16 %v7580
    %v8135 = vunpack.c.l.b16 %v7581
    %v8136 = vunpack.c.l.b16 %v7582
    %v8137 = vunpack.c.l.b16 %v7583
    %v8138 = vunpack.c.l.b16 %v7584
    %v8139 = vunpack.c.l.b16 %v7585
    %v8140 = vunpack.c.l.b16 %v7586
    %v8141 = vunpack.c.l.b16 %v7587
    %v8142 = vunpack.c.l.b16 %v7588
    %v8143 = vunpack.c.l.b16 %v7589
    %v8144 = vunpack.c.l.b16 %v7590
    %v8145 = vunpack.c.l.b16 %v7591
    %v8146 = vunpack.c.l.b16 %v7592
    %v8147 = vunpack.c.l.b16 %v7593
    %v8148 = vunpack.c.l.b16 %v7594
    %v8149 = vunpack.c.l.b16 %v7595
    %v8150 = vunpack.c.l.b16 %v7596
    %v8151 = vunpack.c.l.b16 %v7597
    %v8152 = vunpack.c.l.b16 %v7598
    %v8153 = vunpack.c.l.b16 %v7599
    %v8154 = vunpack.c.l.b16 %v7600
    %v8155 = vunpack.c.l.b16 %v7601
    %v8156 = vunpack.c.l.b16 %v7602
    %v8157 = vunpack.c.l.b16 %v7603
    %v8158 = vpack.c.b16 %v8111, %v8110
    %v8159 = vpack.c.b16 %v8113, %v8112
    %v8160 = vpack.c.b16 %v8115, %v8114
    %v8161 = vpack.c.b16 %v8117, %v8116
    %v8162 = vpack.c.b16 %v8119, %v8118
    %v8163 = vpack.c.b16 %v8121, %v8120
    %v8164 = vpack.c.b16 %v8123, %v8122
    %v8165 = vpack.c.b16 %v8125, %v8124
    %v8166 = vpack.c.b16 %v8127, %v8126
    %v8167 = vpack.c.b16 %v8129, %v8128
    %v8168 = vpack.c.b16 %v8131, %v8130
    %v8169 = vpack.c.b16 %v8133, %v8132
    %v8170 = vpack.c.b16 %v8135, %v8134
    %v8171 = vpack.c.b16 %v8137, %v8136
    %v8172 = vpack.c.b16 %v8139, %v8138
    %v8173 = vpack.c.b16 %v8141, %v8140
    %v8174 = vpack.c.b16 %v8143, %v8142
    %v8175 = vpack.c.b16 %v8145, %v8144
    %v8176 = vpack.c.b16 %v8147, %v8146
    %v8177 = vpack.c.b16 %v8149, %v8148
    %v8178 = vpack.c.b16 %v8151, %v8150
    %v8179 = vpack.c.b16 %v8153, %v8152
    %v8180 = vpack.c.b16 %v8155, %v8154
    %v8181 = vpack.c.b16 %v8157, %v8156
    %8206 = vmatprep.subr.bf16.mxu0 0
    %8207 = vmatpush1.bf16.msra.mxu0 %v8158
    %8208 = vmatprep.subr.bf16.mxu0 0
    %8209 = vmatpush1.bf16.msra.mxu0 %v8159
    %8210 = vmatprep.subr.bf16.mxu0 0
    %8211 = vmatpush1.bf16.msra.mxu0 %v8160
    %8212 = vmatprep.subr.bf16.mxu0 0
    %8213 = vmatpush1.bf16.msra.mxu0 %v8161
    %8214 = vmatprep.subr.bf16.mxu0 0
    %8215 = vmatpush1.bf16.msra.mxu0 %v8162
    %8216 = vmatprep.subr.bf16.mxu0 0
    %8217 = vmatpush1.bf16.msra.mxu0 %v8163
    %8218 = vmatprep.subr.bf16.mxu0 0
    %8219 = vmatpush1.bf16.msra.mxu0 %v8164
    %8220 = vmatprep.subr.bf16.mxu0 0
    %8221 = vmatpush1.bf16.msra.mxu0 %v8165
    %8222 = vmatprep.subr.bf16.mxu0 0
    %8223 = vmatpush1.bf16.msra.mxu0 %v8166
    %8224 = vmatprep.subr.bf16.mxu0 0
    %8225 = vmatpush1.bf16.msra.mxu0 %v8167
    %8226 = vmatprep.subr.bf16.mxu0 0
    %8227 = vmatpush1.bf16.msra.mxu0 %v8168
    %8228 = vmatprep.subr.bf16.mxu0 0
    %8229 = vmatpush1.bf16.msra.mxu0 %v8169
    %8230 = vmatprep.subr.bf16.mxu0 0
    %8231 = vmatpush1.bf16.msra.mxu0 %v8170
    %8232 = vmatprep.subr.bf16.mxu0 0
    %8233 = vmatpush1.bf16.msra.mxu0 %v8171
    %8234 = vmatprep.subr.bf16.mxu0 0
    %8235 = vmatpush1.bf16.msra.mxu0 %v8172
    %8236 = vmatprep.subr.bf16.mxu0 0
    %8237 = vmatpush1.bf16.msra.mxu0 %v8173
    %8238 = vmatprep.mubr.bf16.mxu0 %v7533
    %8239 = vmatmul.mubr.bf16.gmra.mrb[0].mxu0 %v7532
    %v8240 = vpop.f32.mrb[0].mxu0
    %v8241 = vadd.f32 %v8000, %v8240
    %v8242 = vpop.f32.mrb[0].mxu0
    %v8243 = vpop.f32.mrb[0].mxu0
    %v8244 = vadd.f32 %v8003, %v8243
    %v8245 = vpop.f32.mrb[0].mxu0
    %8246 = vmatprep.mubr.bf16.mxu0 %v7536
    %8247 = vmatmul.mubr.bf16.gmra.mrb[0].mxu0 %v7535
    %v8248 = vpop.f32.mrb[0].mxu0
    %v8249 = vadd.f32 %v8008, %v8248
    %v8250 = vpop.f32.mrb[0].mxu0
    %v8251 = vpop.f32.mrb[0].mxu0
    %v8252 = vadd.f32 %v8011, %v8251
    %v8253 = vpop.f32.mrb[0].mxu0
    %8254 = vmatprep.mubr.bf16.mxu0 %v7539
    %8255 = vmatmul.mubr.bf16.gmra.mrb[0].mxu0 %v7538
    %v8256 = vpop.f32.mrb[0].mxu0
    %v8257 = vadd.f32 %v8016, %v8256
    %v8258 = vpop.f32.mrb[0].mxu0
    %v8259 = vpop.f32.mrb[0].mxu0
    %v8260 = vadd.f32 %v8019, %v8259
    %v8261 = vpop.f32.mrb[0].mxu0
    %8262 = vmatprep.mubr.bf16.mxu0 %v7542
    %8263 = vmatmul.mubr.bf16.gmra.mrb[0].mxu0 %v7541
    %v8264 = vpop.f32.mrb[0].mxu0
    %v8265 = vadd.f32 %v8024, %v8264
    %v8266 = vpop.f32.mrb[0].mxu0
    %v8267 = vpop.f32.mrb[0].mxu0
    %v8268 = vadd.f32 %v8027, %v8267
    %v8269 = vpop.f32.mrb[0].mxu0
    %8270 = vmatprep.mubr.bf16.mxu0 %v7545
    %8271 = vmatmul.mubr.bf16.gmra.mrb[0].mxu0 %v7544
    %v8272 = vpop.f32.mrb[0].mxu0
    %v8273 = vadd.f32 %v8032, %v8272
    %v8274 = vpop.f32.mrb[0].mxu0
    %v8275 = vpop.f32.mrb[0].mxu0
    %v8276 = vadd.f32 %v8035, %v8275
    %v8277 = vpop.f32.mrb[0].mxu0
    %8278 = vmatprep.mubr.bf16.mxu0 %v7548
    %8279 = vmatmul.mubr.bf16.gmra.mrb[0].mxu0 %v7547
    %v8280 = vpop.f32.mrb[0].mxu0
    %v8281 = vadd.f32 %v8040, %v8280
    %v8282 = vpop.f32.mrb[0].mxu0
    %v8283 = vpop.f32.mrb[0].mxu0
    %v8284 = vadd.f32 %v8043, %v8283
    %v8285 = vpop.f32.mrb[0].mxu0
    %8286 = vmatprep.mubr.bf16.mxu0 %v7551
    %8287 = vmatmul.mubr.bf16.gmra.mrb[0].mxu0 %v7550
    %v8288 = vpop.f32.mrb[0].mxu0
    %v8289 = vadd.f32 %v8048, %v8288
    %v8290 = vpop.f32.mrb[0].mxu0
    %v8291 = vpop.f32.mrb[0].mxu0
    %v8292 = vadd.f32 %v8051, %v8291
    %v8293 = vpop.f32.mrb[0].mxu0
    %8294 = vmatprep.mubr.bf16.mxu0 %v7554
    %8295 = vmatmul.mubr.bf16.gmra.mrb[0].mxu0 %v7553
    %v8296 = vpop.f32.mrb[0].mxu0
    %v8297 = vadd.f32 %v8056, %v8296
    %v8298 = vpop.f32.mrb[0].mxu0
    %v8299 = vpop.f32.mrb[0].mxu0
    %v8300 = vadd.f32 %v8059, %v8299
    %v8301 = vpop.f32.mrb[0].mxu0
    %8302 = vdwg.mxu0
    %8303 = vmatprep.subr.bf16.mxu0 0
    %8304 = vmatpush1.bf16.msra.mxu0 %v8174
    %8305 = vmatprep.subr.bf16.mxu0 0
    %8306 = vmatpush1.bf16.msra.mxu0 %v8175
    %8307 = vmatprep.subr.bf16.mxu0 0
    %8308 = vmatpush1.bf16.msra.mxu0 %v8176
    %8309 = vmatprep.subr.bf16.mxu0 0
    %8310 = vmatpush1.bf16.msra.mxu0 %v8177
    %8311 = vmatprep.subr.bf16.mxu0 0
    %8312 = vmatpush1.bf16.msra.mxu0 %v8178
    %8313 = vmatprep.subr.bf16.mxu0 0
    %8314 = vmatpush1.bf16.msra.mxu0 %v8179
    %8315 = vmatprep.subr.bf16.mxu0 0
    %8316 = vmatpush1.bf16.msra.mxu0 %v8180
    %8317 = vmatprep.subr.bf16.mxu0 0
    %8318 = vmatpush1.bf16.msra.mxu0 %v8181
    %8319 = vmatprep.subr.bf16.mxu0 0
    %8320 = vmatpush1.bf16.msra.mxu0 0
    %8321 = vmatprep.subr.bf16.mxu0 0
    %8322 = vmatpush1.bf16.msra.mxu0 0
    %8323 = vmatprep.subr.bf16.mxu0 0
    %8324 = vmatpush1.bf16.msra.mxu0 0
    %8325 = vmatprep.subr.bf16.mxu0 0
    %8326 = vmatpush1.bf16.msra.mxu0 0
    %8327 = vmatprep.subr.bf16.mxu0 0
    %8328 = vmatpush1.bf16.msra.mxu0 0
    %8329 = vmatprep.subr.bf16.mxu0 0
    %8330 = vmatpush1.bf16.msra.mxu0 0
    %8331 = vmatprep.subr.bf16.mxu0 0
    %8332 = vmatpush1.bf16.msra.mxu0 0
    %8333 = vmatprep.subr.bf16.mxu0 0
    %8334 = vmatpush1.bf16.msra.mxu0 0
    %8335 = vmatprep.mubr.bf16.mxu0 0
    %8336 = vmatmul.mubr.bf16.gmra.mrb[0].mxu0 %v7534
    %v8337 = vpop.f32.mrb[0].mxu0
    %v8338 = vadd.f32 %v8241, %v8337
    %v8339 = vpop.f32.mrb[0].mxu0
    %v8340 = vpop.f32.mrb[0].mxu0
    %v8341 = vadd.f32 %v8244, %v8340
    %v8342 = vpop.f32.mrb[0].mxu0
    %8343 = vmatprep.mubr.bf16.mxu0 0
    %8344 = vmatmul.mubr.bf16.gmra.mrb[0].mxu0 %v7537
    %v8345 = vpop.f32.mrb[0].mxu0
    %v8346 = vadd.f32 %v8249, %v8345
    %v8347 = vpop.f32.mrb[0].mxu0
    %v8348 = vpop.f32.mrb[0].mxu0
    %v8349 = vadd.f32 %v8252, %v8348
    %v8350 = vpop.f32.mrb[0].mxu0
    %8351 = vmatprep.mubr.bf16.mxu0 0
    %8352 = vmatmul.mubr.bf16.gmra.mrb[0].mxu0 %v7540
    %v8353 = vpop.f32.mrb[0].mxu0
    %v8354 = vadd.f32 %v8257, %v8353
    %v8355 = vpop.f32.mrb[0].mxu0
    %v8356 = vpop.f32.mrb[0].mxu0
    %v8357 = vadd.f32 %v8260, %v8356
    %v8358 = vpop.f32.mrb[0].mxu0
    %8359 = vmatprep.mubr.bf16.mxu0 0
    %8360 = vmatmul.mubr.bf16.gmra.mrb[0].mxu0 %v7543
    %v8361 = vpop.f32.mrb[0].mxu0
    %v8362 = vadd.f32 %v8265, %v8361
    %v8363 = vpop.f32.mrb[0].mxu0
    %v8364 = vpop.f32.mrb[0].mxu0
    %v8365 = vadd.f32 %v8268, %v8364
    %v8366 = vpop.f32.mrb[0].mxu0
    %8367 = vmatprep.mubr.bf16.mxu0 0
    %8368 = vmatmul.mubr.bf16.gmra.mrb[0].mxu0 %v7546
    %v8369 = vpop.f32.mrb[0].mxu0
    %v8370 = vadd.f32 %v8273, %v8369
    %v8371 = vpop.f32.mrb[0].mxu0
    %v8372 = vpop.f32.mrb[0].mxu0
    %v8373 = vadd.f32 %v8276, %v8372
    %v8374 = vpop.f32.mrb[0].mxu0
    %8375 = vmatprep.mubr.bf16.mxu0 0
    %8376 = vmatmul.mubr.bf16.gmra.mrb[0].mxu0 %v7549
    %v8377 = vpop.f32.mrb[0].mxu0
    %v8378 = vadd.f32 %v8281, %v8377
    %v8379 = vpop.f32.mrb[0].mxu0
    %v8380 = vpop.f32.mrb[0].mxu0
    %v8381 = vadd.f32 %v8284, %v8380
    %v8382 = vpop.f32.mrb[0].mxu0
    %8383 = vmatprep.mubr.bf16.mxu0 0
    %8384 = vmatmul.mubr.bf16.gmra.mrb[0].mxu0 %v7552
    %v8385 = vpop.f32.mrb[0].mxu0
    %v8386 = vadd.f32 %v8289, %v8385
    %v8387 = vpop.f32.mrb[0].mxu0
    %v8388 = vpop.f32.mrb[0].mxu0
    %v8389 = vadd.f32 %v8292, %v8388
    %v8390 = vpop.f32.mrb[0].mxu0
    %8391 = vmatprep.mubr.bf16.mxu0 0
    %8392 = vmatmul.mubr.bf16.gmra.mrb[0].mxu0 %v7555
    %v8393 = vpop.f32.mrb[0].mxu0
    %v8394 = vadd.f32 %v8297, %v8393
    %v8395 = vpop.f32.mrb[0].mxu0
    %v8396 = vpop.f32.mrb[0].mxu0
    %v8397 = vadd.f32 %v8300, %v8396
    %v8398 = vpop.f32.mrb[0].mxu0
    %8399 = vdwg.mxu0
    %v8400 = vld [vmem:[%s1193] sm:$0xff]
    %v8401 = vld [vmem:[%s1193 + $0x8] sm:$0xff]
    %v8402 = vld [vmem:[%s1193 + $0x10] sm:$0xff]
    %v8403 = vld [vmem:[%s1193 + $0x18] sm:$0xff]
    %v8404 = vld [vmem:[%s1193 + $0x20] sm:$0xff]
    %v8405 = vld [vmem:[%s1193 + $0x28] sm:$0xff]
    %v8406 = vld [vmem:[%s1193 + $0x30] sm:$0xff]
    %v8407 = vld [vmem:[%s1193 + $0x38] sm:$0xff]
    %v8408 = vld [vmem:[%s1193 + $0x40] sm:$0xff]
    %v8409 = vld [vmem:[%s1193 + $0x48] sm:$0xff]
    %v8410 = vld [vmem:[%s1193 + $0x50] sm:$0xff]
    %v8411 = vld [vmem:[%s1193 + $0x58] sm:$0xff]
    %v8412 = vld [vmem:[%s1193 + $0x60] sm:$0xff]
    %v8413 = vld [vmem:[%s1193 + $0x68] sm:$0xff]
    %v8414 = vld [vmem:[%s1193 + $0x70] sm:$0xff]
    %v8415 = vld [vmem:[%s1193 + $0x78] sm:$0xff]
    %v8416 = vld [vmem:[%s1193 + $0x80] sm:$0xff]
    %v8417 = vld [vmem:[%s1193 + $0x88] sm:$0xff]
    %v8418 = vld [vmem:[%s1193 + $0x90] sm:$0xff]
    %v8419 = vld [vmem:[%s1193 + $0x98] sm:$0xff]
    %v8420 = vld [vmem:[%s1193 + $0xa0] sm:$0xff]
    %v8421 = vld [vmem:[%s1193 + $0xa8] sm:$0xff]
    %v8422 = vld [vmem:[%s1193 + $0xb0] sm:$0xff]
    %v8423 = vld [vmem:[%s1193 + $0xb8] sm:$0xff]
    %v8424 = vld [vmem:[%s1193 + $0xf0] sm:$0xff]
    %v8425 = vld [vmem:[%s1193 + $0xf8] sm:$0xff]
    %v8426 = vld [vmem:[%s1193 + $0x100] sm:$0xff]
    %v8427 = vld [vmem:[%s1193 + $0x108] sm:$0xff]
    %v8428 = vld [vmem:[%s1193 + $0x110] sm:$0xff]
    %v8429 = vld [vmem:[%s1193 + $0x118] sm:$0xff]
    %v8430 = vld [vmem:[%s1193 + $0x120] sm:$0xff]
    %v8431 = vld [vmem:[%s1193 + $0x128] sm:$0xff]
    %v8432 = vld [vmem:[%s1193 + $0x130] sm:$0xff]
    %v8433 = vld [vmem:[%s1193 + $0x138] sm:$0xff]
    %v8434 = vld [vmem:[%s1193 + $0x140] sm:$0xff]
    %v8435 = vld [vmem:[%s1193 + $0x148] sm:$0xff]
    %v8436 = vld [vmem:[%s1193 + $0x150] sm:$0xff]
    %v8437 = vld [vmem:[%s1193 + $0x158] sm:$0xff]
    %v8438 = vld [vmem:[%s1193 + $0x160] sm:$0xff]
    %v8439 = vld [vmem:[%s1193 + $0x168] sm:$0xff]
    %v8440 = vld [vmem:[%s1193 + $0x170] sm:$0xff]
    %v8441 = vld [vmem:[%s1193 + $0x178] sm:$0xff]
    %v8442 = vld [vmem:[%s1193 + $0x180] sm:$0xff]
    %v8443 = vld [vmem:[%s1193 + $0x188] sm:$0xff]
    %v8444 = vld [vmem:[%s1193 + $0x190] sm:$0xff]
    %v8445 = vld [vmem:[%s1193 + $0x198] sm:$0xff]
    %v8446 = vld [vmem:[%s1193 + $0x1a0] sm:$0xff]
    %v8447 = vld [vmem:[%s1193 + $0x1a8] sm:$0xff]
    %v8448 = vpack.c.bf16 %v8403, %v8400
    %v8449 = vpack.c.bf16 %v8404, %v8401
    %v8450 = vpack.c.bf16 %v8405, %v8402
    %v8451 = vpack.c.bf16 %v8409, %v8406
    %v8452 = vpack.c.bf16 %v8410, %v8407
    %v8453 = vpack.c.bf16 %v8411, %v8408
    %v8454 = vpack.c.bf16 %v8415, %v8412
    %v8455 = vpack.c.bf16 %v8416, %v8413
    %v8456 = vpack.c.bf16 %v8417, %v8414
    %v8457 = vpack.c.bf16 %v8421, %v8418
    %v8458 = vpack.c.bf16 %v8422, %v8419
    %v8459 = vpack.c.bf16 %v8423, %v8420
    %v8460 = vpack.c.bf16 %v8427, %v8424
    %v8461 = vpack.c.bf16 %v8428, %v8425
    %v8462 = vpack.c.bf16 %v8429, %v8426
    %v8463 = vpack.c.bf16 %v8433, %v8430
    %v8464 = vpack.c.bf16 %v8434, %v8431
    %v8465 = vpack.c.bf16 %v8435, %v8432
    %v8466 = vpack.c.bf16 %v8439, %v8436
    %v8467 = vpack.c.bf16 %v8440, %v8437
    %v8468 = vpack.c.bf16 %v8441, %v8438
    %v8469 = vpack.c.bf16 %v8445, %v8442
    %v8470 = vpack.c.bf16 %v8446, %v8443
    %v8471 = vpack.c.bf16 %v8447, %v8444
    %v8472 = vld [vmem:[%s1266] sm:$0xf]
    %v8473 = vld [vmem:[%s1266 + $0x4] sm:$0xf]
    %v8474 = vld [vmem:[%s1266 + $0x8] sm:$0xf]
    %v8475 = vld [vmem:[%s1266 + $0xc] sm:$0xf]
    %v8476 = vld [vmem:[%s1266 + $0x10] sm:$0xf]
    %v8477 = vld [vmem:[%s1266 + $0x14] sm:$0xf]
    %v8478 = vld [vmem:[%s1266 + $0x18] sm:$0xf]
    %v8479 = vld [vmem:[%s1266 + $0x1c] sm:$0xf]
    %v8480 = vld [vmem:[%s1266 + $0x20] sm:$0xf]
    %v8481 = vld [vmem:[%s1266 + $0x24] sm:$0xf]
    %v8482 = vld [vmem:[%s1266 + $0x28] sm:$0xf]
    %v8483 = vld [vmem:[%s1266 + $0x2c] sm:$0xf]
    %v8484 = vld [vmem:[%s1266 + $0x30] sm:$0xf]
    %v8485 = vld [vmem:[%s1266 + $0x34] sm:$0xf]
    %v8486 = vld [vmem:[%s1266 + $0x38] sm:$0xf]
    %v8487 = vld [vmem:[%s1266 + $0x3c] sm:$0xf]
    %v8488 = vld [vmem:[%s1266 + $0x40] sm:$0xf]
    %v8489 = vld [vmem:[%s1266 + $0x44] sm:$0xf]
    %v8490 = vld [vmem:[%s1266 + $0x48] sm:$0xf]
    %v8491 = vld [vmem:[%s1266 + $0x4c] sm:$0xf]
    %v8492 = vld [vmem:[%s1266 + $0x50] sm:$0xf]
    %v8493 = vld [vmem:[%s1266 + $0x54] sm:$0xf]
    %v8494 = vld [vmem:[%s1266 + $0x58] sm:$0xf]
    %v8495 = vld [vmem:[%s1266 + $0x5c] sm:$0xf]
    %v8496 = vld [vmem:[%s1266 + $0x60] sm:$0xf]
    %v8497 = vld [vmem:[%s1266 + $0x64] sm:$0xf]
    %v8498 = vld [vmem:[%s1266 + $0x68] sm:$0xf]
    %v8499 = vld [vmem:[%s1266 + $0x6c] sm:$0xf]
    %v8500 = vld [vmem:[%s1266 + $0x70] sm:$0xf]
    %v8501 = vld [vmem:[%s1266 + $0x74] sm:$0xf]
    %v8502 = vld [vmem:[%s1266 + $0x78] sm:$0xf]
    %v8503 = vld [vmem:[%s1266 + $0x7c] sm:$0xf]
    %v8504 = vld [vmem:[%s1266 + $0x80] sm:$0xf]
    %v8505 = vld [vmem:[%s1266 + $0x84] sm:$0xf]
    %v8506 = vld [vmem:[%s1266 + $0x88] sm:$0xf]
    %v8507 = vld [vmem:[%s1266 + $0x8c] sm:$0xf]
    %v8508 = vld [vmem:[%s1266 + $0x90] sm:$0xf]
    %v8509 = vld [vmem:[%s1266 + $0x94] sm:$0xf]
    %v8510 = vld [vmem:[%s1266 + $0x98] sm:$0xf]
    %v8511 = vld [vmem:[%s1266 + $0x9c] sm:$0xf]
    %v8512 = vld [vmem:[%s1266 + $0xa0] sm:$0xf]
    %v8513 = vld [vmem:[%s1266 + $0xa4] sm:$0xf]
    %v8514 = vld [vmem:[%s1266 + $0xa8] sm:$0xf]
    %v8515 = vld [vmem:[%s1266 + $0xac] sm:$0xf]
    %v8516 = vld [vmem:[%s1266 + $0xb0] sm:$0xf]
    %v8517 = vld [vmem:[%s1266 + $0xb4] sm:$0xf]
    %v8518 = vld [vmem:[%s1266 + $0xb8] sm:$0xf]
    %v8519 = vld [vmem:[%s1266 + $0xbc] sm:$0xf]
    %v8568 = vunpack.c.l.b16 %v8472
    %v8569 = vunpack.c.l.b16 %v8473
    %v8570 = vunpack.c.l.b16 %v8474
    %v8571 = vunpack.c.l.b16 %v8475
    %v8572 = vunpack.c.l.b16 %v8476
    %v8573 = vunpack.c.l.b16 %v8477
    %v8574 = vunpack.c.l.b16 %v8478
    %v8575 = vunpack.c.l.b16 %v8479
    %v8576 = vunpack.c.l.b16 %v8480
    %v8577 = vunpack.c.l.b16 %v8481
    %v8578 = vunpack.c.l.b16 %v8482
    %v8579 = vunpack.c.l.b16 %v8483
    %v8580 = vunpack.c.l.b16 %v8484
    %v8581 = vunpack.c.l.b16 %v8485
    %v8582 = vunpack.c.l.b16 %v8486
    %v8583 = vunpack.c.l.b16 %v8487
    %v8584 = vunpack.c.l.b16 %v8488
    %v8585 = vunpack.c.l.b16 %v8489
    %v8586 = vunpack.c.l.b16 %v8490
    %v8587 = vunpack.c.l.b16 %v8491
    %v8588 = vunpack.c.l.b16 %v8492
    %v8589 = vunpack.c.l.b16 %v8493
    %v8590 = vunpack.c.l.b16 %v8494
    %v8591 = vunpack.c.l.b16 %v8495
    %v8592 = vunpack.c.l.b16 %v8496
    %v8593 = vunpack.c.l.b16 %v8497
    %v8594 = vunpack.c.l.b16 %v8498
    %v8595 = vunpack.c.l.b16 %v8499
    %v8596 = vunpack.c.l.b16 %v8500
    %v8597 = vunpack.c.l.b16 %v8501
    %v8598 = vunpack.c.l.b16 %v8502
    %v8599 = vunpack.c.l.b16 %v8503
    %v8600 = vunpack.c.l.b16 %v8504
    %v8601 = vunpack.c.l.b16 %v8505
    %v8602 = vunpack.c.l.b16 %v8506
    %v8603 = vunpack.c.l.b16 %v8507
    %v8604 = vunpack.c.l.b16 %v8508
    %v8605 = vunpack.c.l.b16 %v8509
    %v8606 = vunpack.c.l.b16 %v8510
    %v8607 = vunpack.c.l.b16 %v8511
    %v8608 = vunpack.c.l.b16 %v8512
    %v8609 = vunpack.c.l.b16 %v8513
    %v8610 = vunpack.c.l.b16 %v8514
    %v8611 = vunpack.c.l.b16 %v8515
    %v8612 = vunpack.c.l.b16 %v8516
    %v8613 = vunpack.c.l.b16 %v8517
    %v8614 = vunpack.c.l.b16 %v8518
    %v8615 = vunpack.c.l.b16 %v8519
    %v8616 = vpack.c.b16 %v8569, %v8568
    %v8617 = vpack.c.b16 %v8571, %v8570
    %v8618 = vpack.c.b16 %v8573, %v8572
    %v8619 = vpack.c.b16 %v8575, %v8574
    %v8620 = vpack.c.b16 %v8577, %v8576
    %v8621 = vpack.c.b16 %v8579, %v8578
    %v8622 = vpack.c.b16 %v8581, %v8580
    %v8623 = vpack.c.b16 %v8583, %v8582
    %v8624 = vpack.c.b16 %v8585, %v8584
    %v8625 = vpack.c.b16 %v8587, %v8586
    %v8626 = vpack.c.b16 %v8589, %v8588
    %v8627 = vpack.c.b16 %v8591, %v8590
    %v8628 = vpack.c.b16 %v8593, %v8592
    %v8629 = vpack.c.b16 %v8595, %v8594
    %v8630 = vpack.c.b16 %v8597, %v8596
    %v8631 = vpack.c.b16 %v8599, %v8598
    %v8632 = vpack.c.b16 %v8601, %v8600
    %v8633 = vpack.c.b16 %v8603, %v8602
    %v8634 = vpack.c.b16 %v8605, %v8604
    %v8635 = vpack.c.b16 %v8607, %v8606
    %v8636 = vpack.c.b16 %v8609, %v8608
    %v8637 = vpack.c.b16 %v8611, %v8610
    %v8638 = vpack.c.b16 %v8613, %v8612
    %v8639 = vpack.c.b16 %v8615, %v8614
    %8664 = vmatprep.subr.bf16.mxu0 0
    %8665 = vmatpush1.bf16.msra.mxu0 %v8616
    %8666 = vmatprep.subr.bf16.mxu0 0
    %8667 = vmatpush1.bf16.msra.mxu0 %v8617
    %8668 = vmatprep.subr.bf16.mxu0 0
    %8669 = vmatpush1.bf16.msra.mxu0 %v8618
    %8670 = vmatprep.subr.bf16.mxu0 0
    %8671 = vmatpush1.bf16.msra.mxu0 %v8619
    %8672 = vmatprep.subr.bf16.mxu0 0
    %8673 = vmatpush1.bf16.msra.mxu0 %v8620
    %8674 = vmatprep.subr.bf16.mxu0 0
    %8675 = vmatpush1.bf16.msra.mxu0 %v8621
    %8676 = vmatprep.subr.bf16.mxu0 0
    %8677 = vmatpush1.bf16.msra.mxu0 %v8622
    %8678 = vmatprep.subr.bf16.mxu0 0
    %8679 = vmatpush1.bf16.msra.mxu0 %v8623
    %8680 = vmatprep.subr.bf16.mxu0 0
    %8681 = vmatpush1.bf16.msra.mxu0 %v8624
    %8682 = vmatprep.subr.bf16.mxu0 0
    %8683 = vmatpush1.bf16.msra.mxu0 %v8625
    %8684 = vmatprep.subr.bf16.mxu0 0
    %8685 = vmatpush1.bf16.msra.mxu0 %v8626
    %8686 = vmatprep.subr.bf16.mxu0 0
    %8687 = vmatpush1.bf16.msra.mxu0 %v8627
    %8688 = vmatprep.subr.bf16.mxu0 0
    %8689 = vmatpush1.bf16.msra.mxu0 %v8628
    %8690 = vmatprep.subr.bf16.mxu0 0
    %8691 = vmatpush1.bf16.msra.mxu0 %v8629
    %8692 = vmatprep.subr.bf16.mxu0 0
    %8693 = vmatpush1.bf16.msra.mxu0 %v8630
    %8694 = vmatprep.subr.bf16.mxu0 0
    %8695 = vmatpush1.bf16.msra.mxu0 %v8631
    %8696 = vmatprep.mubr.bf16.mxu0 %v8449
    %8697 = vmatmul.mubr.bf16.gmra.mrb[0].mxu0 %v8448
    %v8698 = vpop.f32.mrb[0].mxu0
    %v8699 = vadd.f32 0.0, %v8698
    %v8700 = vpop.f32.mrb[0].mxu0
    %v8701 = vpop.f32.mrb[0].mxu0
    %v8702 = vadd.f32 0.0, %v8701
    %v8703 = vpop.f32.mrb[0].mxu0
    %8704 = vmatprep.mubr.bf16.mxu0 %v8452
    %8705 = vmatmul.mubr.bf16.gmra.mrb[0].mxu0 %v8451
    %v8706 = vpop.f32.mrb[0].mxu0
    %v8707 = vadd.f32 0.0, %v8706
    %v8708 = vpop.f32.mrb[0].mxu0
    %v8709 = vpop.f32.mrb[0].mxu0
    %v8710 = vadd.f32 0.0, %v8709
    %v8711 = vpop.f32.mrb[0].mxu0
    %8712 = vmatprep.mubr.bf16.mxu0 %v8455
    %8713 = vmatmul.mubr.bf16.gmra.mrb[0].mxu0 %v8454
    %v8714 = vpop.f32.mrb[0].mxu0
    %v8715 = vadd.f32 0.0, %v8714
    %v8716 = vpop.f32.mrb[0].mxu0
    %v8717 = vpop.f32.mrb[0].mxu0
    %v8718 = vadd.f32 0.0, %v8717
    %v8719 = vpop.f32.mrb[0].mxu0
    %8720 = vmatprep.mubr.bf16.mxu0 %v8458
    %8721 = vmatmul.mubr.bf16.gmra.mrb[0].mxu0 %v8457
    %v8722 = vpop.f32.mrb[0].mxu0
    %v8723 = vadd.f32 0.0, %v8722
    %v8724 = vpop.f32.mrb[0].mxu0
    %v8725 = vpop.f32.mrb[0].mxu0
    %v8726 = vadd.f32 0.0, %v8725
    %v8727 = vpop.f32.mrb[0].mxu0
    %8728 = vmatprep.mubr.bf16.mxu0 %v8461
    %8729 = vmatmul.mubr.bf16.gmra.mrb[0].mxu0 %v8460
    %v8730 = vpop.f32.mrb[0].mxu0
    %v8731 = vadd.f32 0.0, %v8730
    %v8732 = vpop.f32.mrb[0].mxu0
    %v8733 = vpop.f32.mrb[0].mxu0
    %v8734 = vadd.f32 0.0, %v8733
    %v8735 = vpop.f32.mrb[0].mxu0
    %8736 = vmatprep.mubr.bf16.mxu0 %v8464
    %8737 = vmatmul.mubr.bf16.gmra.mrb[0].mxu0 %v8463
    %v8738 = vpop.f32.mrb[0].mxu0
    %v8739 = vadd.f32 0.0, %v8738
    %v8740 = vpop.f32.mrb[0].mxu0
    %v8741 = vpop.f32.mrb[0].mxu0
    %v8742 = vadd.f32 0.0, %v8741
    %v8743 = vpop.f32.mrb[0].mxu0
    %8744 = vmatprep.mubr.bf16.mxu0 %v8467
    %8745 = vmatmul.mubr.bf16.gmra.mrb[0].mxu0 %v8466
    %v8746 = vpop.f32.mrb[0].mxu0
    %v8747 = vadd.f32 0.0, %v8746
    %v8748 = vpop.f32.mrb[0].mxu0
    %v8749 = vpop.f32.mrb[0].mxu0
    %v8750 = vadd.f32 0.0, %v8749
    %v8751 = vpop.f32.mrb[0].mxu0
    %8752 = vmatprep.mubr.bf16.mxu0 %v8470
    %8753 = vmatmul.mubr.bf16.gmra.mrb[0].mxu0 %v8469
    %v8754 = vpop.f32.mrb[0].mxu0
    %v8755 = vadd.f32 0.0, %v8754
    %v8756 = vpop.f32.mrb[0].mxu0
    %v8757 = vpop.f32.mrb[0].mxu0
    %v8758 = vadd.f32 0.0, %v8757
    %v8759 = vpop.f32.mrb[0].mxu0
    %8760 = vdwg.mxu0
    %8761 = vmatprep.subr.bf16.mxu0 0
    %8762 = vmatpush1.bf16.msra.mxu0 %v8632
    %8763 = vmatprep.subr.bf16.mxu0 0
    %8764 = vmatpush1.bf16.msra.mxu0 %v8633
    %8765 = vmatprep.subr.bf16.mxu0 0
    %8766 = vmatpush1.bf16.msra.mxu0 %v8634
    %8767 = vmatprep.subr.bf16.mxu0 0
    %8768 = vmatpush1.bf16.msra.mxu0 %v8635
    %8769 = vmatprep.subr.bf16.mxu0 0
    %8770 = vmatpush1.bf16.msra.mxu0 %v8636
    %8771 = vmatprep.subr.bf16.mxu0 0
    %8772 = vmatpush1.bf16.msra.mxu0 %v8637
    %8773 = vmatprep.subr.bf16.mxu0 0
    %8774 = vmatpush1.bf16.msra.mxu0 %v8638
    %8775 = vmatprep.subr.bf16.mxu0 0
    %8776 = vmatpush1.bf16.msra.mxu0 %v8639
    %8777 = vmatprep.subr.bf16.mxu0 0
    %8778 = vmatpush1.bf16.msra.mxu0 0
    %8779 = vmatprep.subr.bf16.mxu0 0
    %8780 = vmatpush1.bf16.msra.mxu0 0
    %8781 = vmatprep.subr.bf16.mxu0 0
    %8782 = vmatpush1.bf16.msra.mxu0 0
    %8783 = vmatprep.subr.bf16.mxu0 0
    %8784 = vmatpush1.bf16.msra.mxu0 0
    %8785 = vmatprep.subr.bf16.mxu0 0
    %8786 = vmatpush1.bf16.msra.mxu0 0
    %8787 = vmatprep.subr.bf16.mxu0 0
    %8788 = vmatpush1.bf16.msra.mxu0 0
    %8789 = vmatprep.subr.bf16.mxu0 0
    %8790 = vmatpush1.bf16.msra.mxu0 0
    %8791 = vmatprep.subr.bf16.mxu0 0
    %8792 = vmatpush1.bf16.msra.mxu0 0
    %8793 = vmatprep.mubr.bf16.mxu0 0
    %8794 = vmatmul.mubr.bf16.gmra.mrb[0].mxu0 %v8450
    %v8795 = vpop.f32.mrb[0].mxu0
    %v8796 = vadd.f32 %v8699, %v8795
    %v8797 = vpop.f32.mrb[0].mxu0
    %v8798 = vpop.f32.mrb[0].mxu0
    %v8799 = vadd.f32 %v8702, %v8798
    %v8800 = vpop.f32.mrb[0].mxu0
    %8801 = vmatprep.mubr.bf16.mxu0 0
    %8802 = vmatmul.mubr.bf16.gmra.mrb[0].mxu0 %v8453
    %v8803 = vpop.f32.mrb[0].mxu0
    %v8804 = vadd.f32 %v8707, %v8803
    %v8805 = vpop.f32.mrb[0].mxu0
    %v8806 = vpop.f32.mrb[0].mxu0
    %v8807 = vadd.f32 %v8710, %v8806
    %v8808 = vpop.f32.mrb[0].mxu0
    %8809 = vmatprep.mubr.bf16.mxu0 0
    %8810 = vmatmul.mubr.bf16.gmra.mrb[0].mxu0 %v8456
    %v8811 = vpop.f32.mrb[0].mxu0
    %v8812 = vadd.f32 %v8715, %v8811
    %v8813 = vpop.f32.mrb[0].mxu0
    %v8814 = vpop.f32.mrb[0].mxu0
    %v8815 = vadd.f32 %v8718, %v8814
    %v8816 = vpop.f32.mrb[0].mxu0
    %8817 = vmatprep.mubr.bf16.mxu0 0
    %8818 = vmatmul.mubr.bf16.gmra.mrb[0].mxu0 %v8459
    %v8819 = vpop.f32.mrb[0].mxu0
    %v8820 = vadd.f32 %v8723, %v8819
    %v8821 = vpop.f32.mrb[0].mxu0
    %v8822 = vpop.f32.mrb[0].mxu0
    %v8823 = vadd.f32 %v8726, %v8822
    %v8824 = vpop.f32.mrb[0].mxu0
    %8825 = vmatprep.mubr.bf16.mxu0 0
    %8826 = vmatmul.mubr.bf16.gmra.mrb[0].mxu0 %v8462
    %v8827 = vpop.f32.mrb[0].mxu0
    %v8828 = vadd.f32 %v8731, %v8827
    %v8829 = vpop.f32.mrb[0].mxu0
    %v8830 = vpop.f32.mrb[0].mxu0
    %v8831 = vadd.f32 %v8734, %v8830
    %v8832 = vpop.f32.mrb[0].mxu0
    %8833 = vmatprep.mubr.bf16.mxu0 0
    %8834 = vmatmul.mubr.bf16.gmra.mrb[0].mxu0 %v8465
    %v8835 = vpop.f32.mrb[0].mxu0
    %v8836 = vadd.f32 %v8739, %v8835
    %v8837 = vpop.f32.mrb[0].mxu0
    %v8838 = vpop.f32.mrb[0].mxu0
    %v8839 = vadd.f32 %v8742, %v8838
    %v8840 = vpop.f32.mrb[0].mxu0
    %8841 = vmatprep.mubr.bf16.mxu0 0
    %8842 = vmatmul.mubr.bf16.gmra.mrb[0].mxu0 %v8468
    %v8843 = vpop.f32.mrb[0].mxu0
    %v8844 = vadd.f32 %v8747, %v8843
    %v8845 = vpop.f32.mrb[0].mxu0
    %v8846 = vpop.f32.mrb[0].mxu0
    %v8847 = vadd.f32 %v8750, %v8846
    %v8848 = vpop.f32.mrb[0].mxu0
    %8849 = vmatprep.mubr.bf16.mxu0 0
    %8850 = vmatmul.mubr.bf16.gmra.mrb[0].mxu0 %v8471
    %v8851 = vpop.f32.mrb[0].mxu0
    %v8852 = vadd.f32 %v8755, %v8851
    %v8853 = vpop.f32.mrb[0].mxu0
    %v8854 = vpop.f32.mrb[0].mxu0
    %v8855 = vadd.f32 %v8758, %v8854
    %v8856 = vpop.f32.mrb[0].mxu0
    %8857 = vdwg.mxu0
    %v8858 = vadd.f32 %v8338, %v8796
    %v8859 = vadd.f32 %v8341, %v8799
    %v8860 = vadd.f32 %v8346, %v8804
    %v8861 = vadd.f32 %v8349, %v8807
    %v8862 = vadd.f32 %v8354, %v8812
    %v8863 = vadd.f32 %v8357, %v8815
    %v8864 = vadd.f32 %v8362, %v8820
    %v8865 = vadd.f32 %v8365, %v8823
    %v8866 = vadd.f32 %v8370, %v8828
    %v8867 = vadd.f32 %v8373, %v8831
    %v8868 = vadd.f32 %v8378, %v8836
    %v8869 = vadd.f32 %v8381, %v8839
    %v8870 = vadd.f32 %v8386, %v8844
    %v8871 = vadd.f32 %v8389, %v8847
    %v8872 = vadd.f32 %v8394, %v8852
    %v8873 = vadd.f32 %v8397, %v8855
    %8874 = vmatprep.subr.mxu0 0.0
    %8875 = vmatpush1.msra.mxu0 %v8858
    %8876 = vmatprep.subr.mxu0 0.0
    %8877 = vmatpush1.msra.mxu0 %v8859
    %8878 = vmatprep.subr.mxu0 0.0
    %8879 = vmatpush1.msra.mxu0 %v8860
    %8880 = vmatprep.subr.mxu0 0.0
    %8881 = vmatpush1.msra.mxu0 %v8861
    %8882 = vmatprep.subr.mxu0 0.0
    %8883 = vmatpush1.msra.mxu0 %v8862
    %8884 = vmatprep.subr.mxu0 0.0
    %8885 = vmatpush1.msra.mxu0 %v8863
    %8886 = vmatprep.subr.mxu0 0.0
    %8887 = vmatpush1.msra.mxu0 %v8864
    %8888 = vmatprep.subr.mxu0 0.0
    %8889 = vmatpush1.msra.mxu0 %v8865
    %8890 = vmatprep.subr.mxu0 0.0
    %8891 = vmatpush1.msra.mxu0 %v8866
    %8892 = vmatprep.subr.mxu0 0.0
    %8893 = vmatpush1.msra.mxu0 %v8867
    %8894 = vmatprep.subr.mxu0 0.0
    %8895 = vmatpush1.msra.mxu0 %v8868
    %8896 = vmatprep.subr.mxu0 0.0
    %8897 = vmatpush1.msra.mxu0 %v8869
    %8898 = vmatprep.subr.mxu0 0.0
    %8899 = vmatpush1.msra.mxu0 %v8870
    %8900 = vmatprep.subr.mxu0 0.0
    %8901 = vmatpush1.msra.mxu0 %v8871
    %8902 = vmatprep.subr.mxu0 0.0
    %8903 = vmatpush1.msra.mxu0 %v8872
    %8904 = vmatprep.subr.mxu0 0.0
    %8905 = vmatpush1.msra.mxu0 %v8873
    %8906 = vmatprep.subr.mxu0 0.0
    %8907 = vmatpush1.msra.mxu0 0.0
    %8908 = vmatprep.subr.mxu0 0.0
    %8909 = vmatpush1.msra.mxu0 0.0
    %8910 = vmatprep.subr.mxu0 0.0
    %8911 = vmatpush1.msra.mxu0 0.0
    %8912 = vmatprep.subr.mxu0 0.0
    %8913 = vmatpush1.msra.mxu0 0.0
    %8914 = vmatprep.subr.mxu0 0.0
    %8915 = vmatpush1.msra.mxu0 0.0
    %8916 = vmatprep.subr.mxu0 0.0
    %8917 = vmatpush1.msra.mxu0 0.0
    %8918 = vmatprep.subr.mxu0 0.0
    %8919 = vmatpush1.msra.mxu0 0.0
    %8920 = vmatprep.subr.mxu0 0.0
    %8921 = vmatpush1.msra.mxu0 0.0
    %8922 = vmatprep.subr.mxu0 0.0
    %8923 = vmatpush1.msra.mxu0 0.0
    %8924 = vmatprep.subr.mxu0 0.0
    %8925 = vmatpush1.msra.mxu0 0.0
    %8926 = vmatprep.subr.mxu0 0.0
    %8927 = vmatpush1.msra.mxu0 0.0
    %8928 = vmatprep.subr.mxu0 0.0
    %8929 = vmatpush1.msra.mxu0 0.0
    %8930 = vmatprep.subr.mxu0 0.0
    %8931 = vmatpush1.msra.mxu0 0.0
    %8932 = vmatprep.subr.mxu0 0.0
    %8933 = vmatpush1.msra.mxu0 0.0
    %8934 = vmatprep.subr.mxu0 0.0
    %8935 = vmatpush1.msra.mxu0 0.0
    %8936 = vmatprep.subr.mxu0 0.0
    %8937 = vmatpush1.msra.mxu0 0.0
    %8938 = vmatprep.mubr.f32.mxu0 0.0
    %8939 = vmatmul.mubr.f32.gmra.mrb[0].mxu0 1.0
    %v8940 = vpop.f32.mrb[0].mxu0
    %v8941 = vadd.f32 0.0, %v8940
    %v8942 = vpop.f32.mrb[0].mxu0
    %8943 = vdwg.mxu0
    %v8944 = vmul.f32 %v8941, 0.0078125
    %v8945 = vlaneseq
    %v8946 = vshrl.u32 %v8945, 7
    %v8947 = vsub.s32 0, %v8946
    %v8948 = vrot.slane %v8944, %v8947
    %v8949 = vsub.f32 %v8858, %v8948
    %v8950 = vsub.f32 %v8859, %v8948
    %v8951 = vsub.f32 %v8860, %v8948
    %v8952 = vsub.f32 %v8861, %v8948
    %v8953 = vsub.f32 %v8862, %v8948
    %v8954 = vsub.f32 %v8863, %v8948
    %v8955 = vsub.f32 %v8864, %v8948
    %v8956 = vsub.f32 %v8865, %v8948
    %v8957 = vsub.f32 %v8866, %v8948
    %v8958 = vsub.f32 %v8867, %v8948
    %v8959 = vsub.f32 %v8868, %v8948
    %v8960 = vsub.f32 %v8869, %v8948
    %v8961 = vsub.f32 %v8870, %v8948
    %v8962 = vsub.f32 %v8871, %v8948
    %v8963 = vsub.f32 %v8872, %v8948
    %v8964 = vsub.f32 %v8873, %v8948
    %v8965 = vmul.f32 %v8949, %v8949
    %v8966 = vmul.f32 %v8950, %v8950
    %v8967 = vmul.f32 %v8951, %v8951
    %v8968 = vmul.f32 %v8952, %v8952
    %v8969 = vmul.f32 %v8953, %v8953
    %v8970 = vmul.f32 %v8954, %v8954
    %v8971 = vmul.f32 %v8955, %v8955
    %v8972 = vmul.f32 %v8956, %v8956
    %v8973 = vmul.f32 %v8957, %v8957
    %v8974 = vmul.f32 %v8958, %v8958
    %v8975 = vmul.f32 %v8959, %v8959
    %v8976 = vmul.f32 %v8960, %v8960
    %v8977 = vmul.f32 %v8961, %v8961
    %v8978 = vmul.f32 %v8962, %v8962
    %v8979 = vmul.f32 %v8963, %v8963
    %v8980 = vmul.f32 %v8964, %v8964
    %8981 = vmatprep.subr.mxu0 0.0
    %8982 = vmatpush1.msra.mxu0 %v8965
    %8983 = vmatprep.subr.mxu0 0.0
    %8984 = vmatpush1.msra.mxu0 %v8966
    %8985 = vmatprep.subr.mxu0 0.0
    %8986 = vmatpush1.msra.mxu0 %v8967
    %8987 = vmatprep.subr.mxu0 0.0
    %8988 = vmatpush1.msra.mxu0 %v8968
    %8989 = vmatprep.subr.mxu0 0.0
    %8990 = vmatpush1.msra.mxu0 %v8969
    %8991 = vmatprep.subr.mxu0 0.0
    %8992 = vmatpush1.msra.mxu0 %v8970
    %8993 = vmatprep.subr.mxu0 0.0
    %8994 = vmatpush1.msra.mxu0 %v8971
    %8995 = vmatprep.subr.mxu0 0.0
    %8996 = vmatpush1.msra.mxu0 %v8972
    %8997 = vmatprep.subr.mxu0 0.0
    %8998 = vmatpush1.msra.mxu0 %v8973
    %8999 = vmatprep.subr.mxu0 0.0
    %9000 = vmatpush1.msra.mxu0 %v8974
    %9001 = vmatprep.subr.mxu0 0.0
    %9002 = vmatpush1.msra.mxu0 %v8975
    %9003 = vmatprep.subr.mxu0 0.0
    %9004 = vmatpush1.msra.mxu0 %v8976
    %9005 = vmatprep.subr.mxu0 0.0
    %9006 = vmatpush1.msra.mxu0 %v8977
    %9007 = vmatprep.subr.mxu0 0.0
    %9008 = vmatpush1.msra.mxu0 %v8978
    %9009 = vmatprep.subr.mxu0 0.0
    %9010 = vmatpush1.msra.mxu0 %v8979
    %9011 = vmatprep.subr.mxu0 0.0
    %9012 = vmatpush1.msra.mxu0 %v8980
    %9013 = vmatprep.subr.mxu0 0.0
    %9014 = vmatpush1.msra.mxu0 0.0
    %9015 = vmatprep.subr.mxu0 0.0
    %9016 = vmatpush1.msra.mxu0 0.0
    %9017 = vmatprep.subr.mxu0 0.0
    %9018 = vmatpush1.msra.mxu0 0.0
    %9019 = vmatprep.subr.mxu0 0.0
    %9020 = vmatpush1.msra.mxu0 0.0
    %9021 = vmatprep.subr.mxu0 0.0
    %9022 = vmatpush1.msra.mxu0 0.0
    %9023 = vmatprep.subr.mxu0 0.0
    %9024 = vmatpush1.msra.mxu0 0.0
    %9025 = vmatprep.subr.mxu0 0.0
    %9026 = vmatpush1.msra.mxu0 0.0
    %9027 = vmatprep.subr.mxu0 0.0
    %9028 = vmatpush1.msra.mxu0 0.0
    %9029 = vmatprep.subr.mxu0 0.0
    %9030 = vmatpush1.msra.mxu0 0.0
    %9031 = vmatprep.subr.mxu0 0.0
    %9032 = vmatpush1.msra.mxu0 0.0
    %9033 = vmatprep.subr.mxu0 0.0
    %9034 = vmatpush1.msra.mxu0 0.0
    %9035 = vmatprep.subr.mxu0 0.0
    %9036 = vmatpush1.msra.mxu0 0.0
    %9037 = vmatprep.subr.mxu0 0.0
    %9038 = vmatpush1.msra.mxu0 0.0
    %9039 = vmatprep.subr.mxu0 0.0
    %9040 = vmatpush1.msra.mxu0 0.0
    %9041 = vmatprep.subr.mxu0 0.0
    %9042 = vmatpush1.msra.mxu0 0.0
    %9043 = vmatprep.subr.mxu0 0.0
    %9044 = vmatpush1.msra.mxu0 0.0
    %9045 = vmatprep.mubr.f32.mxu0 0.0
    %9046 = vmatmul.mubr.f32.gmra.mrb[0].mxu0 1.0
    %v9047 = vpop.f32.mrb[0].mxu0
    %v9048 = vadd.f32 0.0, %v9047
    %v9049 = vpop.f32.mrb[0].mxu0
    %9050 = vdwg.mxu0
    %v9051 = vmul.f32 %v9048, 0.0078125
    %v9052 = vadd.f32 %v9051, 1e-05
    %v9053 = vrsqrt.pop %v9052
    %v9054 = vlaneseq
    %v9055 = vshrl.u32 %v9054, 7
    %v9056 = vsub.s32 0, %v9055
    %v9057 = vrot.slane %v9053, %v9056
    %v9058 = vmul.f32 %v8949, %v9057
    %v9059 = vmul.f32 %v8950, %v9057
    %v9060 = vmul.f32 %v8951, %v9057
    %v9061 = vmul.f32 %v8952, %v9057
    %v9062 = vmul.f32 %v8953, %v9057
    %v9063 = vmul.f32 %v8954, %v9057
    %v9064 = vmul.f32 %v8955, %v9057
    %v9065 = vmul.f32 %v8956, %v9057
    %v9066 = vmul.f32 %v8957, %v9057
    %v9067 = vmul.f32 %v8958, %v9057
    %v9068 = vmul.f32 %v8959, %v9057
    %v9069 = vmul.f32 %v8960, %v9057
    %v9070 = vmul.f32 %v8961, %v9057
    %v9071 = vmul.f32 %v8962, %v9057
    %v9072 = vmul.f32 %v8963, %v9057
    %v9073 = vmul.f32 %v8964, %v9057
    %v9074 = vmul.f32 %v9058, %v1873
    %v9075 = vmul.f32 %v9059, %v1873
    %v9076 = vmul.f32 %v9060, %v1873
    %v9077 = vmul.f32 %v9061, %v1873
    %v9078 = vmul.f32 %v9062, %v1873
    %v9079 = vmul.f32 %v9063, %v1873
    %v9080 = vmul.f32 %v9064, %v1873
    %v9081 = vmul.f32 %v9065, %v1873
    %v9082 = vmul.f32 %v9066, %v1873
    %v9083 = vmul.f32 %v9067, %v1873
    %v9084 = vmul.f32 %v9068, %v1873
    %v9085 = vmul.f32 %v9069, %v1873
    %v9086 = vmul.f32 %v9070, %v1873
    %v9087 = vmul.f32 %v9071, %v1873
    %v9088 = vmul.f32 %v9072, %v1873
    %v9089 = vmul.f32 %v9073, %v1873
    %v9090 = vadd.f32 %v9074, %v1895
    %v9091 = vadd.f32 %v9075, %v1895
    %v9092 = vadd.f32 %v9076, %v1895
    %v9093 = vadd.f32 %v9077, %v1895
    %v9094 = vadd.f32 %v9078, %v1895
    %v9095 = vadd.f32 %v9079, %v1895
    %v9096 = vadd.f32 %v9080, %v1895
    %v9097 = vadd.f32 %v9081, %v1895
    %v9098 = vadd.f32 %v9082, %v1895
    %v9099 = vadd.f32 %v9083, %v1895
    %v9100 = vadd.f32 %v9084, %v1895
    %v9101 = vadd.f32 %v9085, %v1895
    %v9102 = vadd.f32 %v9086, %v1895
    %v9103 = vadd.f32 %v9087, %v1895
    %v9104 = vadd.f32 %v9088, %v1895
    %v9105 = vadd.f32 %v9089, %v1895
    %vm9106 = vcmp.ge.f32.partialorder %v9090, 0.0
    %vm9107 = vcmp.ge.f32.partialorder %v9091, 0.0
    %vm9108 = vcmp.ge.f32.partialorder %v9092, 0.0
    %vm9109 = vcmp.ge.f32.partialorder %v9093, 0.0
    %vm9110 = vcmp.ge.f32.partialorder %v9094, 0.0
    %vm9111 = vcmp.ge.f32.partialorder %v9095, 0.0
    %vm9112 = vcmp.ge.f32.partialorder %v9096, 0.0
    %vm9113 = vcmp.ge.f32.partialorder %v9097, 0.0
    %vm9114 = vcmp.ge.f32.partialorder %v9098, 0.0
    %vm9115 = vcmp.ge.f32.partialorder %v9099, 0.0
    %vm9116 = vcmp.ge.f32.partialorder %v9100, 0.0
    %vm9117 = vcmp.ge.f32.partialorder %v9101, 0.0
    %vm9118 = vcmp.ge.f32.partialorder %v9102, 0.0
    %vm9119 = vcmp.ge.f32.partialorder %v9103, 0.0
    %vm9120 = vcmp.ge.f32.partialorder %v9104, 0.0
    %vm9121 = vcmp.ge.f32.partialorder %v9105, 0.0
    %v9122 = vmul.f32 %v1929, %v9090
    %v9123 = vmul.f32 %v1929, %v9091
    %v9124 = vmul.f32 %v1929, %v9092
    %v9125 = vmul.f32 %v1929, %v9093
    %v9126 = vmul.f32 %v1929, %v9094
    %v9127 = vmul.f32 %v1929, %v9095
    %v9128 = vmul.f32 %v1929, %v9096
    %v9129 = vmul.f32 %v1929, %v9097
    %v9130 = vmul.f32 %v1929, %v9098
    %v9131 = vmul.f32 %v1929, %v9099
    %v9132 = vmul.f32 %v1929, %v9100
    %v9133 = vmul.f32 %v1929, %v9101
    %v9134 = vmul.f32 %v1929, %v9102
    %v9135 = vmul.f32 %v1929, %v9103
    %v9136 = vmul.f32 %v1929, %v9104
    %v9137 = vmul.f32 %v1929, %v9105
    %v9138 = vsel %vm9106, %v9090, %v9122
    %v9139 = vsel %vm9107, %v9091, %v9123
    %v9140 = vsel %vm9108, %v9092, %v9124
    %v9141 = vsel %vm9109, %v9093, %v9125
    %v9142 = vsel %vm9110, %v9094, %v9126
    %v9143 = vsel %vm9111, %v9095, %v9127
    %v9144 = vsel %vm9112, %v9096, %v9128
    %v9145 = vsel %vm9113, %v9097, %v9129
    %v9146 = vsel %vm9114, %v9098, %v9130
    %v9147 = vsel %vm9115, %v9099, %v9131
    %v9148 = vsel %vm9116, %v9100, %v9132
    %v9149 = vsel %vm9117, %v9101, %v9133
    %v9150 = vsel %vm9118, %v9102, %v9134
    %v9151 = vsel %vm9119, %v9103, %v9135
    %v9152 = vsel %vm9120, %v9104, %v9136
    %v9153 = vsel %vm9121, %v9105, %v9137
    %9154 = vst [vmem:[%s67 + $0x8] sm:$0xff] %v9138
    %9155 = vst [vmem:[%s67 + $0x20] sm:$0xff] %v9139
    %9156 = vst [vmem:[%s67 + $0x38] sm:$0xff] %v9140
    %9157 = vst [vmem:[%s67 + $0x50] sm:$0xff] %v9141
    %9158 = vst [vmem:[%s67 + $0x68] sm:$0xff] %v9142
    %9159 = vst [vmem:[%s67 + $0x80] sm:$0xff] %v9143
    %9160 = vst [vmem:[%s67 + $0x98] sm:$0xff] %v9144
    %9161 = vst [vmem:[%s67 + $0xb0] sm:$0xff] %v9145
    %9162 = vst [vmem:[%s67 + $0xf8] sm:$0xff] %v9146
    %9163 = vst [vmem:[%s67 + $0x110] sm:$0xff] %v9147
    %9164 = vst [vmem:[%s67 + $0x128] sm:$0xff] %v9148
    %9165 = vst [vmem:[%s67 + $0x140] sm:$0xff] %v9149
    %9166 = vst [vmem:[%s67 + $0x158] sm:$0xff] %v9150
    %9167 = vst [vmem:[%s67 + $0x170] sm:$0xff] %v9151
    %9168 = vst [vmem:[%s67 + $0x188] sm:$0xff] %v9152
    %9169 = vst [vmem:[%s67 + $0x1a0] sm:$0xff] %v9153
    %v9186 = vrot.slane %v9138, 7
    %v9187 = vrot.slane %v9139, 7
    %v9188 = vrot.slane %v9140, 7
    %v9189 = vrot.slane %v9141, 7
    %v9190 = vrot.slane %v9142, 7
    %v9191 = vrot.slane %v9143, 7
    %v9192 = vrot.slane %v9144, 7
    %v9193 = vrot.slane %v9145, 7
    %v9194 = vrot.slane %v9146, 7
    %v9195 = vrot.slane %v9147, 7
    %v9196 = vrot.slane %v9148, 7
    %v9197 = vrot.slane %v9149, 7
    %v9198 = vrot.slane %v9150, 7
    %v9199 = vrot.slane %v9151, 7
    %v9200 = vrot.slane %v9152, 7
    %v9201 = vrot.slane %v9153, 7
    %9218 = vst [vmem:[%s67] sm:$0xfe] %v9186
    %9219 = vst [vmem:[%s67 + $0x18] sm:$0xfe] %v9187
    %9220 = vst [vmem:[%s67 + $0x30] sm:$0xfe] %v9188
    %9221 = vst [vmem:[%s67 + $0x48] sm:$0xfe] %v9189
    %9222 = vst [vmem:[%s67 + $0x60] sm:$0xfe] %v9190
    %9223 = vst [vmem:[%s67 + $0x78] sm:$0xfe] %v9191
    %9224 = vst [vmem:[%s67 + $0x90] sm:$0xfe] %v9192
    %9225 = vst [vmem:[%s67 + $0xa8] sm:$0xfe] %v9193
    %9226 = vst [vmem:[%s67 + $0xf0] sm:$0xfe] %v9194
    %9227 = vst [vmem:[%s67 + $0x108] sm:$0xfe] %v9195
    %9228 = vst [vmem:[%s67 + $0x120] sm:$0xfe] %v9196
    %9229 = vst [vmem:[%s67 + $0x138] sm:$0xfe] %v9197
    %9230 = vst [vmem:[%s67 + $0x150] sm:$0xfe] %v9198
    %9231 = vst [vmem:[%s67 + $0x168] sm:$0xfe] %v9199
    %9232 = vst [vmem:[%s67 + $0x180] sm:$0xfe] %v9200
    %9233 = vst [vmem:[%s67 + $0x198] sm:$0xfe] %v9201
    %v9234 = vrot.slane %v9138, 1
    %v9235 = vrot.slane %v9139, 1
    %v9236 = vrot.slane %v9140, 1
    %v9237 = vrot.slane %v9141, 1
    %v9238 = vrot.slane %v9142, 1
    %v9239 = vrot.slane %v9143, 1
    %v9240 = vrot.slane %v9144, 1
    %v9241 = vrot.slane %v9145, 1
    %v9242 = vrot.slane %v9146, 1
    %v9243 = vrot.slane %v9147, 1
    %v9244 = vrot.slane %v9148, 1
    %v9245 = vrot.slane %v9149, 1
    %v9246 = vrot.slane %v9150, 1
    %v9247 = vrot.slane %v9151, 1
    %v9248 = vrot.slane %v9152, 1
    %v9249 = vrot.slane %v9153, 1
    %9266 = vst [vmem:[%s67 + $0x10] sm:$0x7f] %v9234
    %9267 = vst [vmem:[%s67 + $0x28] sm:$0x7f] %v9235
    %9268 = vst [vmem:[%s67 + $0x40] sm:$0x7f] %v9236
    %9269 = vst [vmem:[%s67 + $0x58] sm:$0x7f] %v9237
    %9270 = vst [vmem:[%s67 + $0x70] sm:$0x7f] %v9238
    %9271 = vst [vmem:[%s67 + $0x88] sm:$0x7f] %v9239
    %9272 = vst [vmem:[%s67 + $0xa0] sm:$0x7f] %v9240
    %9273 = vst [vmem:[%s67 + $0xb8] sm:$0x7f] %v9241
    %9274 = vst [vmem:[%s67 + $0x100] sm:$0x7f] %v9242
    %9275 = vst [vmem:[%s67 + $0x118] sm:$0x7f] %v9243
    %9276 = vst [vmem:[%s67 + $0x130] sm:$0x7f] %v9244
    %9277 = vst [vmem:[%s67 + $0x148] sm:$0x7f] %v9245
    %9278 = vst [vmem:[%s67 + $0x160] sm:$0x7f] %v9246
    %9279 = vst [vmem:[%s67 + $0x178] sm:$0x7f] %v9247
    %9280 = vst [vmem:[%s67 + $0x190] sm:$0x7f] %v9248
    %9281 = vst [vmem:[%s67 + $0x1a8] sm:$0x7f] %v9249
    %v9282 = vld [vmem:[#allocation2] sm:$0xff]
    %v9283 = vld [vmem:[#allocation2 + $0x8] sm:$0xff]
    %v9284 = vld [vmem:[#allocation2 + $0x10] sm:$0xff]
    %v9285 = vld [vmem:[#allocation2 + $0x18] sm:$0xff]
    %v9286 = vld [vmem:[#allocation2 + $0x20] sm:$0xff]
    %v9287 = vld [vmem:[#allocation2 + $0x28] sm:$0xff]
    %v9288 = vld [vmem:[#allocation2 + $0x30] sm:$0xff]
    %v9289 = vld [vmem:[#allocation2 + $0x38] sm:$0xff]
    %v9290 = vld [vmem:[#allocation2 + $0x40] sm:$0xff]
    %v9291 = vld [vmem:[#allocation2 + $0x48] sm:$0xff]
    %v9292 = vld [vmem:[#allocation2 + $0x50] sm:$0xff]
    %v9293 = vld [vmem:[#allocation2 + $0x58] sm:$0xff]
    %v9294 = vld [vmem:[#allocation2 + $0x60] sm:$0xff]
    %v9295 = vld [vmem:[#allocation2 + $0x68] sm:$0xff]
    %v9296 = vld [vmem:[#allocation2 + $0x70] sm:$0xff]
    %v9297 = vld [vmem:[#allocation2 + $0x78] sm:$0xff]
    %v9298 = vld [vmem:[#allocation2 + $0x80] sm:$0xff]
    %v9299 = vld [vmem:[#allocation2 + $0x88] sm:$0xff]
    %v9300 = vld [vmem:[#allocation2 + $0x90] sm:$0xff]
    %v9301 = vld [vmem:[#allocation2 + $0x98] sm:$0xff]
    %v9302 = vld [vmem:[#allocation2 + $0xa0] sm:$0xff]
    %v9303 = vld [vmem:[#allocation2 + $0xa8] sm:$0xff]
    %v9304 = vld [vmem:[#allocation2 + $0xb0] sm:$0xff]
    %v9305 = vld [vmem:[#allocation2 + $0xb8] sm:$0xff]
    %v9306 = vld [vmem:[#allocation2 + $0xf0] sm:$0xff]
    %v9307 = vld [vmem:[#allocation2 + $0xf8] sm:$0xff]
    %v9308 = vld [vmem:[#allocation2 + $0x100] sm:$0xff]
    %v9309 = vld [vmem:[#allocation2 + $0x108] sm:$0xff]
    %v9310 = vld [vmem:[#allocation2 + $0x110] sm:$0xff]
    %v9311 = vld [vmem:[#allocation2 + $0x118] sm:$0xff]
    %v9312 = vld [vmem:[#allocation2 + $0x120] sm:$0xff]
    %v9313 = vld [vmem:[#allocation2 + $0x128] sm:$0xff]
    %v9314 = vld [vmem:[#allocation2 + $0x130] sm:$0xff]
    %v9315 = vld [vmem:[#allocation2 + $0x138] sm:$0xff]
    %v9316 = vld [vmem:[#allocation2 + $0x140] sm:$0xff]
    %v9317 = vld [vmem:[#allocation2 + $0x148] sm:$0xff]
    %v9318 = vld [vmem:[#allocation2 + $0x150] sm:$0xff]
    %v9319 = vld [vmem:[#allocation2 + $0x158] sm:$0xff]
    %v9320 = vld [vmem:[#allocation2 + $0x160] sm:$0xff]
    %v9321 = vld [vmem:[#allocation2 + $0x168] sm:$0xff]
    %v9322 = vld [vmem:[#allocation2 + $0x170] sm:$0xff]
    %v9323 = vld [vmem:[#allocation2 + $0x178] sm:$0xff]
    %v9324 = vld [vmem:[#allocation2 + $0x180] sm:$0xff]
    %v9325 = vld [vmem:[#allocation2 + $0x188] sm:$0xff]
    %v9326 = vld [vmem:[#allocation2 + $0x190] sm:$0xff]
    %v9327 = vld [vmem:[#allocation2 + $0x198] sm:$0xff]
    %v9328 = vld [vmem:[#allocation2 + $0x1a0] sm:$0xff]
    %v9329 = vld [vmem:[#allocation2 + $0x1a8] sm:$0xff]
    %v9330 = vpack.c.bf16 %v9285, %v9282
    %v9331 = vpack.c.bf16 %v9286, %v9283
    %v9332 = vpack.c.bf16 %v9287, %v9284
    %v9333 = vpack.c.bf16 %v9291, %v9288
    %v9334 = vpack.c.bf16 %v9292, %v9289
    %v9335 = vpack.c.bf16 %v9293, %v9290
    %v9336 = vpack.c.bf16 %v9297, %v9294
    %v9337 = vpack.c.bf16 %v9298, %v9295
    %v9338 = vpack.c.bf16 %v9299, %v9296
    %v9339 = vpack.c.bf16 %v9303, %v9300
    %v9340 = vpack.c.bf16 %v9304, %v9301
    %v9341 = vpack.c.bf16 %v9305, %v9302
    %v9342 = vpack.c.bf16 %v9309, %v9306
    %v9343 = vpack.c.bf16 %v9310, %v9307
    %v9344 = vpack.c.bf16 %v9311, %v9308
    %v9345 = vpack.c.bf16 %v9315, %v9312
    %v9346 = vpack.c.bf16 %v9316, %v9313
    %v9347 = vpack.c.bf16 %v9317, %v9314
    %v9348 = vpack.c.bf16 %v9321, %v9318
    %v9349 = vpack.c.bf16 %v9322, %v9319
    %v9350 = vpack.c.bf16 %v9323, %v9320
    %v9351 = vpack.c.bf16 %v9327, %v9324
    %v9352 = vpack.c.bf16 %v9328, %v9325
    %v9353 = vpack.c.bf16 %v9329, %v9326
    %v9354 = vld [vmem:[#allocation8] sm:$0xf]
    %v9355 = vld [vmem:[#allocation8 + $0x4] sm:$0xf]
    %v9356 = vld [vmem:[#allocation8 + $0x8] sm:$0xf]
    %v9357 = vld [vmem:[#allocation8 + $0xc] sm:$0xf]
    %v9358 = vld [vmem:[#allocation8 + $0x10] sm:$0xf]
    %v9359 = vld [vmem:[#allocation8 + $0x14] sm:$0xf]
    %v9360 = vld [vmem:[#allocation8 + $0x18] sm:$0xf]
    %v9361 = vld [vmem:[#allocation8 + $0x1c] sm:$0xf]
    %v9362 = vld [vmem:[#allocation8 + $0x20] sm:$0xf]
    %v9363 = vld [vmem:[#allocation8 + $0x24] sm:$0xf]
    %v9364 = vld [vmem:[#allocation8 + $0x28] sm:$0xf]
    %v9365 = vld [vmem:[#allocation8 + $0x2c] sm:$0xf]
    %v9366 = vld [vmem:[#allocation8 + $0x30] sm:$0xf]
    %v9367 = vld [vmem:[#allocation8 + $0x34] sm:$0xf]
    %v9368 = vld [vmem:[#allocation8 + $0x38] sm:$0xf]
    %v9369 = vld [vmem:[#allocation8 + $0x3c] sm:$0xf]
    %v9370 = vld [vmem:[#allocation8 + $0x40] sm:$0xf]
    %v9371 = vld [vmem:[#allocation8 + $0x44] sm:$0xf]
    %v9372 = vld [vmem:[#allocation8 + $0x48] sm:$0xf]
    %v9373 = vld [vmem:[#allocation8 + $0x4c] sm:$0xf]
    %v9374 = vld [vmem:[#allocation8 + $0x50] sm:$0xf]
    %v9375 = vld [vmem:[#allocation8 + $0x54] sm:$0xf]
    %v9376 = vld [vmem:[#allocation8 + $0x58] sm:$0xf]
    %v9377 = vld [vmem:[#allocation8 + $0x5c] sm:$0xf]
    %v9378 = vld [vmem:[#allocation8 + $0x60] sm:$0xf]
    %v9379 = vld [vmem:[#allocation8 + $0x64] sm:$0xf]
    %v9380 = vld [vmem:[#allocation8 + $0x68] sm:$0xf]
    %v9381 = vld [vmem:[#allocation8 + $0x6c] sm:$0xf]
    %v9382 = vld [vmem:[#allocation8 + $0x70] sm:$0xf]
    %v9383 = vld [vmem:[#allocation8 + $0x74] sm:$0xf]
    %v9384 = vld [vmem:[#allocation8 + $0x78] sm:$0xf]
    %v9385 = vld [vmem:[#allocation8 + $0x7c] sm:$0xf]
    %v9386 = vld [vmem:[#allocation8 + $0x80] sm:$0xf]
    %v9387 = vld [vmem:[#allocation8 + $0x84] sm:$0xf]
    %v9388 = vld [vmem:[#allocation8 + $0x88] sm:$0xf]
    %v9389 = vld [vmem:[#allocation8 + $0x8c] sm:$0xf]
    %v9390 = vld [vmem:[#allocation8 + $0x90] sm:$0xf]
    %v9391 = vld [vmem:[#allocation8 + $0x94] sm:$0xf]
    %v9392 = vld [vmem:[#allocation8 + $0x98] sm:$0xf]
    %v9393 = vld [vmem:[#allocation8 + $0x9c] sm:$0xf]
    %v9394 = vld [vmem:[#allocation8 + $0xa0] sm:$0xf]
    %v9395 = vld [vmem:[#allocation8 + $0xa4] sm:$0xf]
    %v9396 = vld [vmem:[#allocation8 + $0xa8] sm:$0xf]
    %v9397 = vld [vmem:[#allocation8 + $0xac] sm:$0xf]
    %v9398 = vld [vmem:[#allocation8 + $0xb0] sm:$0xf]
    %v9399 = vld [vmem:[#allocation8 + $0xb4] sm:$0xf]
    %v9400 = vld [vmem:[#allocation8 + $0xb8] sm:$0xf]
    %v9401 = vld [vmem:[#allocation8 + $0xbc] sm:$0xf]
    %v9402 = vld [vmem:[%s67] sm:$0xff]
    %v9403 = vld [vmem:[%s67 + $0x8] sm:$0xff]
    %v9404 = vld [vmem:[%s67 + $0x10] sm:$0xff]
    %v9405 = vld [vmem:[%s67 + $0x18] sm:$0xff]
    %v9406 = vld [vmem:[%s67 + $0x20] sm:$0xff]
    %v9407 = vld [vmem:[%s67 + $0x28] sm:$0xff]
    %v9408 = vld [vmem:[%s67 + $0x30] sm:$0xff]
    %v9409 = vld [vmem:[%s67 + $0x38] sm:$0xff]
    %v9410 = vld [vmem:[%s67 + $0x40] sm:$0xff]
    %v9411 = vld [vmem:[%s67 + $0x48] sm:$0xff]
    %v9412 = vld [vmem:[%s67 + $0x50] sm:$0xff]
    %v9413 = vld [vmem:[%s67 + $0x58] sm:$0xff]
    %v9414 = vld [vmem:[%s67 + $0x60] sm:$0xff]
    %v9415 = vld [vmem:[%s67 + $0x68] sm:$0xff]
    %v9416 = vld [vmem:[%s67 + $0x70] sm:$0xff]
    %v9417 = vld [vmem:[%s67 + $0x78] sm:$0xff]
    %v9418 = vld [vmem:[%s67 + $0x80] sm:$0xff]
    %v9419 = vld [vmem:[%s67 + $0x88] sm:$0xff]
    %v9420 = vld [vmem:[%s67 + $0x90] sm:$0xff]
    %v9421 = vld [vmem:[%s67 + $0x98] sm:$0xff]
    %v9422 = vld [vmem:[%s67 + $0xa0] sm:$0xff]
    %v9423 = vld [vmem:[%s67 + $0xa8] sm:$0xff]
    %v9424 = vld [vmem:[%s67 + $0xb0] sm:$0xff]
    %v9425 = vld [vmem:[%s67 + $0xb8] sm:$0xff]
    %v9426 = vld [vmem:[%s67 + $0xf0] sm:$0xff]
    %v9427 = vld [vmem:[%s67 + $0xf8] sm:$0xff]
    %v9428 = vld [vmem:[%s67 + $0x100] sm:$0xff]
    %v9429 = vld [vmem:[%s67 + $0x108] sm:$0xff]
    %v9430 = vld [vmem:[%s67 + $0x110] sm:$0xff]
    %v9431 = vld [vmem:[%s67 + $0x118] sm:$0xff]
    %v9432 = vld [vmem:[%s67 + $0x120] sm:$0xff]
    %v9433 = vld [vmem:[%s67 + $0x128] sm:$0xff]
    %v9434 = vld [vmem:[%s67 + $0x130] sm:$0xff]
    %v9435 = vld [vmem:[%s67 + $0x138] sm:$0xff]
    %v9436 = vld [vmem:[%s67 + $0x140] sm:$0xff]
    %v9437 = vld [vmem:[%s67 + $0x148] sm:$0xff]
    %v9438 = vld [vmem:[%s67 + $0x150] sm:$0xff]
    %v9439 = vld [vmem:[%s67 + $0x158] sm:$0xff]
    %v9440 = vld [vmem:[%s67 + $0x160] sm:$0xff]
    %v9441 = vld [vmem:[%s67 + $0x168] sm:$0xff]
    %v9442 = vld [vmem:[%s67 + $0x170] sm:$0xff]
    %v9443 = vld [vmem:[%s67 + $0x178] sm:$0xff]
    %v9444 = vld [vmem:[%s67 + $0x180] sm:$0xff]
    %v9445 = vld [vmem:[%s67 + $0x188] sm:$0xff]
    %v9446 = vld [vmem:[%s67 + $0x190] sm:$0xff]
    %v9447 = vld [vmem:[%s67 + $0x198] sm:$0xff]
    %v9448 = vld [vmem:[%s67 + $0x1a0] sm:$0xff]
    %v9449 = vld [vmem:[%s67 + $0x1a8] sm:$0xff]
    %v9450 = vpack.c.bf16 %v9405, %v9402
    %v9451 = vpack.c.bf16 %v9406, %v9403
    %v9452 = vpack.c.bf16 %v9407, %v9404
    %v9453 = vpack.c.bf16 %v9411, %v9408
    %v9454 = vpack.c.bf16 %v9412, %v9409
    %v9455 = vpack.c.bf16 %v9413, %v9410
    %v9456 = vpack.c.bf16 %v9417, %v9414
    %v9457 = vpack.c.bf16 %v9418, %v9415
    %v9458 = vpack.c.bf16 %v9419, %v9416
    %v9459 = vpack.c.bf16 %v9423, %v9420
    %v9460 = vpack.c.bf16 %v9424, %v9421
    %v9461 = vpack.c.bf16 %v9425, %v9422
    %v9462 = vpack.c.bf16 %v9429, %v9426
    %v9463 = vpack.c.bf16 %v9430, %v9427
    %v9464 = vpack.c.bf16 %v9431, %v9428
    %v9465 = vpack.c.bf16 %v9435, %v9432
    %v9466 = vpack.c.bf16 %v9436, %v9433
    %v9467 = vpack.c.bf16 %v9437, %v9434
    %v9468 = vpack.c.bf16 %v9441, %v9438
    %v9469 = vpack.c.bf16 %v9442, %v9439
    %v9470 = vpack.c.bf16 %v9443, %v9440
    %v9471 = vpack.c.bf16 %v9447, %v9444
    %v9472 = vpack.c.bf16 %v9448, %v9445
    %v9473 = vpack.c.bf16 %v9449, %v9446
    %v9474 = vld [vmem:[%s468] sm:$0xf]
    %v9475 = vld [vmem:[%s468 + $0x4] sm:$0xf]
    %v9476 = vld [vmem:[%s468 + $0x8] sm:$0xf]
    %v9477 = vld [vmem:[%s468 + $0xc] sm:$0xf]
    %v9478 = vld [vmem:[%s468 + $0x10] sm:$0xf]
    %v9479 = vld [vmem:[%s468 + $0x14] sm:$0xf]
    %v9480 = vld [vmem:[%s468 + $0x18] sm:$0xf]
    %v9481 = vld [vmem:[%s468 + $0x1c] sm:$0xf]
    %v9482 = vld [vmem:[%s468 + $0x20] sm:$0xf]
    %v9483 = vld [vmem:[%s468 + $0x24] sm:$0xf]
    %v9484 = vld [vmem:[%s468 + $0x28] sm:$0xf]
    %v9485 = vld [vmem:[%s468 + $0x2c] sm:$0xf]
    %v9486 = vld [vmem:[%s468 + $0x30] sm:$0xf]
    %v9487 = vld [vmem:[%s468 + $0x34] sm:$0xf]
    %v9488 = vld [vmem:[%s468 + $0x38] sm:$0xf]
    %v9489 = vld [vmem:[%s468 + $0x3c] sm:$0xf]
    %v9490 = vld [vmem:[%s468 + $0x40] sm:$0xf]
    %v9491 = vld [vmem:[%s468 + $0x44] sm:$0xf]
    %v9492 = vld [vmem:[%s468 + $0x48] sm:$0xf]
    %v9493 = vld [vmem:[%s468 + $0x4c] sm:$0xf]
    %v9494 = vld [vmem:[%s468 + $0x50] sm:$0xf]
    %v9495 = vld [vmem:[%s468 + $0x54] sm:$0xf]
    %v9496 = vld [vmem:[%s468 + $0x58] sm:$0xf]
    %v9497 = vld [vmem:[%s468 + $0x5c] sm:$0xf]
    %v9498 = vld [vmem:[%s468 + $0x60] sm:$0xf]
    %v9499 = vld [vmem:[%s468 + $0x64] sm:$0xf]
    %v9500 = vld [vmem:[%s468 + $0x68] sm:$0xf]
    %v9501 = vld [vmem:[%s468 + $0x6c] sm:$0xf]
    %v9502 = vld [vmem:[%s468 + $0x70] sm:$0xf]
    %v9503 = vld [vmem:[%s468 + $0x74] sm:$0xf]
    %v9504 = vld [vmem:[%s468 + $0x78] sm:$0xf]
    %v9505 = vld [vmem:[%s468 + $0x7c] sm:$0xf]
    %v9506 = vld [vmem:[%s468 + $0x80] sm:$0xf]
    %v9507 = vld [vmem:[%s468 + $0x84] sm:$0xf]
    %v9508 = vld [vmem:[%s468 + $0x88] sm:$0xf]
    %v9509 = vld [vmem:[%s468 + $0x8c] sm:$0xf]
    %v9510 = vld [vmem:[%s468 + $0x90] sm:$0xf]
    %v9511 = vld [vmem:[%s468 + $0x94] sm:$0xf]
    %v9512 = vld [vmem:[%s468 + $0x98] sm:$0xf]
    %v9513 = vld [vmem:[%s468 + $0x9c] sm:$0xf]
    %v9514 = vld [vmem:[%s468 + $0xa0] sm:$0xf]
    %v9515 = vld [vmem:[%s468 + $0xa4] sm:$0xf]
    %v9516 = vld [vmem:[%s468 + $0xa8] sm:$0xf]
    %v9517 = vld [vmem:[%s468 + $0xac] sm:$0xf]
    %v9518 = vld [vmem:[%s468 + $0xb0] sm:$0xf]
    %v9519 = vld [vmem:[%s468 + $0xb4] sm:$0xf]
    %v9520 = vld [vmem:[%s468 + $0xb8] sm:$0xf]
    %v9521 = vld [vmem:[%s468 + $0xbc] sm:$0xf]
    %v9570 = vunpack.c.l.b16 %v9474
    %v9571 = vunpack.c.l.b16 %v9475
    %v9572 = vunpack.c.l.b16 %v9476
    %v9573 = vunpack.c.l.b16 %v9477
    %v9574 = vunpack.c.l.b16 %v9478
    %v9575 = vunpack.c.l.b16 %v9479
    %v9576 = vunpack.c.l.b16 %v9480
    %v9577 = vunpack.c.l.b16 %v9481
    %v9578 = vunpack.c.l.b16 %v9482
    %v9579 = vunpack.c.l.b16 %v9483
    %v9580 = vunpack.c.l.b16 %v9484
    %v9581 = vunpack.c.l.b16 %v9485
    %v9582 = vunpack.c.l.b16 %v9486
    %v9583 = vunpack.c.l.b16 %v9487
    %v9584 = vunpack.c.l.b16 %v9488
    %v9585 = vunpack.c.l.b16 %v9489
    %v9586 = vunpack.c.l.b16 %v9490
    %v9587 = vunpack.c.l.b16 %v9491
    %v9588 = vunpack.c.l.b16 %v9492
    %v9589 = vunpack.c.l.b16 %v9493
    %v9590 = vunpack.c.l.b16 %v9494
    %v9591 = vunpack.c.l.b16 %v9495
    %v9592 = vunpack.c.l.b16 %v9496
    %v9593 = vunpack.c.l.b16 %v9497
    %v9594 = vunpack.c.l.b16 %v9498
    %v9595 = vunpack.c.l.b16 %v9499
    %v9596 = vunpack.c.l.b16 %v9500
    %v9597 = vunpack.c.l.b16 %v9501
    %v9598 = vunpack.c.l.b16 %v9502
    %v9599 = vunpack.c.l.b16 %v9503
    %v9600 = vunpack.c.l.b16 %v9504
    %v9601 = vunpack.c.l.b16 %v9505
    %v9602 = vunpack.c.l.b16 %v9506
    %v9603 = vunpack.c.l.b16 %v9507
    %v9604 = vunpack.c.l.b16 %v9508
    %v9605 = vunpack.c.l.b16 %v9509
    %v9606 = vunpack.c.l.b16 %v9510
    %v9607 = vunpack.c.l.b16 %v9511
    %v9608 = vunpack.c.l.b16 %v9512
    %v9609 = vunpack.c.l.b16 %v9513
    %v9610 = vunpack.c.l.b16 %v9514
    %v9611 = vunpack.c.l.b16 %v9515
    %v9612 = vunpack.c.l.b16 %v9516
    %v9613 = vunpack.c.l.b16 %v9517
    %v9614 = vunpack.c.l.b16 %v9518
    %v9615 = vunpack.c.l.b16 %v9519
    %v9616 = vunpack.c.l.b16 %v9520
    %v9617 = vunpack.c.l.b16 %v9521
    %v9618 = vpack.c.b16 %v9571, %v9570
    %v9619 = vpack.c.b16 %v9573, %v9572
    %v9620 = vpack.c.b16 %v9575, %v9574
    %v9621 = vpack.c.b16 %v9577, %v9576
    %v9622 = vpack.c.b16 %v9579, %v9578
    %v9623 = vpack.c.b16 %v9581, %v9580
    %v9624 = vpack.c.b16 %v9583, %v9582
    %v9625 = vpack.c.b16 %v9585, %v9584
    %v9626 = vpack.c.b16 %v9587, %v9586
    %v9627 = vpack.c.b16 %v9589, %v9588
    %v9628 = vpack.c.b16 %v9591, %v9590
    %v9629 = vpack.c.b16 %v9593, %v9592
    %v9630 = vpack.c.b16 %v9595, %v9594
    %v9631 = vpack.c.b16 %v9597, %v9596
    %v9632 = vpack.c.b16 %v9599, %v9598
    %v9633 = vpack.c.b16 %v9601, %v9600
    %v9634 = vpack.c.b16 %v9603, %v9602
    %v9635 = vpack.c.b16 %v9605, %v9604
    %v9636 = vpack.c.b16 %v9607, %v9606
    %v9637 = vpack.c.b16 %v9609, %v9608
    %v9638 = vpack.c.b16 %v9611, %v9610
    %v9639 = vpack.c.b16 %v9613, %v9612
    %v9640 = vpack.c.b16 %v9615, %v9614
    %v9641 = vpack.c.b16 %v9617, %v9616
    %9666 = vmatprep.subr.bf16.mxu0 0
    %9667 = vmatpush1.bf16.msra.mxu0 %v9618
    %9668 = vmatprep.subr.bf16.mxu0 0
    %9669 = vmatpush1.bf16.msra.mxu0 %v9619
    %9670 = vmatprep.subr.bf16.mxu0 0
    %9671 = vmatpush1.bf16.msra.mxu0 %v9620
    %9672 = vmatprep.subr.bf16.mxu0 0
    %9673 = vmatpush1.bf16.msra.mxu0 %v9621
    %9674 = vmatprep.subr.bf16.mxu0 0
    %9675 = vmatpush1.bf16.msra.mxu0 %v9622
    %9676 = vmatprep.subr.bf16.mxu0 0
    %9677 = vmatpush1.bf16.msra.mxu0 %v9623
    %9678 = vmatprep.subr.bf16.mxu0 0
    %9679 = vmatpush1.bf16.msra.mxu0 %v9624
    %9680 = vmatprep.subr.bf16.mxu0 0
    %9681 = vmatpush1.bf16.msra.mxu0 %v9625
    %9682 = vmatprep.subr.bf16.mxu0 0
    %9683 = vmatpush1.bf16.msra.mxu0 %v9626
    %9684 = vmatprep.subr.bf16.mxu0 0
    %9685 = vmatpush1.bf16.msra.mxu0 %v9627
    %9686 = vmatprep.subr.bf16.mxu0 0
    %9687 = vmatpush1.bf16.msra.mxu0 %v9628
    %9688 = vmatprep.subr.bf16.mxu0 0
    %9689 = vmatpush1.bf16.msra.mxu0 %v9629
    %9690 = vmatprep.subr.bf16.mxu0 0
    %9691 = vmatpush1.bf16.msra.mxu0 %v9630
    %9692 = vmatprep.subr.bf16.mxu0 0
    %9693 = vmatpush1.bf16.msra.mxu0 %v9631
    %9694 = vmatprep.subr.bf16.mxu0 0
    %9695 = vmatpush1.bf16.msra.mxu0 %v9632
    %9696 = vmatprep.subr.bf16.mxu0 0
    %9697 = vmatpush1.bf16.msra.mxu0 %v9633
    %9698 = vmatprep.mubr.bf16.mxu0 %v9451
    %9699 = vmatmul.mubr.bf16.gmra.mrb[0].mxu0 %v9450
    %v9700 = vpop.f32.mrb[0].mxu0
    %v9701 = vadd.f32 0.0, %v9700
    %v9702 = vpop.f32.mrb[0].mxu0
    %v9703 = vpop.f32.mrb[0].mxu0
    %v9704 = vadd.f32 0.0, %v9703
    %v9705 = vpop.f32.mrb[0].mxu0
    %9706 = vmatprep.mubr.bf16.mxu0 %v9454
    %9707 = vmatmul.mubr.bf16.gmra.mrb[0].mxu0 %v9453
    %v9708 = vpop.f32.mrb[0].mxu0
    %v9709 = vadd.f32 0.0, %v9708
    %v9710 = vpop.f32.mrb[0].mxu0
    %v9711 = vpop.f32.mrb[0].mxu0
    %v9712 = vadd.f32 0.0, %v9711
    %v9713 = vpop.f32.mrb[0].mxu0
    %9714 = vmatprep.mubr.bf16.mxu0 %v9457
    %9715 = vmatmul.mubr.bf16.gmra.mrb[0].mxu0 %v9456
    %v9716 = vpop.f32.mrb[0].mxu0
    %v9717 = vadd.f32 0.0, %v9716
    %v9718 = vpop.f32.mrb[0].mxu0
    %v9719 = vpop.f32.mrb[0].mxu0
    %v9720 = vadd.f32 0.0, %v9719
    %v9721 = vpop.f32.mrb[0].mxu0
    %9722 = vmatprep.mubr.bf16.mxu0 %v9460
    %9723 = vmatmul.mubr.bf16.gmra.mrb[0].mxu0 %v9459
    %v9724 = vpop.f32.mrb[0].mxu0
    %v9725 = vadd.f32 0.0, %v9724
    %v9726 = vpop.f32.mrb[0].mxu0
    %v9727 = vpop.f32.mrb[0].mxu0
    %v9728 = vadd.f32 0.0, %v9727
    %v9729 = vpop.f32.mrb[0].mxu0
    %9730 = vmatprep.mubr.bf16.mxu0 %v9463
    %9731 = vmatmul.mubr.bf16.gmra.mrb[0].mxu0 %v9462
    %v9732 = vpop.f32.mrb[0].mxu0
    %v9733 = vadd.f32 0.0, %v9732
    %v9734 = vpop.f32.mrb[0].mxu0
    %v9735 = vpop.f32.mrb[0].mxu0
    %v9736 = vadd.f32 0.0, %v9735
    %v9737 = vpop.f32.mrb[0].mxu0
    %9738 = vmatprep.mubr.bf16.mxu0 %v9466
    %9739 = vmatmul.mubr.bf16.gmra.mrb[0].mxu0 %v9465
    %v9740 = vpop.f32.mrb[0].mxu0
    %v9741 = vadd.f32 0.0, %v9740
    %v9742 = vpop.f32.mrb[0].mxu0
    %v9743 = vpop.f32.mrb[0].mxu0
    %v9744 = vadd.f32 0.0, %v9743
    %v9745 = vpop.f32.mrb[0].mxu0
    %9746 = vmatprep.mubr.bf16.mxu0 %v9469
    %9747 = vmatmul.mubr.bf16.gmra.mrb[0].mxu0 %v9468
    %v9748 = vpop.f32.mrb[0].mxu0
    %v9749 = vadd.f32 0.0, %v9748
    %v9750 = vpop.f32.mrb[0].mxu0
    %v9751 = vpop.f32.mrb[0].mxu0
    %v9752 = vadd.f32 0.0, %v9751
    %v9753 = vpop.f32.mrb[0].mxu0
    %9754 = vmatprep.mubr.bf16.mxu0 %v9472
    %9755 = vmatmul.mubr.bf16.gmra.mrb[0].mxu0 %v9471
    %v9756 = vpop.f32.mrb[0].mxu0
    %v9757 = vadd.f32 0.0, %v9756
    %v9758 = vpop.f32.mrb[0].mxu0
    %v9759 = vpop.f32.mrb[0].mxu0
    %v9760 = vadd.f32 0.0, %v9759
    %v9761 = vpop.f32.mrb[0].mxu0
    %9762 = vdwg.mxu0
    %9763 = vmatprep.subr.bf16.mxu0 0
    %9764 = vmatpush1.bf16.msra.mxu0 %v9634
    %9765 = vmatprep.subr.bf16.mxu0 0
    %9766 = vmatpush1.bf16.msra.mxu0 %v9635
    %9767 = vmatprep.subr.bf16.mxu0 0
    %9768 = vmatpush1.bf16.msra.mxu0 %v9636
    %9769 = vmatprep.subr.bf16.mxu0 0
    %9770 = vmatpush1.bf16.msra.mxu0 %v9637
    %9771 = vmatprep.subr.bf16.mxu0 0
    %9772 = vmatpush1.bf16.msra.mxu0 %v9638
    %9773 = vmatprep.subr.bf16.mxu0 0
    %9774 = vmatpush1.bf16.msra.mxu0 %v9639
    %9775 = vmatprep.subr.bf16.mxu0 0
    %9776 = vmatpush1.bf16.msra.mxu0 %v9640
    %9777 = vmatprep.subr.bf16.mxu0 0
    %9778 = vmatpush1.bf16.msra.mxu0 %v9641
    %9779 = vmatprep.subr.bf16.mxu0 0
    %9780 = vmatpush1.bf16.msra.mxu0 0
    %9781 = vmatprep.subr.bf16.mxu0 0
    %9782 = vmatpush1.bf16.msra.mxu0 0
    %9783 = vmatprep.subr.bf16.mxu0 0
    %9784 = vmatpush1.bf16.msra.mxu0 0
    %9785 = vmatprep.subr.bf16.mxu0 0
    %9786 = vmatpush1.bf16.msra.mxu0 0
    %9787 = vmatprep.subr.bf16.mxu0 0
    %9788 = vmatpush1.bf16.msra.mxu0 0
    %9789 = vmatprep.subr.bf16.mxu0 0
    %9790 = vmatpush1.bf16.msra.mxu0 0
    %9791 = vmatprep.subr.bf16.mxu0 0
    %9792 = vmatpush1.bf16.msra.mxu0 0
    %9793 = vmatprep.subr.bf16.mxu0 0
    %9794 = vmatpush1.bf16.msra.mxu0 0
    %9795 = vmatprep.mubr.bf16.mxu0 0
    %9796 = vmatmul.mubr.bf16.gmra.mrb[0].mxu0 %v9452
    %v9797 = vpop.f32.mrb[0].mxu0
    %v9798 = vadd.f32 %v9701, %v9797
    %v9799 = vpop.f32.mrb[0].mxu0
    %v9800 = vpop.f32.mrb[0].mxu0
    %v9801 = vadd.f32 %v9704, %v9800
    %v9802 = vpop.f32.mrb[0].mxu0
    %9803 = vmatprep.mubr.bf16.mxu0 0
    %9804 = vmatmul.mubr.bf16.gmra.mrb[0].mxu0 %v9455
    %v9805 = vpop.f32.mrb[0].mxu0
    %v9806 = vadd.f32 %v9709, %v9805
    %v9807 = vpop.f32.mrb[0].mxu0
    %v9808 = vpop.f32.mrb[0].mxu0
    %v9809 = vadd.f32 %v9712, %v9808
    %v9810 = vpop.f32.mrb[0].mxu0
    %9811 = vmatprep.mubr.bf16.mxu0 0
    %9812 = vmatmul.mubr.bf16.gmra.mrb[0].mxu0 %v9458
    %v9813 = vpop.f32.mrb[0].mxu0
    %v9814 = vadd.f32 %v9717, %v9813
    %v9815 = vpop.f32.mrb[0].mxu0
    %v9816 = vpop.f32.mrb[0].mxu0
    %v9817 = vadd.f32 %v9720, %v9816
    %v9818 = vpop.f32.mrb[0].mxu0
    %9819 = vmatprep.mubr.bf16.mxu0 0
    %9820 = vmatmul.mubr.bf16.gmra.mrb[0].mxu0 %v9461
    %v9821 = vpop.f32.mrb[0].mxu0
    %v9822 = vadd.f32 %v9725, %v9821
    %v9823 = vpop.f32.mrb[0].mxu0
    %v9824 = vpop.f32.mrb[0].mxu0
    %v9825 = vadd.f32 %v9728, %v9824
    %v9826 = vpop.f32.mrb[0].mxu0
    %9827 = vmatprep.mubr.bf16.mxu0 0
    %9828 = vmatmul.mubr.bf16.gmra.mrb[0].mxu0 %v9464
    %v9829 = vpop.f32.mrb[0].mxu0
    %v9830 = vadd.f32 %v9733, %v9829
    %v9831 = vpop.f32.mrb[0].mxu0
    %v9832 = vpop.f32.mrb[0].mxu0
    %v9833 = vadd.f32 %v9736, %v9832
    %v9834 = vpop.f32.mrb[0].mxu0
    %9835 = vmatprep.mubr.bf16.mxu0 0
    %9836 = vmatmul.mubr.bf16.gmra.mrb[0].mxu0 %v9467
    %v9837 = vpop.f32.mrb[0].mxu0
    %v9838 = vadd.f32 %v9741, %v9837
    %v9839 = vpop.f32.mrb[0].mxu0
    %v9840 = vpop.f32.mrb[0].mxu0
    %v9841 = vadd.f32 %v9744, %v9840
    %v9842 = vpop.f32.mrb[0].mxu0
    %9843 = vmatprep.mubr.bf16.mxu0 0
    %9844 = vmatmul.mubr.bf16.gmra.mrb[0].mxu0 %v9470
    %v9845 = vpop.f32.mrb[0].mxu0
    %v9846 = vadd.f32 %v9749, %v9845
    %v9847 = vpop.f32.mrb[0].mxu0
    %v9848 = vpop.f32.mrb[0].mxu0
    %v9849 = vadd.f32 %v9752, %v9848
    %v9850 = vpop.f32.mrb[0].mxu0
    %9851 = vmatprep.mubr.bf16.mxu0 0
    %9852 = vmatmul.mubr.bf16.gmra.mrb[0].mxu0 %v9473
    %v9853 = vpop.f32.mrb[0].mxu0
    %v9854 = vadd.f32 %v9757, %v9853
    %v9855 = vpop.f32.mrb[0].mxu0
    %v9856 = vpop.f32.mrb[0].mxu0
    %v9857 = vadd.f32 %v9760, %v9856
    %v9858 = vpop.f32.mrb[0].mxu0
    %9859 = vdwg.mxu0
    %v9908 = vunpack.c.l.b16 %v9354
    %v9909 = vunpack.c.l.b16 %v9355
    %v9910 = vunpack.c.l.b16 %v9356
    %v9911 = vunpack.c.l.b16 %v9357
    %v9912 = vunpack.c.l.b16 %v9358
    %v9913 = vunpack.c.l.b16 %v9359
    %v9914 = vunpack.c.l.b16 %v9360
    %v9915 = vunpack.c.l.b16 %v9361
    %v9916 = vunpack.c.l.b16 %v9362
    %v9917 = vunpack.c.l.b16 %v9363
    %v9918 = vunpack.c.l.b16 %v9364
    %v9919 = vunpack.c.l.b16 %v9365
    %v9920 = vunpack.c.l.b16 %v9366
    %v9921 = vunpack.c.l.b16 %v9367
    %v9922 = vunpack.c.l.b16 %v9368
    %v9923 = vunpack.c.l.b16 %v9369
    %v9924 = vunpack.c.l.b16 %v9370
    %v9925 = vunpack.c.l.b16 %v9371
    %v9926 = vunpack.c.l.b16 %v9372
    %v9927 = vunpack.c.l.b16 %v9373
    %v9928 = vunpack.c.l.b16 %v9374
    %v9929 = vunpack.c.l.b16 %v9375
    %v9930 = vunpack.c.l.b16 %v9376
    %v9931 = vunpack.c.l.b16 %v9377
    %v9932 = vunpack.c.l.b16 %v9378
    %v9933 = vunpack.c.l.b16 %v9379
    %v9934 = vunpack.c.l.b16 %v9380
    %v9935 = vunpack.c.l.b16 %v9381
    %v9936 = vunpack.c.l.b16 %v9382
    %v9937 = vunpack.c.l.b16 %v9383
    %v9938 = vunpack.c.l.b16 %v9384
    %v9939 = vunpack.c.l.b16 %v9385
    %v9940 = vunpack.c.l.b16 %v9386
    %v9941 = vunpack.c.l.b16 %v9387
    %v9942 = vunpack.c.l.b16 %v9388
    %v9943 = vunpack.c.l.b16 %v9389
    %v9944 = vunpack.c.l.b16 %v9390
    %v9945 = vunpack.c.l.b16 %v9391
    %v9946 = vunpack.c.l.b16 %v9392
    %v9947 = vunpack.c.l.b16 %v9393
    %v9948 = vunpack.c.l.b16 %v9394
    %v9949 = vunpack.c.l.b16 %v9395
    %v9950 = vunpack.c.l.b16 %v9396
    %v9951 = vunpack.c.l.b16 %v9397
    %v9952 = vunpack.c.l.b16 %v9398
    %v9953 = vunpack.c.l.b16 %v9399
    %v9954 = vunpack.c.l.b16 %v9400
    %v9955 = vunpack.c.l.b16 %v9401
    %v9956 = vpack.c.b16 %v9909, %v9908
    %v9957 = vpack.c.b16 %v9911, %v9910
    %v9958 = vpack.c.b16 %v9913, %v9912
    %v9959 = vpack.c.b16 %v9915, %v9914
    %v9960 = vpack.c.b16 %v9917, %v9916
    %v9961 = vpack.c.b16 %v9919, %v9918
    %v9962 = vpack.c.b16 %v9921, %v9920
    %v9963 = vpack.c.b16 %v9923, %v9922
    %v9964 = vpack.c.b16 %v9925, %v9924
    %v9965 = vpack.c.b16 %v9927, %v9926
    %v9966 = vpack.c.b16 %v9929, %v9928
    %v9967 = vpack.c.b16 %v9931, %v9930
    %v9968 = vpack.c.b16 %v9933, %v9932
    %v9969 = vpack.c.b16 %v9935, %v9934
    %v9970 = vpack.c.b16 %v9937, %v9936
    %v9971 = vpack.c.b16 %v9939, %v9938
    %v9972 = vpack.c.b16 %v9941, %v9940
    %v9973 = vpack.c.b16 %v9943, %v9942
    %v9974 = vpack.c.b16 %v9945, %v9944
    %v9975 = vpack.c.b16 %v9947, %v9946
    %v9976 = vpack.c.b16 %v9949, %v9948
    %v9977 = vpack.c.b16 %v9951, %v9950
    %v9978 = vpack.c.b16 %v9953, %v9952
    %v9979 = vpack.c.b16 %v9955, %v9954
    %10004 = vmatprep.subr.bf16.mxu0 0
    %10005 = vmatpush1.bf16.msra.mxu0 %v9956
    %10006 = vmatprep.subr.bf16.mxu0 0
    %10007 = vmatpush1.bf16.msra.mxu0 %v9957
    %10008 = vmatprep.subr.bf16.mxu0 0
    %10009 = vmatpush1.bf16.msra.mxu0 %v9958
    %10010 = vmatprep.subr.bf16.mxu0 0
    %10011 = vmatpush1.bf16.msra.mxu0 %v9959
    %10012 = vmatprep.subr.bf16.mxu0 0
    %10013 = vmatpush1.bf16.msra.mxu0 %v9960
    %10014 = vmatprep.subr.bf16.mxu0 0
    %10015 = vmatpush1.bf16.msra.mxu0 %v9961
    %10016 = vmatprep.subr.bf16.mxu0 0
    %10017 = vmatpush1.bf16.msra.mxu0 %v9962
    %10018 = vmatprep.subr.bf16.mxu0 0
    %10019 = vmatpush1.bf16.msra.mxu0 %v9963
    %10020 = vmatprep.subr.bf16.mxu0 0
    %10021 = vmatpush1.bf16.msra.mxu0 %v9964
    %10022 = vmatprep.subr.bf16.mxu0 0
    %10023 = vmatpush1.bf16.msra.mxu0 %v9965
    %10024 = vmatprep.subr.bf16.mxu0 0
    %10025 = vmatpush1.bf16.msra.mxu0 %v9966
    %10026 = vmatprep.subr.bf16.mxu0 0
    %10027 = vmatpush1.bf16.msra.mxu0 %v9967
    %10028 = vmatprep.subr.bf16.mxu0 0
    %10029 = vmatpush1.bf16.msra.mxu0 %v9968
    %10030 = vmatprep.subr.bf16.mxu0 0
    %10031 = vmatpush1.bf16.msra.mxu0 %v9969
    %10032 = vmatprep.subr.bf16.mxu0 0
    %10033 = vmatpush1.bf16.msra.mxu0 %v9970
    %10034 = vmatprep.subr.bf16.mxu0 0
    %10035 = vmatpush1.bf16.msra.mxu0 %v9971
    %10036 = vmatprep.mubr.bf16.mxu0 %v9331
    %10037 = vmatmul.mubr.bf16.gmra.mrb[0].mxu0 %v9330
    %v10038 = vpop.f32.mrb[0].mxu0
    %v10039 = vadd.f32 %v9798, %v10038
    %v10040 = vpop.f32.mrb[0].mxu0
    %v10041 = vpop.f32.mrb[0].mxu0
    %v10042 = vadd.f32 %v9801, %v10041
    %v10043 = vpop.f32.mrb[0].mxu0
    %10044 = vmatprep.mubr.bf16.mxu0 %v9334
    %10045 = vmatmul.mubr.bf16.gmra.mrb[0].mxu0 %v9333
    %v10046 = vpop.f32.mrb[0].mxu0
    %v10047 = vadd.f32 %v9806, %v10046
    %v10048 = vpop.f32.mrb[0].mxu0
    %v10049 = vpop.f32.mrb[0].mxu0
    %v10050 = vadd.f32 %v9809, %v10049
    %v10051 = vpop.f32.mrb[0].mxu0
    %10052 = vmatprep.mubr.bf16.mxu0 %v9337
    %10053 = vmatmul.mubr.bf16.gmra.mrb[0].mxu0 %v9336
    %v10054 = vpop.f32.mrb[0].mxu0
    %v10055 = vadd.f32 %v9814, %v10054
    %v10056 = vpop.f32.mrb[0].mxu0
    %v10057 = vpop.f32.mrb[0].mxu0
    %v10058 = vadd.f32 %v9817, %v10057
    %v10059 = vpop.f32.mrb[0].mxu0
    %10060 = vmatprep.mubr.bf16.mxu0 %v9340
    %10061 = vmatmul.mubr.bf16.gmra.mrb[0].mxu0 %v9339
    %v10062 = vpop.f32.mrb[0].mxu0
    %v10063 = vadd.f32 %v9822, %v10062
    %v10064 = vpop.f32.mrb[0].mxu0
    %v10065 = vpop.f32.mrb[0].mxu0
    %v10066 = vadd.f32 %v9825, %v10065
    %v10067 = vpop.f32.mrb[0].mxu0
    %10068 = vmatprep.mubr.bf16.mxu0 %v9343
    %10069 = vmatmul.mubr.bf16.gmra.mrb[0].mxu0 %v9342
    %v10070 = vpop.f32.mrb[0].mxu0
    %v10071 = vadd.f32 %v9830, %v10070
    %v10072 = vpop.f32.mrb[0].mxu0
    %v10073 = vpop.f32.mrb[0].mxu0
    %v10074 = vadd.f32 %v9833, %v10073
    %v10075 = vpop.f32.mrb[0].mxu0
    %10076 = vmatprep.mubr.bf16.mxu0 %v9346
    %10077 = vmatmul.mubr.bf16.gmra.mrb[0].mxu0 %v9345
    %v10078 = vpop.f32.mrb[0].mxu0
    %v10079 = vadd.f32 %v9838, %v10078
    %v10080 = vpop.f32.mrb[0].mxu0
    %v10081 = vpop.f32.mrb[0].mxu0
    %v10082 = vadd.f32 %v9841, %v10081
    %v10083 = vpop.f32.mrb[0].mxu0
    %10084 = vmatprep.mubr.bf16.mxu0 %v9349
    %10085 = vmatmul.mubr.bf16.gmra.mrb[0].mxu0 %v9348
    %v10086 = vpop.f32.mrb[0].mxu0
    %v10087 = vadd.f32 %v9846, %v10086
    %v10088 = vpop.f32.mrb[0].mxu0
    %v10089 = vpop.f32.mrb[0].mxu0
    %v10090 = vadd.f32 %v9849, %v10089
    %v10091 = vpop.f32.mrb[0].mxu0
    %10092 = vmatprep.mubr.bf16.mxu0 %v9352
    %10093 = vmatmul.mubr.bf16.gmra.mrb[0].mxu0 %v9351
    %v10094 = vpop.f32.mrb[0].mxu0
    %v10095 = vadd.f32 %v9854, %v10094
    %v10096 = vpop.f32.mrb[0].mxu0
    %v10097 = vpop.f32.mrb[0].mxu0
    %v10098 = vadd.f32 %v9857, %v10097
    %v10099 = vpop.f32.mrb[0].mxu0
    %10100 = vdwg.mxu0
    %10101 = vmatprep.subr.bf16.mxu0 0
    %10102 = vmatpush1.bf16.msra.mxu0 %v9972
    %10103 = vmatprep.subr.bf16.mxu0 0
    %10104 = vmatpush1.bf16.msra.mxu0 %v9973
    %10105 = vmatprep.subr.bf16.mxu0 0
    %10106 = vmatpush1.bf16.msra.mxu0 %v9974
    %10107 = vmatprep.subr.bf16.mxu0 0
    %10108 = vmatpush1.bf16.msra.mxu0 %v9975
    %10109 = vmatprep.subr.bf16.mxu0 0
    %10110 = vmatpush1.bf16.msra.mxu0 %v9976
    %10111 = vmatprep.subr.bf16.mxu0 0
    %10112 = vmatpush1.bf16.msra.mxu0 %v9977
    %10113 = vmatprep.subr.bf16.mxu0 0
    %10114 = vmatpush1.bf16.msra.mxu0 %v9978
    %10115 = vmatprep.subr.bf16.mxu0 0
    %10116 = vmatpush1.bf16.msra.mxu0 %v9979
    %10117 = vmatprep.subr.bf16.mxu0 0
    %10118 = vmatpush1.bf16.msra.mxu0 0
    %10119 = vmatprep.subr.bf16.mxu0 0
    %10120 = vmatpush1.bf16.msra.mxu0 0
    %10121 = vmatprep.subr.bf16.mxu0 0
    %10122 = vmatpush1.bf16.msra.mxu0 0
    %10123 = vmatprep.subr.bf16.mxu0 0
    %10124 = vmatpush1.bf16.msra.mxu0 0
    %10125 = vmatprep.subr.bf16.mxu0 0
    %10126 = vmatpush1.bf16.msra.mxu0 0
    %10127 = vmatprep.subr.bf16.mxu0 0
    %10128 = vmatpush1.bf16.msra.mxu0 0
    %10129 = vmatprep.subr.bf16.mxu0 0
    %10130 = vmatpush1.bf16.msra.mxu0 0
    %10131 = vmatprep.subr.bf16.mxu0 0
    %10132 = vmatpush1.bf16.msra.mxu0 0
    %10133 = vmatprep.mubr.bf16.mxu0 0
    %10134 = vmatmul.mubr.bf16.gmra.mrb[0].mxu0 %v9332
    %v10135 = vpop.f32.mrb[0].mxu0
    %v10136 = vadd.f32 %v10039, %v10135
    %v10137 = vpop.f32.mrb[0].mxu0
    %v10138 = vpop.f32.mrb[0].mxu0
    %v10139 = vadd.f32 %v10042, %v10138
    %v10140 = vpop.f32.mrb[0].mxu0
    %10141 = vmatprep.mubr.bf16.mxu0 0
    %10142 = vmatmul.mubr.bf16.gmra.mrb[0].mxu0 %v9335
    %v10143 = vpop.f32.mrb[0].mxu0
    %v10144 = vadd.f32 %v10047, %v10143
    %v10145 = vpop.f32.mrb[0].mxu0
    %v10146 = vpop.f32.mrb[0].mxu0
    %v10147 = vadd.f32 %v10050, %v10146
    %v10148 = vpop.f32.mrb[0].mxu0
    %10149 = vmatprep.mubr.bf16.mxu0 0
    %10150 = vmatmul.mubr.bf16.gmra.mrb[0].mxu0 %v9338
    %v10151 = vpop.f32.mrb[0].mxu0
    %v10152 = vadd.f32 %v10055, %v10151
    %v10153 = vpop.f32.mrb[0].mxu0
    %v10154 = vpop.f32.mrb[0].mxu0
    %v10155 = vadd.f32 %v10058, %v10154
    %v10156 = vpop.f32.mrb[0].mxu0
    %10157 = vmatprep.mubr.bf16.mxu0 0
    %10158 = vmatmul.mubr.bf16.gmra.mrb[0].mxu0 %v9341
    %v10159 = vpop.f32.mrb[0].mxu0
    %v10160 = vadd.f32 %v10063, %v10159
    %v10161 = vpop.f32.mrb[0].mxu0
    %v10162 = vpop.f32.mrb[0].mxu0
    %v10163 = vadd.f32 %v10066, %v10162
    %v10164 = vpop.f32.mrb[0].mxu0
    %10165 = vmatprep.mubr.bf16.mxu0 0
    %10166 = vmatmul.mubr.bf16.gmra.mrb[0].mxu0 %v9344
    %v10167 = vpop.f32.mrb[0].mxu0
    %v10168 = vadd.f32 %v10071, %v10167
    %v10169 = vpop.f32.mrb[0].mxu0
    %v10170 = vpop.f32.mrb[0].mxu0
    %v10171 = vadd.f32 %v10074, %v10170
    %v10172 = vpop.f32.mrb[0].mxu0
    %10173 = vmatprep.mubr.bf16.mxu0 0
    %10174 = vmatmul.mubr.bf16.gmra.mrb[0].mxu0 %v9347
    %v10175 = vpop.f32.mrb[0].mxu0
    %v10176 = vadd.f32 %v10079, %v10175
    %v10177 = vpop.f32.mrb[0].mxu0
    %v10178 = vpop.f32.mrb[0].mxu0
    %v10179 = vadd.f32 %v10082, %v10178
    %v10180 = vpop.f32.mrb[0].mxu0
    %10181 = vmatprep.mubr.bf16.mxu0 0
    %10182 = vmatmul.mubr.bf16.gmra.mrb[0].mxu0 %v9350
    %v10183 = vpop.f32.mrb[0].mxu0
    %v10184 = vadd.f32 %v10087, %v10183
    %v10185 = vpop.f32.mrb[0].mxu0
    %v10186 = vpop.f32.mrb[0].mxu0
    %v10187 = vadd.f32 %v10090, %v10186
    %v10188 = vpop.f32.mrb[0].mxu0
    %10189 = vmatprep.mubr.bf16.mxu0 0
    %10190 = vmatmul.mubr.bf16.gmra.mrb[0].mxu0 %v9353
    %v10191 = vpop.f32.mrb[0].mxu0
    %v10192 = vadd.f32 %v10095, %v10191
    %v10193 = vpop.f32.mrb[0].mxu0
    %v10194 = vpop.f32.mrb[0].mxu0
    %v10195 = vadd.f32 %v10098, %v10194
    %v10196 = vpop.f32.mrb[0].mxu0
    %10197 = vdwg.mxu0
    %v10198 = vld [vmem:[%s1193] sm:$0xff]
    %v10199 = vld [vmem:[%s1193 + $0x8] sm:$0xff]
    %v10200 = vld [vmem:[%s1193 + $0x10] sm:$0xff]
    %v10201 = vld [vmem:[%s1193 + $0x18] sm:$0xff]
    %v10202 = vld [vmem:[%s1193 + $0x20] sm:$0xff]
    %v10203 = vld [vmem:[%s1193 + $0x28] sm:$0xff]
    %v10204 = vld [vmem:[%s1193 + $0x30] sm:$0xff]
    %v10205 = vld [vmem:[%s1193 + $0x38] sm:$0xff]
    %v10206 = vld [vmem:[%s1193 + $0x40] sm:$0xff]
    %v10207 = vld [vmem:[%s1193 + $0x48] sm:$0xff]
    %v10208 = vld [vmem:[%s1193 + $0x50] sm:$0xff]
    %v10209 = vld [vmem:[%s1193 + $0x58] sm:$0xff]
    %v10210 = vld [vmem:[%s1193 + $0x60] sm:$0xff]
    %v10211 = vld [vmem:[%s1193 + $0x68] sm:$0xff]
    %v10212 = vld [vmem:[%s1193 + $0x70] sm:$0xff]
    %v10213 = vld [vmem:[%s1193 + $0x78] sm:$0xff]
    %v10214 = vld [vmem:[%s1193 + $0x80] sm:$0xff]
    %v10215 = vld [vmem:[%s1193 + $0x88] sm:$0xff]
    %v10216 = vld [vmem:[%s1193 + $0x90] sm:$0xff]
    %v10217 = vld [vmem:[%s1193 + $0x98] sm:$0xff]
    %v10218 = vld [vmem:[%s1193 + $0xa0] sm:$0xff]
    %v10219 = vld [vmem:[%s1193 + $0xa8] sm:$0xff]
    %v10220 = vld [vmem:[%s1193 + $0xb0] sm:$0xff]
    %v10221 = vld [vmem:[%s1193 + $0xb8] sm:$0xff]
    %v10222 = vld [vmem:[%s1193 + $0xf0] sm:$0xff]
    %v10223 = vld [vmem:[%s1193 + $0xf8] sm:$0xff]
    %v10224 = vld [vmem:[%s1193 + $0x100] sm:$0xff]
    %v10225 = vld [vmem:[%s1193 + $0x108] sm:$0xff]
    %v10226 = vld [vmem:[%s1193 + $0x110] sm:$0xff]
    %v10227 = vld [vmem:[%s1193 + $0x118] sm:$0xff]
    %v10228 = vld [vmem:[%s1193 + $0x120] sm:$0xff]
    %v10229 = vld [vmem:[%s1193 + $0x128] sm:$0xff]
    %v10230 = vld [vmem:[%s1193 + $0x130] sm:$0xff]
    %v10231 = vld [vmem:[%s1193 + $0x138] sm:$0xff]
    %v10232 = vld [vmem:[%s1193 + $0x140] sm:$0xff]
    %v10233 = vld [vmem:[%s1193 + $0x148] sm:$0xff]
    %v10234 = vld [vmem:[%s1193 + $0x150] sm:$0xff]
    %v10235 = vld [vmem:[%s1193 + $0x158] sm:$0xff]
    %v10236 = vld [vmem:[%s1193 + $0x160] sm:$0xff]
    %v10237 = vld [vmem:[%s1193 + $0x168] sm:$0xff]
    %v10238 = vld [vmem:[%s1193 + $0x170] sm:$0xff]
    %v10239 = vld [vmem:[%s1193 + $0x178] sm:$0xff]
    %v10240 = vld [vmem:[%s1193 + $0x180] sm:$0xff]
    %v10241 = vld [vmem:[%s1193 + $0x188] sm:$0xff]
    %v10242 = vld [vmem:[%s1193 + $0x190] sm:$0xff]
    %v10243 = vld [vmem:[%s1193 + $0x198] sm:$0xff]
    %v10244 = vld [vmem:[%s1193 + $0x1a0] sm:$0xff]
    %v10245 = vld [vmem:[%s1193 + $0x1a8] sm:$0xff]
    %v10246 = vpack.c.bf16 %v10201, %v10198
    %v10247 = vpack.c.bf16 %v10202, %v10199
    %v10248 = vpack.c.bf16 %v10203, %v10200
    %v10249 = vpack.c.bf16 %v10207, %v10204
    %v10250 = vpack.c.bf16 %v10208, %v10205
    %v10251 = vpack.c.bf16 %v10209, %v10206
    %v10252 = vpack.c.bf16 %v10213, %v10210
    %v10253 = vpack.c.bf16 %v10214, %v10211
    %v10254 = vpack.c.bf16 %v10215, %v10212
    %v10255 = vpack.c.bf16 %v10219, %v10216
    %v10256 = vpack.c.bf16 %v10220, %v10217
    %v10257 = vpack.c.bf16 %v10221, %v10218
    %v10258 = vpack.c.bf16 %v10225, %v10222
    %v10259 = vpack.c.bf16 %v10226, %v10223
    %v10260 = vpack.c.bf16 %v10227, %v10224
    %v10261 = vpack.c.bf16 %v10231, %v10228
    %v10262 = vpack.c.bf16 %v10232, %v10229
    %v10263 = vpack.c.bf16 %v10233, %v10230
    %v10264 = vpack.c.bf16 %v10237, %v10234
    %v10265 = vpack.c.bf16 %v10238, %v10235
    %v10266 = vpack.c.bf16 %v10239, %v10236
    %v10267 = vpack.c.bf16 %v10243, %v10240
    %v10268 = vpack.c.bf16 %v10244, %v10241
    %v10269 = vpack.c.bf16 %v10245, %v10242
    %v10270 = vld [vmem:[%s1266] sm:$0xf]
    %v10271 = vld [vmem:[%s1266 + $0x4] sm:$0xf]
    %v10272 = vld [vmem:[%s1266 + $0x8] sm:$0xf]
    %v10273 = vld [vmem:[%s1266 + $0xc] sm:$0xf]
    %v10274 = vld [vmem:[%s1266 + $0x10] sm:$0xf]
    %v10275 = vld [vmem:[%s1266 + $0x14] sm:$0xf]
    %v10276 = vld [vmem:[%s1266 + $0x18] sm:$0xf]
    %v10277 = vld [vmem:[%s1266 + $0x1c] sm:$0xf]
    %v10278 = vld [vmem:[%s1266 + $0x20] sm:$0xf]
    %v10279 = vld [vmem:[%s1266 + $0x24] sm:$0xf]
    %v10280 = vld [vmem:[%s1266 + $0x28] sm:$0xf]
    %v10281 = vld [vmem:[%s1266 + $0x2c] sm:$0xf]
    %v10282 = vld [vmem:[%s1266 + $0x30] sm:$0xf]
    %v10283 = vld [vmem:[%s1266 + $0x34] sm:$0xf]
    %v10284 = vld [vmem:[%s1266 + $0x38] sm:$0xf]
    %v10285 = vld [vmem:[%s1266 + $0x3c] sm:$0xf]
    %v10286 = vld [vmem:[%s1266 + $0x40] sm:$0xf]
    %v10287 = vld [vmem:[%s1266 + $0x44] sm:$0xf]
    %v10288 = vld [vmem:[%s1266 + $0x48] sm:$0xf]
    %v10289 = vld [vmem:[%s1266 + $0x4c] sm:$0xf]
    %v10290 = vld [vmem:[%s1266 + $0x50] sm:$0xf]
    %v10291 = vld [vmem:[%s1266 + $0x54] sm:$0xf]
    %v10292 = vld [vmem:[%s1266 + $0x58] sm:$0xf]
    %v10293 = vld [vmem:[%s1266 + $0x5c] sm:$0xf]
    %v10294 = vld [vmem:[%s1266 + $0x60] sm:$0xf]
    %v10295 = vld [vmem:[%s1266 + $0x64] sm:$0xf]
    %v10296 = vld [vmem:[%s1266 + $0x68] sm:$0xf]
    %v10297 = vld [vmem:[%s1266 + $0x6c] sm:$0xf]
    %v10298 = vld [vmem:[%s1266 + $0x70] sm:$0xf]
    %v10299 = vld [vmem:[%s1266 + $0x74] sm:$0xf]
    %v10300 = vld [vmem:[%s1266 + $0x78] sm:$0xf]
    %v10301 = vld [vmem:[%s1266 + $0x7c] sm:$0xf]
    %v10302 = vld [vmem:[%s1266 + $0x80] sm:$0xf]
    %v10303 = vld [vmem:[%s1266 + $0x84] sm:$0xf]
    %v10304 = vld [vmem:[%s1266 + $0x88] sm:$0xf]
    %v10305 = vld [vmem:[%s1266 + $0x8c] sm:$0xf]
    %v10306 = vld [vmem:[%s1266 + $0x90] sm:$0xf]
    %v10307 = vld [vmem:[%s1266 + $0x94] sm:$0xf]
    %v10308 = vld [vmem:[%s1266 + $0x98] sm:$0xf]
    %v10309 = vld [vmem:[%s1266 + $0x9c] sm:$0xf]
    %v10310 = vld [vmem:[%s1266 + $0xa0] sm:$0xf]
    %v10311 = vld [vmem:[%s1266 + $0xa4] sm:$0xf]
    %v10312 = vld [vmem:[%s1266 + $0xa8] sm:$0xf]
    %v10313 = vld [vmem:[%s1266 + $0xac] sm:$0xf]
    %v10314 = vld [vmem:[%s1266 + $0xb0] sm:$0xf]
    %v10315 = vld [vmem:[%s1266 + $0xb4] sm:$0xf]
    %v10316 = vld [vmem:[%s1266 + $0xb8] sm:$0xf]
    %v10317 = vld [vmem:[%s1266 + $0xbc] sm:$0xf]
    %v10366 = vunpack.c.l.b16 %v10270
    %v10367 = vunpack.c.l.b16 %v10271
    %v10368 = vunpack.c.l.b16 %v10272
    %v10369 = vunpack.c.l.b16 %v10273
    %v10370 = vunpack.c.l.b16 %v10274
    %v10371 = vunpack.c.l.b16 %v10275
    %v10372 = vunpack.c.l.b16 %v10276
    %v10373 = vunpack.c.l.b16 %v10277
    %v10374 = vunpack.c.l.b16 %v10278
    %v10375 = vunpack.c.l.b16 %v10279
    %v10376 = vunpack.c.l.b16 %v10280
    %v10377 = vunpack.c.l.b16 %v10281
    %v10378 = vunpack.c.l.b16 %v10282
    %v10379 = vunpack.c.l.b16 %v10283
    %v10380 = vunpack.c.l.b16 %v10284
    %v10381 = vunpack.c.l.b16 %v10285
    %v10382 = vunpack.c.l.b16 %v10286
    %v10383 = vunpack.c.l.b16 %v10287
    %v10384 = vunpack.c.l.b16 %v10288
    %v10385 = vunpack.c.l.b16 %v10289
    %v10386 = vunpack.c.l.b16 %v10290
    %v10387 = vunpack.c.l.b16 %v10291
    %v10388 = vunpack.c.l.b16 %v10292
    %v10389 = vunpack.c.l.b16 %v10293
    %v10390 = vunpack.c.l.b16 %v10294
    %v10391 = vunpack.c.l.b16 %v10295
    %v10392 = vunpack.c.l.b16 %v10296
    %v10393 = vunpack.c.l.b16 %v10297
    %v10394 = vunpack.c.l.b16 %v10298
    %v10395 = vunpack.c.l.b16 %v10299
    %v10396 = vunpack.c.l.b16 %v10300
    %v10397 = vunpack.c.l.b16 %v10301
    %v10398 = vunpack.c.l.b16 %v10302
    %v10399 = vunpack.c.l.b16 %v10303
    %v10400 = vunpack.c.l.b16 %v10304
    %v10401 = vunpack.c.l.b16 %v10305
    %v10402 = vunpack.c.l.b16 %v10306
    %v10403 = vunpack.c.l.b16 %v10307
    %v10404 = vunpack.c.l.b16 %v10308
    %v10405 = vunpack.c.l.b16 %v10309
    %v10406 = vunpack.c.l.b16 %v10310
    %v10407 = vunpack.c.l.b16 %v10311
    %v10408 = vunpack.c.l.b16 %v10312
    %v10409 = vunpack.c.l.b16 %v10313
    %v10410 = vunpack.c.l.b16 %v10314
    %v10411 = vunpack.c.l.b16 %v10315
    %v10412 = vunpack.c.l.b16 %v10316
    %v10413 = vunpack.c.l.b16 %v10317
    %v10414 = vpack.c.b16 %v10367, %v10366
    %v10415 = vpack.c.b16 %v10369, %v10368
    %v10416 = vpack.c.b16 %v10371, %v10370
    %v10417 = vpack.c.b16 %v10373, %v10372
    %v10418 = vpack.c.b16 %v10375, %v10374
    %v10419 = vpack.c.b16 %v10377, %v10376
    %v10420 = vpack.c.b16 %v10379, %v10378
    %v10421 = vpack.c.b16 %v10381, %v10380
    %v10422 = vpack.c.b16 %v10383, %v10382
    %v10423 = vpack.c.b16 %v10385, %v10384
    %v10424 = vpack.c.b16 %v10387, %v10386
    %v10425 = vpack.c.b16 %v10389, %v10388
    %v10426 = vpack.c.b16 %v10391, %v10390
    %v10427 = vpack.c.b16 %v10393, %v10392
    %v10428 = vpack.c.b16 %v10395, %v10394
    %v10429 = vpack.c.b16 %v10397, %v10396
    %v10430 = vpack.c.b16 %v10399, %v10398
    %v10431 = vpack.c.b16 %v10401, %v10400
    %v10432 = vpack.c.b16 %v10403, %v10402
    %v10433 = vpack.c.b16 %v10405, %v10404
    %v10434 = vpack.c.b16 %v10407, %v10406
    %v10435 = vpack.c.b16 %v10409, %v10408
    %v10436 = vpack.c.b16 %v10411, %v10410
    %v10437 = vpack.c.b16 %v10413, %v10412
    %10462 = vmatprep.subr.bf16.mxu0 0
    %10463 = vmatpush1.bf16.msra.mxu0 %v10414
    %10464 = vmatprep.subr.bf16.mxu0 0
    %10465 = vmatpush1.bf16.msra.mxu0 %v10415
    %10466 = vmatprep.subr.bf16.mxu0 0
    %10467 = vmatpush1.bf16.msra.mxu0 %v10416
    %10468 = vmatprep.subr.bf16.mxu0 0
    %10469 = vmatpush1.bf16.msra.mxu0 %v10417
    %10470 = vmatprep.subr.bf16.mxu0 0
    %10471 = vmatpush1.bf16.msra.mxu0 %v10418
    %10472 = vmatprep.subr.bf16.mxu0 0
    %10473 = vmatpush1.bf16.msra.mxu0 %v10419
    %10474 = vmatprep.subr.bf16.mxu0 0
    %10475 = vmatpush1.bf16.msra.mxu0 %v10420
    %10476 = vmatprep.subr.bf16.mxu0 0
    %10477 = vmatpush1.bf16.msra.mxu0 %v10421
    %10478 = vmatprep.subr.bf16.mxu0 0
    %10479 = vmatpush1.bf16.msra.mxu0 %v10422
    %10480 = vmatprep.subr.bf16.mxu0 0
    %10481 = vmatpush1.bf16.msra.mxu0 %v10423
    %10482 = vmatprep.subr.bf16.mxu0 0
    %10483 = vmatpush1.bf16.msra.mxu0 %v10424
    %10484 = vmatprep.subr.bf16.mxu0 0
    %10485 = vmatpush1.bf16.msra.mxu0 %v10425
    %10486 = vmatprep.subr.bf16.mxu0 0
    %10487 = vmatpush1.bf16.msra.mxu0 %v10426
    %10488 = vmatprep.subr.bf16.mxu0 0
    %10489 = vmatpush1.bf16.msra.mxu0 %v10427
    %10490 = vmatprep.subr.bf16.mxu0 0
    %10491 = vmatpush1.bf16.msra.mxu0 %v10428
    %10492 = vmatprep.subr.bf16.mxu0 0
    %10493 = vmatpush1.bf16.msra.mxu0 %v10429
    %10494 = vmatprep.mubr.bf16.mxu0 %v10247
    %10495 = vmatmul.mubr.bf16.gmra.mrb[0].mxu0 %v10246
    %v10496 = vpop.f32.mrb[0].mxu0
    %v10497 = vadd.f32 0.0, %v10496
    %v10498 = vpop.f32.mrb[0].mxu0
    %v10499 = vpop.f32.mrb[0].mxu0
    %v10500 = vadd.f32 0.0, %v10499
    %v10501 = vpop.f32.mrb[0].mxu0
    %10502 = vmatprep.mubr.bf16.mxu0 %v10250
    %10503 = vmatmul.mubr.bf16.gmra.mrb[0].mxu0 %v10249
    %v10504 = vpop.f32.mrb[0].mxu0
    %v10505 = vadd.f32 0.0, %v10504
    %v10506 = vpop.f32.mrb[0].mxu0
    %v10507 = vpop.f32.mrb[0].mxu0
    %v10508 = vadd.f32 0.0, %v10507
    %v10509 = vpop.f32.mrb[0].mxu0
    %10510 = vmatprep.mubr.bf16.mxu0 %v10253
    %10511 = vmatmul.mubr.bf16.gmra.mrb[0].mxu0 %v10252
    %v10512 = vpop.f32.mrb[0].mxu0
    %v10513 = vadd.f32 0.0, %v10512
    %v10514 = vpop.f32.mrb[0].mxu0
    %v10515 = vpop.f32.mrb[0].mxu0
    %v10516 = vadd.f32 0.0, %v10515
    %v10517 = vpop.f32.mrb[0].mxu0
    %10518 = vmatprep.mubr.bf16.mxu0 %v10256
    %10519 = vmatmul.mubr.bf16.gmra.mrb[0].mxu0 %v10255
    %v10520 = vpop.f32.mrb[0].mxu0
    %v10521 = vadd.f32 0.0, %v10520
    %v10522 = vpop.f32.mrb[0].mxu0
    %v10523 = vpop.f32.mrb[0].mxu0
    %v10524 = vadd.f32 0.0, %v10523
    %v10525 = vpop.f32.mrb[0].mxu0
    %10526 = vmatprep.mubr.bf16.mxu0 %v10259
    %10527 = vmatmul.mubr.bf16.gmra.mrb[0].mxu0 %v10258
    %v10528 = vpop.f32.mrb[0].mxu0
    %v10529 = vadd.f32 0.0, %v10528
    %v10530 = vpop.f32.mrb[0].mxu0
    %v10531 = vpop.f32.mrb[0].mxu0
    %v10532 = vadd.f32 0.0, %v10531
    %v10533 = vpop.f32.mrb[0].mxu0
    %10534 = vmatprep.mubr.bf16.mxu0 %v10262
    %10535 = vmatmul.mubr.bf16.gmra.mrb[0].mxu0 %v10261
    %v10536 = vpop.f32.mrb[0].mxu0
    %v10537 = vadd.f32 0.0, %v10536
    %v10538 = vpop.f32.mrb[0].mxu0
    %v10539 = vpop.f32.mrb[0].mxu0
    %v10540 = vadd.f32 0.0, %v10539
    %v10541 = vpop.f32.mrb[0].mxu0
    %10542 = vmatprep.mubr.bf16.mxu0 %v10265
    %10543 = vmatmul.mubr.bf16.gmra.mrb[0].mxu0 %v10264
    %v10544 = vpop.f32.mrb[0].mxu0
    %v10545 = vadd.f32 0.0, %v10544
    %v10546 = vpop.f32.mrb[0].mxu0
    %v10547 = vpop.f32.mrb[0].mxu0
    %v10548 = vadd.f32 0.0, %v10547
    %v10549 = vpop.f32.mrb[0].mxu0
    %10550 = vmatprep.mubr.bf16.mxu0 %v10268
    %10551 = vmatmul.mubr.bf16.gmra.mrb[0].mxu0 %v10267
    %v10552 = vpop.f32.mrb[0].mxu0
    %v10553 = vadd.f32 0.0, %v10552
    %v10554 = vpop.f32.mrb[0].mxu0
    %v10555 = vpop.f32.mrb[0].mxu0
    %v10556 = vadd.f32 0.0, %v10555
    %v10557 = vpop.f32.mrb[0].mxu0
    %10558 = vdwg.mxu0
    %10559 = vmatprep.subr.bf16.mxu0 0
    %10560 = vmatpush1.bf16.msra.mxu0 %v10430
    %10561 = vmatprep.subr.bf16.mxu0 0
    %10562 = vmatpush1.bf16.msra.mxu0 %v10431
    %10563 = vmatprep.subr.bf16.mxu0 0
    %10564 = vmatpush1.bf16.msra.mxu0 %v10432
    %10565 = vmatprep.subr.bf16.mxu0 0
    %10566 = vmatpush1.bf16.msra.mxu0 %v10433
    %10567 = vmatprep.subr.bf16.mxu0 0
    %10568 = vmatpush1.bf16.msra.mxu0 %v10434
    %10569 = vmatprep.subr.bf16.mxu0 0
    %10570 = vmatpush1.bf16.msra.mxu0 %v10435
    %10571 = vmatprep.subr.bf16.mxu0 0
    %10572 = vmatpush1.bf16.msra.mxu0 %v10436
    %10573 = vmatprep.subr.bf16.mxu0 0
    %10574 = vmatpush1.bf16.msra.mxu0 %v10437
    %10575 = vmatprep.subr.bf16.mxu0 0
    %10576 = vmatpush1.bf16.msra.mxu0 0
    %10577 = vmatprep.subr.bf16.mxu0 0
    %10578 = vmatpush1.bf16.msra.mxu0 0
    %10579 = vmatprep.subr.bf16.mxu0 0
    %10580 = vmatpush1.bf16.msra.mxu0 0
    %10581 = vmatprep.subr.bf16.mxu0 0
    %10582 = vmatpush1.bf16.msra.mxu0 0
    %10583 = vmatprep.subr.bf16.mxu0 0
    %10584 = vmatpush1.bf16.msra.mxu0 0
    %10585 = vmatprep.subr.bf16.mxu0 0
    %10586 = vmatpush1.bf16.msra.mxu0 0
    %10587 = vmatprep.subr.bf16.mxu0 0
    %10588 = vmatpush1.bf16.msra.mxu0 0
    %10589 = vmatprep.subr.bf16.mxu0 0
    %10590 = vmatpush1.bf16.msra.mxu0 0
    %10591 = vmatprep.mubr.bf16.mxu0 0
    %10592 = vmatmul.mubr.bf16.gmra.mrb[0].mxu0 %v10248
    %v10593 = vpop.f32.mrb[0].mxu0
    %v10594 = vadd.f32 %v10497, %v10593
    %v10595 = vpop.f32.mrb[0].mxu0
    %v10596 = vpop.f32.mrb[0].mxu0
    %v10597 = vadd.f32 %v10500, %v10596
    %v10598 = vpop.f32.mrb[0].mxu0
    %10599 = vmatprep.mubr.bf16.mxu0 0
    %10600 = vmatmul.mubr.bf16.gmra.mrb[0].mxu0 %v10251
    %v10601 = vpop.f32.mrb[0].mxu0
    %v10602 = vadd.f32 %v10505, %v10601
    %v10603 = vpop.f32.mrb[0].mxu0
    %v10604 = vpop.f32.mrb[0].mxu0
    %v10605 = vadd.f32 %v10508, %v10604
    %v10606 = vpop.f32.mrb[0].mxu0
    %10607 = vmatprep.mubr.bf16.mxu0 0
    %10608 = vmatmul.mubr.bf16.gmra.mrb[0].mxu0 %v10254
    %v10609 = vpop.f32.mrb[0].mxu0
    %v10610 = vadd.f32 %v10513, %v10609
    %v10611 = vpop.f32.mrb[0].mxu0
    %v10612 = vpop.f32.mrb[0].mxu0
    %v10613 = vadd.f32 %v10516, %v10612
    %v10614 = vpop.f32.mrb[0].mxu0
    %10615 = vmatprep.mubr.bf16.mxu0 0
    %10616 = vmatmul.mubr.bf16.gmra.mrb[0].mxu0 %v10257
    %v10617 = vpop.f32.mrb[0].mxu0
    %v10618 = vadd.f32 %v10521, %v10617
    %v10619 = vpop.f32.mrb[0].mxu0
    %v10620 = vpop.f32.mrb[0].mxu0
    %v10621 = vadd.f32 %v10524, %v10620
    %v10622 = vpop.f32.mrb[0].mxu0
    %10623 = vmatprep.mubr.bf16.mxu0 0
    %10624 = vmatmul.mubr.bf16.gmra.mrb[0].mxu0 %v10260
    %v10625 = vpop.f32.mrb[0].mxu0
    %v10626 = vadd.f32 %v10529, %v10625
    %v10627 = vpop.f32.mrb[0].mxu0
    %v10628 = vpop.f32.mrb[0].mxu0
    %v10629 = vadd.f32 %v10532, %v10628
    %v10630 = vpop.f32.mrb[0].mxu0
    %10631 = vmatprep.mubr.bf16.mxu0 0
    %10632 = vmatmul.mubr.bf16.gmra.mrb[0].mxu0 %v10263
    %v10633 = vpop.f32.mrb[0].mxu0
    %v10634 = vadd.f32 %v10537, %v10633
    %v10635 = vpop.f32.mrb[0].mxu0
    %v10636 = vpop.f32.mrb[0].mxu0
    %v10637 = vadd.f32 %v10540, %v10636
    %v10638 = vpop.f32.mrb[0].mxu0
    %10639 = vmatprep.mubr.bf16.mxu0 0
    %10640 = vmatmul.mubr.bf16.gmra.mrb[0].mxu0 %v10266
    %v10641 = vpop.f32.mrb[0].mxu0
    %v10642 = vadd.f32 %v10545, %v10641
    %v10643 = vpop.f32.mrb[0].mxu0
    %v10644 = vpop.f32.mrb[0].mxu0
    %v10645 = vadd.f32 %v10548, %v10644
    %v10646 = vpop.f32.mrb[0].mxu0
    %10647 = vmatprep.mubr.bf16.mxu0 0
    %10648 = vmatmul.mubr.bf16.gmra.mrb[0].mxu0 %v10269
    %v10649 = vpop.f32.mrb[0].mxu0
    %v10650 = vadd.f32 %v10553, %v10649
    %v10651 = vpop.f32.mrb[0].mxu0
    %v10652 = vpop.f32.mrb[0].mxu0
    %v10653 = vadd.f32 %v10556, %v10652
    %v10654 = vpop.f32.mrb[0].mxu0
    %10655 = vdwg.mxu0
    %v10656 = vadd.f32 %v10136, %v10594
    %v10657 = vadd.f32 %v10139, %v10597
    %v10658 = vadd.f32 %v10144, %v10602
    %v10659 = vadd.f32 %v10147, %v10605
    %v10660 = vadd.f32 %v10152, %v10610
    %v10661 = vadd.f32 %v10155, %v10613
    %v10662 = vadd.f32 %v10160, %v10618
    %v10663 = vadd.f32 %v10163, %v10621
    %v10664 = vadd.f32 %v10168, %v10626
    %v10665 = vadd.f32 %v10171, %v10629
    %v10666 = vadd.f32 %v10176, %v10634
    %v10667 = vadd.f32 %v10179, %v10637
    %v10668 = vadd.f32 %v10184, %v10642
    %v10669 = vadd.f32 %v10187, %v10645
    %v10670 = vadd.f32 %v10192, %v10650
    %v10671 = vadd.f32 %v10195, %v10653
    %10672 = vmatprep.subr.mxu0 0.0
    %10673 = vmatpush1.msra.mxu0 %v10656
    %10674 = vmatprep.subr.mxu0 0.0
    %10675 = vmatpush1.msra.mxu0 %v10657
    %10676 = vmatprep.subr.mxu0 0.0
    %10677 = vmatpush1.msra.mxu0 %v10658
    %10678 = vmatprep.subr.mxu0 0.0
    %10679 = vmatpush1.msra.mxu0 %v10659
    %10680 = vmatprep.subr.mxu0 0.0
    %10681 = vmatpush1.msra.mxu0 %v10660
    %10682 = vmatprep.subr.mxu0 0.0
    %10683 = vmatpush1.msra.mxu0 %v10661
    %10684 = vmatprep.subr.mxu0 0.0
    %10685 = vmatpush1.msra.mxu0 %v10662
    %10686 = vmatprep.subr.mxu0 0.0
    %10687 = vmatpush1.msra.mxu0 %v10663
    %10688 = vmatprep.subr.mxu0 0.0
    %10689 = vmatpush1.msra.mxu0 %v10664
    %10690 = vmatprep.subr.mxu0 0.0
    %10691 = vmatpush1.msra.mxu0 %v10665
    %10692 = vmatprep.subr.mxu0 0.0
    %10693 = vmatpush1.msra.mxu0 %v10666
    %10694 = vmatprep.subr.mxu0 0.0
    %10695 = vmatpush1.msra.mxu0 %v10667
    %10696 = vmatprep.subr.mxu0 0.0
    %10697 = vmatpush1.msra.mxu0 %v10668
    %10698 = vmatprep.subr.mxu0 0.0
    %10699 = vmatpush1.msra.mxu0 %v10669
    %10700 = vmatprep.subr.mxu0 0.0
    %10701 = vmatpush1.msra.mxu0 %v10670
    %10702 = vmatprep.subr.mxu0 0.0
    %10703 = vmatpush1.msra.mxu0 %v10671
    %10704 = vmatprep.subr.mxu0 0.0
    %10705 = vmatpush1.msra.mxu0 0.0
    %10706 = vmatprep.subr.mxu0 0.0
    %10707 = vmatpush1.msra.mxu0 0.0
    %10708 = vmatprep.subr.mxu0 0.0
    %10709 = vmatpush1.msra.mxu0 0.0
    %10710 = vmatprep.subr.mxu0 0.0
    %10711 = vmatpush1.msra.mxu0 0.0
    %10712 = vmatprep.subr.mxu0 0.0
    %10713 = vmatpush1.msra.mxu0 0.0
    %10714 = vmatprep.subr.mxu0 0.0
    %10715 = vmatpush1.msra.mxu0 0.0
    %10716 = vmatprep.subr.mxu0 0.0
    %10717 = vmatpush1.msra.mxu0 0.0
    %10718 = vmatprep.subr.mxu0 0.0
    %10719 = vmatpush1.msra.mxu0 0.0
    %10720 = vmatprep.subr.mxu0 0.0
    %10721 = vmatpush1.msra.mxu0 0.0
    %10722 = vmatprep.subr.mxu0 0.0
    %10723 = vmatpush1.msra.mxu0 0.0
    %10724 = vmatprep.subr.mxu0 0.0
    %10725 = vmatpush1.msra.mxu0 0.0
    %10726 = vmatprep.subr.mxu0 0.0
    %10727 = vmatpush1.msra.mxu0 0.0
    %10728 = vmatprep.subr.mxu0 0.0
    %10729 = vmatpush1.msra.mxu0 0.0
    %10730 = vmatprep.subr.mxu0 0.0
    %10731 = vmatpush1.msra.mxu0 0.0
    %10732 = vmatprep.subr.mxu0 0.0
    %10733 = vmatpush1.msra.mxu0 0.0
    %10734 = vmatprep.subr.mxu0 0.0
    %10735 = vmatpush1.msra.mxu0 0.0
    %10736 = vmatprep.mubr.f32.mxu0 0.0
    %10737 = vmatmul.mubr.f32.gmra.mrb[0].mxu0 1.0
    %v10738 = vpop.f32.mrb[0].mxu0
    %v10739 = vadd.f32 0.0, %v10738
    %v10740 = vpop.f32.mrb[0].mxu0
    %10741 = vdwg.mxu0
    %v10742 = vmul.f32 %v10739, 0.0078125
    %v10743 = vlaneseq
    %v10744 = vshrl.u32 %v10743, 7
    %v10745 = vsub.s32 0, %v10744
    %v10746 = vrot.slane %v10742, %v10745
    %v10747 = vsub.f32 %v10656, %v10746
    %v10748 = vsub.f32 %v10657, %v10746
    %v10749 = vsub.f32 %v10658, %v10746
    %v10750 = vsub.f32 %v10659, %v10746
    %v10751 = vsub.f32 %v10660, %v10746
    %v10752 = vsub.f32 %v10661, %v10746
    %v10753 = vsub.f32 %v10662, %v10746
    %v10754 = vsub.f32 %v10663, %v10746
    %v10755 = vsub.f32 %v10664, %v10746
    %v10756 = vsub.f32 %v10665, %v10746
    %v10757 = vsub.f32 %v10666, %v10746
    %v10758 = vsub.f32 %v10667, %v10746
    %v10759 = vsub.f32 %v10668, %v10746
    %v10760 = vsub.f32 %v10669, %v10746
    %v10761 = vsub.f32 %v10670, %v10746
    %v10762 = vsub.f32 %v10671, %v10746
    %v10763 = vmul.f32 %v10747, %v10747
    %v10764 = vmul.f32 %v10748, %v10748
    %v10765 = vmul.f32 %v10749, %v10749
    %v10766 = vmul.f32 %v10750, %v10750
    %v10767 = vmul.f32 %v10751, %v10751
    %v10768 = vmul.f32 %v10752, %v10752
    %v10769 = vmul.f32 %v10753, %v10753
    %v10770 = vmul.f32 %v10754, %v10754
    %v10771 = vmul.f32 %v10755, %v10755
    %v10772 = vmul.f32 %v10756, %v10756
    %v10773 = vmul.f32 %v10757, %v10757
    %v10774 = vmul.f32 %v10758, %v10758
    %v10775 = vmul.f32 %v10759, %v10759
    %v10776 = vmul.f32 %v10760, %v10760
    %v10777 = vmul.f32 %v10761, %v10761
    %v10778 = vmul.f32 %v10762, %v10762
    %10779 = vmatprep.subr.mxu0 0.0
    %10780 = vmatpush1.msra.mxu0 %v10763
    %10781 = vmatprep.subr.mxu0 0.0
    %10782 = vmatpush1.msra.mxu0 %v10764
    %10783 = vmatprep.subr.mxu0 0.0
    %10784 = vmatpush1.msra.mxu0 %v10765
    %10785 = vmatprep.subr.mxu0 0.0
    %10786 = vmatpush1.msra.mxu0 %v10766
    %10787 = vmatprep.subr.mxu0 0.0
    %10788 = vmatpush1.msra.mxu0 %v10767
    %10789 = vmatprep.subr.mxu0 0.0
    %10790 = vmatpush1.msra.mxu0 %v10768
    %10791 = vmatprep.subr.mxu0 0.0
    %10792 = vmatpush1.msra.mxu0 %v10769
    %10793 = vmatprep.subr.mxu0 0.0
    %10794 = vmatpush1.msra.mxu0 %v10770
    %10795 = vmatprep.subr.mxu0 0.0
    %10796 = vmatpush1.msra.mxu0 %v10771
    %10797 = vmatprep.subr.mxu0 0.0
    %10798 = vmatpush1.msra.mxu0 %v10772
    %10799 = vmatprep.subr.mxu0 0.0
    %10800 = vmatpush1.msra.mxu0 %v10773
    %10801 = vmatprep.subr.mxu0 0.0
    %10802 = vmatpush1.msra.mxu0 %v10774
    %10803 = vmatprep.subr.mxu0 0.0
    %10804 = vmatpush1.msra.mxu0 %v10775
    %10805 = vmatprep.subr.mxu0 0.0
    %10806 = vmatpush1.msra.mxu0 %v10776
    %10807 = vmatprep.subr.mxu0 0.0
    %10808 = vmatpush1.msra.mxu0 %v10777
    %10809 = vmatprep.subr.mxu0 0.0
    %10810 = vmatpush1.msra.mxu0 %v10778
    %10811 = vmatprep.subr.mxu0 0.0
    %10812 = vmatpush1.msra.mxu0 0.0
    %10813 = vmatprep.subr.mxu0 0.0
    %10814 = vmatpush1.msra.mxu0 0.0
    %10815 = vmatprep.subr.mxu0 0.0
    %10816 = vmatpush1.msra.mxu0 0.0
    %10817 = vmatprep.subr.mxu0 0.0
    %10818 = vmatpush1.msra.mxu0 0.0
    %10819 = vmatprep.subr.mxu0 0.0
    %10820 = vmatpush1.msra.mxu0 0.0
    %10821 = vmatprep.subr.mxu0 0.0
    %10822 = vmatpush1.msra.mxu0 0.0
    %10823 = vmatprep.subr.mxu0 0.0
    %10824 = vmatpush1.msra.mxu0 0.0
    %10825 = vmatprep.subr.mxu0 0.0
    %10826 = vmatpush1.msra.mxu0 0.0
    %10827 = vmatprep.subr.mxu0 0.0
    %10828 = vmatpush1.msra.mxu0 0.0
    %10829 = vmatprep.subr.mxu0 0.0
    %10830 = vmatpush1.msra.mxu0 0.0
    %10831 = vmatprep.subr.mxu0 0.0
    %10832 = vmatpush1.msra.mxu0 0.0
    %10833 = vmatprep.subr.mxu0 0.0
    %10834 = vmatpush1.msra.mxu0 0.0
    %10835 = vmatprep.subr.mxu0 0.0
    %10836 = vmatpush1.msra.mxu0 0.0
    %10837 = vmatprep.subr.mxu0 0.0
    %10838 = vmatpush1.msra.mxu0 0.0
    %10839 = vmatprep.subr.mxu0 0.0
    %10840 = vmatpush1.msra.mxu0 0.0
    %10841 = vmatprep.subr.mxu0 0.0
    %10842 = vmatpush1.msra.mxu0 0.0
    %10843 = vmatprep.mubr.f32.mxu0 0.0
    %10844 = vmatmul.mubr.f32.gmra.mrb[0].mxu0 1.0
    %v10845 = vpop.f32.mrb[0].mxu0
    %v10846 = vadd.f32 0.0, %v10845
    %v10847 = vpop.f32.mrb[0].mxu0
    %10848 = vdwg.mxu0
    %v10849 = vmul.f32 %v10846, 0.0078125
    %v10850 = vadd.f32 %v10849, 1e-05
    %v10851 = vrsqrt.pop %v10850
    %v10852 = vlaneseq
    %v10853 = vshrl.u32 %v10852, 7
    %v10854 = vsub.s32 0, %v10853
    %v10855 = vrot.slane %v10851, %v10854
    %v10856 = vmul.f32 %v10747, %v10855
    %v10857 = vmul.f32 %v10748, %v10855
    %v10858 = vmul.f32 %v10749, %v10855
    %v10859 = vmul.f32 %v10750, %v10855
    %v10860 = vmul.f32 %v10751, %v10855
    %v10861 = vmul.f32 %v10752, %v10855
    %v10862 = vmul.f32 %v10753, %v10855
    %v10863 = vmul.f32 %v10754, %v10855
    %v10864 = vmul.f32 %v10755, %v10855
    %v10865 = vmul.f32 %v10756, %v10855
    %v10866 = vmul.f32 %v10757, %v10855
    %v10867 = vmul.f32 %v10758, %v10855
    %v10868 = vmul.f32 %v10759, %v10855
    %v10869 = vmul.f32 %v10760, %v10855
    %v10870 = vmul.f32 %v10761, %v10855
    %v10871 = vmul.f32 %v10762, %v10855
    %v10872 = vmul.f32 %v10856, %v1873
    %v10873 = vmul.f32 %v10857, %v1873
    %v10874 = vmul.f32 %v10858, %v1873
    %v10875 = vmul.f32 %v10859, %v1873
    %v10876 = vmul.f32 %v10860, %v1873
    %v10877 = vmul.f32 %v10861, %v1873
    %v10878 = vmul.f32 %v10862, %v1873
    %v10879 = vmul.f32 %v10863, %v1873
    %v10880 = vmul.f32 %v10864, %v1873
    %v10881 = vmul.f32 %v10865, %v1873
    %v10882 = vmul.f32 %v10866, %v1873
    %v10883 = vmul.f32 %v10867, %v1873
    %v10884 = vmul.f32 %v10868, %v1873
    %v10885 = vmul.f32 %v10869, %v1873
    %v10886 = vmul.f32 %v10870, %v1873
    %v10887 = vmul.f32 %v10871, %v1873
    %v10888 = vadd.f32 %v10872, %v1895
    %v10889 = vadd.f32 %v10873, %v1895
    %v10890 = vadd.f32 %v10874, %v1895
    %v10891 = vadd.f32 %v10875, %v1895
    %v10892 = vadd.f32 %v10876, %v1895
    %v10893 = vadd.f32 %v10877, %v1895
    %v10894 = vadd.f32 %v10878, %v1895
    %v10895 = vadd.f32 %v10879, %v1895
    %v10896 = vadd.f32 %v10880, %v1895
    %v10897 = vadd.f32 %v10881, %v1895
    %v10898 = vadd.f32 %v10882, %v1895
    %v10899 = vadd.f32 %v10883, %v1895
    %v10900 = vadd.f32 %v10884, %v1895
    %v10901 = vadd.f32 %v10885, %v1895
    %v10902 = vadd.f32 %v10886, %v1895
    %v10903 = vadd.f32 %v10887, %v1895
    %v10904 = vld [vmem:[#allocation3] sm:$0xff]
    %v10905 = vld [vmem:[#allocation3 + $0x8] sm:$0xff]
    %v10906 = vld [vmem:[#allocation3 + $0x10] sm:$0xff]
    %v10907 = vld [vmem:[#allocation3 + $0x18] sm:$0xff]
    %v10908 = vld [vmem:[#allocation3 + $0x20] sm:$0xff]
    %v10909 = vld [vmem:[#allocation3 + $0x28] sm:$0xff]
    %v10910 = vld [vmem:[#allocation3 + $0x30] sm:$0xff]
    %v10911 = vld [vmem:[#allocation3 + $0x38] sm:$0xff]
    %v10912 = vld [vmem:[#allocation3 + $0x40] sm:$0xff]
    %v10913 = vld [vmem:[#allocation3 + $0x48] sm:$0xff]
    %v10914 = vld [vmem:[#allocation3 + $0x50] sm:$0xff]
    %v10915 = vld [vmem:[#allocation3 + $0x58] sm:$0xff]
    %v10916 = vld [vmem:[#allocation3 + $0x60] sm:$0xff]
    %v10917 = vld [vmem:[#allocation3 + $0x68] sm:$0xff]
    %v10918 = vld [vmem:[#allocation3 + $0x70] sm:$0xff]
    %v10919 = vld [vmem:[#allocation3 + $0x78] sm:$0xff]
    %v10920 = vadd.f32 %v10888, %v10904
    %v10921 = vadd.f32 %v10889, %v10905
    %v10922 = vadd.f32 %v10890, %v10906
    %v10923 = vadd.f32 %v10891, %v10907
    %v10924 = vadd.f32 %v10892, %v10908
    %v10925 = vadd.f32 %v10893, %v10909
    %v10926 = vadd.f32 %v10894, %v10910
    %v10927 = vadd.f32 %v10895, %v10911
    %v10928 = vadd.f32 %v10896, %v10912
    %v10929 = vadd.f32 %v10897, %v10913
    %v10930 = vadd.f32 %v10898, %v10914
    %v10931 = vadd.f32 %v10899, %v10915
    %v10932 = vadd.f32 %v10900, %v10916
    %v10933 = vadd.f32 %v10901, %v10917
    %v10934 = vadd.f32 %v10902, %v10918
    %v10935 = vadd.f32 %v10903, %v10919
    %v10936 = vld [vmem:[#allocation5] sm:$0xff]
    %v10937 = vld [vmem:[#allocation5 + $0x8] sm:$0xff]
    %v10938 = vld [vmem:[#allocation5 + $0x10] sm:$0xff]
    %v10939 = vld [vmem:[#allocation5 + $0x18] sm:$0xff]
    %v10940 = vld [vmem:[#allocation5 + $0x20] sm:$0xff]
    %v10941 = vld [vmem:[#allocation5 + $0x28] sm:$0xff]
    %v10942 = vld [vmem:[#allocation5 + $0x30] sm:$0xff]
    %v10943 = vld [vmem:[#allocation5 + $0x38] sm:$0xff]
    %v10944 = vld [vmem:[#allocation5 + $0x40] sm:$0xff]
    %v10945 = vld [vmem:[#allocation5 + $0x48] sm:$0xff]
    %v10946 = vld [vmem:[#allocation5 + $0x50] sm:$0xff]
    %v10947 = vld [vmem:[#allocation5 + $0x58] sm:$0xff]
    %v10948 = vld [vmem:[#allocation5 + $0x60] sm:$0xff]
    %v10949 = vld [vmem:[#allocation5 + $0x68] sm:$0xff]
    %v10950 = vld [vmem:[#allocation5 + $0x70] sm:$0xff]
    %v10951 = vld [vmem:[#allocation5 + $0x78] sm:$0xff]
    %v10952 = vadd.f32 %v10920, %v10936
    %v10953 = vadd.f32 %v10921, %v10937
    %v10954 = vadd.f32 %v10922, %v10938
    %v10955 = vadd.f32 %v10923, %v10939
    %v10956 = vadd.f32 %v10924, %v10940
    %v10957 = vadd.f32 %v10925, %v10941
    %v10958 = vadd.f32 %v10926, %v10942
    %v10959 = vadd.f32 %v10927, %v10943
    %v10960 = vadd.f32 %v10928, %v10944
    %v10961 = vadd.f32 %v10929, %v10945
    %v10962 = vadd.f32 %v10930, %v10946
    %v10963 = vadd.f32 %v10931, %v10947
    %v10964 = vadd.f32 %v10932, %v10948
    %v10965 = vadd.f32 %v10933, %v10949
    %v10966 = vadd.f32 %v10934, %v10950
    %v10967 = vadd.f32 %v10935, %v10951
    %10968 = vst [vmem:[#allocation10] sm:$0xff] %v10952
    %10969 = vst [vmem:[#allocation10 + $0x8] sm:$0xff] %v10953
    %10970 = vst [vmem:[#allocation10 + $0x10] sm:$0xff] %v10954
    %10971 = vst [vmem:[#allocation10 + $0x18] sm:$0xff] %v10955
    %10972 = vst [vmem:[#allocation10 + $0x20] sm:$0xff] %v10956
    %10973 = vst [vmem:[#allocation10 + $0x28] sm:$0xff] %v10957
    %10974 = vst [vmem:[#allocation10 + $0x30] sm:$0xff] %v10958
    %10975 = vst [vmem:[#allocation10 + $0x38] sm:$0xff] %v10959
    %10976 = vst [vmem:[#allocation10 + $0x40] sm:$0xff] %v10960
    %10977 = vst [vmem:[#allocation10 + $0x48] sm:$0xff] %v10961
    %10978 = vst [vmem:[#allocation10 + $0x50] sm:$0xff] %v10962
    %10979 = vst [vmem:[#allocation10 + $0x58] sm:$0xff] %v10963
    %10980 = vst [vmem:[#allocation10 + $0x60] sm:$0xff] %v10964
    %10981 = vst [vmem:[#allocation10 + $0x68] sm:$0xff] %v10965
    %10982 = vst [vmem:[#allocation10 + $0x70] sm:$0xff] %v10966
    %10983 = vst [vmem:[#allocation10 + $0x78] sm:$0xff] %v10967
    // Predicated region
    $region30: #{tpu_custom_call.1} parent=1 // pred_check
      _
    $region31: #{tpu_custom_call.1} parent=1 // pred_check_branch
      %10985 = sbr.rel (0) target = $region33
    $region32: #{tpu_custom_call.1} parent=1 // pred_region
      %s10987 = ssub.s32 2048, 2048
      %10988 = vsyncadd [#allocation7], %s10987
      %s10989 = sshll.u32 [#allocation10], 4
      %s10990 = int_to_ptr.vmem [resolvable:$true] %s10989
      %10995 = dma.vmem_to_hbm [thread:$0]  %s10990, 2048, %s5, [#allocation7], 128, 128, 8
    $region33: #{tpu_custom_call.1} parent=1 // pred_fallthru
      _
    // Predicated region
    $region34: #{tpu_custom_call.1} parent=1 // pred_check
      _
    $region35: #{tpu_custom_call.1} parent=1 // pred_check_branch
      %10997 = sbr.rel (0) target = $region37
    $region36: #{tpu_custom_call.1} parent=1 // pred_region
      %10998 = dma.done [#allocation7], 2048
    $region37: #{tpu_custom_call.1} parent=1 // pred_fallthru
      _
    %10999 = vsyncpa [#allocation6], 1
    %11000 = vsyncpa [#allocation9], 1
    %11001 = vsyncpa [#allocation7], 1

</llo_original>
